<compile_context>
chip_gen: v7x
topology: tpu7x:2x2x1
jax: 0.10.0
libtpu: 0.0.40
codegen_flags: <defaults>
</compile_context>

<pallas_src>
import functools

import jax
import jax.numpy as jnp
import numpy as np
from jax import lax
from jax.experimental import pallas as pl
from jax.experimental.pallas import tpu as pltpu


# ---------------------------------------------------------------------------
# graph-support construction (plain numpy glue, mirrors the torch code)
# ---------------------------------------------------------------------------
def calculate_random_walk_matrix(adj_mx):
    """D^-1 A  (dense version of the scipy code in the reference)."""
    adj_mx = np.asarray(adj_mx, dtype=np.float64)
    d = adj_mx.sum(axis=1)
    d_inv = np.zeros_like(d)
    np.divide(1.0, d, out=d_inv, where=d != 0)      # robust: no garbage where d==0
    d_inv[np.isinf(d_inv)] = 0.0
    return (np.diag(d_inv) @ adj_mx).astype(np.float32)


def build_dual_random_walk_supports(adj_mx):
    # filter_type == 'dual_random_walk'
    s1 = calculate_random_walk_matrix(adj_mx).T
    s2 = calculate_random_walk_matrix(np.asarray(adj_mx).T).T
    return [jnp.asarray(s1, jnp.float32), jnp.asarray(s2, jnp.float32)]


# ---------------------------------------------------------------------------
# Pallas kernel: whole sequence in one invocation, fori_loop over time
# ---------------------------------------------------------------------------
def _dcrnn_kernel(gx_ru_ref, gx_c_ref, s1_ref, s2_ref, wh_ru_ref, wh_c_ref,
                  h_out_ref, *, seq_len, hidden_dim, max_diffusion_step,
                  mxu_dtype):
    H = hidden_dim
    K = max_diffusion_step
    num_nodes = gx_ru_ref.shape[1]

    # One load each; these stay live in VMEM/vregs across the whole sequence.
    s1 = s1_ref[...]              # (N, N)      mxu_dtype
    s2 = s2_ref[...]              # (N, N)      mxu_dtype
    wh_ru = wh_ru_ref[...]        # (M, H, 2H)  mxu_dtype  (fused r|u h-row blocks)
    wh_c = wh_c_ref[...]          # (M, H, H)   mxu_dtype  (candidate h-row blocks)

    def diffuse_blocks(feat_f32):
        # Chebyshev diffusion of an (N, H) feature over both supports.
        # Returns [T0, T1(s1), .., TK(s1), T1(s2), .., TK(s2)] already cast to the
        # MXU dtype (each block cast exactly once; recurrence arithmetic stays f32).
        feat_m = feat_f32.astype(mxu_dtype)
        blocks_m = [feat_m]
        for s_mat in (s1, s2):
            x1 = jnp.dot(s_mat, feat_m, preferred_element_type=jnp.float32)
            x1_m = x1.astype(mxu_dtype)
            blocks_m.append(x1_m)
            prev_m, prev_f, prev2_f = x1_m, x1, feat_f32
            for _ in range(2, K + 1):
                x2 = 2.0 * jnp.dot(s_mat, prev_m,
                                   preferred_element_type=jnp.float32) - prev2_f
                x2_m = x2.astype(mxu_dtype)
                blocks_m.append(x2_m)
                prev_m, prev_f, prev2_f = x2_m, x2, prev_f
        return blocks_m

    def gate_preact(blocks_m, w, base):
        # base + sum_m blocks[m] @ w[m]  — MXU accumulation, no lane concat.
        acc = base
        for m, blk in enumerate(blocks_m):
            acc = acc + jnp.dot(blk, w[m], preferred_element_type=jnp.float32)
        return acc

    def step(t, h):
        hd = diffuse_blocks(h)
        pre_ru = gate_preact(hd, wh_ru, gx_ru_ref[t])        # (N, 2H), f32
        r = jax.nn.sigmoid(pre_ru[:, :H])
        u = jax.nn.sigmoid(pre_ru[:, H:])
        rhd = diffuse_blocks(r * h)
        c = jnp.tanh(gate_preact(rhd, wh_c, gx_c_ref[t]))    # (N, H), f32
        h_new = u * h + (1.0 - u) * c
        h_out_ref[t] = h_new
        return h_new

    h0 = jnp.zeros((num_nodes, H), jnp.float32)
    lax.fori_loop(0, seq_len, step, h0, unroll=True)


def _full_spec(shape):
    n = len(shape)
    return pl.BlockSpec(shape, lambda i: (0,) * n)


def dcrnn_forward(x, supports, params, *, hidden_dim, max_diffusion_step=2,
                  mxu_dtype=jnp.bfloat16):
    """x: (num_nodes, seq_len, in_dim) -> (num_nodes, seq_len, 1)."""
    num_nodes, seq_len, in_dim = x.shape
    s1, s2 = supports
    wr, wu, wc, br, bu, bc, wo, bo = params
    input_size = in_dim + hidden_dim
    num_matrices = 2 * max_diffusion_step + 1
    assert wr.shape == (input_size * num_matrices, hidden_dim)

    # ---- hoisted x-dependent diffusion + gate pre-activations (linear in x) ----
    xf = x.astype(jnp.float32).reshape(num_nodes, seq_len * in_dim)
    blocks = [xf]
    for s in (s1, s2):
        x0, x1 = xf, s @ xf
        blocks.append(x1)
        for _ in range(2, max_diffusion_step + 1):
            x2 = 2.0 * (s @ x1) - x0
            blocks.append(x2)
            x1, x0 = x2, x1
    dx = jnp.stack(blocks).reshape(num_matrices, num_nodes, seq_len, in_dim)

    def split_rows(w):
        w = w.reshape(num_matrices, input_size, hidden_dim)
        return w[:, :in_dim, :], w[:, in_dim:, :]

    wrx, wrh = split_rows(wr)
    wux, wuh = split_rows(wu)
    wcx, wch = split_rows(wc)

    wx_ru = jnp.concatenate([wrx, wux], axis=-1)          # (M, in_dim, 2H)
    wh_ru = jnp.concatenate([wrh, wuh], axis=-1)          # (M, H, 2H)
    b_ru = jnp.concatenate([br, bu])                      # (2H,)

    # x-contributions (plus biases) to the gate pre-activations, for every t.
    gx_ru = jnp.einsum('mnti,mio->tno', dx, wx_ru) + b_ru     # (T, N, 2H) f32
    gx_c = jnp.einsum('mnti,mio->tno', dx, wcx) + bc          # (T, N, H)  f32

    # bf16 operands for the in-kernel MXU work; accumulation/elementwise stay f32.
    s1m = s1.astype(mxu_dtype)
    s2m = s2.astype(mxu_dtype)
    wh_ru_m = wh_ru.astype(mxu_dtype)
    wh_c_m = wch.astype(mxu_dtype)

    kernel = functools.partial(
        _dcrnn_kernel, seq_len=seq_len, hidden_dim=hidden_dim,
        max_diffusion_step=max_diffusion_step, mxu_dtype=mxu_dtype)

    h_all = pl.pallas_call(
        kernel,
        out_shape=jax.ShapeDtypeStruct((seq_len, num_nodes, hidden_dim),
                                       jnp.float32),
        grid_spec=pltpu.PrefetchScalarGridSpec(
            num_scalar_prefetch=0,
            grid=(1,),                       # single invocation; loop is in-kernel
            in_specs=[
                _full_spec(gx_ru.shape),     # (T, N, 2H)
                _full_spec(gx_c.shape),      # (T, N, H)
                _full_spec(s1m.shape),       # (N, N)
                _full_spec(s2m.shape),       # (N, N)
                _full_spec(wh_ru_m.shape),   # (M, H, 2H)
                _full_spec(wh_c_m.shape),    # (M, H, H)
            ],
            out_specs=_full_spec((seq_len, num_nodes, hidden_dim)),
        ),
        compiler_params=pltpu.CompilerParams(
            dimension_semantics=("arbitrary",)),
    )(gx_ru, gx_c, s1m, s2m, wh_ru_m, wh_c_m)

    # Output Linear(H -> 1): one lane-dense XLA matmul over all timesteps.
    out_tm = jnp.einsum('tnh,ho->tno', h_all, wo) + bo        # (T, N, 1)
    return jnp.transpose(out_tm, (1, 0, 2))                    # (N, T, 1)


# ---------------------------------------------------------------------------
# pure-JAX reference (mirrors the PyTorch forward) for a correctness check
# ---------------------------------------------------------------------------
def dcrnn_reference(x, supports, params, *, hidden_dim, max_diffusion_step=2):
    num_nodes, seq_len, in_dim = x.shape
    wr, wu, wc, br, bu, bc, wo, bo = params

    def diffuse(feat):
        outs = [feat]
        for s in supports:
            x0 = feat
            x1 = s @ x0
            outs.append(x1)
            for _ in range(2, max_diffusion_step + 1):
                x2 = 2.0 * (s @ x1) - x0
                outs.append(x2)
                x1, x0 = x2, x1
        return jnp.concatenate(outs, axis=-1)

    h = jnp.zeros((num_nodes, hidden_dim), jnp.float32)
    outs = []
    for t in range(seq_len):
        x_t = x[:, t, :]
        sc = diffuse(jnp.concatenate([x_t, h], axis=-1))
        r = jax.nn.sigmoid(sc @ wr + br)
        u = jax.nn.sigmoid(sc @ wu + bu)
        scr = diffuse(jnp.concatenate([x_t, r * h], axis=-1))
        c = jnp.tanh(scr @ wc + bc)
        h = u * h + (1.0 - u) * c
        outs.append(h @ wo + bo)
    return jnp.stack(outs, axis=1)


# ---------------------------------------------------------------------------
# parameter init (deterministic, xavier-uniform for the gate weights)
# ---------------------------------------------------------------------------
def init_params(key, in_dim, hidden_dim, num_matrices):
    input_size = in_dim + hidden_dim
    rows = input_size * num_matrices
    k_r, k_u, k_c, k_o = jax.random.split(key, 4)

    def xavier(k, fan_in, fan_out):
        bound = np.sqrt(6.0 / (fan_in + fan_out))
        return jax.random.uniform(k, (fan_in, fan_out), jnp.float32, -bound, bound)

    wr = xavier(k_r, rows, hidden_dim)
    wu = xavier(k_u, rows, hidden_dim)
    wc = xavier(k_c, rows, hidden_dim)
    br = jnp.zeros((hidden_dim,), jnp.float32)
    bu = jnp.zeros((hidden_dim,), jnp.float32)
    bc = jnp.zeros((hidden_dim,), jnp.float32)
    lim = 1.0 / np.sqrt(hidden_dim)
    wo = jax.random.uniform(k_o, (hidden_dim, 1), jnp.float32, -lim, lim)
    bo = jnp.zeros((1,), jnp.float32)
    return (wr, wu, wc, br, bu, bc, wo, bo)


if __name__ == "__main__":
    num_nodes = 16
    seq_len = 8
    in_dim = 4
    hidden_dim = 32
    max_diffusion_step = 2

    key = jax.random.PRNGKey(0)
    k_x, k_adj, k_p = jax.random.split(key, 3)

    # deterministic sparse-ish adjacency
    adj = np.asarray(jax.random.uniform(k_adj, (num_nodes, num_nodes)))
    adj = (adj > 0.6).astype(np.float32) * adj
    np.fill_diagonal(adj, 1.0)

    supports = build_dual_random_walk_supports(adj)   # dual_random_walk -> 2 supports
    num_matrices = 2 * max_diffusion_step + 1

    params = init_params(k_p, in_dim, hidden_dim, num_matrices)
    x = jax.random.normal(k_x, (num_nodes, seq_len, in_dim), jnp.float32)

    fwd = jax.jit(functools.partial(dcrnn_forward, hidden_dim=hidden_dim,
                                    max_diffusion_step=max_diffusion_step))
    out = fwd(x, supports, params)
    out = jax.block_until_ready(out)
    assert out.shape == (num_nodes, seq_len, 1)

    ref = dcrnn_reference(x, supports, params, hidden_dim=hidden_dim,
                          max_diffusion_step=max_diffusion_step)
    # In-kernel matmul operands are bf16 (f32 accumulation), so compare against
    # the pure-f32 reference with a slightly looser tolerance.
    np.testing.assert_allclose(np.asarray(out), np.asarray(ref),
                               rtol=3e-2, atol=3e-2)

    print("KERNEL_OK")
</pallas_src>

<mosaic_0001>
module attributes {stable_mosaic.version = 11 : i64} {
  func.func @_dcrnn_kernel(%arg0: i32, %arg1: memref<8x16x64xf32, #tpu.memory_space<vmem>>, %arg2: memref<8x16x32xf32, #tpu.memory_space<vmem>>, %arg3: memref<16x16xbf16, #tpu.memory_space<vmem>>, %arg4: memref<16x16xbf16, #tpu.memory_space<vmem>>, %arg5: memref<5x32x64xbf16, #tpu.memory_space<vmem>>, %arg6: memref<5x32x32xbf16, #tpu.memory_space<vmem>>, %arg7: memref<8x16x32xf32, #tpu.memory_space<vmem>>) attributes {dimension_semantics = [#tpu.dimension_semantics<arbitrary>], iteration_bounds = array<i64: 1>, scalar_prefetch = 0 : i64, scratch_operands = 0 : i64, tpu.core_type = #tpu.core_type<tc>, window_params = [{pipeline_mode = #tpu.pipeline_mode<synchronous>, transform_indices = @transform_0, window_bounds = array<i64: 8, 16, 64>}, {pipeline_mode = #tpu.pipeline_mode<synchronous>, transform_indices = @transform_1, window_bounds = array<i64: 8, 16, 32>}, {pipeline_mode = #tpu.pipeline_mode<synchronous>, transform_indices = @transform_2, window_bounds = array<i64: 16, 16>}, {pipeline_mode = #tpu.pipeline_mode<synchronous>, transform_indices = @transform_3, window_bounds = array<i64: 16, 16>}, {pipeline_mode = #tpu.pipeline_mode<synchronous>, transform_indices = @transform_4, window_bounds = array<i64: 5, 32, 64>}, {pipeline_mode = #tpu.pipeline_mode<synchronous>, transform_indices = @transform_5, window_bounds = array<i64: 5, 32, 32>}, {pipeline_mode = #tpu.pipeline_mode<synchronous>, transform_indices = @transform_6, window_bounds = array<i64: 8, 16, 32>}]} {
    %c0 = arith.constant 0 : index
    %c0_0 = arith.constant 0 : index
    %0 = vector.load %arg3[%c0, %c0_0] : memref<16x16xbf16, #tpu.memory_space<vmem>>, vector<16x16xbf16>
    %c0_1 = arith.constant 0 : index
    %c0_2 = arith.constant 0 : index
    %1 = vector.load %arg4[%c0_1, %c0_2] : memref<16x16xbf16, #tpu.memory_space<vmem>>, vector<16x16xbf16>
    %c0_3 = arith.constant 0 : index
    %c0_4 = arith.constant 0 : index
    %c0_5 = arith.constant 0 : index
    %2 = vector.load %arg5[%c0_3, %c0_4, %c0_5] : memref<5x32x64xbf16, #tpu.memory_space<vmem>>, vector<5x32x64xbf16>
    %c0_6 = arith.constant 0 : index
    %c0_7 = arith.constant 0 : index
    %c0_8 = arith.constant 0 : index
    %3 = vector.load %arg6[%c0_6, %c0_7, %c0_8] : memref<5x32x32xbf16, #tpu.memory_space<vmem>>, vector<5x32x32xbf16>
    %cst = arith.constant 0.000000e+00 : f32
    %4 = vector.broadcast %cst : f32 to vector<16x32xf32>
    %c0_i32 = arith.constant 0 : i32
    %5 = arith.truncf %4 : vector<16x32xf32> to vector<16x32xbf16>
    %cst_9 = arith.constant dense<0.000000e+00> : vector<16x32xf32>
    %6 = tpu.matmul %0, %5, %cst_9 {dimension_numbers = #tpu.dot_dimension_numbers<[1], [0], [0], [1], [0, 0, 1, 1], [], []>} : vector<16x16xbf16>, vector<16x32xbf16>, vector<16x32xf32> -> vector<16x32xf32>
    %7 = arith.truncf %6 : vector<16x32xf32> to vector<16x32xbf16>
    %cst_10 = arith.constant dense<0.000000e+00> : vector<16x32xf32>
    %8 = tpu.matmul %0, %7, %cst_10 {dimension_numbers = #tpu.dot_dimension_numbers<[1], [0], [0], [1], [0, 0, 1, 1], [], []>} : vector<16x16xbf16>, vector<16x32xbf16>, vector<16x32xf32> -> vector<16x32xf32>
    %cst_11 = arith.constant 2.000000e+00 : f32
    %9 = vector.broadcast %cst_11 : f32 to vector<16x32xf32>
    %10 = arith.mulf %9, %8 : vector<16x32xf32>
    %11 = arith.subf %10, %4 : vector<16x32xf32>
    %12 = arith.truncf %11 : vector<16x32xf32> to vector<16x32xbf16>
    %cst_12 = arith.constant dense<0.000000e+00> : vector<16x32xf32>
    %13 = tpu.matmul %1, %5, %cst_12 {dimension_numbers = #tpu.dot_dimension_numbers<[1], [0], [0], [1], [0, 0, 1, 1], [], []>} : vector<16x16xbf16>, vector<16x32xbf16>, vector<16x32xf32> -> vector<16x32xf32>
    %14 = arith.truncf %13 : vector<16x32xf32> to vector<16x32xbf16>
    %cst_13 = arith.constant dense<0.000000e+00> : vector<16x32xf32>
    %15 = tpu.matmul %1, %14, %cst_13 {dimension_numbers = #tpu.dot_dimension_numbers<[1], [0], [0], [1], [0, 0, 1, 1], [], []>} : vector<16x16xbf16>, vector<16x32xbf16>, vector<16x32xf32> -> vector<16x32xf32>
    %cst_14 = arith.constant 2.000000e+00 : f32
    %16 = vector.broadcast %cst_14 : f32 to vector<16x32xf32>
    %17 = arith.mulf %16, %15 : vector<16x32xf32>
    %18 = arith.subf %17, %4 : vector<16x32xf32>
    %19 = arith.truncf %18 : vector<16x32xf32> to vector<16x32xbf16>
    %20 = arith.index_cast %c0_i32 : i32 to index
    %c0_15 = arith.constant 0 : index
    %c0_16 = arith.constant 0 : index
    %21 = vector.load %arg1[%20, %c0_15, %c0_16] : memref<8x16x64xf32, #tpu.memory_space<vmem>>, vector<1x16x64xf32>
    %22 = vector.shape_cast %21 : vector<1x16x64xf32> to vector<16x64xf32>
    %23 = vector.extract_strided_slice %2 {offsets = [0, 0, 0], sizes = [1, 32, 64], strides = [1, 1, 1]} : vector<5x32x64xbf16> to vector<1x32x64xbf16>
    %24 = vector.shape_cast %23 : vector<1x32x64xbf16> to vector<32x64xbf16>
    %cst_17 = arith.constant dense<0.000000e+00> : vector<16x64xf32>
    %25 = tpu.matmul %5, %24, %cst_17 {dimension_numbers = #tpu.dot_dimension_numbers<[1], [0], [0], [1], [0, 0, 1, 1], [], []>} : vector<16x32xbf16>, vector<32x64xbf16>, vector<16x64xf32> -> vector<16x64xf32>
    %26 = arith.addf %22, %25 : vector<16x64xf32>
    %27 = vector.extract_strided_slice %2 {offsets = [1, 0, 0], sizes = [1, 32, 64], strides = [1, 1, 1]} : vector<5x32x64xbf16> to vector<1x32x64xbf16>
    %28 = vector.shape_cast %27 : vector<1x32x64xbf16> to vector<32x64xbf16>
    %cst_18 = arith.constant dense<0.000000e+00> : vector<16x64xf32>
    %29 = tpu.matmul %7, %28, %cst_18 {dimension_numbers = #tpu.dot_dimension_numbers<[1], [0], [0], [1], [0, 0, 1, 1], [], []>} : vector<16x32xbf16>, vector<32x64xbf16>, vector<16x64xf32> -> vector<16x64xf32>
    %30 = arith.addf %26, %29 : vector<16x64xf32>
    %31 = vector.extract_strided_slice %2 {offsets = [2, 0, 0], sizes = [1, 32, 64], strides = [1, 1, 1]} : vector<5x32x64xbf16> to vector<1x32x64xbf16>
    %32 = vector.shape_cast %31 : vector<1x32x64xbf16> to vector<32x64xbf16>
    %cst_19 = arith.constant dense<0.000000e+00> : vector<16x64xf32>
    %33 = tpu.matmul %12, %32, %cst_19 {dimension_numbers = #tpu.dot_dimension_numbers<[1], [0], [0], [1], [0, 0, 1, 1], [], []>} : vector<16x32xbf16>, vector<32x64xbf16>, vector<16x64xf32> -> vector<16x64xf32>
    %34 = arith.addf %30, %33 : vector<16x64xf32>
    %35 = vector.extract_strided_slice %2 {offsets = [3, 0, 0], sizes = [1, 32, 64], strides = [1, 1, 1]} : vector<5x32x64xbf16> to vector<1x32x64xbf16>
    %36 = vector.shape_cast %35 : vector<1x32x64xbf16> to vector<32x64xbf16>
    %cst_20 = arith.constant dense<0.000000e+00> : vector<16x64xf32>
    %37 = tpu.matmul %14, %36, %cst_20 {dimension_numbers = #tpu.dot_dimension_numbers<[1], [0], [0], [1], [0, 0, 1, 1], [], []>} : vector<16x32xbf16>, vector<32x64xbf16>, vector<16x64xf32> -> vector<16x64xf32>
    %38 = arith.addf %34, %37 : vector<16x64xf32>
    %39 = vector.extract_strided_slice %2 {offsets = [4, 0, 0], sizes = [1, 32, 64], strides = [1, 1, 1]} : vector<5x32x64xbf16> to vector<1x32x64xbf16>
    %40 = vector.shape_cast %39 : vector<1x32x64xbf16> to vector<32x64xbf16>
    %cst_21 = arith.constant dense<0.000000e+00> : vector<16x64xf32>
    %41 = tpu.matmul %19, %40, %cst_21 {dimension_numbers = #tpu.dot_dimension_numbers<[1], [0], [0], [1], [0, 0, 1, 1], [], []>} : vector<16x32xbf16>, vector<32x64xbf16>, vector<16x64xf32> -> vector<16x64xf32>
    %42 = arith.addf %38, %41 : vector<16x64xf32>
    %43 = vector.extract_strided_slice %42 {offsets = [0, 0], sizes = [16, 32], strides = [1, 1]} : vector<16x64xf32> to vector<16x32xf32>
    %44 = arith.negf %43 : vector<16x32xf32>
    %45 = math.exp %44 : vector<16x32xf32>
    %cst_22 = arith.constant 1.000000e+00 : f32
    %46 = vector.broadcast %cst_22 : f32 to vector<16x32xf32>
    %47 = arith.addf %46, %45 : vector<16x32xf32>
    %48 = arith.divf %46, %47 : vector<16x32xf32>
    %49 = vector.extract_strided_slice %42 {offsets = [0, 32], sizes = [16, 32], strides = [1, 1]} : vector<16x64xf32> to vector<16x32xf32>
    %50 = arith.negf %49 : vector<16x32xf32>
    %51 = math.exp %50 : vector<16x32xf32>
    %cst_23 = arith.constant 1.000000e+00 : f32
    %52 = vector.broadcast %cst_23 : f32 to vector<16x32xf32>
    %53 = arith.addf %52, %51 : vector<16x32xf32>
    %54 = arith.divf %52, %53 : vector<16x32xf32>
    %55 = arith.mulf %48, %4 : vector<16x32xf32>
    %56 = arith.truncf %55 : vector<16x32xf32> to vector<16x32xbf16>
    %cst_24 = arith.constant dense<0.000000e+00> : vector<16x32xf32>
    %57 = tpu.matmul %0, %56, %cst_24 {dimension_numbers = #tpu.dot_dimension_numbers<[1], [0], [0], [1], [0, 0, 1, 1], [], []>} : vector<16x16xbf16>, vector<16x32xbf16>, vector<16x32xf32> -> vector<16x32xf32>
    %58 = arith.truncf %57 : vector<16x32xf32> to vector<16x32xbf16>
    %cst_25 = arith.constant dense<0.000000e+00> : vector<16x32xf32>
    %59 = tpu.matmul %0, %58, %cst_25 {dimension_numbers = #tpu.dot_dimension_numbers<[1], [0], [0], [1], [0, 0, 1, 1], [], []>} : vector<16x16xbf16>, vector<16x32xbf16>, vector<16x32xf32> -> vector<16x32xf32>
    %cst_26 = arith.constant 2.000000e+00 : f32
    %60 = vector.broadcast %cst_26 : f32 to vector<16x32xf32>
    %61 = arith.mulf %60, %59 : vector<16x32xf32>
    %62 = arith.subf %61, %55 : vector<16x32xf32>
    %63 = arith.truncf %62 : vector<16x32xf32> to vector<16x32xbf16>
    %cst_27 = arith.constant dense<0.000000e+00> : vector<16x32xf32>
    %64 = tpu.matmul %1, %56, %cst_27 {dimension_numbers = #tpu.dot_dimension_numbers<[1], [0], [0], [1], [0, 0, 1, 1], [], []>} : vector<16x16xbf16>, vector<16x32xbf16>, vector<16x32xf32> -> vector<16x32xf32>
    %65 = arith.truncf %64 : vector<16x32xf32> to vector<16x32xbf16>
    %cst_28 = arith.constant dense<0.000000e+00> : vector<16x32xf32>
    %66 = tpu.matmul %1, %65, %cst_28 {dimension_numbers = #tpu.dot_dimension_numbers<[1], [0], [0], [1], [0, 0, 1, 1], [], []>} : vector<16x16xbf16>, vector<16x32xbf16>, vector<16x32xf32> -> vector<16x32xf32>
    %cst_29 = arith.constant 2.000000e+00 : f32
    %67 = vector.broadcast %cst_29 : f32 to vector<16x32xf32>
    %68 = arith.mulf %67, %66 : vector<16x32xf32>
    %69 = arith.subf %68, %55 : vector<16x32xf32>
    %70 = arith.truncf %69 : vector<16x32xf32> to vector<16x32xbf16>
    %71 = arith.index_cast %c0_i32 : i32 to index
    %c0_30 = arith.constant 0 : index
    %c0_31 = arith.constant 0 : index
    %72 = vector.load %arg2[%71, %c0_30, %c0_31] : memref<8x16x32xf32, #tpu.memory_space<vmem>>, vector<1x16x32xf32>
    %73 = vector.shape_cast %72 : vector<1x16x32xf32> to vector<16x32xf32>
    %74 = vector.extract_strided_slice %3 {offsets = [0, 0, 0], sizes = [1, 32, 32], strides = [1, 1, 1]} : vector<5x32x32xbf16> to vector<1x32x32xbf16>
    %75 = vector.shape_cast %74 : vector<1x32x32xbf16> to vector<32x32xbf16>
    %cst_32 = arith.constant dense<0.000000e+00> : vector<16x32xf32>
    %76 = tpu.matmul %56, %75, %cst_32 {dimension_numbers = #tpu.dot_dimension_numbers<[1], [0], [0], [1], [0, 0, 1, 1], [], []>} : vector<16x32xbf16>, vector<32x32xbf16>, vector<16x32xf32> -> vector<16x32xf32>
    %77 = arith.addf %73, %76 : vector<16x32xf32>
    %78 = vector.extract_strided_slice %3 {offsets = [1, 0, 0], sizes = [1, 32, 32], strides = [1, 1, 1]} : vector<5x32x32xbf16> to vector<1x32x32xbf16>
    %79 = vector.shape_cast %78 : vector<1x32x32xbf16> to vector<32x32xbf16>
    %cst_33 = arith.constant dense<0.000000e+00> : vector<16x32xf32>
    %80 = tpu.matmul %58, %79, %cst_33 {dimension_numbers = #tpu.dot_dimension_numbers<[1], [0], [0], [1], [0, 0, 1, 1], [], []>} : vector<16x32xbf16>, vector<32x32xbf16>, vector<16x32xf32> -> vector<16x32xf32>
    %81 = arith.addf %77, %80 : vector<16x32xf32>
    %82 = vector.extract_strided_slice %3 {offsets = [2, 0, 0], sizes = [1, 32, 32], strides = [1, 1, 1]} : vector<5x32x32xbf16> to vector<1x32x32xbf16>
    %83 = vector.shape_cast %82 : vector<1x32x32xbf16> to vector<32x32xbf16>
    %cst_34 = arith.constant dense<0.000000e+00> : vector<16x32xf32>
    %84 = tpu.matmul %63, %83, %cst_34 {dimension_numbers = #tpu.dot_dimension_numbers<[1], [0], [0], [1], [0, 0, 1, 1], [], []>} : vector<16x32xbf16>, vector<32x32xbf16>, vector<16x32xf32> -> vector<16x32xf32>
    %85 = arith.addf %81, %84 : vector<16x32xf32>
    %86 = vector.extract_strided_slice %3 {offsets = [3, 0, 0], sizes = [1, 32, 32], strides = [1, 1, 1]} : vector<5x32x32xbf16> to vector<1x32x32xbf16>
    %87 = vector.shape_cast %86 : vector<1x32x32xbf16> to vector<32x32xbf16>
    %cst_35 = arith.constant dense<0.000000e+00> : vector<16x32xf32>
    %88 = tpu.matmul %65, %87, %cst_35 {dimension_numbers = #tpu.dot_dimension_numbers<[1], [0], [0], [1], [0, 0, 1, 1], [], []>} : vector<16x32xbf16>, vector<32x32xbf16>, vector<16x32xf32> -> vector<16x32xf32>
    %89 = arith.addf %85, %88 : vector<16x32xf32>
    %90 = vector.extract_strided_slice %3 {offsets = [4, 0, 0], sizes = [1, 32, 32], strides = [1, 1, 1]} : vector<5x32x32xbf16> to vector<1x32x32xbf16>
    %91 = vector.shape_cast %90 : vector<1x32x32xbf16> to vector<32x32xbf16>
    %cst_36 = arith.constant dense<0.000000e+00> : vector<16x32xf32>
    %92 = tpu.matmul %70, %91, %cst_36 {dimension_numbers = #tpu.dot_dimension_numbers<[1], [0], [0], [1], [0, 0, 1, 1], [], []>} : vector<16x32xbf16>, vector<32x32xbf16>, vector<16x32xf32> -> vector<16x32xf32>
    %93 = arith.addf %89, %92 : vector<16x32xf32>
    %94 = math.tanh %93 : vector<16x32xf32>
    %95 = arith.mulf %54, %4 : vector<16x32xf32>
    %cst_37 = arith.constant 1.000000e+00 : f32
    %96 = vector.broadcast %cst_37 : f32 to vector<16x32xf32>
    %97 = arith.subf %96, %54 : vector<16x32xf32>
    %98 = arith.mulf %97, %94 : vector<16x32xf32>
    %99 = arith.addf %95, %98 : vector<16x32xf32>
    %100 = arith.index_cast %c0_i32 : i32 to index
    %c0_38 = arith.constant 0 : index
    %c0_39 = arith.constant 0 : index
    %101 = vector.load %arg7[%100, %c0_38, %c0_39] : memref<8x16x32xf32, #tpu.memory_space<vmem>>, vector<1x16x32xf32>
    %102 = vector.shape_cast %101 : vector<1x16x32xf32> to vector<16x32xf32>
    %103 = vector.shape_cast %99 : vector<16x32xf32> to vector<1x16x32xf32>
    tpu.vector_store %arg7[%100, %c0_38, %c0_39], %103 {strides = array<i32>} : memref<8x16x32xf32, #tpu.memory_space<vmem>>, vector<1x16x32xf32>,
    %c1_i32 = arith.constant 1 : i32
    %104 = arith.truncf %99 : vector<16x32xf32> to vector<16x32xbf16>
    %cst_40 = arith.constant dense<0.000000e+00> : vector<16x32xf32>
    %105 = tpu.matmul %0, %104, %cst_40 {dimension_numbers = #tpu.dot_dimension_numbers<[1], [0], [0], [1], [0, 0, 1, 1], [], []>} : vector<16x16xbf16>, vector<16x32xbf16>, vector<16x32xf32> -> vector<16x32xf32>
    %106 = arith.truncf %105 : vector<16x32xf32> to vector<16x32xbf16>
    %cst_41 = arith.constant dense<0.000000e+00> : vector<16x32xf32>
    %107 = tpu.matmul %0, %106, %cst_41 {dimension_numbers = #tpu.dot_dimension_numbers<[1], [0], [0], [1], [0, 0, 1, 1], [], []>} : vector<16x16xbf16>, vector<16x32xbf16>, vector<16x32xf32> -> vector<16x32xf32>
    %cst_42 = arith.constant 2.000000e+00 : f32
    %108 = vector.broadcast %cst_42 : f32 to vector<16x32xf32>
    %109 = arith.mulf %108, %107 : vector<16x32xf32>
    %110 = arith.subf %109, %99 : vector<16x32xf32>
    %111 = arith.truncf %110 : vector<16x32xf32> to vector<16x32xbf16>
    %cst_43 = arith.constant dense<0.000000e+00> : vector<16x32xf32>
    %112 = tpu.matmul %1, %104, %cst_43 {dimension_numbers = #tpu.dot_dimension_numbers<[1], [0], [0], [1], [0, 0, 1, 1], [], []>} : vector<16x16xbf16>, vector<16x32xbf16>, vector<16x32xf32> -> vector<16x32xf32>
    %113 = arith.truncf %112 : vector<16x32xf32> to vector<16x32xbf16>
    %cst_44 = arith.constant dense<0.000000e+00> : vector<16x32xf32>
    %114 = tpu.matmul %1, %113, %cst_44 {dimension_numbers = #tpu.dot_dimension_numbers<[1], [0], [0], [1], [0, 0, 1, 1], [], []>} : vector<16x16xbf16>, vector<16x32xbf16>, vector<16x32xf32> -> vector<16x32xf32>
    %cst_45 = arith.constant 2.000000e+00 : f32
    %115 = vector.broadcast %cst_45 : f32 to vector<16x32xf32>
    %116 = arith.mulf %115, %114 : vector<16x32xf32>
    %117 = arith.subf %116, %99 : vector<16x32xf32>
    %118 = arith.truncf %117 : vector<16x32xf32> to vector<16x32xbf16>
    %119 = arith.index_cast %c1_i32 : i32 to index
    %c0_46 = arith.constant 0 : index
    %c0_47 = arith.constant 0 : index
    %120 = vector.load %arg1[%119, %c0_46, %c0_47] : memref<8x16x64xf32, #tpu.memory_space<vmem>>, vector<1x16x64xf32>
    %121 = vector.shape_cast %120 : vector<1x16x64xf32> to vector<16x64xf32>
    %122 = vector.extract_strided_slice %2 {offsets = [0, 0, 0], sizes = [1, 32, 64], strides = [1, 1, 1]} : vector<5x32x64xbf16> to vector<1x32x64xbf16>
    %123 = vector.shape_cast %122 : vector<1x32x64xbf16> to vector<32x64xbf16>
    %cst_48 = arith.constant dense<0.000000e+00> : vector<16x64xf32>
    %124 = tpu.matmul %104, %123, %cst_48 {dimension_numbers = #tpu.dot_dimension_numbers<[1], [0], [0], [1], [0, 0, 1, 1], [], []>} : vector<16x32xbf16>, vector<32x64xbf16>, vector<16x64xf32> -> vector<16x64xf32>
    %125 = arith.addf %121, %124 : vector<16x64xf32>
    %126 = vector.extract_strided_slice %2 {offsets = [1, 0, 0], sizes = [1, 32, 64], strides = [1, 1, 1]} : vector<5x32x64xbf16> to vector<1x32x64xbf16>
    %127 = vector.shape_cast %126 : vector<1x32x64xbf16> to vector<32x64xbf16>
    %cst_49 = arith.constant dense<0.000000e+00> : vector<16x64xf32>
    %128 = tpu.matmul %106, %127, %cst_49 {dimension_numbers = #tpu.dot_dimension_numbers<[1], [0], [0], [1], [0, 0, 1, 1], [], []>} : vector<16x32xbf16>, vector<32x64xbf16>, vector<16x64xf32> -> vector<16x64xf32>
    %129 = arith.addf %125, %128 : vector<16x64xf32>
    %130 = vector.extract_strided_slice %2 {offsets = [2, 0, 0], sizes = [1, 32, 64], strides = [1, 1, 1]} : vector<5x32x64xbf16> to vector<1x32x64xbf16>
    %131 = vector.shape_cast %130 : vector<1x32x64xbf16> to vector<32x64xbf16>
    %cst_50 = arith.constant dense<0.000000e+00> : vector<16x64xf32>
    %132 = tpu.matmul %111, %131, %cst_50 {dimension_numbers = #tpu.dot_dimension_numbers<[1], [0], [0], [1], [0, 0, 1, 1], [], []>} : vector<16x32xbf16>, vector<32x64xbf16>, vector<16x64xf32> -> vector<16x64xf32>
    %133 = arith.addf %129, %132 : vector<16x64xf32>
    %134 = vector.extract_strided_slice %2 {offsets = [3, 0, 0], sizes = [1, 32, 64], strides = [1, 1, 1]} : vector<5x32x64xbf16> to vector<1x32x64xbf16>
    %135 = vector.shape_cast %134 : vector<1x32x64xbf16> to vector<32x64xbf16>
    %cst_51 = arith.constant dense<0.000000e+00> : vector<16x64xf32>
    %136 = tpu.matmul %113, %135, %cst_51 {dimension_numbers = #tpu.dot_dimension_numbers<[1], [0], [0], [1], [0, 0, 1, 1], [], []>} : vector<16x32xbf16>, vector<32x64xbf16>, vector<16x64xf32> -> vector<16x64xf32>
    %137 = arith.addf %133, %136 : vector<16x64xf32>
    %138 = vector.extract_strided_slice %2 {offsets = [4, 0, 0], sizes = [1, 32, 64], strides = [1, 1, 1]} : vector<5x32x64xbf16> to vector<1x32x64xbf16>
    %139 = vector.shape_cast %138 : vector<1x32x64xbf16> to vector<32x64xbf16>
    %cst_52 = arith.constant dense<0.000000e+00> : vector<16x64xf32>
    %140 = tpu.matmul %118, %139, %cst_52 {dimension_numbers = #tpu.dot_dimension_numbers<[1], [0], [0], [1], [0, 0, 1, 1], [], []>} : vector<16x32xbf16>, vector<32x64xbf16>, vector<16x64xf32> -> vector<16x64xf32>
    %141 = arith.addf %137, %140 : vector<16x64xf32>
    %142 = vector.extract_strided_slice %141 {offsets = [0, 0], sizes = [16, 32], strides = [1, 1]} : vector<16x64xf32> to vector<16x32xf32>
    %143 = arith.negf %142 : vector<16x32xf32>
    %144 = math.exp %143 : vector<16x32xf32>
    %cst_53 = arith.constant 1.000000e+00 : f32
    %145 = vector.broadcast %cst_53 : f32 to vector<16x32xf32>
    %146 = arith.addf %145, %144 : vector<16x32xf32>
    %147 = arith.divf %145, %146 : vector<16x32xf32>
    %148 = vector.extract_strided_slice %141 {offsets = [0, 32], sizes = [16, 32], strides = [1, 1]} : vector<16x64xf32> to vector<16x32xf32>
    %149 = arith.negf %148 : vector<16x32xf32>
    %150 = math.exp %149 : vector<16x32xf32>
    %cst_54 = arith.constant 1.000000e+00 : f32
    %151 = vector.broadcast %cst_54 : f32 to vector<16x32xf32>
    %152 = arith.addf %151, %150 : vector<16x32xf32>
    %153 = arith.divf %151, %152 : vector<16x32xf32>
    %154 = arith.mulf %147, %99 : vector<16x32xf32>
    %155 = arith.truncf %154 : vector<16x32xf32> to vector<16x32xbf16>
    %cst_55 = arith.constant dense<0.000000e+00> : vector<16x32xf32>
    %156 = tpu.matmul %0, %155, %cst_55 {dimension_numbers = #tpu.dot_dimension_numbers<[1], [0], [0], [1], [0, 0, 1, 1], [], []>} : vector<16x16xbf16>, vector<16x32xbf16>, vector<16x32xf32> -> vector<16x32xf32>
    %157 = arith.truncf %156 : vector<16x32xf32> to vector<16x32xbf16>
    %cst_56 = arith.constant dense<0.000000e+00> : vector<16x32xf32>
    %158 = tpu.matmul %0, %157, %cst_56 {dimension_numbers = #tpu.dot_dimension_numbers<[1], [0], [0], [1], [0, 0, 1, 1], [], []>} : vector<16x16xbf16>, vector<16x32xbf16>, vector<16x32xf32> -> vector<16x32xf32>
    %cst_57 = arith.constant 2.000000e+00 : f32
    %159 = vector.broadcast %cst_57 : f32 to vector<16x32xf32>
    %160 = arith.mulf %159, %158 : vector<16x32xf32>
    %161 = arith.subf %160, %154 : vector<16x32xf32>
    %162 = arith.truncf %161 : vector<16x32xf32> to vector<16x32xbf16>
    %cst_58 = arith.constant dense<0.000000e+00> : vector<16x32xf32>
    %163 = tpu.matmul %1, %155, %cst_58 {dimension_numbers = #tpu.dot_dimension_numbers<[1], [0], [0], [1], [0, 0, 1, 1], [], []>} : vector<16x16xbf16>, vector<16x32xbf16>, vector<16x32xf32> -> vector<16x32xf32>
    %164 = arith.truncf %163 : vector<16x32xf32> to vector<16x32xbf16>
    %cst_59 = arith.constant dense<0.000000e+00> : vector<16x32xf32>
    %165 = tpu.matmul %1, %164, %cst_59 {dimension_numbers = #tpu.dot_dimension_numbers<[1], [0], [0], [1], [0, 0, 1, 1], [], []>} : vector<16x16xbf16>, vector<16x32xbf16>, vector<16x32xf32> -> vector<16x32xf32>
    %cst_60 = arith.constant 2.000000e+00 : f32
    %166 = vector.broadcast %cst_60 : f32 to vector<16x32xf32>
    %167 = arith.mulf %166, %165 : vector<16x32xf32>
    %168 = arith.subf %167, %154 : vector<16x32xf32>
    %169 = arith.truncf %168 : vector<16x32xf32> to vector<16x32xbf16>
    %170 = arith.index_cast %c1_i32 : i32 to index
    %c0_61 = arith.constant 0 : index
    %c0_62 = arith.constant 0 : index
    %171 = vector.load %arg2[%170, %c0_61, %c0_62] : memref<8x16x32xf32, #tpu.memory_space<vmem>>, vector<1x16x32xf32>
    %172 = vector.shape_cast %171 : vector<1x16x32xf32> to vector<16x32xf32>
    %173 = vector.extract_strided_slice %3 {offsets = [0, 0, 0], sizes = [1, 32, 32], strides = [1, 1, 1]} : vector<5x32x32xbf16> to vector<1x32x32xbf16>
    %174 = vector.shape_cast %173 : vector<1x32x32xbf16> to vector<32x32xbf16>
    %cst_63 = arith.constant dense<0.000000e+00> : vector<16x32xf32>
    %175 = tpu.matmul %155, %174, %cst_63 {dimension_numbers = #tpu.dot_dimension_numbers<[1], [0], [0], [1], [0, 0, 1, 1], [], []>} : vector<16x32xbf16>, vector<32x32xbf16>, vector<16x32xf32> -> vector<16x32xf32>
    %176 = arith.addf %172, %175 : vector<16x32xf32>
    %177 = vector.extract_strided_slice %3 {offsets = [1, 0, 0], sizes = [1, 32, 32], strides = [1, 1, 1]} : vector<5x32x32xbf16> to vector<1x32x32xbf16>
    %178 = vector.shape_cast %177 : vector<1x32x32xbf16> to vector<32x32xbf16>
    %cst_64 = arith.constant dense<0.000000e+00> : vector<16x32xf32>
    %179 = tpu.matmul %157, %178, %cst_64 {dimension_numbers = #tpu.dot_dimension_numbers<[1], [0], [0], [1], [0, 0, 1, 1], [], []>} : vector<16x32xbf16>, vector<32x32xbf16>, vector<16x32xf32> -> vector<16x32xf32>
    %180 = arith.addf %176, %179 : vector<16x32xf32>
    %181 = vector.extract_strided_slice %3 {offsets = [2, 0, 0], sizes = [1, 32, 32], strides = [1, 1, 1]} : vector<5x32x32xbf16> to vector<1x32x32xbf16>
    %182 = vector.shape_cast %181 : vector<1x32x32xbf16> to vector<32x32xbf16>
    %cst_65 = arith.constant dense<0.000000e+00> : vector<16x32xf32>
    %183 = tpu.matmul %162, %182, %cst_65 {dimension_numbers = #tpu.dot_dimension_numbers<[1], [0], [0], [1], [0, 0, 1, 1], [], []>} : vector<16x32xbf16>, vector<32x32xbf16>, vector<16x32xf32> -> vector<16x32xf32>
    %184 = arith.addf %180, %183 : vector<16x32xf32>
    %185 = vector.extract_strided_slice %3 {offsets = [3, 0, 0], sizes = [1, 32, 32], strides = [1, 1, 1]} : vector<5x32x32xbf16> to vector<1x32x32xbf16>
    %186 = vector.shape_cast %185 : vector<1x32x32xbf16> to vector<32x32xbf16>
    %cst_66 = arith.constant dense<0.000000e+00> : vector<16x32xf32>
    %187 = tpu.matmul %164, %186, %cst_66 {dimension_numbers = #tpu.dot_dimension_numbers<[1], [0], [0], [1], [0, 0, 1, 1], [], []>} : vector<16x32xbf16>, vector<32x32xbf16>, vector<16x32xf32> -> vector<16x32xf32>
    %188 = arith.addf %184, %187 : vector<16x32xf32>
    %189 = vector.extract_strided_slice %3 {offsets = [4, 0, 0], sizes = [1, 32, 32], strides = [1, 1, 1]} : vector<5x32x32xbf16> to vector<1x32x32xbf16>
    %190 = vector.shape_cast %189 : vector<1x32x32xbf16> to vector<32x32xbf16>
    %cst_67 = arith.constant dense<0.000000e+00> : vector<16x32xf32>
    %191 = tpu.matmul %169, %190, %cst_67 {dimension_numbers = #tpu.dot_dimension_numbers<[1], [0], [0], [1], [0, 0, 1, 1], [], []>} : vector<16x32xbf16>, vector<32x32xbf16>, vector<16x32xf32> -> vector<16x32xf32>
    %192 = arith.addf %188, %191 : vector<16x32xf32>
    %193 = math.tanh %192 : vector<16x32xf32>
    %194 = arith.mulf %153, %99 : vector<16x32xf32>
    %cst_68 = arith.constant 1.000000e+00 : f32
    %195 = vector.broadcast %cst_68 : f32 to vector<16x32xf32>
    %196 = arith.subf %195, %153 : vector<16x32xf32>
    %197 = arith.mulf %196, %193 : vector<16x32xf32>
    %198 = arith.addf %194, %197 : vector<16x32xf32>
    %199 = arith.index_cast %c1_i32 : i32 to index
    %c0_69 = arith.constant 0 : index
    %c0_70 = arith.constant 0 : index
    %200 = vector.load %arg7[%199, %c0_69, %c0_70] : memref<8x16x32xf32, #tpu.memory_space<vmem>>, vector<1x16x32xf32>
    %201 = vector.shape_cast %200 : vector<1x16x32xf32> to vector<16x32xf32>
    %202 = vector.shape_cast %198 : vector<16x32xf32> to vector<1x16x32xf32>
    tpu.vector_store %arg7[%199, %c0_69, %c0_70], %202 {strides = array<i32>} : memref<8x16x32xf32, #tpu.memory_space<vmem>>, vector<1x16x32xf32>,
    %c2_i32 = arith.constant 2 : i32
    %203 = arith.truncf %198 : vector<16x32xf32> to vector<16x32xbf16>
    %cst_71 = arith.constant dense<0.000000e+00> : vector<16x32xf32>
    %204 = tpu.matmul %0, %203, %cst_71 {dimension_numbers = #tpu.dot_dimension_numbers<[1], [0], [0], [1], [0, 0, 1, 1], [], []>} : vector<16x16xbf16>, vector<16x32xbf16>, vector<16x32xf32> -> vector<16x32xf32>
    %205 = arith.truncf %204 : vector<16x32xf32> to vector<16x32xbf16>
    %cst_72 = arith.constant dense<0.000000e+00> : vector<16x32xf32>
    %206 = tpu.matmul %0, %205, %cst_72 {dimension_numbers = #tpu.dot_dimension_numbers<[1], [0], [0], [1], [0, 0, 1, 1], [], []>} : vector<16x16xbf16>, vector<16x32xbf16>, vector<16x32xf32> -> vector<16x32xf32>
    %cst_73 = arith.constant 2.000000e+00 : f32
    %207 = vector.broadcast %cst_73 : f32 to vector<16x32xf32>
    %208 = arith.mulf %207, %206 : vector<16x32xf32>
    %209 = arith.subf %208, %198 : vector<16x32xf32>
    %210 = arith.truncf %209 : vector<16x32xf32> to vector<16x32xbf16>
    %cst_74 = arith.constant dense<0.000000e+00> : vector<16x32xf32>
    %211 = tpu.matmul %1, %203, %cst_74 {dimension_numbers = #tpu.dot_dimension_numbers<[1], [0], [0], [1], [0, 0, 1, 1], [], []>} : vector<16x16xbf16>, vector<16x32xbf16>, vector<16x32xf32> -> vector<16x32xf32>
    %212 = arith.truncf %211 : vector<16x32xf32> to vector<16x32xbf16>
    %cst_75 = arith.constant dense<0.000000e+00> : vector<16x32xf32>
    %213 = tpu.matmul %1, %212, %cst_75 {dimension_numbers = #tpu.dot_dimension_numbers<[1], [0], [0], [1], [0, 0, 1, 1], [], []>} : vector<16x16xbf16>, vector<16x32xbf16>, vector<16x32xf32> -> vector<16x32xf32>
    %cst_76 = arith.constant 2.000000e+00 : f32
    %214 = vector.broadcast %cst_76 : f32 to vector<16x32xf32>
    %215 = arith.mulf %214, %213 : vector<16x32xf32>
    %216 = arith.subf %215, %198 : vector<16x32xf32>
    %217 = arith.truncf %216 : vector<16x32xf32> to vector<16x32xbf16>
    %218 = arith.index_cast %c2_i32 : i32 to index
    %c0_77 = arith.constant 0 : index
    %c0_78 = arith.constant 0 : index
    %219 = vector.load %arg1[%218, %c0_77, %c0_78] : memref<8x16x64xf32, #tpu.memory_space<vmem>>, vector<1x16x64xf32>
    %220 = vector.shape_cast %219 : vector<1x16x64xf32> to vector<16x64xf32>
    %221 = vector.extract_strided_slice %2 {offsets = [0, 0, 0], sizes = [1, 32, 64], strides = [1, 1, 1]} : vector<5x32x64xbf16> to vector<1x32x64xbf16>
    %222 = vector.shape_cast %221 : vector<1x32x64xbf16> to vector<32x64xbf16>
    %cst_79 = arith.constant dense<0.000000e+00> : vector<16x64xf32>
    %223 = tpu.matmul %203, %222, %cst_79 {dimension_numbers = #tpu.dot_dimension_numbers<[1], [0], [0], [1], [0, 0, 1, 1], [], []>} : vector<16x32xbf16>, vector<32x64xbf16>, vector<16x64xf32> -> vector<16x64xf32>
    %224 = arith.addf %220, %223 : vector<16x64xf32>
    %225 = vector.extract_strided_slice %2 {offsets = [1, 0, 0], sizes = [1, 32, 64], strides = [1, 1, 1]} : vector<5x32x64xbf16> to vector<1x32x64xbf16>
    %226 = vector.shape_cast %225 : vector<1x32x64xbf16> to vector<32x64xbf16>
    %cst_80 = arith.constant dense<0.000000e+00> : vector<16x64xf32>
    %227 = tpu.matmul %205, %226, %cst_80 {dimension_numbers = #tpu.dot_dimension_numbers<[1], [0], [0], [1], [0, 0, 1, 1], [], []>} : vector<16x32xbf16>, vector<32x64xbf16>, vector<16x64xf32> -> vector<16x64xf32>
    %228 = arith.addf %224, %227 : vector<16x64xf32>
    %229 = vector.extract_strided_slice %2 {offsets = [2, 0, 0], sizes = [1, 32, 64], strides = [1, 1, 1]} : vector<5x32x64xbf16> to vector<1x32x64xbf16>
    %230 = vector.shape_cast %229 : vector<1x32x64xbf16> to vector<32x64xbf16>
    %cst_81 = arith.constant dense<0.000000e+00> : vector<16x64xf32>
    %231 = tpu.matmul %210, %230, %cst_81 {dimension_numbers = #tpu.dot_dimension_numbers<[1], [0], [0], [1], [0, 0, 1, 1], [], []>} : vector<16x32xbf16>, vector<32x64xbf16>, vector<16x64xf32> -> vector<16x64xf32>
    %232 = arith.addf %228, %231 : vector<16x64xf32>
    %233 = vector.extract_strided_slice %2 {offsets = [3, 0, 0], sizes = [1, 32, 64], strides = [1, 1, 1]} : vector<5x32x64xbf16> to vector<1x32x64xbf16>
    %234 = vector.shape_cast %233 : vector<1x32x64xbf16> to vector<32x64xbf16>
    %cst_82 = arith.constant dense<0.000000e+00> : vector<16x64xf32>
    %235 = tpu.matmul %212, %234, %cst_82 {dimension_numbers = #tpu.dot_dimension_numbers<[1], [0], [0], [1], [0, 0, 1, 1], [], []>} : vector<16x32xbf16>, vector<32x64xbf16>, vector<16x64xf32> -> vector<16x64xf32>
    %236 = arith.addf %232, %235 : vector<16x64xf32>
    %237 = vector.extract_strided_slice %2 {offsets = [4, 0, 0], sizes = [1, 32, 64], strides = [1, 1, 1]} : vector<5x32x64xbf16> to vector<1x32x64xbf16>
    %238 = vector.shape_cast %237 : vector<1x32x64xbf16> to vector<32x64xbf16>
    %cst_83 = arith.constant dense<0.000000e+00> : vector<16x64xf32>
    %239 = tpu.matmul %217, %238, %cst_83 {dimension_numbers = #tpu.dot_dimension_numbers<[1], [0], [0], [1], [0, 0, 1, 1], [], []>} : vector<16x32xbf16>, vector<32x64xbf16>, vector<16x64xf32> -> vector<16x64xf32>
    %240 = arith.addf %236, %239 : vector<16x64xf32>
    %241 = vector.extract_strided_slice %240 {offsets = [0, 0], sizes = [16, 32], strides = [1, 1]} : vector<16x64xf32> to vector<16x32xf32>
    %242 = arith.negf %241 : vector<16x32xf32>
    %243 = math.exp %242 : vector<16x32xf32>
    %cst_84 = arith.constant 1.000000e+00 : f32
    %244 = vector.broadcast %cst_84 : f32 to vector<16x32xf32>
    %245 = arith.addf %244, %243 : vector<16x32xf32>
    %246 = arith.divf %244, %245 : vector<16x32xf32>
    %247 = vector.extract_strided_slice %240 {offsets = [0, 32], sizes = [16, 32], strides = [1, 1]} : vector<16x64xf32> to vector<16x32xf32>
    %248 = arith.negf %247 : vector<16x32xf32>
    %249 = math.exp %248 : vector<16x32xf32>
    %cst_85 = arith.constant 1.000000e+00 : f32
    %250 = vector.broadcast %cst_85 : f32 to vector<16x32xf32>
    %251 = arith.addf %250, %249 : vector<16x32xf32>
    %252 = arith.divf %250, %251 : vector<16x32xf32>
    %253 = arith.mulf %246, %198 : vector<16x32xf32>
    %254 = arith.truncf %253 : vector<16x32xf32> to vector<16x32xbf16>
    %cst_86 = arith.constant dense<0.000000e+00> : vector<16x32xf32>
    %255 = tpu.matmul %0, %254, %cst_86 {dimension_numbers = #tpu.dot_dimension_numbers<[1], [0], [0], [1], [0, 0, 1, 1], [], []>} : vector<16x16xbf16>, vector<16x32xbf16>, vector<16x32xf32> -> vector<16x32xf32>
    %256 = arith.truncf %255 : vector<16x32xf32> to vector<16x32xbf16>
    %cst_87 = arith.constant dense<0.000000e+00> : vector<16x32xf32>
    %257 = tpu.matmul %0, %256, %cst_87 {dimension_numbers = #tpu.dot_dimension_numbers<[1], [0], [0], [1], [0, 0, 1, 1], [], []>} : vector<16x16xbf16>, vector<16x32xbf16>, vector<16x32xf32> -> vector<16x32xf32>
    %cst_88 = arith.constant 2.000000e+00 : f32
    %258 = vector.broadcast %cst_88 : f32 to vector<16x32xf32>
    %259 = arith.mulf %258, %257 : vector<16x32xf32>
    %260 = arith.subf %259, %253 : vector<16x32xf32>
    %261 = arith.truncf %260 : vector<16x32xf32> to vector<16x32xbf16>
    %cst_89 = arith.constant dense<0.000000e+00> : vector<16x32xf32>
    %262 = tpu.matmul %1, %254, %cst_89 {dimension_numbers = #tpu.dot_dimension_numbers<[1], [0], [0], [1], [0, 0, 1, 1], [], []>} : vector<16x16xbf16>, vector<16x32xbf16>, vector<16x32xf32> -> vector<16x32xf32>
    %263 = arith.truncf %262 : vector<16x32xf32> to vector<16x32xbf16>
    %cst_90 = arith.constant dense<0.000000e+00> : vector<16x32xf32>
    %264 = tpu.matmul %1, %263, %cst_90 {dimension_numbers = #tpu.dot_dimension_numbers<[1], [0], [0], [1], [0, 0, 1, 1], [], []>} : vector<16x16xbf16>, vector<16x32xbf16>, vector<16x32xf32> -> vector<16x32xf32>
    %cst_91 = arith.constant 2.000000e+00 : f32
    %265 = vector.broadcast %cst_91 : f32 to vector<16x32xf32>
    %266 = arith.mulf %265, %264 : vector<16x32xf32>
    %267 = arith.subf %266, %253 : vector<16x32xf32>
    %268 = arith.truncf %267 : vector<16x32xf32> to vector<16x32xbf16>
    %269 = arith.index_cast %c2_i32 : i32 to index
    %c0_92 = arith.constant 0 : index
    %c0_93 = arith.constant 0 : index
    %270 = vector.load %arg2[%269, %c0_92, %c0_93] : memref<8x16x32xf32, #tpu.memory_space<vmem>>, vector<1x16x32xf32>
    %271 = vector.shape_cast %270 : vector<1x16x32xf32> to vector<16x32xf32>
    %272 = vector.extract_strided_slice %3 {offsets = [0, 0, 0], sizes = [1, 32, 32], strides = [1, 1, 1]} : vector<5x32x32xbf16> to vector<1x32x32xbf16>
    %273 = vector.shape_cast %272 : vector<1x32x32xbf16> to vector<32x32xbf16>
    %cst_94 = arith.constant dense<0.000000e+00> : vector<16x32xf32>
    %274 = tpu.matmul %254, %273, %cst_94 {dimension_numbers = #tpu.dot_dimension_numbers<[1], [0], [0], [1], [0, 0, 1, 1], [], []>} : vector<16x32xbf16>, vector<32x32xbf16>, vector<16x32xf32> -> vector<16x32xf32>
    %275 = arith.addf %271, %274 : vector<16x32xf32>
    %276 = vector.extract_strided_slice %3 {offsets = [1, 0, 0], sizes = [1, 32, 32], strides = [1, 1, 1]} : vector<5x32x32xbf16> to vector<1x32x32xbf16>
    %277 = vector.shape_cast %276 : vector<1x32x32xbf16> to vector<32x32xbf16>
    %cst_95 = arith.constant dense<0.000000e+00> : vector<16x32xf32>
    %278 = tpu.matmul %256, %277, %cst_95 {dimension_numbers = #tpu.dot_dimension_numbers<[1], [0], [0], [1], [0, 0, 1, 1], [], []>} : vector<16x32xbf16>, vector<32x32xbf16>, vector<16x32xf32> -> vector<16x32xf32>
    %279 = arith.addf %275, %278 : vector<16x32xf32>
    %280 = vector.extract_strided_slice %3 {offsets = [2, 0, 0], sizes = [1, 32, 32], strides = [1, 1, 1]} : vector<5x32x32xbf16> to vector<1x32x32xbf16>
    %281 = vector.shape_cast %280 : vector<1x32x32xbf16> to vector<32x32xbf16>
    %cst_96 = arith.constant dense<0.000000e+00> : vector<16x32xf32>
    %282 = tpu.matmul %261, %281, %cst_96 {dimension_numbers = #tpu.dot_dimension_numbers<[1], [0], [0], [1], [0, 0, 1, 1], [], []>} : vector<16x32xbf16>, vector<32x32xbf16>, vector<16x32xf32> -> vector<16x32xf32>
    %283 = arith.addf %279, %282 : vector<16x32xf32>
    %284 = vector.extract_strided_slice %3 {offsets = [3, 0, 0], sizes = [1, 32, 32], strides = [1, 1, 1]} : vector<5x32x32xbf16> to vector<1x32x32xbf16>
    %285 = vector.shape_cast %284 : vector<1x32x32xbf16> to vector<32x32xbf16>
    %cst_97 = arith.constant dense<0.000000e+00> : vector<16x32xf32>
    %286 = tpu.matmul %263, %285, %cst_97 {dimension_numbers = #tpu.dot_dimension_numbers<[1], [0], [0], [1], [0, 0, 1, 1], [], []>} : vector<16x32xbf16>, vector<32x32xbf16>, vector<16x32xf32> -> vector<16x32xf32>
    %287 = arith.addf %283, %286 : vector<16x32xf32>
    %288 = vector.extract_strided_slice %3 {offsets = [4, 0, 0], sizes = [1, 32, 32], strides = [1, 1, 1]} : vector<5x32x32xbf16> to vector<1x32x32xbf16>
    %289 = vector.shape_cast %288 : vector<1x32x32xbf16> to vector<32x32xbf16>
    %cst_98 = arith.constant dense<0.000000e+00> : vector<16x32xf32>
    %290 = tpu.matmul %268, %289, %cst_98 {dimension_numbers = #tpu.dot_dimension_numbers<[1], [0], [0], [1], [0, 0, 1, 1], [], []>} : vector<16x32xbf16>, vector<32x32xbf16>, vector<16x32xf32> -> vector<16x32xf32>
    %291 = arith.addf %287, %290 : vector<16x32xf32>
    %292 = math.tanh %291 : vector<16x32xf32>
    %293 = arith.mulf %252, %198 : vector<16x32xf32>
    %cst_99 = arith.constant 1.000000e+00 : f32
    %294 = vector.broadcast %cst_99 : f32 to vector<16x32xf32>
    %295 = arith.subf %294, %252 : vector<16x32xf32>
    %296 = arith.mulf %295, %292 : vector<16x32xf32>
    %297 = arith.addf %293, %296 : vector<16x32xf32>
    %298 = arith.index_cast %c2_i32 : i32 to index
    %c0_100 = arith.constant 0 : index
    %c0_101 = arith.constant 0 : index
    %299 = vector.load %arg7[%298, %c0_100, %c0_101] : memref<8x16x32xf32, #tpu.memory_space<vmem>>, vector<1x16x32xf32>
    %300 = vector.shape_cast %299 : vector<1x16x32xf32> to vector<16x32xf32>
    %301 = vector.shape_cast %297 : vector<16x32xf32> to vector<1x16x32xf32>
    tpu.vector_store %arg7[%298, %c0_100, %c0_101], %301 {strides = array<i32>} : memref<8x16x32xf32, #tpu.memory_space<vmem>>, vector<1x16x32xf32>,
    %c3_i32 = arith.constant 3 : i32
    %302 = arith.truncf %297 : vector<16x32xf32> to vector<16x32xbf16>
    %cst_102 = arith.constant dense<0.000000e+00> : vector<16x32xf32>
    %303 = tpu.matmul %0, %302, %cst_102 {dimension_numbers = #tpu.dot_dimension_numbers<[1], [0], [0], [1], [0, 0, 1, 1], [], []>} : vector<16x16xbf16>, vector<16x32xbf16>, vector<16x32xf32> -> vector<16x32xf32>
    %304 = arith.truncf %303 : vector<16x32xf32> to vector<16x32xbf16>
    %cst_103 = arith.constant dense<0.000000e+00> : vector<16x32xf32>
    %305 = tpu.matmul %0, %304, %cst_103 {dimension_numbers = #tpu.dot_dimension_numbers<[1], [0], [0], [1], [0, 0, 1, 1], [], []>} : vector<16x16xbf16>, vector<16x32xbf16>, vector<16x32xf32> -> vector<16x32xf32>
    %cst_104 = arith.constant 2.000000e+00 : f32
    %306 = vector.broadcast %cst_104 : f32 to vector<16x32xf32>
    %307 = arith.mulf %306, %305 : vector<16x32xf32>
    %308 = arith.subf %307, %297 : vector<16x32xf32>
    %309 = arith.truncf %308 : vector<16x32xf32> to vector<16x32xbf16>
    %cst_105 = arith.constant dense<0.000000e+00> : vector<16x32xf32>
    %310 = tpu.matmul %1, %302, %cst_105 {dimension_numbers = #tpu.dot_dimension_numbers<[1], [0], [0], [1], [0, 0, 1, 1], [], []>} : vector<16x16xbf16>, vector<16x32xbf16>, vector<16x32xf32> -> vector<16x32xf32>
    %311 = arith.truncf %310 : vector<16x32xf32> to vector<16x32xbf16>
    %cst_106 = arith.constant dense<0.000000e+00> : vector<16x32xf32>
    %312 = tpu.matmul %1, %311, %cst_106 {dimension_numbers = #tpu.dot_dimension_numbers<[1], [0], [0], [1], [0, 0, 1, 1], [], []>} : vector<16x16xbf16>, vector<16x32xbf16>, vector<16x32xf32> -> vector<16x32xf32>
    %cst_107 = arith.constant 2.000000e+00 : f32
    %313 = vector.broadcast %cst_107 : f32 to vector<16x32xf32>
    %314 = arith.mulf %313, %312 : vector<16x32xf32>
    %315 = arith.subf %314, %297 : vector<16x32xf32>
    %316 = arith.truncf %315 : vector<16x32xf32> to vector<16x32xbf16>
    %317 = arith.index_cast %c3_i32 : i32 to index
    %c0_108 = arith.constant 0 : index
    %c0_109 = arith.constant 0 : index
    %318 = vector.load %arg1[%317, %c0_108, %c0_109] : memref<8x16x64xf32, #tpu.memory_space<vmem>>, vector<1x16x64xf32>
    %319 = vector.shape_cast %318 : vector<1x16x64xf32> to vector<16x64xf32>
    %320 = vector.extract_strided_slice %2 {offsets = [0, 0, 0], sizes = [1, 32, 64], strides = [1, 1, 1]} : vector<5x32x64xbf16> to vector<1x32x64xbf16>
    %321 = vector.shape_cast %320 : vector<1x32x64xbf16> to vector<32x64xbf16>
    %cst_110 = arith.constant dense<0.000000e+00> : vector<16x64xf32>
    %322 = tpu.matmul %302, %321, %cst_110 {dimension_numbers = #tpu.dot_dimension_numbers<[1], [0], [0], [1], [0, 0, 1, 1], [], []>} : vector<16x32xbf16>, vector<32x64xbf16>, vector<16x64xf32> -> vector<16x64xf32>
    %323 = arith.addf %319, %322 : vector<16x64xf32>
    %324 = vector.extract_strided_slice %2 {offsets = [1, 0, 0], sizes = [1, 32, 64], strides = [1, 1, 1]} : vector<5x32x64xbf16> to vector<1x32x64xbf16>
    %325 = vector.shape_cast %324 : vector<1x32x64xbf16> to vector<32x64xbf16>
    %cst_111 = arith.constant dense<0.000000e+00> : vector<16x64xf32>
    %326 = tpu.matmul %304, %325, %cst_111 {dimension_numbers = #tpu.dot_dimension_numbers<[1], [0], [0], [1], [0, 0, 1, 1], [], []>} : vector<16x32xbf16>, vector<32x64xbf16>, vector<16x64xf32> -> vector<16x64xf32>
    %327 = arith.addf %323, %326 : vector<16x64xf32>
    %328 = vector.extract_strided_slice %2 {offsets = [2, 0, 0], sizes = [1, 32, 64], strides = [1, 1, 1]} : vector<5x32x64xbf16> to vector<1x32x64xbf16>
    %329 = vector.shape_cast %328 : vector<1x32x64xbf16> to vector<32x64xbf16>
    %cst_112 = arith.constant dense<0.000000e+00> : vector<16x64xf32>
    %330 = tpu.matmul %309, %329, %cst_112 {dimension_numbers = #tpu.dot_dimension_numbers<[1], [0], [0], [1], [0, 0, 1, 1], [], []>} : vector<16x32xbf16>, vector<32x64xbf16>, vector<16x64xf32> -> vector<16x64xf32>
    %331 = arith.addf %327, %330 : vector<16x64xf32>
    %332 = vector.extract_strided_slice %2 {offsets = [3, 0, 0], sizes = [1, 32, 64], strides = [1, 1, 1]} : vector<5x32x64xbf16> to vector<1x32x64xbf16>
    %333 = vector.shape_cast %332 : vector<1x32x64xbf16> to vector<32x64xbf16>
    %cst_113 = arith.constant dense<0.000000e+00> : vector<16x64xf32>
    %334 = tpu.matmul %311, %333, %cst_113 {dimension_numbers = #tpu.dot_dimension_numbers<[1], [0], [0], [1], [0, 0, 1, 1], [], []>} : vector<16x32xbf16>, vector<32x64xbf16>, vector<16x64xf32> -> vector<16x64xf32>
    %335 = arith.addf %331, %334 : vector<16x64xf32>
    %336 = vector.extract_strided_slice %2 {offsets = [4, 0, 0], sizes = [1, 32, 64], strides = [1, 1, 1]} : vector<5x32x64xbf16> to vector<1x32x64xbf16>
    %337 = vector.shape_cast %336 : vector<1x32x64xbf16> to vector<32x64xbf16>
    %cst_114 = arith.constant dense<0.000000e+00> : vector<16x64xf32>
    %338 = tpu.matmul %316, %337, %cst_114 {dimension_numbers = #tpu.dot_dimension_numbers<[1], [0], [0], [1], [0, 0, 1, 1], [], []>} : vector<16x32xbf16>, vector<32x64xbf16>, vector<16x64xf32> -> vector<16x64xf32>
    %339 = arith.addf %335, %338 : vector<16x64xf32>
    %340 = vector.extract_strided_slice %339 {offsets = [0, 0], sizes = [16, 32], strides = [1, 1]} : vector<16x64xf32> to vector<16x32xf32>
    %341 = arith.negf %340 : vector<16x32xf32>
    %342 = math.exp %341 : vector<16x32xf32>
    %cst_115 = arith.constant 1.000000e+00 : f32
    %343 = vector.broadcast %cst_115 : f32 to vector<16x32xf32>
    %344 = arith.addf %343, %342 : vector<16x32xf32>
    %345 = arith.divf %343, %344 : vector<16x32xf32>
    %346 = vector.extract_strided_slice %339 {offsets = [0, 32], sizes = [16, 32], strides = [1, 1]} : vector<16x64xf32> to vector<16x32xf32>
    %347 = arith.negf %346 : vector<16x32xf32>
    %348 = math.exp %347 : vector<16x32xf32>
    %cst_116 = arith.constant 1.000000e+00 : f32
    %349 = vector.broadcast %cst_116 : f32 to vector<16x32xf32>
    %350 = arith.addf %349, %348 : vector<16x32xf32>
    %351 = arith.divf %349, %350 : vector<16x32xf32>
    %352 = arith.mulf %345, %297 : vector<16x32xf32>
    %353 = arith.truncf %352 : vector<16x32xf32> to vector<16x32xbf16>
    %cst_117 = arith.constant dense<0.000000e+00> : vector<16x32xf32>
    %354 = tpu.matmul %0, %353, %cst_117 {dimension_numbers = #tpu.dot_dimension_numbers<[1], [0], [0], [1], [0, 0, 1, 1], [], []>} : vector<16x16xbf16>, vector<16x32xbf16>, vector<16x32xf32> -> vector<16x32xf32>
    %355 = arith.truncf %354 : vector<16x32xf32> to vector<16x32xbf16>
    %cst_118 = arith.constant dense<0.000000e+00> : vector<16x32xf32>
    %356 = tpu.matmul %0, %355, %cst_118 {dimension_numbers = #tpu.dot_dimension_numbers<[1], [0], [0], [1], [0, 0, 1, 1], [], []>} : vector<16x16xbf16>, vector<16x32xbf16>, vector<16x32xf32> -> vector<16x32xf32>
    %cst_119 = arith.constant 2.000000e+00 : f32
    %357 = vector.broadcast %cst_119 : f32 to vector<16x32xf32>
    %358 = arith.mulf %357, %356 : vector<16x32xf32>
    %359 = arith.subf %358, %352 : vector<16x32xf32>
    %360 = arith.truncf %359 : vector<16x32xf32> to vector<16x32xbf16>
    %cst_120 = arith.constant dense<0.000000e+00> : vector<16x32xf32>
    %361 = tpu.matmul %1, %353, %cst_120 {dimension_numbers = #tpu.dot_dimension_numbers<[1], [0], [0], [1], [0, 0, 1, 1], [], []>} : vector<16x16xbf16>, vector<16x32xbf16>, vector<16x32xf32> -> vector<16x32xf32>
    %362 = arith.truncf %361 : vector<16x32xf32> to vector<16x32xbf16>
    %cst_121 = arith.constant dense<0.000000e+00> : vector<16x32xf32>
    %363 = tpu.matmul %1, %362, %cst_121 {dimension_numbers = #tpu.dot_dimension_numbers<[1], [0], [0], [1], [0, 0, 1, 1], [], []>} : vector<16x16xbf16>, vector<16x32xbf16>, vector<16x32xf32> -> vector<16x32xf32>
    %cst_122 = arith.constant 2.000000e+00 : f32
    %364 = vector.broadcast %cst_122 : f32 to vector<16x32xf32>
    %365 = arith.mulf %364, %363 : vector<16x32xf32>
    %366 = arith.subf %365, %352 : vector<16x32xf32>
    %367 = arith.truncf %366 : vector<16x32xf32> to vector<16x32xbf16>
    %368 = arith.index_cast %c3_i32 : i32 to index
    %c0_123 = arith.constant 0 : index
    %c0_124 = arith.constant 0 : index
    %369 = vector.load %arg2[%368, %c0_123, %c0_124] : memref<8x16x32xf32, #tpu.memory_space<vmem>>, vector<1x16x32xf32>
    %370 = vector.shape_cast %369 : vector<1x16x32xf32> to vector<16x32xf32>
    %371 = vector.extract_strided_slice %3 {offsets = [0, 0, 0], sizes = [1, 32, 32], strides = [1, 1, 1]} : vector<5x32x32xbf16> to vector<1x32x32xbf16>
    %372 = vector.shape_cast %371 : vector<1x32x32xbf16> to vector<32x32xbf16>
    %cst_125 = arith.constant dense<0.000000e+00> : vector<16x32xf32>
    %373 = tpu.matmul %353, %372, %cst_125 {dimension_numbers = #tpu.dot_dimension_numbers<[1], [0], [0], [1], [0, 0, 1, 1], [], []>} : vector<16x32xbf16>, vector<32x32xbf16>, vector<16x32xf32> -> vector<16x32xf32>
    %374 = arith.addf %370, %373 : vector<16x32xf32>
    %375 = vector.extract_strided_slice %3 {offsets = [1, 0, 0], sizes = [1, 32, 32], strides = [1, 1, 1]} : vector<5x32x32xbf16> to vector<1x32x32xbf16>
    %376 = vector.shape_cast %375 : vector<1x32x32xbf16> to vector<32x32xbf16>
    %cst_126 = arith.constant dense<0.000000e+00> : vector<16x32xf32>
    %377 = tpu.matmul %355, %376, %cst_126 {dimension_numbers = #tpu.dot_dimension_numbers<[1], [0], [0], [1], [0, 0, 1, 1], [], []>} : vector<16x32xbf16>, vector<32x32xbf16>, vector<16x32xf32> -> vector<16x32xf32>
    %378 = arith.addf %374, %377 : vector<16x32xf32>
    %379 = vector.extract_strided_slice %3 {offsets = [2, 0, 0], sizes = [1, 32, 32], strides = [1, 1, 1]} : vector<5x32x32xbf16> to vector<1x32x32xbf16>
    %380 = vector.shape_cast %379 : vector<1x32x32xbf16> to vector<32x32xbf16>
    %cst_127 = arith.constant dense<0.000000e+00> : vector<16x32xf32>
    %381 = tpu.matmul %360, %380, %cst_127 {dimension_numbers = #tpu.dot_dimension_numbers<[1], [0], [0], [1], [0, 0, 1, 1], [], []>} : vector<16x32xbf16>, vector<32x32xbf16>, vector<16x32xf32> -> vector<16x32xf32>
    %382 = arith.addf %378, %381 : vector<16x32xf32>
    %383 = vector.extract_strided_slice %3 {offsets = [3, 0, 0], sizes = [1, 32, 32], strides = [1, 1, 1]} : vector<5x32x32xbf16> to vector<1x32x32xbf16>
    %384 = vector.shape_cast %383 : vector<1x32x32xbf16> to vector<32x32xbf16>
    %cst_128 = arith.constant dense<0.000000e+00> : vector<16x32xf32>
    %385 = tpu.matmul %362, %384, %cst_128 {dimension_numbers = #tpu.dot_dimension_numbers<[1], [0], [0], [1], [0, 0, 1, 1], [], []>} : vector<16x32xbf16>, vector<32x32xbf16>, vector<16x32xf32> -> vector<16x32xf32>
    %386 = arith.addf %382, %385 : vector<16x32xf32>
    %387 = vector.extract_strided_slice %3 {offsets = [4, 0, 0], sizes = [1, 32, 32], strides = [1, 1, 1]} : vector<5x32x32xbf16> to vector<1x32x32xbf16>
    %388 = vector.shape_cast %387 : vector<1x32x32xbf16> to vector<32x32xbf16>
    %cst_129 = arith.constant dense<0.000000e+00> : vector<16x32xf32>
    %389 = tpu.matmul %367, %388, %cst_129 {dimension_numbers = #tpu.dot_dimension_numbers<[1], [0], [0], [1], [0, 0, 1, 1], [], []>} : vector<16x32xbf16>, vector<32x32xbf16>, vector<16x32xf32> -> vector<16x32xf32>
    %390 = arith.addf %386, %389 : vector<16x32xf32>
    %391 = math.tanh %390 : vector<16x32xf32>
    %392 = arith.mulf %351, %297 : vector<16x32xf32>
    %cst_130 = arith.constant 1.000000e+00 : f32
    %393 = vector.broadcast %cst_130 : f32 to vector<16x32xf32>
    %394 = arith.subf %393, %351 : vector<16x32xf32>
    %395 = arith.mulf %394, %391 : vector<16x32xf32>
    %396 = arith.addf %392, %395 : vector<16x32xf32>
    %397 = arith.index_cast %c3_i32 : i32 to index
    %c0_131 = arith.constant 0 : index
    %c0_132 = arith.constant 0 : index
    %398 = vector.load %arg7[%397, %c0_131, %c0_132] : memref<8x16x32xf32, #tpu.memory_space<vmem>>, vector<1x16x32xf32>
    %399 = vector.shape_cast %398 : vector<1x16x32xf32> to vector<16x32xf32>
    %400 = vector.shape_cast %396 : vector<16x32xf32> to vector<1x16x32xf32>
    tpu.vector_store %arg7[%397, %c0_131, %c0_132], %400 {strides = array<i32>} : memref<8x16x32xf32, #tpu.memory_space<vmem>>, vector<1x16x32xf32>,
    %c4_i32 = arith.constant 4 : i32
    %401 = arith.truncf %396 : vector<16x32xf32> to vector<16x32xbf16>
    %cst_133 = arith.constant dense<0.000000e+00> : vector<16x32xf32>
    %402 = tpu.matmul %0, %401, %cst_133 {dimension_numbers = #tpu.dot_dimension_numbers<[1], [0], [0], [1], [0, 0, 1, 1], [], []>} : vector<16x16xbf16>, vector<16x32xbf16>, vector<16x32xf32> -> vector<16x32xf32>
    %403 = arith.truncf %402 : vector<16x32xf32> to vector<16x32xbf16>
    %cst_134 = arith.constant dense<0.000000e+00> : vector<16x32xf32>
    %404 = tpu.matmul %0, %403, %cst_134 {dimension_numbers = #tpu.dot_dimension_numbers<[1], [0], [0], [1], [0, 0, 1, 1], [], []>} : vector<16x16xbf16>, vector<16x32xbf16>, vector<16x32xf32> -> vector<16x32xf32>
    %cst_135 = arith.constant 2.000000e+00 : f32
    %405 = vector.broadcast %cst_135 : f32 to vector<16x32xf32>
    %406 = arith.mulf %405, %404 : vector<16x32xf32>
    %407 = arith.subf %406, %396 : vector<16x32xf32>
    %408 = arith.truncf %407 : vector<16x32xf32> to vector<16x32xbf16>
    %cst_136 = arith.constant dense<0.000000e+00> : vector<16x32xf32>
    %409 = tpu.matmul %1, %401, %cst_136 {dimension_numbers = #tpu.dot_dimension_numbers<[1], [0], [0], [1], [0, 0, 1, 1], [], []>} : vector<16x16xbf16>, vector<16x32xbf16>, vector<16x32xf32> -> vector<16x32xf32>
    %410 = arith.truncf %409 : vector<16x32xf32> to vector<16x32xbf16>
    %cst_137 = arith.constant dense<0.000000e+00> : vector<16x32xf32>
    %411 = tpu.matmul %1, %410, %cst_137 {dimension_numbers = #tpu.dot_dimension_numbers<[1], [0], [0], [1], [0, 0, 1, 1], [], []>} : vector<16x16xbf16>, vector<16x32xbf16>, vector<16x32xf32> -> vector<16x32xf32>
    %cst_138 = arith.constant 2.000000e+00 : f32
    %412 = vector.broadcast %cst_138 : f32 to vector<16x32xf32>
    %413 = arith.mulf %412, %411 : vector<16x32xf32>
    %414 = arith.subf %413, %396 : vector<16x32xf32>
    %415 = arith.truncf %414 : vector<16x32xf32> to vector<16x32xbf16>
    %416 = arith.index_cast %c4_i32 : i32 to index
    %c0_139 = arith.constant 0 : index
    %c0_140 = arith.constant 0 : index
    %417 = vector.load %arg1[%416, %c0_139, %c0_140] : memref<8x16x64xf32, #tpu.memory_space<vmem>>, vector<1x16x64xf32>
    %418 = vector.shape_cast %417 : vector<1x16x64xf32> to vector<16x64xf32>
    %419 = vector.extract_strided_slice %2 {offsets = [0, 0, 0], sizes = [1, 32, 64], strides = [1, 1, 1]} : vector<5x32x64xbf16> to vector<1x32x64xbf16>
    %420 = vector.shape_cast %419 : vector<1x32x64xbf16> to vector<32x64xbf16>
    %cst_141 = arith.constant dense<0.000000e+00> : vector<16x64xf32>
    %421 = tpu.matmul %401, %420, %cst_141 {dimension_numbers = #tpu.dot_dimension_numbers<[1], [0], [0], [1], [0, 0, 1, 1], [], []>} : vector<16x32xbf16>, vector<32x64xbf16>, vector<16x64xf32> -> vector<16x64xf32>
    %422 = arith.addf %418, %421 : vector<16x64xf32>
    %423 = vector.extract_strided_slice %2 {offsets = [1, 0, 0], sizes = [1, 32, 64], strides = [1, 1, 1]} : vector<5x32x64xbf16> to vector<1x32x64xbf16>
    %424 = vector.shape_cast %423 : vector<1x32x64xbf16> to vector<32x64xbf16>
    %cst_142 = arith.constant dense<0.000000e+00> : vector<16x64xf32>
    %425 = tpu.matmul %403, %424, %cst_142 {dimension_numbers = #tpu.dot_dimension_numbers<[1], [0], [0], [1], [0, 0, 1, 1], [], []>} : vector<16x32xbf16>, vector<32x64xbf16>, vector<16x64xf32> -> vector<16x64xf32>
    %426 = arith.addf %422, %425 : vector<16x64xf32>
    %427 = vector.extract_strided_slice %2 {offsets = [2, 0, 0], sizes = [1, 32, 64], strides = [1, 1, 1]} : vector<5x32x64xbf16> to vector<1x32x64xbf16>
    %428 = vector.shape_cast %427 : vector<1x32x64xbf16> to vector<32x64xbf16>
    %cst_143 = arith.constant dense<0.000000e+00> : vector<16x64xf32>
    %429 = tpu.matmul %408, %428, %cst_143 {dimension_numbers = #tpu.dot_dimension_numbers<[1], [0], [0], [1], [0, 0, 1, 1], [], []>} : vector<16x32xbf16>, vector<32x64xbf16>, vector<16x64xf32> -> vector<16x64xf32>
    %430 = arith.addf %426, %429 : vector<16x64xf32>
    %431 = vector.extract_strided_slice %2 {offsets = [3, 0, 0], sizes = [1, 32, 64], strides = [1, 1, 1]} : vector<5x32x64xbf16> to vector<1x32x64xbf16>
    %432 = vector.shape_cast %431 : vector<1x32x64xbf16> to vector<32x64xbf16>
    %cst_144 = arith.constant dense<0.000000e+00> : vector<16x64xf32>
    %433 = tpu.matmul %410, %432, %cst_144 {dimension_numbers = #tpu.dot_dimension_numbers<[1], [0], [0], [1], [0, 0, 1, 1], [], []>} : vector<16x32xbf16>, vector<32x64xbf16>, vector<16x64xf32> -> vector<16x64xf32>
    %434 = arith.addf %430, %433 : vector<16x64xf32>
    %435 = vector.extract_strided_slice %2 {offsets = [4, 0, 0], sizes = [1, 32, 64], strides = [1, 1, 1]} : vector<5x32x64xbf16> to vector<1x32x64xbf16>
    %436 = vector.shape_cast %435 : vector<1x32x64xbf16> to vector<32x64xbf16>
    %cst_145 = arith.constant dense<0.000000e+00> : vector<16x64xf32>
    %437 = tpu.matmul %415, %436, %cst_145 {dimension_numbers = #tpu.dot_dimension_numbers<[1], [0], [0], [1], [0, 0, 1, 1], [], []>} : vector<16x32xbf16>, vector<32x64xbf16>, vector<16x64xf32> -> vector<16x64xf32>
    %438 = arith.addf %434, %437 : vector<16x64xf32>
    %439 = vector.extract_strided_slice %438 {offsets = [0, 0], sizes = [16, 32], strides = [1, 1]} : vector<16x64xf32> to vector<16x32xf32>
    %440 = arith.negf %439 : vector<16x32xf32>
    %441 = math.exp %440 : vector<16x32xf32>
    %cst_146 = arith.constant 1.000000e+00 : f32
    %442 = vector.broadcast %cst_146 : f32 to vector<16x32xf32>
    %443 = arith.addf %442, %441 : vector<16x32xf32>
    %444 = arith.divf %442, %443 : vector<16x32xf32>
    %445 = vector.extract_strided_slice %438 {offsets = [0, 32], sizes = [16, 32], strides = [1, 1]} : vector<16x64xf32> to vector<16x32xf32>
    %446 = arith.negf %445 : vector<16x32xf32>
    %447 = math.exp %446 : vector<16x32xf32>
    %cst_147 = arith.constant 1.000000e+00 : f32
    %448 = vector.broadcast %cst_147 : f32 to vector<16x32xf32>
    %449 = arith.addf %448, %447 : vector<16x32xf32>
    %450 = arith.divf %448, %449 : vector<16x32xf32>
    %451 = arith.mulf %444, %396 : vector<16x32xf32>
    %452 = arith.truncf %451 : vector<16x32xf32> to vector<16x32xbf16>
    %cst_148 = arith.constant dense<0.000000e+00> : vector<16x32xf32>
    %453 = tpu.matmul %0, %452, %cst_148 {dimension_numbers = #tpu.dot_dimension_numbers<[1], [0], [0], [1], [0, 0, 1, 1], [], []>} : vector<16x16xbf16>, vector<16x32xbf16>, vector<16x32xf32> -> vector<16x32xf32>
    %454 = arith.truncf %453 : vector<16x32xf32> to vector<16x32xbf16>
    %cst_149 = arith.constant dense<0.000000e+00> : vector<16x32xf32>
    %455 = tpu.matmul %0, %454, %cst_149 {dimension_numbers = #tpu.dot_dimension_numbers<[1], [0], [0], [1], [0, 0, 1, 1], [], []>} : vector<16x16xbf16>, vector<16x32xbf16>, vector<16x32xf32> -> vector<16x32xf32>
    %cst_150 = arith.constant 2.000000e+00 : f32
    %456 = vector.broadcast %cst_150 : f32 to vector<16x32xf32>
    %457 = arith.mulf %456, %455 : vector<16x32xf32>
    %458 = arith.subf %457, %451 : vector<16x32xf32>
    %459 = arith.truncf %458 : vector<16x32xf32> to vector<16x32xbf16>
    %cst_151 = arith.constant dense<0.000000e+00> : vector<16x32xf32>
    %460 = tpu.matmul %1, %452, %cst_151 {dimension_numbers = #tpu.dot_dimension_numbers<[1], [0], [0], [1], [0, 0, 1, 1], [], []>} : vector<16x16xbf16>, vector<16x32xbf16>, vector<16x32xf32> -> vector<16x32xf32>
    %461 = arith.truncf %460 : vector<16x32xf32> to vector<16x32xbf16>
    %cst_152 = arith.constant dense<0.000000e+00> : vector<16x32xf32>
    %462 = tpu.matmul %1, %461, %cst_152 {dimension_numbers = #tpu.dot_dimension_numbers<[1], [0], [0], [1], [0, 0, 1, 1], [], []>} : vector<16x16xbf16>, vector<16x32xbf16>, vector<16x32xf32> -> vector<16x32xf32>
    %cst_153 = arith.constant 2.000000e+00 : f32
    %463 = vector.broadcast %cst_153 : f32 to vector<16x32xf32>
    %464 = arith.mulf %463, %462 : vector<16x32xf32>
    %465 = arith.subf %464, %451 : vector<16x32xf32>
    %466 = arith.truncf %465 : vector<16x32xf32> to vector<16x32xbf16>
    %467 = arith.index_cast %c4_i32 : i32 to index
    %c0_154 = arith.constant 0 : index
    %c0_155 = arith.constant 0 : index
    %468 = vector.load %arg2[%467, %c0_154, %c0_155] : memref<8x16x32xf32, #tpu.memory_space<vmem>>, vector<1x16x32xf32>
    %469 = vector.shape_cast %468 : vector<1x16x32xf32> to vector<16x32xf32>
    %470 = vector.extract_strided_slice %3 {offsets = [0, 0, 0], sizes = [1, 32, 32], strides = [1, 1, 1]} : vector<5x32x32xbf16> to vector<1x32x32xbf16>
    %471 = vector.shape_cast %470 : vector<1x32x32xbf16> to vector<32x32xbf16>
    %cst_156 = arith.constant dense<0.000000e+00> : vector<16x32xf32>
    %472 = tpu.matmul %452, %471, %cst_156 {dimension_numbers = #tpu.dot_dimension_numbers<[1], [0], [0], [1], [0, 0, 1, 1], [], []>} : vector<16x32xbf16>, vector<32x32xbf16>, vector<16x32xf32> -> vector<16x32xf32>
    %473 = arith.addf %469, %472 : vector<16x32xf32>
    %474 = vector.extract_strided_slice %3 {offsets = [1, 0, 0], sizes = [1, 32, 32], strides = [1, 1, 1]} : vector<5x32x32xbf16> to vector<1x32x32xbf16>
    %475 = vector.shape_cast %474 : vector<1x32x32xbf16> to vector<32x32xbf16>
    %cst_157 = arith.constant dense<0.000000e+00> : vector<16x32xf32>
    %476 = tpu.matmul %454, %475, %cst_157 {dimension_numbers = #tpu.dot_dimension_numbers<[1], [0], [0], [1], [0, 0, 1, 1], [], []>} : vector<16x32xbf16>, vector<32x32xbf16>, vector<16x32xf32> -> vector<16x32xf32>
    %477 = arith.addf %473, %476 : vector<16x32xf32>
    %478 = vector.extract_strided_slice %3 {offsets = [2, 0, 0], sizes = [1, 32, 32], strides = [1, 1, 1]} : vector<5x32x32xbf16> to vector<1x32x32xbf16>
    %479 = vector.shape_cast %478 : vector<1x32x32xbf16> to vector<32x32xbf16>
    %cst_158 = arith.constant dense<0.000000e+00> : vector<16x32xf32>
    %480 = tpu.matmul %459, %479, %cst_158 {dimension_numbers = #tpu.dot_dimension_numbers<[1], [0], [0], [1], [0, 0, 1, 1], [], []>} : vector<16x32xbf16>, vector<32x32xbf16>, vector<16x32xf32> -> vector<16x32xf32>
    %481 = arith.addf %477, %480 : vector<16x32xf32>
    %482 = vector.extract_strided_slice %3 {offsets = [3, 0, 0], sizes = [1, 32, 32], strides = [1, 1, 1]} : vector<5x32x32xbf16> to vector<1x32x32xbf16>
    %483 = vector.shape_cast %482 : vector<1x32x32xbf16> to vector<32x32xbf16>
    %cst_159 = arith.constant dense<0.000000e+00> : vector<16x32xf32>
    %484 = tpu.matmul %461, %483, %cst_159 {dimension_numbers = #tpu.dot_dimension_numbers<[1], [0], [0], [1], [0, 0, 1, 1], [], []>} : vector<16x32xbf16>, vector<32x32xbf16>, vector<16x32xf32> -> vector<16x32xf32>
    %485 = arith.addf %481, %484 : vector<16x32xf32>
    %486 = vector.extract_strided_slice %3 {offsets = [4, 0, 0], sizes = [1, 32, 32], strides = [1, 1, 1]} : vector<5x32x32xbf16> to vector<1x32x32xbf16>
    %487 = vector.shape_cast %486 : vector<1x32x32xbf16> to vector<32x32xbf16>
    %cst_160 = arith.constant dense<0.000000e+00> : vector<16x32xf32>
    %488 = tpu.matmul %466, %487, %cst_160 {dimension_numbers = #tpu.dot_dimension_numbers<[1], [0], [0], [1], [0, 0, 1, 1], [], []>} : vector<16x32xbf16>, vector<32x32xbf16>, vector<16x32xf32> -> vector<16x32xf32>
    %489 = arith.addf %485, %488 : vector<16x32xf32>
    %490 = math.tanh %489 : vector<16x32xf32>
    %491 = arith.mulf %450, %396 : vector<16x32xf32>
    %cst_161 = arith.constant 1.000000e+00 : f32
    %492 = vector.broadcast %cst_161 : f32 to vector<16x32xf32>
    %493 = arith.subf %492, %450 : vector<16x32xf32>
    %494 = arith.mulf %493, %490 : vector<16x32xf32>
    %495 = arith.addf %491, %494 : vector<16x32xf32>
    %496 = arith.index_cast %c4_i32 : i32 to index
    %c0_162 = arith.constant 0 : index
    %c0_163 = arith.constant 0 : index
    %497 = vector.load %arg7[%496, %c0_162, %c0_163] : memref<8x16x32xf32, #tpu.memory_space<vmem>>, vector<1x16x32xf32>
    %498 = vector.shape_cast %497 : vector<1x16x32xf32> to vector<16x32xf32>
    %499 = vector.shape_cast %495 : vector<16x32xf32> to vector<1x16x32xf32>
    tpu.vector_store %arg7[%496, %c0_162, %c0_163], %499 {strides = array<i32>} : memref<8x16x32xf32, #tpu.memory_space<vmem>>, vector<1x16x32xf32>,
    %c5_i32 = arith.constant 5 : i32
    %500 = arith.truncf %495 : vector<16x32xf32> to vector<16x32xbf16>
    %cst_164 = arith.constant dense<0.000000e+00> : vector<16x32xf32>
    %501 = tpu.matmul %0, %500, %cst_164 {dimension_numbers = #tpu.dot_dimension_numbers<[1], [0], [0], [1], [0, 0, 1, 1], [], []>} : vector<16x16xbf16>, vector<16x32xbf16>, vector<16x32xf32> -> vector<16x32xf32>
    %502 = arith.truncf %501 : vector<16x32xf32> to vector<16x32xbf16>
    %cst_165 = arith.constant dense<0.000000e+00> : vector<16x32xf32>
    %503 = tpu.matmul %0, %502, %cst_165 {dimension_numbers = #tpu.dot_dimension_numbers<[1], [0], [0], [1], [0, 0, 1, 1], [], []>} : vector<16x16xbf16>, vector<16x32xbf16>, vector<16x32xf32> -> vector<16x32xf32>
    %cst_166 = arith.constant 2.000000e+00 : f32
    %504 = vector.broadcast %cst_166 : f32 to vector<16x32xf32>
    %505 = arith.mulf %504, %503 : vector<16x32xf32>
    %506 = arith.subf %505, %495 : vector<16x32xf32>
    %507 = arith.truncf %506 : vector<16x32xf32> to vector<16x32xbf16>
    %cst_167 = arith.constant dense<0.000000e+00> : vector<16x32xf32>
    %508 = tpu.matmul %1, %500, %cst_167 {dimension_numbers = #tpu.dot_dimension_numbers<[1], [0], [0], [1], [0, 0, 1, 1], [], []>} : vector<16x16xbf16>, vector<16x32xbf16>, vector<16x32xf32> -> vector<16x32xf32>
    %509 = arith.truncf %508 : vector<16x32xf32> to vector<16x32xbf16>
    %cst_168 = arith.constant dense<0.000000e+00> : vector<16x32xf32>
    %510 = tpu.matmul %1, %509, %cst_168 {dimension_numbers = #tpu.dot_dimension_numbers<[1], [0], [0], [1], [0, 0, 1, 1], [], []>} : vector<16x16xbf16>, vector<16x32xbf16>, vector<16x32xf32> -> vector<16x32xf32>
    %cst_169 = arith.constant 2.000000e+00 : f32
    %511 = vector.broadcast %cst_169 : f32 to vector<16x32xf32>
    %512 = arith.mulf %511, %510 : vector<16x32xf32>
    %513 = arith.subf %512, %495 : vector<16x32xf32>
    %514 = arith.truncf %513 : vector<16x32xf32> to vector<16x32xbf16>
    %515 = arith.index_cast %c5_i32 : i32 to index
    %c0_170 = arith.constant 0 : index
    %c0_171 = arith.constant 0 : index
    %516 = vector.load %arg1[%515, %c0_170, %c0_171] : memref<8x16x64xf32, #tpu.memory_space<vmem>>, vector<1x16x64xf32>
    %517 = vector.shape_cast %516 : vector<1x16x64xf32> to vector<16x64xf32>
    %518 = vector.extract_strided_slice %2 {offsets = [0, 0, 0], sizes = [1, 32, 64], strides = [1, 1, 1]} : vector<5x32x64xbf16> to vector<1x32x64xbf16>
    %519 = vector.shape_cast %518 : vector<1x32x64xbf16> to vector<32x64xbf16>
    %cst_172 = arith.constant dense<0.000000e+00> : vector<16x64xf32>
    %520 = tpu.matmul %500, %519, %cst_172 {dimension_numbers = #tpu.dot_dimension_numbers<[1], [0], [0], [1], [0, 0, 1, 1], [], []>} : vector<16x32xbf16>, vector<32x64xbf16>, vector<16x64xf32> -> vector<16x64xf32>
    %521 = arith.addf %517, %520 : vector<16x64xf32>
    %522 = vector.extract_strided_slice %2 {offsets = [1, 0, 0], sizes = [1, 32, 64], strides = [1, 1, 1]} : vector<5x32x64xbf16> to vector<1x32x64xbf16>
    %523 = vector.shape_cast %522 : vector<1x32x64xbf16> to vector<32x64xbf16>
    %cst_173 = arith.constant dense<0.000000e+00> : vector<16x64xf32>
    %524 = tpu.matmul %502, %523, %cst_173 {dimension_numbers = #tpu.dot_dimension_numbers<[1], [0], [0], [1], [0, 0, 1, 1], [], []>} : vector<16x32xbf16>, vector<32x64xbf16>, vector<16x64xf32> -> vector<16x64xf32>
    %525 = arith.addf %521, %524 : vector<16x64xf32>
    %526 = vector.extract_strided_slice %2 {offsets = [2, 0, 0], sizes = [1, 32, 64], strides = [1, 1, 1]} : vector<5x32x64xbf16> to vector<1x32x64xbf16>
    %527 = vector.shape_cast %526 : vector<1x32x64xbf16> to vector<32x64xbf16>
    %cst_174 = arith.constant dense<0.000000e+00> : vector<16x64xf32>
    %528 = tpu.matmul %507, %527, %cst_174 {dimension_numbers = #tpu.dot_dimension_numbers<[1], [0], [0], [1], [0, 0, 1, 1], [], []>} : vector<16x32xbf16>, vector<32x64xbf16>, vector<16x64xf32> -> vector<16x64xf32>
    %529 = arith.addf %525, %528 : vector<16x64xf32>
    %530 = vector.extract_strided_slice %2 {offsets = [3, 0, 0], sizes = [1, 32, 64], strides = [1, 1, 1]} : vector<5x32x64xbf16> to vector<1x32x64xbf16>
    %531 = vector.shape_cast %530 : vector<1x32x64xbf16> to vector<32x64xbf16>
    %cst_175 = arith.constant dense<0.000000e+00> : vector<16x64xf32>
    %532 = tpu.matmul %509, %531, %cst_175 {dimension_numbers = #tpu.dot_dimension_numbers<[1], [0], [0], [1], [0, 0, 1, 1], [], []>} : vector<16x32xbf16>, vector<32x64xbf16>, vector<16x64xf32> -> vector<16x64xf32>
    %533 = arith.addf %529, %532 : vector<16x64xf32>
    %534 = vector.extract_strided_slice %2 {offsets = [4, 0, 0], sizes = [1, 32, 64], strides = [1, 1, 1]} : vector<5x32x64xbf16> to vector<1x32x64xbf16>
    %535 = vector.shape_cast %534 : vector<1x32x64xbf16> to vector<32x64xbf16>
    %cst_176 = arith.constant dense<0.000000e+00> : vector<16x64xf32>
    %536 = tpu.matmul %514, %535, %cst_176 {dimension_numbers = #tpu.dot_dimension_numbers<[1], [0], [0], [1], [0, 0, 1, 1], [], []>} : vector<16x32xbf16>, vector<32x64xbf16>, vector<16x64xf32> -> vector<16x64xf32>
    %537 = arith.addf %533, %536 : vector<16x64xf32>
    %538 = vector.extract_strided_slice %537 {offsets = [0, 0], sizes = [16, 32], strides = [1, 1]} : vector<16x64xf32> to vector<16x32xf32>
    %539 = arith.negf %538 : vector<16x32xf32>
    %540 = math.exp %539 : vector<16x32xf32>
    %cst_177 = arith.constant 1.000000e+00 : f32
    %541 = vector.broadcast %cst_177 : f32 to vector<16x32xf32>
    %542 = arith.addf %541, %540 : vector<16x32xf32>
    %543 = arith.divf %541, %542 : vector<16x32xf32>
    %544 = vector.extract_strided_slice %537 {offsets = [0, 32], sizes = [16, 32], strides = [1, 1]} : vector<16x64xf32> to vector<16x32xf32>
    %545 = arith.negf %544 : vector<16x32xf32>
    %546 = math.exp %545 : vector<16x32xf32>
    %cst_178 = arith.constant 1.000000e+00 : f32
    %547 = vector.broadcast %cst_178 : f32 to vector<16x32xf32>
    %548 = arith.addf %547, %546 : vector<16x32xf32>
    %549 = arith.divf %547, %548 : vector<16x32xf32>
    %550 = arith.mulf %543, %495 : vector<16x32xf32>
    %551 = arith.truncf %550 : vector<16x32xf32> to vector<16x32xbf16>
    %cst_179 = arith.constant dense<0.000000e+00> : vector<16x32xf32>
    %552 = tpu.matmul %0, %551, %cst_179 {dimension_numbers = #tpu.dot_dimension_numbers<[1], [0], [0], [1], [0, 0, 1, 1], [], []>} : vector<16x16xbf16>, vector<16x32xbf16>, vector<16x32xf32> -> vector<16x32xf32>
    %553 = arith.truncf %552 : vector<16x32xf32> to vector<16x32xbf16>
    %cst_180 = arith.constant dense<0.000000e+00> : vector<16x32xf32>
    %554 = tpu.matmul %0, %553, %cst_180 {dimension_numbers = #tpu.dot_dimension_numbers<[1], [0], [0], [1], [0, 0, 1, 1], [], []>} : vector<16x16xbf16>, vector<16x32xbf16>, vector<16x32xf32> -> vector<16x32xf32>
    %cst_181 = arith.constant 2.000000e+00 : f32
    %555 = vector.broadcast %cst_181 : f32 to vector<16x32xf32>
    %556 = arith.mulf %555, %554 : vector<16x32xf32>
    %557 = arith.subf %556, %550 : vector<16x32xf32>
    %558 = arith.truncf %557 : vector<16x32xf32> to vector<16x32xbf16>
    %cst_182 = arith.constant dense<0.000000e+00> : vector<16x32xf32>
    %559 = tpu.matmul %1, %551, %cst_182 {dimension_numbers = #tpu.dot_dimension_numbers<[1], [0], [0], [1], [0, 0, 1, 1], [], []>} : vector<16x16xbf16>, vector<16x32xbf16>, vector<16x32xf32> -> vector<16x32xf32>
    %560 = arith.truncf %559 : vector<16x32xf32> to vector<16x32xbf16>
    %cst_183 = arith.constant dense<0.000000e+00> : vector<16x32xf32>
    %561 = tpu.matmul %1, %560, %cst_183 {dimension_numbers = #tpu.dot_dimension_numbers<[1], [0], [0], [1], [0, 0, 1, 1], [], []>} : vector<16x16xbf16>, vector<16x32xbf16>, vector<16x32xf32> -> vector<16x32xf32>
    %cst_184 = arith.constant 2.000000e+00 : f32
    %562 = vector.broadcast %cst_184 : f32 to vector<16x32xf32>
    %563 = arith.mulf %562, %561 : vector<16x32xf32>
    %564 = arith.subf %563, %550 : vector<16x32xf32>
    %565 = arith.truncf %564 : vector<16x32xf32> to vector<16x32xbf16>
    %566 = arith.index_cast %c5_i32 : i32 to index
    %c0_185 = arith.constant 0 : index
    %c0_186 = arith.constant 0 : index
    %567 = vector.load %arg2[%566, %c0_185, %c0_186] : memref<8x16x32xf32, #tpu.memory_space<vmem>>, vector<1x16x32xf32>
    %568 = vector.shape_cast %567 : vector<1x16x32xf32> to vector<16x32xf32>
    %569 = vector.extract_strided_slice %3 {offsets = [0, 0, 0], sizes = [1, 32, 32], strides = [1, 1, 1]} : vector<5x32x32xbf16> to vector<1x32x32xbf16>
    %570 = vector.shape_cast %569 : vector<1x32x32xbf16> to vector<32x32xbf16>
    %cst_187 = arith.constant dense<0.000000e+00> : vector<16x32xf32>
    %571 = tpu.matmul %551, %570, %cst_187 {dimension_numbers = #tpu.dot_dimension_numbers<[1], [0], [0], [1], [0, 0, 1, 1], [], []>} : vector<16x32xbf16>, vector<32x32xbf16>, vector<16x32xf32> -> vector<16x32xf32>
    %572 = arith.addf %568, %571 : vector<16x32xf32>
    %573 = vector.extract_strided_slice %3 {offsets = [1, 0, 0], sizes = [1, 32, 32], strides = [1, 1, 1]} : vector<5x32x32xbf16> to vector<1x32x32xbf16>
    %574 = vector.shape_cast %573 : vector<1x32x32xbf16> to vector<32x32xbf16>
    %cst_188 = arith.constant dense<0.000000e+00> : vector<16x32xf32>
    %575 = tpu.matmul %553, %574, %cst_188 {dimension_numbers = #tpu.dot_dimension_numbers<[1], [0], [0], [1], [0, 0, 1, 1], [], []>} : vector<16x32xbf16>, vector<32x32xbf16>, vector<16x32xf32> -> vector<16x32xf32>
    %576 = arith.addf %572, %575 : vector<16x32xf32>
    %577 = vector.extract_strided_slice %3 {offsets = [2, 0, 0], sizes = [1, 32, 32], strides = [1, 1, 1]} : vector<5x32x32xbf16> to vector<1x32x32xbf16>
    %578 = vector.shape_cast %577 : vector<1x32x32xbf16> to vector<32x32xbf16>
    %cst_189 = arith.constant dense<0.000000e+00> : vector<16x32xf32>
    %579 = tpu.matmul %558, %578, %cst_189 {dimension_numbers = #tpu.dot_dimension_numbers<[1], [0], [0], [1], [0, 0, 1, 1], [], []>} : vector<16x32xbf16>, vector<32x32xbf16>, vector<16x32xf32> -> vector<16x32xf32>
    %580 = arith.addf %576, %579 : vector<16x32xf32>
    %581 = vector.extract_strided_slice %3 {offsets = [3, 0, 0], sizes = [1, 32, 32], strides = [1, 1, 1]} : vector<5x32x32xbf16> to vector<1x32x32xbf16>
    %582 = vector.shape_cast %581 : vector<1x32x32xbf16> to vector<32x32xbf16>
    %cst_190 = arith.constant dense<0.000000e+00> : vector<16x32xf32>
    %583 = tpu.matmul %560, %582, %cst_190 {dimension_numbers = #tpu.dot_dimension_numbers<[1], [0], [0], [1], [0, 0, 1, 1], [], []>} : vector<16x32xbf16>, vector<32x32xbf16>, vector<16x32xf32> -> vector<16x32xf32>
    %584 = arith.addf %580, %583 : vector<16x32xf32>
    %585 = vector.extract_strided_slice %3 {offsets = [4, 0, 0], sizes = [1, 32, 32], strides = [1, 1, 1]} : vector<5x32x32xbf16> to vector<1x32x32xbf16>
    %586 = vector.shape_cast %585 : vector<1x32x32xbf16> to vector<32x32xbf16>
    %cst_191 = arith.constant dense<0.000000e+00> : vector<16x32xf32>
    %587 = tpu.matmul %565, %586, %cst_191 {dimension_numbers = #tpu.dot_dimension_numbers<[1], [0], [0], [1], [0, 0, 1, 1], [], []>} : vector<16x32xbf16>, vector<32x32xbf16>, vector<16x32xf32> -> vector<16x32xf32>
    %588 = arith.addf %584, %587 : vector<16x32xf32>
    %589 = math.tanh %588 : vector<16x32xf32>
    %590 = arith.mulf %549, %495 : vector<16x32xf32>
    %cst_192 = arith.constant 1.000000e+00 : f32
    %591 = vector.broadcast %cst_192 : f32 to vector<16x32xf32>
    %592 = arith.subf %591, %549 : vector<16x32xf32>
    %593 = arith.mulf %592, %589 : vector<16x32xf32>
    %594 = arith.addf %590, %593 : vector<16x32xf32>
    %595 = arith.index_cast %c5_i32 : i32 to index
    %c0_193 = arith.constant 0 : index
    %c0_194 = arith.constant 0 : index
    %596 = vector.load %arg7[%595, %c0_193, %c0_194] : memref<8x16x32xf32, #tpu.memory_space<vmem>>, vector<1x16x32xf32>
    %597 = vector.shape_cast %596 : vector<1x16x32xf32> to vector<16x32xf32>
    %598 = vector.shape_cast %594 : vector<16x32xf32> to vector<1x16x32xf32>
    tpu.vector_store %arg7[%595, %c0_193, %c0_194], %598 {strides = array<i32>} : memref<8x16x32xf32, #tpu.memory_space<vmem>>, vector<1x16x32xf32>,
    %c6_i32 = arith.constant 6 : i32
    %599 = arith.truncf %594 : vector<16x32xf32> to vector<16x32xbf16>
    %cst_195 = arith.constant dense<0.000000e+00> : vector<16x32xf32>
    %600 = tpu.matmul %0, %599, %cst_195 {dimension_numbers = #tpu.dot_dimension_numbers<[1], [0], [0], [1], [0, 0, 1, 1], [], []>} : vector<16x16xbf16>, vector<16x32xbf16>, vector<16x32xf32> -> vector<16x32xf32>
    %601 = arith.truncf %600 : vector<16x32xf32> to vector<16x32xbf16>
    %cst_196 = arith.constant dense<0.000000e+00> : vector<16x32xf32>
    %602 = tpu.matmul %0, %601, %cst_196 {dimension_numbers = #tpu.dot_dimension_numbers<[1], [0], [0], [1], [0, 0, 1, 1], [], []>} : vector<16x16xbf16>, vector<16x32xbf16>, vector<16x32xf32> -> vector<16x32xf32>
    %cst_197 = arith.constant 2.000000e+00 : f32
    %603 = vector.broadcast %cst_197 : f32 to vector<16x32xf32>
    %604 = arith.mulf %603, %602 : vector<16x32xf32>
    %605 = arith.subf %604, %594 : vector<16x32xf32>
    %606 = arith.truncf %605 : vector<16x32xf32> to vector<16x32xbf16>
    %cst_198 = arith.constant dense<0.000000e+00> : vector<16x32xf32>
    %607 = tpu.matmul %1, %599, %cst_198 {dimension_numbers = #tpu.dot_dimension_numbers<[1], [0], [0], [1], [0, 0, 1, 1], [], []>} : vector<16x16xbf16>, vector<16x32xbf16>, vector<16x32xf32> -> vector<16x32xf32>
    %608 = arith.truncf %607 : vector<16x32xf32> to vector<16x32xbf16>
    %cst_199 = arith.constant dense<0.000000e+00> : vector<16x32xf32>
    %609 = tpu.matmul %1, %608, %cst_199 {dimension_numbers = #tpu.dot_dimension_numbers<[1], [0], [0], [1], [0, 0, 1, 1], [], []>} : vector<16x16xbf16>, vector<16x32xbf16>, vector<16x32xf32> -> vector<16x32xf32>
    %cst_200 = arith.constant 2.000000e+00 : f32
    %610 = vector.broadcast %cst_200 : f32 to vector<16x32xf32>
    %611 = arith.mulf %610, %609 : vector<16x32xf32>
    %612 = arith.subf %611, %594 : vector<16x32xf32>
    %613 = arith.truncf %612 : vector<16x32xf32> to vector<16x32xbf16>
    %614 = arith.index_cast %c6_i32 : i32 to index
    %c0_201 = arith.constant 0 : index
    %c0_202 = arith.constant 0 : index
    %615 = vector.load %arg1[%614, %c0_201, %c0_202] : memref<8x16x64xf32, #tpu.memory_space<vmem>>, vector<1x16x64xf32>
    %616 = vector.shape_cast %615 : vector<1x16x64xf32> to vector<16x64xf32>
    %617 = vector.extract_strided_slice %2 {offsets = [0, 0, 0], sizes = [1, 32, 64], strides = [1, 1, 1]} : vector<5x32x64xbf16> to vector<1x32x64xbf16>
    %618 = vector.shape_cast %617 : vector<1x32x64xbf16> to vector<32x64xbf16>
    %cst_203 = arith.constant dense<0.000000e+00> : vector<16x64xf32>
    %619 = tpu.matmul %599, %618, %cst_203 {dimension_numbers = #tpu.dot_dimension_numbers<[1], [0], [0], [1], [0, 0, 1, 1], [], []>} : vector<16x32xbf16>, vector<32x64xbf16>, vector<16x64xf32> -> vector<16x64xf32>
    %620 = arith.addf %616, %619 : vector<16x64xf32>
    %621 = vector.extract_strided_slice %2 {offsets = [1, 0, 0], sizes = [1, 32, 64], strides = [1, 1, 1]} : vector<5x32x64xbf16> to vector<1x32x64xbf16>
    %622 = vector.shape_cast %621 : vector<1x32x64xbf16> to vector<32x64xbf16>
    %cst_204 = arith.constant dense<0.000000e+00> : vector<16x64xf32>
    %623 = tpu.matmul %601, %622, %cst_204 {dimension_numbers = #tpu.dot_dimension_numbers<[1], [0], [0], [1], [0, 0, 1, 1], [], []>} : vector<16x32xbf16>, vector<32x64xbf16>, vector<16x64xf32> -> vector<16x64xf32>
    %624 = arith.addf %620, %623 : vector<16x64xf32>
    %625 = vector.extract_strided_slice %2 {offsets = [2, 0, 0], sizes = [1, 32, 64], strides = [1, 1, 1]} : vector<5x32x64xbf16> to vector<1x32x64xbf16>
    %626 = vector.shape_cast %625 : vector<1x32x64xbf16> to vector<32x64xbf16>
    %cst_205 = arith.constant dense<0.000000e+00> : vector<16x64xf32>
    %627 = tpu.matmul %606, %626, %cst_205 {dimension_numbers = #tpu.dot_dimension_numbers<[1], [0], [0], [1], [0, 0, 1, 1], [], []>} : vector<16x32xbf16>, vector<32x64xbf16>, vector<16x64xf32> -> vector<16x64xf32>
    %628 = arith.addf %624, %627 : vector<16x64xf32>
    %629 = vector.extract_strided_slice %2 {offsets = [3, 0, 0], sizes = [1, 32, 64], strides = [1, 1, 1]} : vector<5x32x64xbf16> to vector<1x32x64xbf16>
    %630 = vector.shape_cast %629 : vector<1x32x64xbf16> to vector<32x64xbf16>
    %cst_206 = arith.constant dense<0.000000e+00> : vector<16x64xf32>
    %631 = tpu.matmul %608, %630, %cst_206 {dimension_numbers = #tpu.dot_dimension_numbers<[1], [0], [0], [1], [0, 0, 1, 1], [], []>} : vector<16x32xbf16>, vector<32x64xbf16>, vector<16x64xf32> -> vector<16x64xf32>
    %632 = arith.addf %628, %631 : vector<16x64xf32>
    %633 = vector.extract_strided_slice %2 {offsets = [4, 0, 0], sizes = [1, 32, 64], strides = [1, 1, 1]} : vector<5x32x64xbf16> to vector<1x32x64xbf16>
    %634 = vector.shape_cast %633 : vector<1x32x64xbf16> to vector<32x64xbf16>
    %cst_207 = arith.constant dense<0.000000e+00> : vector<16x64xf32>
    %635 = tpu.matmul %613, %634, %cst_207 {dimension_numbers = #tpu.dot_dimension_numbers<[1], [0], [0], [1], [0, 0, 1, 1], [], []>} : vector<16x32xbf16>, vector<32x64xbf16>, vector<16x64xf32> -> vector<16x64xf32>
    %636 = arith.addf %632, %635 : vector<16x64xf32>
    %637 = vector.extract_strided_slice %636 {offsets = [0, 0], sizes = [16, 32], strides = [1, 1]} : vector<16x64xf32> to vector<16x32xf32>
    %638 = arith.negf %637 : vector<16x32xf32>
    %639 = math.exp %638 : vector<16x32xf32>
    %cst_208 = arith.constant 1.000000e+00 : f32
    %640 = vector.broadcast %cst_208 : f32 to vector<16x32xf32>
    %641 = arith.addf %640, %639 : vector<16x32xf32>
    %642 = arith.divf %640, %641 : vector<16x32xf32>
    %643 = vector.extract_strided_slice %636 {offsets = [0, 32], sizes = [16, 32], strides = [1, 1]} : vector<16x64xf32> to vector<16x32xf32>
    %644 = arith.negf %643 : vector<16x32xf32>
    %645 = math.exp %644 : vector<16x32xf32>
    %cst_209 = arith.constant 1.000000e+00 : f32
    %646 = vector.broadcast %cst_209 : f32 to vector<16x32xf32>
    %647 = arith.addf %646, %645 : vector<16x32xf32>
    %648 = arith.divf %646, %647 : vector<16x32xf32>
    %649 = arith.mulf %642, %594 : vector<16x32xf32>
    %650 = arith.truncf %649 : vector<16x32xf32> to vector<16x32xbf16>
    %cst_210 = arith.constant dense<0.000000e+00> : vector<16x32xf32>
    %651 = tpu.matmul %0, %650, %cst_210 {dimension_numbers = #tpu.dot_dimension_numbers<[1], [0], [0], [1], [0, 0, 1, 1], [], []>} : vector<16x16xbf16>, vector<16x32xbf16>, vector<16x32xf32> -> vector<16x32xf32>
    %652 = arith.truncf %651 : vector<16x32xf32> to vector<16x32xbf16>
    %cst_211 = arith.constant dense<0.000000e+00> : vector<16x32xf32>
    %653 = tpu.matmul %0, %652, %cst_211 {dimension_numbers = #tpu.dot_dimension_numbers<[1], [0], [0], [1], [0, 0, 1, 1], [], []>} : vector<16x16xbf16>, vector<16x32xbf16>, vector<16x32xf32> -> vector<16x32xf32>
    %cst_212 = arith.constant 2.000000e+00 : f32
    %654 = vector.broadcast %cst_212 : f32 to vector<16x32xf32>
    %655 = arith.mulf %654, %653 : vector<16x32xf32>
    %656 = arith.subf %655, %649 : vector<16x32xf32>
    %657 = arith.truncf %656 : vector<16x32xf32> to vector<16x32xbf16>
    %cst_213 = arith.constant dense<0.000000e+00> : vector<16x32xf32>
    %658 = tpu.matmul %1, %650, %cst_213 {dimension_numbers = #tpu.dot_dimension_numbers<[1], [0], [0], [1], [0, 0, 1, 1], [], []>} : vector<16x16xbf16>, vector<16x32xbf16>, vector<16x32xf32> -> vector<16x32xf32>
    %659 = arith.truncf %658 : vector<16x32xf32> to vector<16x32xbf16>
    %cst_214 = arith.constant dense<0.000000e+00> : vector<16x32xf32>
    %660 = tpu.matmul %1, %659, %cst_214 {dimension_numbers = #tpu.dot_dimension_numbers<[1], [0], [0], [1], [0, 0, 1, 1], [], []>} : vector<16x16xbf16>, vector<16x32xbf16>, vector<16x32xf32> -> vector<16x32xf32>
    %cst_215 = arith.constant 2.000000e+00 : f32
    %661 = vector.broadcast %cst_215 : f32 to vector<16x32xf32>
    %662 = arith.mulf %661, %660 : vector<16x32xf32>
    %663 = arith.subf %662, %649 : vector<16x32xf32>
    %664 = arith.truncf %663 : vector<16x32xf32> to vector<16x32xbf16>
    %665 = arith.index_cast %c6_i32 : i32 to index
    %c0_216 = arith.constant 0 : index
    %c0_217 = arith.constant 0 : index
    %666 = vector.load %arg2[%665, %c0_216, %c0_217] : memref<8x16x32xf32, #tpu.memory_space<vmem>>, vector<1x16x32xf32>
    %667 = vector.shape_cast %666 : vector<1x16x32xf32> to vector<16x32xf32>
    %668 = vector.extract_strided_slice %3 {offsets = [0, 0, 0], sizes = [1, 32, 32], strides = [1, 1, 1]} : vector<5x32x32xbf16> to vector<1x32x32xbf16>
    %669 = vector.shape_cast %668 : vector<1x32x32xbf16> to vector<32x32xbf16>
    %cst_218 = arith.constant dense<0.000000e+00> : vector<16x32xf32>
    %670 = tpu.matmul %650, %669, %cst_218 {dimension_numbers = #tpu.dot_dimension_numbers<[1], [0], [0], [1], [0, 0, 1, 1], [], []>} : vector<16x32xbf16>, vector<32x32xbf16>, vector<16x32xf32> -> vector<16x32xf32>
    %671 = arith.addf %667, %670 : vector<16x32xf32>
    %672 = vector.extract_strided_slice %3 {offsets = [1, 0, 0], sizes = [1, 32, 32], strides = [1, 1, 1]} : vector<5x32x32xbf16> to vector<1x32x32xbf16>
    %673 = vector.shape_cast %672 : vector<1x32x32xbf16> to vector<32x32xbf16>
    %cst_219 = arith.constant dense<0.000000e+00> : vector<16x32xf32>
    %674 = tpu.matmul %652, %673, %cst_219 {dimension_numbers = #tpu.dot_dimension_numbers<[1], [0], [0], [1], [0, 0, 1, 1], [], []>} : vector<16x32xbf16>, vector<32x32xbf16>, vector<16x32xf32> -> vector<16x32xf32>
    %675 = arith.addf %671, %674 : vector<16x32xf32>
    %676 = vector.extract_strided_slice %3 {offsets = [2, 0, 0], sizes = [1, 32, 32], strides = [1, 1, 1]} : vector<5x32x32xbf16> to vector<1x32x32xbf16>
    %677 = vector.shape_cast %676 : vector<1x32x32xbf16> to vector<32x32xbf16>
    %cst_220 = arith.constant dense<0.000000e+00> : vector<16x32xf32>
    %678 = tpu.matmul %657, %677, %cst_220 {dimension_numbers = #tpu.dot_dimension_numbers<[1], [0], [0], [1], [0, 0, 1, 1], [], []>} : vector<16x32xbf16>, vector<32x32xbf16>, vector<16x32xf32> -> vector<16x32xf32>
    %679 = arith.addf %675, %678 : vector<16x32xf32>
    %680 = vector.extract_strided_slice %3 {offsets = [3, 0, 0], sizes = [1, 32, 32], strides = [1, 1, 1]} : vector<5x32x32xbf16> to vector<1x32x32xbf16>
    %681 = vector.shape_cast %680 : vector<1x32x32xbf16> to vector<32x32xbf16>
    %cst_221 = arith.constant dense<0.000000e+00> : vector<16x32xf32>
    %682 = tpu.matmul %659, %681, %cst_221 {dimension_numbers = #tpu.dot_dimension_numbers<[1], [0], [0], [1], [0, 0, 1, 1], [], []>} : vector<16x32xbf16>, vector<32x32xbf16>, vector<16x32xf32> -> vector<16x32xf32>
    %683 = arith.addf %679, %682 : vector<16x32xf32>
    %684 = vector.extract_strided_slice %3 {offsets = [4, 0, 0], sizes = [1, 32, 32], strides = [1, 1, 1]} : vector<5x32x32xbf16> to vector<1x32x32xbf16>
    %685 = vector.shape_cast %684 : vector<1x32x32xbf16> to vector<32x32xbf16>
    %cst_222 = arith.constant dense<0.000000e+00> : vector<16x32xf32>
    %686 = tpu.matmul %664, %685, %cst_222 {dimension_numbers = #tpu.dot_dimension_numbers<[1], [0], [0], [1], [0, 0, 1, 1], [], []>} : vector<16x32xbf16>, vector<32x32xbf16>, vector<16x32xf32> -> vector<16x32xf32>
    %687 = arith.addf %683, %686 : vector<16x32xf32>
    %688 = math.tanh %687 : vector<16x32xf32>
    %689 = arith.mulf %648, %594 : vector<16x32xf32>
    %cst_223 = arith.constant 1.000000e+00 : f32
    %690 = vector.broadcast %cst_223 : f32 to vector<16x32xf32>
    %691 = arith.subf %690, %648 : vector<16x32xf32>
    %692 = arith.mulf %691, %688 : vector<16x32xf32>
    %693 = arith.addf %689, %692 : vector<16x32xf32>
    %694 = arith.index_cast %c6_i32 : i32 to index
    %c0_224 = arith.constant 0 : index
    %c0_225 = arith.constant 0 : index
    %695 = vector.load %arg7[%694, %c0_224, %c0_225] : memref<8x16x32xf32, #tpu.memory_space<vmem>>, vector<1x16x32xf32>
    %696 = vector.shape_cast %695 : vector<1x16x32xf32> to vector<16x32xf32>
    %697 = vector.shape_cast %693 : vector<16x32xf32> to vector<1x16x32xf32>
    tpu.vector_store %arg7[%694, %c0_224, %c0_225], %697 {strides = array<i32>} : memref<8x16x32xf32, #tpu.memory_space<vmem>>, vector<1x16x32xf32>,
    %c7_i32 = arith.constant 7 : i32
    %698 = arith.truncf %693 : vector<16x32xf32> to vector<16x32xbf16>
    %cst_226 = arith.constant dense<0.000000e+00> : vector<16x32xf32>
    %699 = tpu.matmul %0, %698, %cst_226 {dimension_numbers = #tpu.dot_dimension_numbers<[1], [0], [0], [1], [0, 0, 1, 1], [], []>} : vector<16x16xbf16>, vector<16x32xbf16>, vector<16x32xf32> -> vector<16x32xf32>
    %700 = arith.truncf %699 : vector<16x32xf32> to vector<16x32xbf16>
    %cst_227 = arith.constant dense<0.000000e+00> : vector<16x32xf32>
    %701 = tpu.matmul %0, %700, %cst_227 {dimension_numbers = #tpu.dot_dimension_numbers<[1], [0], [0], [1], [0, 0, 1, 1], [], []>} : vector<16x16xbf16>, vector<16x32xbf16>, vector<16x32xf32> -> vector<16x32xf32>
    %cst_228 = arith.constant 2.000000e+00 : f32
    %702 = vector.broadcast %cst_228 : f32 to vector<16x32xf32>
    %703 = arith.mulf %702, %701 : vector<16x32xf32>
    %704 = arith.subf %703, %693 : vector<16x32xf32>
    %705 = arith.truncf %704 : vector<16x32xf32> to vector<16x32xbf16>
    %cst_229 = arith.constant dense<0.000000e+00> : vector<16x32xf32>
    %706 = tpu.matmul %1, %698, %cst_229 {dimension_numbers = #tpu.dot_dimension_numbers<[1], [0], [0], [1], [0, 0, 1, 1], [], []>} : vector<16x16xbf16>, vector<16x32xbf16>, vector<16x32xf32> -> vector<16x32xf32>
    %707 = arith.truncf %706 : vector<16x32xf32> to vector<16x32xbf16>
    %cst_230 = arith.constant dense<0.000000e+00> : vector<16x32xf32>
    %708 = tpu.matmul %1, %707, %cst_230 {dimension_numbers = #tpu.dot_dimension_numbers<[1], [0], [0], [1], [0, 0, 1, 1], [], []>} : vector<16x16xbf16>, vector<16x32xbf16>, vector<16x32xf32> -> vector<16x32xf32>
    %cst_231 = arith.constant 2.000000e+00 : f32
    %709 = vector.broadcast %cst_231 : f32 to vector<16x32xf32>
    %710 = arith.mulf %709, %708 : vector<16x32xf32>
    %711 = arith.subf %710, %693 : vector<16x32xf32>
    %712 = arith.truncf %711 : vector<16x32xf32> to vector<16x32xbf16>
    %713 = arith.index_cast %c7_i32 : i32 to index
    %c0_232 = arith.constant 0 : index
    %c0_233 = arith.constant 0 : index
    %714 = vector.load %arg1[%713, %c0_232, %c0_233] : memref<8x16x64xf32, #tpu.memory_space<vmem>>, vector<1x16x64xf32>
    %715 = vector.shape_cast %714 : vector<1x16x64xf32> to vector<16x64xf32>
    %716 = vector.extract_strided_slice %2 {offsets = [0, 0, 0], sizes = [1, 32, 64], strides = [1, 1, 1]} : vector<5x32x64xbf16> to vector<1x32x64xbf16>
    %717 = vector.shape_cast %716 : vector<1x32x64xbf16> to vector<32x64xbf16>
    %cst_234 = arith.constant dense<0.000000e+00> : vector<16x64xf32>
    %718 = tpu.matmul %698, %717, %cst_234 {dimension_numbers = #tpu.dot_dimension_numbers<[1], [0], [0], [1], [0, 0, 1, 1], [], []>} : vector<16x32xbf16>, vector<32x64xbf16>, vector<16x64xf32> -> vector<16x64xf32>
    %719 = arith.addf %715, %718 : vector<16x64xf32>
    %720 = vector.extract_strided_slice %2 {offsets = [1, 0, 0], sizes = [1, 32, 64], strides = [1, 1, 1]} : vector<5x32x64xbf16> to vector<1x32x64xbf16>
    %721 = vector.shape_cast %720 : vector<1x32x64xbf16> to vector<32x64xbf16>
    %cst_235 = arith.constant dense<0.000000e+00> : vector<16x64xf32>
    %722 = tpu.matmul %700, %721, %cst_235 {dimension_numbers = #tpu.dot_dimension_numbers<[1], [0], [0], [1], [0, 0, 1, 1], [], []>} : vector<16x32xbf16>, vector<32x64xbf16>, vector<16x64xf32> -> vector<16x64xf32>
    %723 = arith.addf %719, %722 : vector<16x64xf32>
    %724 = vector.extract_strided_slice %2 {offsets = [2, 0, 0], sizes = [1, 32, 64], strides = [1, 1, 1]} : vector<5x32x64xbf16> to vector<1x32x64xbf16>
    %725 = vector.shape_cast %724 : vector<1x32x64xbf16> to vector<32x64xbf16>
    %cst_236 = arith.constant dense<0.000000e+00> : vector<16x64xf32>
    %726 = tpu.matmul %705, %725, %cst_236 {dimension_numbers = #tpu.dot_dimension_numbers<[1], [0], [0], [1], [0, 0, 1, 1], [], []>} : vector<16x32xbf16>, vector<32x64xbf16>, vector<16x64xf32> -> vector<16x64xf32>
    %727 = arith.addf %723, %726 : vector<16x64xf32>
    %728 = vector.extract_strided_slice %2 {offsets = [3, 0, 0], sizes = [1, 32, 64], strides = [1, 1, 1]} : vector<5x32x64xbf16> to vector<1x32x64xbf16>
    %729 = vector.shape_cast %728 : vector<1x32x64xbf16> to vector<32x64xbf16>
    %cst_237 = arith.constant dense<0.000000e+00> : vector<16x64xf32>
    %730 = tpu.matmul %707, %729, %cst_237 {dimension_numbers = #tpu.dot_dimension_numbers<[1], [0], [0], [1], [0, 0, 1, 1], [], []>} : vector<16x32xbf16>, vector<32x64xbf16>, vector<16x64xf32> -> vector<16x64xf32>
    %731 = arith.addf %727, %730 : vector<16x64xf32>
    %732 = vector.extract_strided_slice %2 {offsets = [4, 0, 0], sizes = [1, 32, 64], strides = [1, 1, 1]} : vector<5x32x64xbf16> to vector<1x32x64xbf16>
    %733 = vector.shape_cast %732 : vector<1x32x64xbf16> to vector<32x64xbf16>
    %cst_238 = arith.constant dense<0.000000e+00> : vector<16x64xf32>
    %734 = tpu.matmul %712, %733, %cst_238 {dimension_numbers = #tpu.dot_dimension_numbers<[1], [0], [0], [1], [0, 0, 1, 1], [], []>} : vector<16x32xbf16>, vector<32x64xbf16>, vector<16x64xf32> -> vector<16x64xf32>
    %735 = arith.addf %731, %734 : vector<16x64xf32>
    %736 = vector.extract_strided_slice %735 {offsets = [0, 0], sizes = [16, 32], strides = [1, 1]} : vector<16x64xf32> to vector<16x32xf32>
    %737 = arith.negf %736 : vector<16x32xf32>
    %738 = math.exp %737 : vector<16x32xf32>
    %cst_239 = arith.constant 1.000000e+00 : f32
    %739 = vector.broadcast %cst_239 : f32 to vector<16x32xf32>
    %740 = arith.addf %739, %738 : vector<16x32xf32>
    %741 = arith.divf %739, %740 : vector<16x32xf32>
    %742 = vector.extract_strided_slice %735 {offsets = [0, 32], sizes = [16, 32], strides = [1, 1]} : vector<16x64xf32> to vector<16x32xf32>
    %743 = arith.negf %742 : vector<16x32xf32>
    %744 = math.exp %743 : vector<16x32xf32>
    %cst_240 = arith.constant 1.000000e+00 : f32
    %745 = vector.broadcast %cst_240 : f32 to vector<16x32xf32>
    %746 = arith.addf %745, %744 : vector<16x32xf32>
    %747 = arith.divf %745, %746 : vector<16x32xf32>
    %748 = arith.mulf %741, %693 : vector<16x32xf32>
    %749 = arith.truncf %748 : vector<16x32xf32> to vector<16x32xbf16>
    %cst_241 = arith.constant dense<0.000000e+00> : vector<16x32xf32>
    %750 = tpu.matmul %0, %749, %cst_241 {dimension_numbers = #tpu.dot_dimension_numbers<[1], [0], [0], [1], [0, 0, 1, 1], [], []>} : vector<16x16xbf16>, vector<16x32xbf16>, vector<16x32xf32> -> vector<16x32xf32>
    %751 = arith.truncf %750 : vector<16x32xf32> to vector<16x32xbf16>
    %cst_242 = arith.constant dense<0.000000e+00> : vector<16x32xf32>
    %752 = tpu.matmul %0, %751, %cst_242 {dimension_numbers = #tpu.dot_dimension_numbers<[1], [0], [0], [1], [0, 0, 1, 1], [], []>} : vector<16x16xbf16>, vector<16x32xbf16>, vector<16x32xf32> -> vector<16x32xf32>
    %cst_243 = arith.constant 2.000000e+00 : f32
    %753 = vector.broadcast %cst_243 : f32 to vector<16x32xf32>
    %754 = arith.mulf %753, %752 : vector<16x32xf32>
    %755 = arith.subf %754, %748 : vector<16x32xf32>
    %756 = arith.truncf %755 : vector<16x32xf32> to vector<16x32xbf16>
    %cst_244 = arith.constant dense<0.000000e+00> : vector<16x32xf32>
    %757 = tpu.matmul %1, %749, %cst_244 {dimension_numbers = #tpu.dot_dimension_numbers<[1], [0], [0], [1], [0, 0, 1, 1], [], []>} : vector<16x16xbf16>, vector<16x32xbf16>, vector<16x32xf32> -> vector<16x32xf32>
    %758 = arith.truncf %757 : vector<16x32xf32> to vector<16x32xbf16>
    %cst_245 = arith.constant dense<0.000000e+00> : vector<16x32xf32>
    %759 = tpu.matmul %1, %758, %cst_245 {dimension_numbers = #tpu.dot_dimension_numbers<[1], [0], [0], [1], [0, 0, 1, 1], [], []>} : vector<16x16xbf16>, vector<16x32xbf16>, vector<16x32xf32> -> vector<16x32xf32>
    %cst_246 = arith.constant 2.000000e+00 : f32
    %760 = vector.broadcast %cst_246 : f32 to vector<16x32xf32>
    %761 = arith.mulf %760, %759 : vector<16x32xf32>
    %762 = arith.subf %761, %748 : vector<16x32xf32>
    %763 = arith.truncf %762 : vector<16x32xf32> to vector<16x32xbf16>
    %764 = arith.index_cast %c7_i32 : i32 to index
    %c0_247 = arith.constant 0 : index
    %c0_248 = arith.constant 0 : index
    %765 = vector.load %arg2[%764, %c0_247, %c0_248] : memref<8x16x32xf32, #tpu.memory_space<vmem>>, vector<1x16x32xf32>
    %766 = vector.shape_cast %765 : vector<1x16x32xf32> to vector<16x32xf32>
    %767 = vector.extract_strided_slice %3 {offsets = [0, 0, 0], sizes = [1, 32, 32], strides = [1, 1, 1]} : vector<5x32x32xbf16> to vector<1x32x32xbf16>
    %768 = vector.shape_cast %767 : vector<1x32x32xbf16> to vector<32x32xbf16>
    %cst_249 = arith.constant dense<0.000000e+00> : vector<16x32xf32>
    %769 = tpu.matmul %749, %768, %cst_249 {dimension_numbers = #tpu.dot_dimension_numbers<[1], [0], [0], [1], [0, 0, 1, 1], [], []>} : vector<16x32xbf16>, vector<32x32xbf16>, vector<16x32xf32> -> vector<16x32xf32>
    %770 = arith.addf %766, %769 : vector<16x32xf32>
    %771 = vector.extract_strided_slice %3 {offsets = [1, 0, 0], sizes = [1, 32, 32], strides = [1, 1, 1]} : vector<5x32x32xbf16> to vector<1x32x32xbf16>
    %772 = vector.shape_cast %771 : vector<1x32x32xbf16> to vector<32x32xbf16>
    %cst_250 = arith.constant dense<0.000000e+00> : vector<16x32xf32>
    %773 = tpu.matmul %751, %772, %cst_250 {dimension_numbers = #tpu.dot_dimension_numbers<[1], [0], [0], [1], [0, 0, 1, 1], [], []>} : vector<16x32xbf16>, vector<32x32xbf16>, vector<16x32xf32> -> vector<16x32xf32>
    %774 = arith.addf %770, %773 : vector<16x32xf32>
    %775 = vector.extract_strided_slice %3 {offsets = [2, 0, 0], sizes = [1, 32, 32], strides = [1, 1, 1]} : vector<5x32x32xbf16> to vector<1x32x32xbf16>
    %776 = vector.shape_cast %775 : vector<1x32x32xbf16> to vector<32x32xbf16>
    %cst_251 = arith.constant dense<0.000000e+00> : vector<16x32xf32>
    %777 = tpu.matmul %756, %776, %cst_251 {dimension_numbers = #tpu.dot_dimension_numbers<[1], [0], [0], [1], [0, 0, 1, 1], [], []>} : vector<16x32xbf16>, vector<32x32xbf16>, vector<16x32xf32> -> vector<16x32xf32>
    %778 = arith.addf %774, %777 : vector<16x32xf32>
    %779 = vector.extract_strided_slice %3 {offsets = [3, 0, 0], sizes = [1, 32, 32], strides = [1, 1, 1]} : vector<5x32x32xbf16> to vector<1x32x32xbf16>
    %780 = vector.shape_cast %779 : vector<1x32x32xbf16> to vector<32x32xbf16>
    %cst_252 = arith.constant dense<0.000000e+00> : vector<16x32xf32>
    %781 = tpu.matmul %758, %780, %cst_252 {dimension_numbers = #tpu.dot_dimension_numbers<[1], [0], [0], [1], [0, 0, 1, 1], [], []>} : vector<16x32xbf16>, vector<32x32xbf16>, vector<16x32xf32> -> vector<16x32xf32>
    %782 = arith.addf %778, %781 : vector<16x32xf32>
    %783 = vector.extract_strided_slice %3 {offsets = [4, 0, 0], sizes = [1, 32, 32], strides = [1, 1, 1]} : vector<5x32x32xbf16> to vector<1x32x32xbf16>
    %784 = vector.shape_cast %783 : vector<1x32x32xbf16> to vector<32x32xbf16>
    %cst_253 = arith.constant dense<0.000000e+00> : vector<16x32xf32>
    %785 = tpu.matmul %763, %784, %cst_253 {dimension_numbers = #tpu.dot_dimension_numbers<[1], [0], [0], [1], [0, 0, 1, 1], [], []>} : vector<16x32xbf16>, vector<32x32xbf16>, vector<16x32xf32> -> vector<16x32xf32>
    %786 = arith.addf %782, %785 : vector<16x32xf32>
    %787 = math.tanh %786 : vector<16x32xf32>
    %788 = arith.mulf %747, %693 : vector<16x32xf32>
    %cst_254 = arith.constant 1.000000e+00 : f32
    %789 = vector.broadcast %cst_254 : f32 to vector<16x32xf32>
    %790 = arith.subf %789, %747 : vector<16x32xf32>
    %791 = arith.mulf %790, %787 : vector<16x32xf32>
    %792 = arith.addf %788, %791 : vector<16x32xf32>
    %793 = arith.index_cast %c7_i32 : i32 to index
    %c0_255 = arith.constant 0 : index
    %c0_256 = arith.constant 0 : index
    %794 = vector.load %arg7[%793, %c0_255, %c0_256] : memref<8x16x32xf32, #tpu.memory_space<vmem>>, vector<1x16x32xf32>
    %795 = vector.shape_cast %794 : vector<1x16x32xf32> to vector<16x32xf32>
    %796 = vector.shape_cast %792 : vector<16x32xf32> to vector<1x16x32xf32>
    tpu.vector_store %arg7[%793, %c0_255, %c0_256], %796 {strides = array<i32>} : memref<8x16x32xf32, #tpu.memory_space<vmem>>, vector<1x16x32xf32>,
    %c8_i32 = arith.constant 8 : i32
    return
  }
  func.func @transform_0(%arg0: i32) -> (i32, i32, i32) {
    %c0_i32 = arith.constant 0 : i32
    %c0_i32_0 = arith.constant 0 : i32
    %c0_i32_1 = arith.constant 0 : i32
    %c0_i32_2 = arith.constant 0 : i32
    return %c0_i32, %c0_i32_0, %c0_i32_1 : i32, i32, i32
  }
  func.func @transform_1(%arg0: i32) -> (i32, i32, i32) {
    %c0_i32 = arith.constant 0 : i32
    %c0_i32_0 = arith.constant 0 : i32
    %c0_i32_1 = arith.constant 0 : i32
    %c0_i32_2 = arith.constant 0 : i32
    return %c0_i32, %c0_i32_0, %c0_i32_1 : i32, i32, i32
  }
  func.func @transform_2(%arg0: i32) -> (i32, i32) {
    %c0_i32 = arith.constant 0 : i32
    %c0_i32_0 = arith.constant 0 : i32
    %c0_i32_1 = arith.constant 0 : i32
    return %c0_i32, %c0_i32_0 : i32, i32
  }
  func.func @transform_3(%arg0: i32) -> (i32, i32) {
    %c0_i32 = arith.constant 0 : i32
    %c0_i32_0 = arith.constant 0 : i32
    %c0_i32_1 = arith.constant 0 : i32
    return %c0_i32, %c0_i32_0 : i32, i32
  }
  func.func @transform_4(%arg0: i32) -> (i32, i32, i32) {
    %c0_i32 = arith.constant 0 : i32
    %c0_i32_0 = arith.constant 0 : i32
    %c0_i32_1 = arith.constant 0 : i32
    %c0_i32_2 = arith.constant 0 : i32
    return %c0_i32, %c0_i32_0, %c0_i32_1 : i32, i32, i32
  }
  func.func @transform_5(%arg0: i32) -> (i32, i32, i32) {
    %c0_i32 = arith.constant 0 : i32
    %c0_i32_0 = arith.constant 0 : i32
    %c0_i32_1 = arith.constant 0 : i32
    %c0_i32_2 = arith.constant 0 : i32
    return %c0_i32, %c0_i32_0, %c0_i32_1 : i32, i32, i32
  }
  func.func @transform_6(%arg0: i32) -> (i32, i32, i32) {
    %c0_i32 = arith.constant 0 : i32
    %c0_i32_0 = arith.constant 0 : i32
    %c0_i32_1 = arith.constant 0 : i32
    %c0_i32_2 = arith.constant 0 : i32
    return %c0_i32, %c0_i32_0, %c0_i32_1 : i32, i32, i32
  }
}

</mosaic_0001>

<llo_original>
// kernel: dcrnn_forward.1
$region0: #{dcrnn_forward.1}
  #allocation0 [shape = 'u32[]', space=smem, size = 0x4, offset = 0x4, fixed_abs, tag = 'smem constant byte address 0x4 - core index']
  #allocation1 [shape = 'u32[144,128]{1,0:T(1,128)}', space=vmem, size = 0x12000, scoped, tag = 'internal scratch']
  %s0 = inlined_call_operand.vmem [shape: f32[8,16,64], index: 0, kind: input, shape index: {}]
  %s1 = inlined_call_operand.vmem [shape: f32[8,16,32], index: 1, kind: input, shape index: {}]
  %s2 = inlined_call_operand.vmem [shape: bf16[16,16], index: 2, kind: input, shape index: {}]
  %s3 = inlined_call_operand.vmem [shape: bf16[16,16], index: 3, kind: input, shape index: {}]
  %s4 = inlined_call_operand.vmem [shape: bf16[5,32,64], index: 4, kind: input, shape index: {}]
  %s5 = inlined_call_operand.vmem [shape: bf16[5,32,32], index: 5, kind: input, shape index: {}]
  %s6 = inlined_call_operand.vmem [shape: f32[8,16,32], index: 6, kind: output, shape index: {}]
  %s7 = sld [smem:[#allocation0]]
  $region34: #{dcrnn_forward.1} parent=0
    _
  %s9 = ssub.s32 1, %s7
  %s10 = scalar_select 0, %s9, %s7
  // Predicated region
  $region2: #{dcrnn_forward.1} parent=0 // pred_check
    _
  $region3: #{dcrnn_forward.1} parent=0 // pred_check_branch
    %12 = sbr.rel (0) target = $region5
  $region4: #{dcrnn_forward.1} parent=0 // pred_region
    _
  $region5: #{dcrnn_forward.1} parent=0 // pred_fallthru
    _
  // Predicated region
  $region6: #{dcrnn_forward.1} parent=0 // pred_check
    _
  $region7: #{dcrnn_forward.1} parent=0 // pred_check_branch
    %14 = sbr.rel (0) target = $region9
  $region8: #{dcrnn_forward.1} parent=0 // pred_region
    _
  $region9: #{dcrnn_forward.1} parent=0 // pred_fallthru
    _
  // Predicated region
  $region10: #{dcrnn_forward.1} parent=0 // pred_check
    _
  $region11: #{dcrnn_forward.1} parent=0 // pred_check_branch
    %16 = sbr.rel (0) target = $region13
  $region12: #{dcrnn_forward.1} parent=0 // pred_region
    _
  $region13: #{dcrnn_forward.1} parent=0 // pred_fallthru
    _
  // Predicated region
  $region14: #{dcrnn_forward.1} parent=0 // pred_check
    _
  $region15: #{dcrnn_forward.1} parent=0 // pred_check_branch
    %18 = sbr.rel (0) target = $region17
  $region16: #{dcrnn_forward.1} parent=0 // pred_region
    _
  $region17: #{dcrnn_forward.1} parent=0 // pred_fallthru
    _
  // Predicated region
  $region18: #{dcrnn_forward.1} parent=0 // pred_check
    _
  $region19: #{dcrnn_forward.1} parent=0 // pred_check_branch
    %20 = sbr.rel (0) target = $region21
  $region20: #{dcrnn_forward.1} parent=0 // pred_region
    _
  $region21: #{dcrnn_forward.1} parent=0 // pred_fallthru
    _
  // Predicated region
  $region22: #{dcrnn_forward.1} parent=0 // pred_check
    _
  $region23: #{dcrnn_forward.1} parent=0 // pred_check_branch
    %22 = sbr.rel (0) target = $region25
  $region24: #{dcrnn_forward.1} parent=0 // pred_region
    _
  $region25: #{dcrnn_forward.1} parent=0 // pred_fallthru
    _
  %v24 = vld [vmem:[%s2] sm:$0xf]
  %v25 = vld [vmem:[%s2 + $0x4] sm:$0xf]
  %v26 = vld [vmem:[%s3] sm:$0xf]
  %v27 = vld [vmem:[%s3 + $0x4] sm:$0xf]
  %v28 = vld [vmem:[%s4] sm:$0xf]
  %v29 = vld [vmem:[%s4 + $0x4] sm:$0xf]
  %v30 = vld [vmem:[%s4 + $0x8] sm:$0xf]
  %v31 = vld [vmem:[%s4 + $0xc] sm:$0xf]
  %v32 = vld [vmem:[%s4 + $0x10] sm:$0xf]
  %v33 = vld [vmem:[%s4 + $0x14] sm:$0xf]
  %v34 = vld [vmem:[%s4 + $0x18] sm:$0xf]
  %v35 = vld [vmem:[%s4 + $0x1c] sm:$0xf]
  %v36 = vld [vmem:[%s4 + $0x20] sm:$0xf]
  %v37 = vld [vmem:[%s4 + $0x24] sm:$0xf]
  %v38 = vld [vmem:[%s4 + $0x28] sm:$0xf]
  %v39 = vld [vmem:[%s4 + $0x2c] sm:$0xf]
  %v40 = vld [vmem:[%s4 + $0x30] sm:$0xf]
  %v41 = vld [vmem:[%s4 + $0x34] sm:$0xf]
  %v42 = vld [vmem:[%s4 + $0x38] sm:$0xf]
  %v43 = vld [vmem:[%s4 + $0x3c] sm:$0xf]
  %v44 = vld [vmem:[%s4 + $0x40] sm:$0xf]
  %v45 = vld [vmem:[%s4 + $0x44] sm:$0xf]
  %v46 = vld [vmem:[%s4 + $0x48] sm:$0xf]
  %v47 = vld [vmem:[%s4 + $0x4c] sm:$0xf]
  %v48 = vld [vmem:[%s5] sm:$0xf]
  %v49 = vld [vmem:[%s5 + $0x4] sm:$0xf]
  %v50 = vld [vmem:[%s5 + $0x8] sm:$0xf]
  %v51 = vld [vmem:[%s5 + $0xc] sm:$0xf]
  %v52 = vld [vmem:[%s5 + $0x10] sm:$0xf]
  %v53 = vld [vmem:[%s5 + $0x14] sm:$0xf]
  %v54 = vld [vmem:[%s5 + $0x18] sm:$0xf]
  %v55 = vld [vmem:[%s5 + $0x1c] sm:$0xf]
  %v56 = vld [vmem:[%s5 + $0x20] sm:$0xf]
  %v57 = vld [vmem:[%s5 + $0x24] sm:$0xf]
  %v58 = vld [vmem:[%s5 + $0x28] sm:$0xf]
  %v59 = vld [vmem:[%s5 + $0x2c] sm:$0xf]
  %v60 = vld [vmem:[%s5 + $0x30] sm:$0xf]
  %v61 = vld [vmem:[%s5 + $0x34] sm:$0xf]
  %v62 = vld [vmem:[%s5 + $0x38] sm:$0xf]
  %v63 = vld [vmem:[%s5 + $0x3c] sm:$0xf]
  %v64 = vld [vmem:[%s5 + $0x40] sm:$0xf]
  %v65 = vld [vmem:[%s5 + $0x44] sm:$0xf]
  %v66 = vld [vmem:[%s5 + $0x48] sm:$0xf]
  %v67 = vld [vmem:[%s5 + $0x4c] sm:$0xf]
  %v70 = vunpack.c.l.b16 %v24
  %v71 = vunpack.c.l.b16 %v25
  %v72 = vpack.c.b16 %v71, %v70
  %vm73 = vcmask 130048
  %v75 = vsel %vm73, %v72, 0
  %77 = vmatprep.subr.bf16.mxu0 0
  %78 = vmatpush1.bf16.msra.mxu0 0
  %79 = vmatprep.subr.bf16.mxu0 0
  %80 = vmatpush1.bf16.msra.mxu0 0
  %81 = vmatprep.subr.bf16.mxu0 0
  %82 = vmatpush1.bf16.msra.mxu0 0
  %83 = vmatprep.subr.bf16.mxu0 0
  %84 = vmatpush1.bf16.msra.mxu0 0
  %85 = vmatprep.subr.bf16.mxu0 0
  %86 = vmatpush1.bf16.msra.mxu0 0
  %87 = vmatprep.subr.bf16.mxu0 0
  %88 = vmatpush1.bf16.msra.mxu0 0
  %89 = vmatprep.subr.bf16.mxu0 0
  %90 = vmatpush1.bf16.msra.mxu0 0
  %91 = vmatprep.subr.bf16.mxu0 0
  %92 = vmatpush1.bf16.msra.mxu0 0
  %93 = vmatprep.subr.bf16.mxu0 0
  %94 = vmatpush1.bf16.msra.mxu0 0
  %95 = vmatprep.subr.bf16.mxu0 0
  %96 = vmatpush1.bf16.msra.mxu0 0
  %97 = vmatprep.subr.bf16.mxu0 0
  %98 = vmatpush1.bf16.msra.mxu0 0
  %99 = vmatprep.subr.bf16.mxu0 0
  %100 = vmatpush1.bf16.msra.mxu0 0
  %101 = vmatprep.subr.bf16.mxu0 0
  %102 = vmatpush1.bf16.msra.mxu0 0
  %103 = vmatprep.subr.bf16.mxu0 0
  %104 = vmatpush1.bf16.msra.mxu0 0
  %105 = vmatprep.subr.bf16.mxu0 0
  %106 = vmatpush1.bf16.msra.mxu0 0
  %107 = vmatprep.subr.bf16.mxu0 0
  %108 = vmatpush1.bf16.msra.mxu0 0
  %109 = vmatprep.mubr.bf16.mxu0 0
  %110 = vmatmul.mubr.bf16.gmra.mrb[0].mxu0 %v75
  %v111 = vpop.f32.mrb[0].mxu0
  %v112 = vadd.f32 0.0, %v111
  %v113 = vpop.f32.mrb[0].mxu0
  %v114 = vpop.f32.mrb[0].mxu0
  %v115 = vadd.f32 0.0, %v114
  %v116 = vpop.f32.mrb[0].mxu0
  %117 = vdwg.mxu0
  %v118 = vpack.c.bf16 %v115, %v112
  %119 = vmatprep.subr.bf16.mxu0 0
  %120 = vmatpush1.bf16.msra.mxu0 %v118
  %121 = vmatprep.subr.bf16.mxu0 0
  %122 = vmatpush1.bf16.msra.mxu0 0
  %123 = vmatprep.subr.bf16.mxu0 0
  %124 = vmatpush1.bf16.msra.mxu0 0
  %125 = vmatprep.subr.bf16.mxu0 0
  %126 = vmatpush1.bf16.msra.mxu0 0
  %127 = vmatprep.subr.bf16.mxu0 0
  %128 = vmatpush1.bf16.msra.mxu0 0
  %129 = vmatprep.subr.bf16.mxu0 0
  %130 = vmatpush1.bf16.msra.mxu0 0
  %131 = vmatprep.subr.bf16.mxu0 0
  %132 = vmatpush1.bf16.msra.mxu0 0
  %133 = vmatprep.subr.bf16.mxu0 0
  %134 = vmatpush1.bf16.msra.mxu0 0
  %135 = vmatprep.subr.bf16.mxu0 0
  %136 = vmatpush1.bf16.msra.mxu0 0
  %137 = vmatprep.subr.bf16.mxu0 0
  %138 = vmatpush1.bf16.msra.mxu0 0
  %139 = vmatprep.subr.bf16.mxu0 0
  %140 = vmatpush1.bf16.msra.mxu0 0
  %141 = vmatprep.subr.bf16.mxu0 0
  %142 = vmatpush1.bf16.msra.mxu0 0
  %143 = vmatprep.subr.bf16.mxu0 0
  %144 = vmatpush1.bf16.msra.mxu0 0
  %145 = vmatprep.subr.bf16.mxu0 0
  %146 = vmatpush1.bf16.msra.mxu0 0
  %147 = vmatprep.subr.bf16.mxu0 0
  %148 = vmatpush1.bf16.msra.mxu0 0
  %149 = vmatprep.subr.bf16.mxu0 0
  %150 = vmatpush1.bf16.msra.mxu0 0
  %151 = vmatprep.mubr.bf16.mxu0 0
  %152 = vmatmul.mubr.bf16.gmra.mrb[0].mxu0 %v75
  %v153 = vpop.f32.mrb[0].mxu0
  %v154 = vadd.f32 0.0, %v153
  %v155 = vpop.f32.mrb[0].mxu0
  %v156 = vpop.f32.mrb[0].mxu0
  %v157 = vadd.f32 0.0, %v156
  %v158 = vpop.f32.mrb[0].mxu0
  %159 = vdwg.mxu0
  %v160 = vmul.f32 %v154, 2.0
  %v161 = vmul.f32 %v157, 2.0
  %v162 = vpack.c.bf16 %v161, %v160
  %v165 = vunpack.c.l.b16 %v26
  %v166 = vunpack.c.l.b16 %v27
  %v167 = vpack.c.b16 %v166, %v165
  %v169 = vsel %vm73, %v167, 0
  %171 = vmatprep.subr.bf16.mxu0 0
  %172 = vmatpush1.bf16.msra.mxu0 0
  %173 = vmatprep.subr.bf16.mxu0 0
  %174 = vmatpush1.bf16.msra.mxu0 0
  %175 = vmatprep.subr.bf16.mxu0 0
  %176 = vmatpush1.bf16.msra.mxu0 0
  %177 = vmatprep.subr.bf16.mxu0 0
  %178 = vmatpush1.bf16.msra.mxu0 0
  %179 = vmatprep.subr.bf16.mxu0 0
  %180 = vmatpush1.bf16.msra.mxu0 0
  %181 = vmatprep.subr.bf16.mxu0 0
  %182 = vmatpush1.bf16.msra.mxu0 0
  %183 = vmatprep.subr.bf16.mxu0 0
  %184 = vmatpush1.bf16.msra.mxu0 0
  %185 = vmatprep.subr.bf16.mxu0 0
  %186 = vmatpush1.bf16.msra.mxu0 0
  %187 = vmatprep.subr.bf16.mxu0 0
  %188 = vmatpush1.bf16.msra.mxu0 0
  %189 = vmatprep.subr.bf16.mxu0 0
  %190 = vmatpush1.bf16.msra.mxu0 0
  %191 = vmatprep.subr.bf16.mxu0 0
  %192 = vmatpush1.bf16.msra.mxu0 0
  %193 = vmatprep.subr.bf16.mxu0 0
  %194 = vmatpush1.bf16.msra.mxu0 0
  %195 = vmatprep.subr.bf16.mxu0 0
  %196 = vmatpush1.bf16.msra.mxu0 0
  %197 = vmatprep.subr.bf16.mxu0 0
  %198 = vmatpush1.bf16.msra.mxu0 0
  %199 = vmatprep.subr.bf16.mxu0 0
  %200 = vmatpush1.bf16.msra.mxu0 0
  %201 = vmatprep.subr.bf16.mxu0 0
  %202 = vmatpush1.bf16.msra.mxu0 0
  %203 = vmatprep.mubr.bf16.mxu0 0
  %204 = vmatmul.mubr.bf16.gmra.mrb[0].mxu0 %v169
  %v205 = vpop.f32.mrb[0].mxu0
  %v206 = vadd.f32 0.0, %v205
  %v207 = vpop.f32.mrb[0].mxu0
  %v208 = vpop.f32.mrb[0].mxu0
  %v209 = vadd.f32 0.0, %v208
  %v210 = vpop.f32.mrb[0].mxu0
  %211 = vdwg.mxu0
  %v212 = vpack.c.bf16 %v209, %v206
  %213 = vmatprep.subr.bf16.mxu0 0
  %214 = vmatpush1.bf16.msra.mxu0 %v212
  %215 = vmatprep.subr.bf16.mxu0 0
  %216 = vmatpush1.bf16.msra.mxu0 0
  %217 = vmatprep.subr.bf16.mxu0 0
  %218 = vmatpush1.bf16.msra.mxu0 0
  %219 = vmatprep.subr.bf16.mxu0 0
  %220 = vmatpush1.bf16.msra.mxu0 0
  %221 = vmatprep.subr.bf16.mxu0 0
  %222 = vmatpush1.bf16.msra.mxu0 0
  %223 = vmatprep.subr.bf16.mxu0 0
  %224 = vmatpush1.bf16.msra.mxu0 0
  %225 = vmatprep.subr.bf16.mxu0 0
  %226 = vmatpush1.bf16.msra.mxu0 0
  %227 = vmatprep.subr.bf16.mxu0 0
  %228 = vmatpush1.bf16.msra.mxu0 0
  %229 = vmatprep.subr.bf16.mxu0 0
  %230 = vmatpush1.bf16.msra.mxu0 0
  %231 = vmatprep.subr.bf16.mxu0 0
  %232 = vmatpush1.bf16.msra.mxu0 0
  %233 = vmatprep.subr.bf16.mxu0 0
  %234 = vmatpush1.bf16.msra.mxu0 0
  %235 = vmatprep.subr.bf16.mxu0 0
  %236 = vmatpush1.bf16.msra.mxu0 0
  %237 = vmatprep.subr.bf16.mxu0 0
  %238 = vmatpush1.bf16.msra.mxu0 0
  %239 = vmatprep.subr.bf16.mxu0 0
  %240 = vmatpush1.bf16.msra.mxu0 0
  %241 = vmatprep.subr.bf16.mxu0 0
  %242 = vmatpush1.bf16.msra.mxu0 0
  %243 = vmatprep.subr.bf16.mxu0 0
  %244 = vmatpush1.bf16.msra.mxu0 0
  %245 = vmatprep.mubr.bf16.mxu0 0
  %246 = vmatmul.mubr.bf16.gmra.mrb[0].mxu0 %v169
  %v247 = vpop.f32.mrb[0].mxu0
  %v248 = vadd.f32 0.0, %v247
  %v249 = vpop.f32.mrb[0].mxu0
  %v250 = vpop.f32.mrb[0].mxu0
  %v251 = vadd.f32 0.0, %v250
  %v252 = vpop.f32.mrb[0].mxu0
  %253 = vdwg.mxu0
  %v254 = vmul.f32 %v248, 2.0
  %v255 = vmul.f32 %v251, 2.0
  %v256 = vpack.c.bf16 %v255, %v254
  %v257 = vld [vmem:[%s0] sm:$0xff]
  %v258 = vld [vmem:[%s0 + $0x8] sm:$0xff]
  %v263 = vunpack.c.l.b16 %v28
  %v264 = vunpack.c.l.b16 %v29
  %v265 = vunpack.c.l.b16 %v30
  %v266 = vunpack.c.l.b16 %v31
  %v267 = vpack.c.b16 %v264, %v263
  %v268 = vpack.c.b16 %v266, %v265
  %vm271 = vcmask 261120
  %v273 = vsel %vm271, 0, 0
  %275 = vmatprep.subr.bf16.mxu0 0
  %276 = vmatpush1.bf16.msra.mxu0 %v267
  %277 = vmatprep.subr.bf16.mxu0 0
  %278 = vmatpush1.bf16.msra.mxu0 %v268
  %279 = vmatprep.subr.bf16.mxu0 0
  %280 = vmatpush1.bf16.msra.mxu0 0
  %281 = vmatprep.subr.bf16.mxu0 0
  %282 = vmatpush1.bf16.msra.mxu0 0
  %283 = vmatprep.subr.bf16.mxu0 0
  %284 = vmatpush1.bf16.msra.mxu0 0
  %285 = vmatprep.subr.bf16.mxu0 0
  %286 = vmatpush1.bf16.msra.mxu0 0
  %287 = vmatprep.subr.bf16.mxu0 0
  %288 = vmatpush1.bf16.msra.mxu0 0
  %289 = vmatprep.subr.bf16.mxu0 0
  %290 = vmatpush1.bf16.msra.mxu0 0
  %291 = vmatprep.subr.bf16.mxu0 0
  %292 = vmatpush1.bf16.msra.mxu0 0
  %293 = vmatprep.subr.bf16.mxu0 0
  %294 = vmatpush1.bf16.msra.mxu0 0
  %295 = vmatprep.subr.bf16.mxu0 0
  %296 = vmatpush1.bf16.msra.mxu0 0
  %297 = vmatprep.subr.bf16.mxu0 0
  %298 = vmatpush1.bf16.msra.mxu0 0
  %299 = vmatprep.subr.bf16.mxu0 0
  %300 = vmatpush1.bf16.msra.mxu0 0
  %301 = vmatprep.subr.bf16.mxu0 0
  %302 = vmatpush1.bf16.msra.mxu0 0
  %303 = vmatprep.subr.bf16.mxu0 0
  %304 = vmatpush1.bf16.msra.mxu0 0
  %305 = vmatprep.subr.bf16.mxu0 0
  %306 = vmatpush1.bf16.msra.mxu0 0
  %307 = vmatprep.mubr.bf16.mxu0 0
  %308 = vmatmul.mubr.bf16.gmra.mrb[0].mxu0 %v273
  %v309 = vpop.f32.mrb[0].mxu0
  %v310 = vadd.f32 0.0, %v309
  %v311 = vpop.f32.mrb[0].mxu0
  %v312 = vpop.f32.mrb[0].mxu0
  %v313 = vadd.f32 0.0, %v312
  %v314 = vpop.f32.mrb[0].mxu0
  %315 = vdwg.mxu0
  %v316 = vadd.f32 %v257, %v310
  %v317 = vadd.f32 %v258, %v313
  %v322 = vunpack.c.l.b16 %v32
  %v323 = vunpack.c.l.b16 %v33
  %v324 = vunpack.c.l.b16 %v34
  %v325 = vunpack.c.l.b16 %v35
  %v326 = vpack.c.b16 %v323, %v322
  %v327 = vpack.c.b16 %v325, %v324
  %v331 = vsel %vm271, %v118, 0
  %333 = vmatprep.subr.bf16.mxu0 0
  %334 = vmatpush1.bf16.msra.mxu0 %v326
  %335 = vmatprep.subr.bf16.mxu0 0
  %336 = vmatpush1.bf16.msra.mxu0 %v327
  %337 = vmatprep.subr.bf16.mxu0 0
  %338 = vmatpush1.bf16.msra.mxu0 0
  %339 = vmatprep.subr.bf16.mxu0 0
  %340 = vmatpush1.bf16.msra.mxu0 0
  %341 = vmatprep.subr.bf16.mxu0 0
  %342 = vmatpush1.bf16.msra.mxu0 0
  %343 = vmatprep.subr.bf16.mxu0 0
  %344 = vmatpush1.bf16.msra.mxu0 0
  %345 = vmatprep.subr.bf16.mxu0 0
  %346 = vmatpush1.bf16.msra.mxu0 0
  %347 = vmatprep.subr.bf16.mxu0 0
  %348 = vmatpush1.bf16.msra.mxu0 0
  %349 = vmatprep.subr.bf16.mxu0 0
  %350 = vmatpush1.bf16.msra.mxu0 0
  %351 = vmatprep.subr.bf16.mxu0 0
  %352 = vmatpush1.bf16.msra.mxu0 0
  %353 = vmatprep.subr.bf16.mxu0 0
  %354 = vmatpush1.bf16.msra.mxu0 0
  %355 = vmatprep.subr.bf16.mxu0 0
  %356 = vmatpush1.bf16.msra.mxu0 0
  %357 = vmatprep.subr.bf16.mxu0 0
  %358 = vmatpush1.bf16.msra.mxu0 0
  %359 = vmatprep.subr.bf16.mxu0 0
  %360 = vmatpush1.bf16.msra.mxu0 0
  %361 = vmatprep.subr.bf16.mxu0 0
  %362 = vmatpush1.bf16.msra.mxu0 0
  %363 = vmatprep.subr.bf16.mxu0 0
  %364 = vmatpush1.bf16.msra.mxu0 0
  %365 = vmatprep.mubr.bf16.mxu0 0
  %366 = vmatmul.mubr.bf16.gmra.mrb[0].mxu0 %v331
  %v367 = vpop.f32.mrb[0].mxu0
  %v368 = vadd.f32 0.0, %v367
  %v369 = vpop.f32.mrb[0].mxu0
  %v370 = vpop.f32.mrb[0].mxu0
  %v371 = vadd.f32 0.0, %v370
  %v372 = vpop.f32.mrb[0].mxu0
  %373 = vdwg.mxu0
  %v374 = vadd.f32 %v316, %v368
  %v375 = vadd.f32 %v317, %v371
  %v380 = vunpack.c.l.b16 %v36
  %v381 = vunpack.c.l.b16 %v37
  %v382 = vunpack.c.l.b16 %v38
  %v383 = vunpack.c.l.b16 %v39
  %v384 = vpack.c.b16 %v381, %v380
  %v385 = vpack.c.b16 %v383, %v382
  %v389 = vsel %vm271, %v162, 0
  %391 = vmatprep.subr.bf16.mxu0 0
  %392 = vmatpush1.bf16.msra.mxu0 %v384
  %393 = vmatprep.subr.bf16.mxu0 0
  %394 = vmatpush1.bf16.msra.mxu0 %v385
  %395 = vmatprep.subr.bf16.mxu0 0
  %396 = vmatpush1.bf16.msra.mxu0 0
  %397 = vmatprep.subr.bf16.mxu0 0
  %398 = vmatpush1.bf16.msra.mxu0 0
  %399 = vmatprep.subr.bf16.mxu0 0
  %400 = vmatpush1.bf16.msra.mxu0 0
  %401 = vmatprep.subr.bf16.mxu0 0
  %402 = vmatpush1.bf16.msra.mxu0 0
  %403 = vmatprep.subr.bf16.mxu0 0
  %404 = vmatpush1.bf16.msra.mxu0 0
  %405 = vmatprep.subr.bf16.mxu0 0
  %406 = vmatpush1.bf16.msra.mxu0 0
  %407 = vmatprep.subr.bf16.mxu0 0
  %408 = vmatpush1.bf16.msra.mxu0 0
  %409 = vmatprep.subr.bf16.mxu0 0
  %410 = vmatpush1.bf16.msra.mxu0 0
  %411 = vmatprep.subr.bf16.mxu0 0
  %412 = vmatpush1.bf16.msra.mxu0 0
  %413 = vmatprep.subr.bf16.mxu0 0
  %414 = vmatpush1.bf16.msra.mxu0 0
  %415 = vmatprep.subr.bf16.mxu0 0
  %416 = vmatpush1.bf16.msra.mxu0 0
  %417 = vmatprep.subr.bf16.mxu0 0
  %418 = vmatpush1.bf16.msra.mxu0 0
  %419 = vmatprep.subr.bf16.mxu0 0
  %420 = vmatpush1.bf16.msra.mxu0 0
  %421 = vmatprep.subr.bf16.mxu0 0
  %422 = vmatpush1.bf16.msra.mxu0 0
  %423 = vmatprep.mubr.bf16.mxu0 0
  %424 = vmatmul.mubr.bf16.gmra.mrb[0].mxu0 %v389
  %v425 = vpop.f32.mrb[0].mxu0
  %v426 = vadd.f32 0.0, %v425
  %v427 = vpop.f32.mrb[0].mxu0
  %v428 = vpop.f32.mrb[0].mxu0
  %v429 = vadd.f32 0.0, %v428
  %v430 = vpop.f32.mrb[0].mxu0
  %431 = vdwg.mxu0
  %v432 = vadd.f32 %v374, %v426
  %v433 = vadd.f32 %v375, %v429
  %v438 = vunpack.c.l.b16 %v40
  %v439 = vunpack.c.l.b16 %v41
  %v440 = vunpack.c.l.b16 %v42
  %v441 = vunpack.c.l.b16 %v43
  %v442 = vpack.c.b16 %v439, %v438
  %v443 = vpack.c.b16 %v441, %v440
  %v447 = vsel %vm271, %v212, 0
  %449 = vmatprep.subr.bf16.mxu0 0
  %450 = vmatpush1.bf16.msra.mxu0 %v442
  %451 = vmatprep.subr.bf16.mxu0 0
  %452 = vmatpush1.bf16.msra.mxu0 %v443
  %453 = vmatprep.subr.bf16.mxu0 0
  %454 = vmatpush1.bf16.msra.mxu0 0
  %455 = vmatprep.subr.bf16.mxu0 0
  %456 = vmatpush1.bf16.msra.mxu0 0
  %457 = vmatprep.subr.bf16.mxu0 0
  %458 = vmatpush1.bf16.msra.mxu0 0
  %459 = vmatprep.subr.bf16.mxu0 0
  %460 = vmatpush1.bf16.msra.mxu0 0
  %461 = vmatprep.subr.bf16.mxu0 0
  %462 = vmatpush1.bf16.msra.mxu0 0
  %463 = vmatprep.subr.bf16.mxu0 0
  %464 = vmatpush1.bf16.msra.mxu0 0
  %465 = vmatprep.subr.bf16.mxu0 0
  %466 = vmatpush1.bf16.msra.mxu0 0
  %467 = vmatprep.subr.bf16.mxu0 0
  %468 = vmatpush1.bf16.msra.mxu0 0
  %469 = vmatprep.subr.bf16.mxu0 0
  %470 = vmatpush1.bf16.msra.mxu0 0
  %471 = vmatprep.subr.bf16.mxu0 0
  %472 = vmatpush1.bf16.msra.mxu0 0
  %473 = vmatprep.subr.bf16.mxu0 0
  %474 = vmatpush1.bf16.msra.mxu0 0
  %475 = vmatprep.subr.bf16.mxu0 0
  %476 = vmatpush1.bf16.msra.mxu0 0
  %477 = vmatprep.subr.bf16.mxu0 0
  %478 = vmatpush1.bf16.msra.mxu0 0
  %479 = vmatprep.subr.bf16.mxu0 0
  %480 = vmatpush1.bf16.msra.mxu0 0
  %481 = vmatprep.mubr.bf16.mxu0 0
  %482 = vmatmul.mubr.bf16.gmra.mrb[0].mxu0 %v447
  %v483 = vpop.f32.mrb[0].mxu0
  %v484 = vadd.f32 0.0, %v483
  %v485 = vpop.f32.mrb[0].mxu0
  %v486 = vpop.f32.mrb[0].mxu0
  %v487 = vadd.f32 0.0, %v486
  %v488 = vpop.f32.mrb[0].mxu0
  %489 = vdwg.mxu0
  %v490 = vadd.f32 %v432, %v484
  %v491 = vadd.f32 %v433, %v487
  %v496 = vunpack.c.l.b16 %v44
  %v497 = vunpack.c.l.b16 %v45
  %v498 = vunpack.c.l.b16 %v46
  %v499 = vunpack.c.l.b16 %v47
  %v500 = vpack.c.b16 %v497, %v496
  %v501 = vpack.c.b16 %v499, %v498
  %v505 = vsel %vm271, %v256, 0
  %507 = vmatprep.subr.bf16.mxu0 0
  %508 = vmatpush1.bf16.msra.mxu0 %v500
  %509 = vmatprep.subr.bf16.mxu0 0
  %510 = vmatpush1.bf16.msra.mxu0 %v501
  %511 = vmatprep.subr.bf16.mxu0 0
  %512 = vmatpush1.bf16.msra.mxu0 0
  %513 = vmatprep.subr.bf16.mxu0 0
  %514 = vmatpush1.bf16.msra.mxu0 0
  %515 = vmatprep.subr.bf16.mxu0 0
  %516 = vmatpush1.bf16.msra.mxu0 0
  %517 = vmatprep.subr.bf16.mxu0 0
  %518 = vmatpush1.bf16.msra.mxu0 0
  %519 = vmatprep.subr.bf16.mxu0 0
  %520 = vmatpush1.bf16.msra.mxu0 0
  %521 = vmatprep.subr.bf16.mxu0 0
  %522 = vmatpush1.bf16.msra.mxu0 0
  %523 = vmatprep.subr.bf16.mxu0 0
  %524 = vmatpush1.bf16.msra.mxu0 0
  %525 = vmatprep.subr.bf16.mxu0 0
  %526 = vmatpush1.bf16.msra.mxu0 0
  %527 = vmatprep.subr.bf16.mxu0 0
  %528 = vmatpush1.bf16.msra.mxu0 0
  %529 = vmatprep.subr.bf16.mxu0 0
  %530 = vmatpush1.bf16.msra.mxu0 0
  %531 = vmatprep.subr.bf16.mxu0 0
  %532 = vmatpush1.bf16.msra.mxu0 0
  %533 = vmatprep.subr.bf16.mxu0 0
  %534 = vmatpush1.bf16.msra.mxu0 0
  %535 = vmatprep.subr.bf16.mxu0 0
  %536 = vmatpush1.bf16.msra.mxu0 0
  %537 = vmatprep.subr.bf16.mxu0 0
  %538 = vmatpush1.bf16.msra.mxu0 0
  %539 = vmatprep.mubr.bf16.mxu0 0
  %540 = vmatmul.mubr.bf16.gmra.mrb[0].mxu0 %v505
  %v541 = vpop.f32.mrb[0].mxu0
  %v542 = vadd.f32 0.0, %v541
  %v543 = vpop.f32.mrb[0].mxu0
  %v544 = vpop.f32.mrb[0].mxu0
  %v545 = vadd.f32 0.0, %v544
  %v546 = vpop.f32.mrb[0].mxu0
  %547 = vdwg.mxu0
  %v548 = vadd.f32 %v490, %v542
  %v549 = vadd.f32 %v491, %v545
  %v550 = vxor.u32 %v548, 2147483648
  %v551 = vxor.u32 %v549, 2147483648
  %v552 = vmul.f32 %v550, 1.442695
  %v553 = vpow.pop %v552
  %v554 = vmul.f32 %v551, 1.442695
  %v555 = vpow.pop %v554
  %v556 = vadd.f32 %v553, 1.0
  %v557 = vadd.f32 %v555, 1.0
  %v558 = vrcp.pop %v556
  %v559 = vmul.f32 1.0, %v558
  %v560 = vrcp.pop %v557
  %v561 = vmul.f32 1.0, %v560
  %v562 = vmul.f32 %v559, 0.0
  %v563 = vmul.f32 %v561, 0.0
  %v564 = vpack.c.bf16 %v563, %v562
  %565 = vmatprep.subr.bf16.mxu0 0
  %566 = vmatpush1.bf16.msra.mxu0 %v564
  %567 = vmatprep.subr.bf16.mxu0 0
  %568 = vmatpush1.bf16.msra.mxu0 0
  %569 = vmatprep.subr.bf16.mxu0 0
  %570 = vmatpush1.bf16.msra.mxu0 0
  %571 = vmatprep.subr.bf16.mxu0 0
  %572 = vmatpush1.bf16.msra.mxu0 0
  %573 = vmatprep.subr.bf16.mxu0 0
  %574 = vmatpush1.bf16.msra.mxu0 0
  %575 = vmatprep.subr.bf16.mxu0 0
  %576 = vmatpush1.bf16.msra.mxu0 0
  %577 = vmatprep.subr.bf16.mxu0 0
  %578 = vmatpush1.bf16.msra.mxu0 0
  %579 = vmatprep.subr.bf16.mxu0 0
  %580 = vmatpush1.bf16.msra.mxu0 0
  %581 = vmatprep.subr.bf16.mxu0 0
  %582 = vmatpush1.bf16.msra.mxu0 0
  %583 = vmatprep.subr.bf16.mxu0 0
  %584 = vmatpush1.bf16.msra.mxu0 0
  %585 = vmatprep.subr.bf16.mxu0 0
  %586 = vmatpush1.bf16.msra.mxu0 0
  %587 = vmatprep.subr.bf16.mxu0 0
  %588 = vmatpush1.bf16.msra.mxu0 0
  %589 = vmatprep.subr.bf16.mxu0 0
  %590 = vmatpush1.bf16.msra.mxu0 0
  %591 = vmatprep.subr.bf16.mxu0 0
  %592 = vmatpush1.bf16.msra.mxu0 0
  %593 = vmatprep.subr.bf16.mxu0 0
  %594 = vmatpush1.bf16.msra.mxu0 0
  %595 = vmatprep.subr.bf16.mxu0 0
  %596 = vmatpush1.bf16.msra.mxu0 0
  %597 = vmatprep.mubr.bf16.mxu0 0
  %598 = vmatmul.mubr.bf16.gmra.mrb[0].mxu0 %v75
  %v599 = vpop.f32.mrb[0].mxu0
  %v600 = vadd.f32 0.0, %v599
  %v601 = vpop.f32.mrb[0].mxu0
  %v602 = vpop.f32.mrb[0].mxu0
  %v603 = vadd.f32 0.0, %v602
  %v604 = vpop.f32.mrb[0].mxu0
  %605 = vdwg.mxu0
  %v606 = vpack.c.bf16 %v603, %v600
  %607 = vmatprep.subr.bf16.mxu0 0
  %608 = vmatpush1.bf16.msra.mxu0 %v606
  %609 = vmatprep.subr.bf16.mxu0 0
  %610 = vmatpush1.bf16.msra.mxu0 0
  %611 = vmatprep.subr.bf16.mxu0 0
  %612 = vmatpush1.bf16.msra.mxu0 0
  %613 = vmatprep.subr.bf16.mxu0 0
  %614 = vmatpush1.bf16.msra.mxu0 0
  %615 = vmatprep.subr.bf16.mxu0 0
  %616 = vmatpush1.bf16.msra.mxu0 0
  %617 = vmatprep.subr.bf16.mxu0 0
  %618 = vmatpush1.bf16.msra.mxu0 0
  %619 = vmatprep.subr.bf16.mxu0 0
  %620 = vmatpush1.bf16.msra.mxu0 0
  %621 = vmatprep.subr.bf16.mxu0 0
  %622 = vmatpush1.bf16.msra.mxu0 0
  %623 = vmatprep.subr.bf16.mxu0 0
  %624 = vmatpush1.bf16.msra.mxu0 0
  %625 = vmatprep.subr.bf16.mxu0 0
  %626 = vmatpush1.bf16.msra.mxu0 0
  %627 = vmatprep.subr.bf16.mxu0 0
  %628 = vmatpush1.bf16.msra.mxu0 0
  %629 = vmatprep.subr.bf16.mxu0 0
  %630 = vmatpush1.bf16.msra.mxu0 0
  %631 = vmatprep.subr.bf16.mxu0 0
  %632 = vmatpush1.bf16.msra.mxu0 0
  %633 = vmatprep.subr.bf16.mxu0 0
  %634 = vmatpush1.bf16.msra.mxu0 0
  %635 = vmatprep.subr.bf16.mxu0 0
  %636 = vmatpush1.bf16.msra.mxu0 0
  %637 = vmatprep.subr.bf16.mxu0 0
  %638 = vmatpush1.bf16.msra.mxu0 0
  %639 = vmatprep.mubr.bf16.mxu0 0
  %640 = vmatmul.mubr.bf16.gmra.mrb[0].mxu0 %v75
  %v641 = vpop.f32.mrb[0].mxu0
  %v642 = vadd.f32 0.0, %v641
  %v643 = vpop.f32.mrb[0].mxu0
  %v644 = vpop.f32.mrb[0].mxu0
  %v645 = vadd.f32 0.0, %v644
  %v646 = vpop.f32.mrb[0].mxu0
  %647 = vdwg.mxu0
  %v648 = vmul.f32 %v642, 2.0
  %v649 = vmul.f32 %v645, 2.0
  %v650 = vsub.f32 %v648, %v562
  %v651 = vsub.f32 %v649, %v563
  %v652 = vpack.c.bf16 %v651, %v650
  %653 = vmatprep.subr.bf16.mxu0 0
  %654 = vmatpush1.bf16.msra.mxu0 %v564
  %655 = vmatprep.subr.bf16.mxu0 0
  %656 = vmatpush1.bf16.msra.mxu0 0
  %657 = vmatprep.subr.bf16.mxu0 0
  %658 = vmatpush1.bf16.msra.mxu0 0
  %659 = vmatprep.subr.bf16.mxu0 0
  %660 = vmatpush1.bf16.msra.mxu0 0
  %661 = vmatprep.subr.bf16.mxu0 0
  %662 = vmatpush1.bf16.msra.mxu0 0
  %663 = vmatprep.subr.bf16.mxu0 0
  %664 = vmatpush1.bf16.msra.mxu0 0
  %665 = vmatprep.subr.bf16.mxu0 0
  %666 = vmatpush1.bf16.msra.mxu0 0
  %667 = vmatprep.subr.bf16.mxu0 0
  %668 = vmatpush1.bf16.msra.mxu0 0
  %669 = vmatprep.subr.bf16.mxu0 0
  %670 = vmatpush1.bf16.msra.mxu0 0
  %671 = vmatprep.subr.bf16.mxu0 0
  %672 = vmatpush1.bf16.msra.mxu0 0
  %673 = vmatprep.subr.bf16.mxu0 0
  %674 = vmatpush1.bf16.msra.mxu0 0
  %675 = vmatprep.subr.bf16.mxu0 0
  %676 = vmatpush1.bf16.msra.mxu0 0
  %677 = vmatprep.subr.bf16.mxu0 0
  %678 = vmatpush1.bf16.msra.mxu0 0
  %679 = vmatprep.subr.bf16.mxu0 0
  %680 = vmatpush1.bf16.msra.mxu0 0
  %681 = vmatprep.subr.bf16.mxu0 0
  %682 = vmatpush1.bf16.msra.mxu0 0
  %683 = vmatprep.subr.bf16.mxu0 0
  %684 = vmatpush1.bf16.msra.mxu0 0
  %685 = vmatprep.mubr.bf16.mxu0 0
  %686 = vmatmul.mubr.bf16.gmra.mrb[0].mxu0 %v169
  %v687 = vpop.f32.mrb[0].mxu0
  %v688 = vadd.f32 0.0, %v687
  %v689 = vpop.f32.mrb[0].mxu0
  %v690 = vpop.f32.mrb[0].mxu0
  %v691 = vadd.f32 0.0, %v690
  %v692 = vpop.f32.mrb[0].mxu0
  %693 = vdwg.mxu0
  %v694 = vpack.c.bf16 %v691, %v688
  %695 = vmatprep.subr.bf16.mxu0 0
  %696 = vmatpush1.bf16.msra.mxu0 %v694
  %697 = vmatprep.subr.bf16.mxu0 0
  %698 = vmatpush1.bf16.msra.mxu0 0
  %699 = vmatprep.subr.bf16.mxu0 0
  %700 = vmatpush1.bf16.msra.mxu0 0
  %701 = vmatprep.subr.bf16.mxu0 0
  %702 = vmatpush1.bf16.msra.mxu0 0
  %703 = vmatprep.subr.bf16.mxu0 0
  %704 = vmatpush1.bf16.msra.mxu0 0
  %705 = vmatprep.subr.bf16.mxu0 0
  %706 = vmatpush1.bf16.msra.mxu0 0
  %707 = vmatprep.subr.bf16.mxu0 0
  %708 = vmatpush1.bf16.msra.mxu0 0
  %709 = vmatprep.subr.bf16.mxu0 0
  %710 = vmatpush1.bf16.msra.mxu0 0
  %711 = vmatprep.subr.bf16.mxu0 0
  %712 = vmatpush1.bf16.msra.mxu0 0
  %713 = vmatprep.subr.bf16.mxu0 0
  %714 = vmatpush1.bf16.msra.mxu0 0
  %715 = vmatprep.subr.bf16.mxu0 0
  %716 = vmatpush1.bf16.msra.mxu0 0
  %717 = vmatprep.subr.bf16.mxu0 0
  %718 = vmatpush1.bf16.msra.mxu0 0
  %719 = vmatprep.subr.bf16.mxu0 0
  %720 = vmatpush1.bf16.msra.mxu0 0
  %721 = vmatprep.subr.bf16.mxu0 0
  %722 = vmatpush1.bf16.msra.mxu0 0
  %723 = vmatprep.subr.bf16.mxu0 0
  %724 = vmatpush1.bf16.msra.mxu0 0
  %725 = vmatprep.subr.bf16.mxu0 0
  %726 = vmatpush1.bf16.msra.mxu0 0
  %727 = vmatprep.mubr.bf16.mxu0 0
  %728 = vmatmul.mubr.bf16.gmra.mrb[0].mxu0 %v169
  %v729 = vpop.f32.mrb[0].mxu0
  %v730 = vadd.f32 0.0, %v729
  %v731 = vpop.f32.mrb[0].mxu0
  %v732 = vpop.f32.mrb[0].mxu0
  %v733 = vadd.f32 0.0, %v732
  %v734 = vpop.f32.mrb[0].mxu0
  %735 = vdwg.mxu0
  %v736 = vmul.f32 %v730, 2.0
  %v737 = vmul.f32 %v733, 2.0
  %v738 = vsub.f32 %v736, %v562
  %v739 = vsub.f32 %v737, %v563
  %v740 = vpack.c.bf16 %v739, %v738
  %v741 = vld [vmem:[%s1] sm:$0xff]
  %v742 = vld [vmem:[%s1 + $0x8] sm:$0xff]
  %v747 = vunpack.c.l.b16 %v48
  %v748 = vunpack.c.l.b16 %v49
  %v749 = vunpack.c.l.b16 %v50
  %v750 = vunpack.c.l.b16 %v51
  %v751 = vpack.c.b16 %v748, %v747
  %v752 = vpack.c.b16 %v750, %v749
  %v756 = vsel %vm271, %v564, 0
  %758 = vmatprep.subr.bf16.mxu0 0
  %759 = vmatpush1.bf16.msra.mxu0 %v751
  %760 = vmatprep.subr.bf16.mxu0 0
  %761 = vmatpush1.bf16.msra.mxu0 %v752
  %762 = vmatprep.subr.bf16.mxu0 0
  %763 = vmatpush1.bf16.msra.mxu0 0
  %764 = vmatprep.subr.bf16.mxu0 0
  %765 = vmatpush1.bf16.msra.mxu0 0
  %766 = vmatprep.subr.bf16.mxu0 0
  %767 = vmatpush1.bf16.msra.mxu0 0
  %768 = vmatprep.subr.bf16.mxu0 0
  %769 = vmatpush1.bf16.msra.mxu0 0
  %770 = vmatprep.subr.bf16.mxu0 0
  %771 = vmatpush1.bf16.msra.mxu0 0
  %772 = vmatprep.subr.bf16.mxu0 0
  %773 = vmatpush1.bf16.msra.mxu0 0
  %774 = vmatprep.subr.bf16.mxu0 0
  %775 = vmatpush1.bf16.msra.mxu0 0
  %776 = vmatprep.subr.bf16.mxu0 0
  %777 = vmatpush1.bf16.msra.mxu0 0
  %778 = vmatprep.subr.bf16.mxu0 0
  %779 = vmatpush1.bf16.msra.mxu0 0
  %780 = vmatprep.subr.bf16.mxu0 0
  %781 = vmatpush1.bf16.msra.mxu0 0
  %782 = vmatprep.subr.bf16.mxu0 0
  %783 = vmatpush1.bf16.msra.mxu0 0
  %784 = vmatprep.subr.bf16.mxu0 0
  %785 = vmatpush1.bf16.msra.mxu0 0
  %786 = vmatprep.subr.bf16.mxu0 0
  %787 = vmatpush1.bf16.msra.mxu0 0
  %788 = vmatprep.subr.bf16.mxu0 0
  %789 = vmatpush1.bf16.msra.mxu0 0
  %790 = vmatprep.mubr.bf16.mxu0 0
  %791 = vmatmul.mubr.bf16.gmra.mrb[0].mxu0 %v756
  %v792 = vpop.f32.mrb[0].mxu0
  %v793 = vadd.f32 0.0, %v792
  %v794 = vpop.f32.mrb[0].mxu0
  %v795 = vpop.f32.mrb[0].mxu0
  %v796 = vadd.f32 0.0, %v795
  %v797 = vpop.f32.mrb[0].mxu0
  %798 = vdwg.mxu0
  %v799 = vadd.f32 %v741, %v793
  %v800 = vadd.f32 %v742, %v796
  %v805 = vunpack.c.l.b16 %v52
  %v806 = vunpack.c.l.b16 %v53
  %v807 = vunpack.c.l.b16 %v54
  %v808 = vunpack.c.l.b16 %v55
  %v809 = vpack.c.b16 %v806, %v805
  %v810 = vpack.c.b16 %v808, %v807
  %v814 = vsel %vm271, %v606, 0
  %816 = vmatprep.subr.bf16.mxu0 0
  %817 = vmatpush1.bf16.msra.mxu0 %v809
  %818 = vmatprep.subr.bf16.mxu0 0
  %819 = vmatpush1.bf16.msra.mxu0 %v810
  %820 = vmatprep.subr.bf16.mxu0 0
  %821 = vmatpush1.bf16.msra.mxu0 0
  %822 = vmatprep.subr.bf16.mxu0 0
  %823 = vmatpush1.bf16.msra.mxu0 0
  %824 = vmatprep.subr.bf16.mxu0 0
  %825 = vmatpush1.bf16.msra.mxu0 0
  %826 = vmatprep.subr.bf16.mxu0 0
  %827 = vmatpush1.bf16.msra.mxu0 0
  %828 = vmatprep.subr.bf16.mxu0 0
  %829 = vmatpush1.bf16.msra.mxu0 0
  %830 = vmatprep.subr.bf16.mxu0 0
  %831 = vmatpush1.bf16.msra.mxu0 0
  %832 = vmatprep.subr.bf16.mxu0 0
  %833 = vmatpush1.bf16.msra.mxu0 0
  %834 = vmatprep.subr.bf16.mxu0 0
  %835 = vmatpush1.bf16.msra.mxu0 0
  %836 = vmatprep.subr.bf16.mxu0 0
  %837 = vmatpush1.bf16.msra.mxu0 0
  %838 = vmatprep.subr.bf16.mxu0 0
  %839 = vmatpush1.bf16.msra.mxu0 0
  %840 = vmatprep.subr.bf16.mxu0 0
  %841 = vmatpush1.bf16.msra.mxu0 0
  %842 = vmatprep.subr.bf16.mxu0 0
  %843 = vmatpush1.bf16.msra.mxu0 0
  %844 = vmatprep.subr.bf16.mxu0 0
  %845 = vmatpush1.bf16.msra.mxu0 0
  %846 = vmatprep.subr.bf16.mxu0 0
  %847 = vmatpush1.bf16.msra.mxu0 0
  %848 = vmatprep.mubr.bf16.mxu0 0
  %849 = vmatmul.mubr.bf16.gmra.mrb[0].mxu0 %v814
  %v850 = vpop.f32.mrb[0].mxu0
  %v851 = vadd.f32 0.0, %v850
  %v852 = vpop.f32.mrb[0].mxu0
  %v853 = vpop.f32.mrb[0].mxu0
  %v854 = vadd.f32 0.0, %v853
  %v855 = vpop.f32.mrb[0].mxu0
  %856 = vdwg.mxu0
  %v857 = vadd.f32 %v799, %v851
  %v858 = vadd.f32 %v800, %v854
  %v863 = vunpack.c.l.b16 %v56
  %v864 = vunpack.c.l.b16 %v57
  %v865 = vunpack.c.l.b16 %v58
  %v866 = vunpack.c.l.b16 %v59
  %v867 = vpack.c.b16 %v864, %v863
  %v868 = vpack.c.b16 %v866, %v865
  %v872 = vsel %vm271, %v652, 0
  %874 = vmatprep.subr.bf16.mxu0 0
  %875 = vmatpush1.bf16.msra.mxu0 %v867
  %876 = vmatprep.subr.bf16.mxu0 0
  %877 = vmatpush1.bf16.msra.mxu0 %v868
  %878 = vmatprep.subr.bf16.mxu0 0
  %879 = vmatpush1.bf16.msra.mxu0 0
  %880 = vmatprep.subr.bf16.mxu0 0
  %881 = vmatpush1.bf16.msra.mxu0 0
  %882 = vmatprep.subr.bf16.mxu0 0
  %883 = vmatpush1.bf16.msra.mxu0 0
  %884 = vmatprep.subr.bf16.mxu0 0
  %885 = vmatpush1.bf16.msra.mxu0 0
  %886 = vmatprep.subr.bf16.mxu0 0
  %887 = vmatpush1.bf16.msra.mxu0 0
  %888 = vmatprep.subr.bf16.mxu0 0
  %889 = vmatpush1.bf16.msra.mxu0 0
  %890 = vmatprep.subr.bf16.mxu0 0
  %891 = vmatpush1.bf16.msra.mxu0 0
  %892 = vmatprep.subr.bf16.mxu0 0
  %893 = vmatpush1.bf16.msra.mxu0 0
  %894 = vmatprep.subr.bf16.mxu0 0
  %895 = vmatpush1.bf16.msra.mxu0 0
  %896 = vmatprep.subr.bf16.mxu0 0
  %897 = vmatpush1.bf16.msra.mxu0 0
  %898 = vmatprep.subr.bf16.mxu0 0
  %899 = vmatpush1.bf16.msra.mxu0 0
  %900 = vmatprep.subr.bf16.mxu0 0
  %901 = vmatpush1.bf16.msra.mxu0 0
  %902 = vmatprep.subr.bf16.mxu0 0
  %903 = vmatpush1.bf16.msra.mxu0 0
  %904 = vmatprep.subr.bf16.mxu0 0
  %905 = vmatpush1.bf16.msra.mxu0 0
  %906 = vmatprep.mubr.bf16.mxu0 0
  %907 = vmatmul.mubr.bf16.gmra.mrb[0].mxu0 %v872
  %v908 = vpop.f32.mrb[0].mxu0
  %v909 = vadd.f32 0.0, %v908
  %v910 = vpop.f32.mrb[0].mxu0
  %v911 = vpop.f32.mrb[0].mxu0
  %v912 = vadd.f32 0.0, %v911
  %v913 = vpop.f32.mrb[0].mxu0
  %914 = vdwg.mxu0
  %v915 = vadd.f32 %v857, %v909
  %v916 = vadd.f32 %v858, %v912
  %v921 = vunpack.c.l.b16 %v60
  %v922 = vunpack.c.l.b16 %v61
  %v923 = vunpack.c.l.b16 %v62
  %v924 = vunpack.c.l.b16 %v63
  %v925 = vpack.c.b16 %v922, %v921
  %v926 = vpack.c.b16 %v924, %v923
  %v930 = vsel %vm271, %v694, 0
  %932 = vmatprep.subr.bf16.mxu0 0
  %933 = vmatpush1.bf16.msra.mxu0 %v925
  %934 = vmatprep.subr.bf16.mxu0 0
  %935 = vmatpush1.bf16.msra.mxu0 %v926
  %936 = vmatprep.subr.bf16.mxu0 0
  %937 = vmatpush1.bf16.msra.mxu0 0
  %938 = vmatprep.subr.bf16.mxu0 0
  %939 = vmatpush1.bf16.msra.mxu0 0
  %940 = vmatprep.subr.bf16.mxu0 0
  %941 = vmatpush1.bf16.msra.mxu0 0
  %942 = vmatprep.subr.bf16.mxu0 0
  %943 = vmatpush1.bf16.msra.mxu0 0
  %944 = vmatprep.subr.bf16.mxu0 0
  %945 = vmatpush1.bf16.msra.mxu0 0
  %946 = vmatprep.subr.bf16.mxu0 0
  %947 = vmatpush1.bf16.msra.mxu0 0
  %948 = vmatprep.subr.bf16.mxu0 0
  %949 = vmatpush1.bf16.msra.mxu0 0
  %950 = vmatprep.subr.bf16.mxu0 0
  %951 = vmatpush1.bf16.msra.mxu0 0
  %952 = vmatprep.subr.bf16.mxu0 0
  %953 = vmatpush1.bf16.msra.mxu0 0
  %954 = vmatprep.subr.bf16.mxu0 0
  %955 = vmatpush1.bf16.msra.mxu0 0
  %956 = vmatprep.subr.bf16.mxu0 0
  %957 = vmatpush1.bf16.msra.mxu0 0
  %958 = vmatprep.subr.bf16.mxu0 0
  %959 = vmatpush1.bf16.msra.mxu0 0
  %960 = vmatprep.subr.bf16.mxu0 0
  %961 = vmatpush1.bf16.msra.mxu0 0
  %962 = vmatprep.subr.bf16.mxu0 0
  %963 = vmatpush1.bf16.msra.mxu0 0
  %964 = vmatprep.mubr.bf16.mxu0 0
  %965 = vmatmul.mubr.bf16.gmra.mrb[0].mxu0 %v930
  %v966 = vpop.f32.mrb[0].mxu0
  %v967 = vadd.f32 0.0, %v966
  %v968 = vpop.f32.mrb[0].mxu0
  %v969 = vpop.f32.mrb[0].mxu0
  %v970 = vadd.f32 0.0, %v969
  %v971 = vpop.f32.mrb[0].mxu0
  %972 = vdwg.mxu0
  %v973 = vadd.f32 %v915, %v967
  %v974 = vadd.f32 %v916, %v970
  %v979 = vunpack.c.l.b16 %v64
  %v980 = vunpack.c.l.b16 %v65
  %v981 = vunpack.c.l.b16 %v66
  %v982 = vunpack.c.l.b16 %v67
  %v983 = vpack.c.b16 %v980, %v979
  %v984 = vpack.c.b16 %v982, %v981
  %v988 = vsel %vm271, %v740, 0
  %990 = vmatprep.subr.bf16.mxu0 0
  %991 = vmatpush1.bf16.msra.mxu0 %v983
  %992 = vmatprep.subr.bf16.mxu0 0
  %993 = vmatpush1.bf16.msra.mxu0 %v984
  %994 = vmatprep.subr.bf16.mxu0 0
  %995 = vmatpush1.bf16.msra.mxu0 0
  %996 = vmatprep.subr.bf16.mxu0 0
  %997 = vmatpush1.bf16.msra.mxu0 0
  %998 = vmatprep.subr.bf16.mxu0 0
  %999 = vmatpush1.bf16.msra.mxu0 0
  %1000 = vmatprep.subr.bf16.mxu0 0
  %1001 = vmatpush1.bf16.msra.mxu0 0
  %1002 = vmatprep.subr.bf16.mxu0 0
  %1003 = vmatpush1.bf16.msra.mxu0 0
  %1004 = vmatprep.subr.bf16.mxu0 0
  %1005 = vmatpush1.bf16.msra.mxu0 0
  %1006 = vmatprep.subr.bf16.mxu0 0
  %1007 = vmatpush1.bf16.msra.mxu0 0
  %1008 = vmatprep.subr.bf16.mxu0 0
  %1009 = vmatpush1.bf16.msra.mxu0 0
  %1010 = vmatprep.subr.bf16.mxu0 0
  %1011 = vmatpush1.bf16.msra.mxu0 0
  %1012 = vmatprep.subr.bf16.mxu0 0
  %1013 = vmatpush1.bf16.msra.mxu0 0
  %1014 = vmatprep.subr.bf16.mxu0 0
  %1015 = vmatpush1.bf16.msra.mxu0 0
  %1016 = vmatprep.subr.bf16.mxu0 0
  %1017 = vmatpush1.bf16.msra.mxu0 0
  %1018 = vmatprep.subr.bf16.mxu0 0
  %1019 = vmatpush1.bf16.msra.mxu0 0
  %1020 = vmatprep.subr.bf16.mxu0 0
  %1021 = vmatpush1.bf16.msra.mxu0 0
  %1022 = vmatprep.mubr.bf16.mxu0 0
  %1023 = vmatmul.mubr.bf16.gmra.mrb[0].mxu0 %v988
  %v1024 = vpop.f32.mrb[0].mxu0
  %v1025 = vadd.f32 0.0, %v1024
  %v1026 = vpop.f32.mrb[0].mxu0
  %v1027 = vpop.f32.mrb[0].mxu0
  %v1028 = vadd.f32 0.0, %v1027
  %v1029 = vpop.f32.mrb[0].mxu0
  %1030 = vdwg.mxu0
  %v1031 = vadd.f32 %v973, %v1025
  %v1032 = vadd.f32 %v974, %v1028
  %v1033 = vtanh.pop %v1031
  %v1034 = vtanh.pop %v1032
  %v1035 = vsub.f32 1.0, %v559
  %v1036 = vsub.f32 1.0, %v561
  %1039 = vrot.lane.b32.xlu0 %v1033, 32
  %v1040 = vpop.permute.xlu0 %1039
  %1041 = vrot.lane.b32.xlu0 %v1034, 32
  %v1042 = vpop.permute.xlu0 %1041
  %v1045 = vmul.f32 %v1035, %v1040
  %v1046 = vmul.f32 %v1036, %v1042
  %v1047 = vadd.f32 %v562, %v1045
  %v1048 = vadd.f32 %v563, %v1046
  %1051 = vrot.lane.b32.xlu0 %v1047, 96
  %v1052 = vpop.permute.xlu0 %1051
  %1053 = vrot.lane.b32.xlu0 %v1048, 96
  %v1054 = vpop.permute.xlu0 %1053
  %1057 = vst.msk [vmem:[%s6] sm:$0xff] %vm271, %v1052
  %1058 = vst.msk [vmem:[%s6 + $0x8] sm:$0xff] %vm271, %v1054
  %v1059 = vpack.c.bf16 %v1048, %v1047
  %1061 = vrot.lane.b32.xlu0 %v1059, 96
  %v1062 = vpop.permute.xlu0 %1061
  %1064 = vmatprep.subr.bf16.mxu0 0
  %1065 = vmatpush1.bf16.msra.mxu0 %v1062
  %1066 = vmatprep.subr.bf16.mxu0 0
  %1067 = vmatpush1.bf16.msra.mxu0 0
  %1068 = vmatprep.subr.bf16.mxu0 0
  %1069 = vmatpush1.bf16.msra.mxu0 0
  %1070 = vmatprep.subr.bf16.mxu0 0
  %1071 = vmatpush1.bf16.msra.mxu0 0
  %1072 = vmatprep.subr.bf16.mxu0 0
  %1073 = vmatpush1.bf16.msra.mxu0 0
  %1074 = vmatprep.subr.bf16.mxu0 0
  %1075 = vmatpush1.bf16.msra.mxu0 0
  %1076 = vmatprep.subr.bf16.mxu0 0
  %1077 = vmatpush1.bf16.msra.mxu0 0
  %1078 = vmatprep.subr.bf16.mxu0 0
  %1079 = vmatpush1.bf16.msra.mxu0 0
  %1080 = vmatprep.subr.bf16.mxu0 0
  %1081 = vmatpush1.bf16.msra.mxu0 0
  %1082 = vmatprep.subr.bf16.mxu0 0
  %1083 = vmatpush1.bf16.msra.mxu0 0
  %1084 = vmatprep.subr.bf16.mxu0 0
  %1085 = vmatpush1.bf16.msra.mxu0 0
  %1086 = vmatprep.subr.bf16.mxu0 0
  %1087 = vmatpush1.bf16.msra.mxu0 0
  %1088 = vmatprep.subr.bf16.mxu0 0
  %1089 = vmatpush1.bf16.msra.mxu0 0
  %1090 = vmatprep.subr.bf16.mxu0 0
  %1091 = vmatpush1.bf16.msra.mxu0 0
  %1092 = vmatprep.subr.bf16.mxu0 0
  %1093 = vmatpush1.bf16.msra.mxu0 0
  %1094 = vmatprep.subr.bf16.mxu0 0
  %1095 = vmatpush1.bf16.msra.mxu0 0
  %1096 = vmatprep.mubr.bf16.mxu0 0
  %1097 = vmatmul.mubr.bf16.gmra.mrb[0].mxu0 %v75
  %v1098 = vpop.f32.mrb[0].mxu0
  %v1099 = vadd.f32 0.0, %v1098
  %v1100 = vpop.f32.mrb[0].mxu0
  %v1101 = vpop.f32.mrb[0].mxu0
  %v1102 = vadd.f32 0.0, %v1101
  %v1103 = vpop.f32.mrb[0].mxu0
  %1104 = vdwg.mxu0
  %v1105 = vpack.c.bf16 %v1102, %v1099
  %1106 = vmatprep.subr.bf16.mxu0 0
  %1107 = vmatpush1.bf16.msra.mxu0 %v1105
  %1108 = vmatprep.subr.bf16.mxu0 0
  %1109 = vmatpush1.bf16.msra.mxu0 0
  %1110 = vmatprep.subr.bf16.mxu0 0
  %1111 = vmatpush1.bf16.msra.mxu0 0
  %1112 = vmatprep.subr.bf16.mxu0 0
  %1113 = vmatpush1.bf16.msra.mxu0 0
  %1114 = vmatprep.subr.bf16.mxu0 0
  %1115 = vmatpush1.bf16.msra.mxu0 0
  %1116 = vmatprep.subr.bf16.mxu0 0
  %1117 = vmatpush1.bf16.msra.mxu0 0
  %1118 = vmatprep.subr.bf16.mxu0 0
  %1119 = vmatpush1.bf16.msra.mxu0 0
  %1120 = vmatprep.subr.bf16.mxu0 0
  %1121 = vmatpush1.bf16.msra.mxu0 0
  %1122 = vmatprep.subr.bf16.mxu0 0
  %1123 = vmatpush1.bf16.msra.mxu0 0
  %1124 = vmatprep.subr.bf16.mxu0 0
  %1125 = vmatpush1.bf16.msra.mxu0 0
  %1126 = vmatprep.subr.bf16.mxu0 0
  %1127 = vmatpush1.bf16.msra.mxu0 0
  %1128 = vmatprep.subr.bf16.mxu0 0
  %1129 = vmatpush1.bf16.msra.mxu0 0
  %1130 = vmatprep.subr.bf16.mxu0 0
  %1131 = vmatpush1.bf16.msra.mxu0 0
  %1132 = vmatprep.subr.bf16.mxu0 0
  %1133 = vmatpush1.bf16.msra.mxu0 0
  %1134 = vmatprep.subr.bf16.mxu0 0
  %1135 = vmatpush1.bf16.msra.mxu0 0
  %1136 = vmatprep.subr.bf16.mxu0 0
  %1137 = vmatpush1.bf16.msra.mxu0 0
  %1138 = vmatprep.mubr.bf16.mxu0 0
  %1139 = vmatmul.mubr.bf16.gmra.mrb[0].mxu0 %v75
  %v1140 = vpop.f32.mrb[0].mxu0
  %v1141 = vadd.f32 0.0, %v1140
  %v1142 = vpop.f32.mrb[0].mxu0
  %v1143 = vpop.f32.mrb[0].mxu0
  %v1144 = vadd.f32 0.0, %v1143
  %v1145 = vpop.f32.mrb[0].mxu0
  %1146 = vdwg.mxu0
  %v1147 = vmul.f32 %v1141, 2.0
  %v1148 = vmul.f32 %v1144, 2.0
  %v1149 = vsub.f32 %v1147, %v1052
  %v1150 = vsub.f32 %v1148, %v1054
  %v1151 = vpack.c.bf16 %v1150, %v1149
  %1152 = vmatprep.subr.bf16.mxu0 0
  %1153 = vmatpush1.bf16.msra.mxu0 %v1062
  %1154 = vmatprep.subr.bf16.mxu0 0
  %1155 = vmatpush1.bf16.msra.mxu0 0
  %1156 = vmatprep.subr.bf16.mxu0 0
  %1157 = vmatpush1.bf16.msra.mxu0 0
  %1158 = vmatprep.subr.bf16.mxu0 0
  %1159 = vmatpush1.bf16.msra.mxu0 0
  %1160 = vmatprep.subr.bf16.mxu0 0
  %1161 = vmatpush1.bf16.msra.mxu0 0
  %1162 = vmatprep.subr.bf16.mxu0 0
  %1163 = vmatpush1.bf16.msra.mxu0 0
  %1164 = vmatprep.subr.bf16.mxu0 0
  %1165 = vmatpush1.bf16.msra.mxu0 0
  %1166 = vmatprep.subr.bf16.mxu0 0
  %1167 = vmatpush1.bf16.msra.mxu0 0
  %1168 = vmatprep.subr.bf16.mxu0 0
  %1169 = vmatpush1.bf16.msra.mxu0 0
  %1170 = vmatprep.subr.bf16.mxu0 0
  %1171 = vmatpush1.bf16.msra.mxu0 0
  %1172 = vmatprep.subr.bf16.mxu0 0
  %1173 = vmatpush1.bf16.msra.mxu0 0
  %1174 = vmatprep.subr.bf16.mxu0 0
  %1175 = vmatpush1.bf16.msra.mxu0 0
  %1176 = vmatprep.subr.bf16.mxu0 0
  %1177 = vmatpush1.bf16.msra.mxu0 0
  %1178 = vmatprep.subr.bf16.mxu0 0
  %1179 = vmatpush1.bf16.msra.mxu0 0
  %1180 = vmatprep.subr.bf16.mxu0 0
  %1181 = vmatpush1.bf16.msra.mxu0 0
  %1182 = vmatprep.subr.bf16.mxu0 0
  %1183 = vmatpush1.bf16.msra.mxu0 0
  %1184 = vmatprep.mubr.bf16.mxu0 0
  %1185 = vmatmul.mubr.bf16.gmra.mrb[0].mxu0 %v169
  %v1186 = vpop.f32.mrb[0].mxu0
  %v1187 = vadd.f32 0.0, %v1186
  %v1188 = vpop.f32.mrb[0].mxu0
  %v1189 = vpop.f32.mrb[0].mxu0
  %v1190 = vadd.f32 0.0, %v1189
  %v1191 = vpop.f32.mrb[0].mxu0
  %1192 = vdwg.mxu0
  %v1193 = vpack.c.bf16 %v1190, %v1187
  %1194 = vmatprep.subr.bf16.mxu0 0
  %1195 = vmatpush1.bf16.msra.mxu0 %v1193
  %1196 = vmatprep.subr.bf16.mxu0 0
  %1197 = vmatpush1.bf16.msra.mxu0 0
  %1198 = vmatprep.subr.bf16.mxu0 0
  %1199 = vmatpush1.bf16.msra.mxu0 0
  %1200 = vmatprep.subr.bf16.mxu0 0
  %1201 = vmatpush1.bf16.msra.mxu0 0
  %1202 = vmatprep.subr.bf16.mxu0 0
  %1203 = vmatpush1.bf16.msra.mxu0 0
  %1204 = vmatprep.subr.bf16.mxu0 0
  %1205 = vmatpush1.bf16.msra.mxu0 0
  %1206 = vmatprep.subr.bf16.mxu0 0
  %1207 = vmatpush1.bf16.msra.mxu0 0
  %1208 = vmatprep.subr.bf16.mxu0 0
  %1209 = vmatpush1.bf16.msra.mxu0 0
  %1210 = vmatprep.subr.bf16.mxu0 0
  %1211 = vmatpush1.bf16.msra.mxu0 0
  %1212 = vmatprep.subr.bf16.mxu0 0
  %1213 = vmatpush1.bf16.msra.mxu0 0
  %1214 = vmatprep.subr.bf16.mxu0 0
  %1215 = vmatpush1.bf16.msra.mxu0 0
  %1216 = vmatprep.subr.bf16.mxu0 0
  %1217 = vmatpush1.bf16.msra.mxu0 0
  %1218 = vmatprep.subr.bf16.mxu0 0
  %1219 = vmatpush1.bf16.msra.mxu0 0
  %1220 = vmatprep.subr.bf16.mxu0 0
  %1221 = vmatpush1.bf16.msra.mxu0 0
  %1222 = vmatprep.subr.bf16.mxu0 0
  %1223 = vmatpush1.bf16.msra.mxu0 0
  %1224 = vmatprep.subr.bf16.mxu0 0
  %1225 = vmatpush1.bf16.msra.mxu0 0
  %1226 = vmatprep.mubr.bf16.mxu0 0
  %1227 = vmatmul.mubr.bf16.gmra.mrb[0].mxu0 %v169
  %v1228 = vpop.f32.mrb[0].mxu0
  %v1229 = vadd.f32 0.0, %v1228
  %v1230 = vpop.f32.mrb[0].mxu0
  %v1231 = vpop.f32.mrb[0].mxu0
  %v1232 = vadd.f32 0.0, %v1231
  %v1233 = vpop.f32.mrb[0].mxu0
  %1234 = vdwg.mxu0
  %v1235 = vmul.f32 %v1229, 2.0
  %v1236 = vmul.f32 %v1232, 2.0
  %v1237 = vsub.f32 %v1235, %v1052
  %v1238 = vsub.f32 %v1236, %v1054
  %v1239 = vpack.c.bf16 %v1238, %v1237
  %s1240 = scalar_lea.vmem %s0, 16
  %v1241 = vld [vmem:[%s1240] sm:$0xff]
  %v1242 = vld [vmem:[%s1240 + $0x8] sm:$0xff]
  %v1244 = vsel %vm271, %v1062, 0
  %1246 = vmatprep.subr.bf16.mxu0 0
  %1247 = vmatpush1.bf16.msra.mxu0 %v267
  %1248 = vmatprep.subr.bf16.mxu0 0
  %1249 = vmatpush1.bf16.msra.mxu0 %v268
  %1250 = vmatprep.subr.bf16.mxu0 0
  %1251 = vmatpush1.bf16.msra.mxu0 0
  %1252 = vmatprep.subr.bf16.mxu0 0
  %1253 = vmatpush1.bf16.msra.mxu0 0
  %1254 = vmatprep.subr.bf16.mxu0 0
  %1255 = vmatpush1.bf16.msra.mxu0 0
  %1256 = vmatprep.subr.bf16.mxu0 0
  %1257 = vmatpush1.bf16.msra.mxu0 0
  %1258 = vmatprep.subr.bf16.mxu0 0
  %1259 = vmatpush1.bf16.msra.mxu0 0
  %1260 = vmatprep.subr.bf16.mxu0 0
  %1261 = vmatpush1.bf16.msra.mxu0 0
  %1262 = vmatprep.subr.bf16.mxu0 0
  %1263 = vmatpush1.bf16.msra.mxu0 0
  %1264 = vmatprep.subr.bf16.mxu0 0
  %1265 = vmatpush1.bf16.msra.mxu0 0
  %1266 = vmatprep.subr.bf16.mxu0 0
  %1267 = vmatpush1.bf16.msra.mxu0 0
  %1268 = vmatprep.subr.bf16.mxu0 0
  %1269 = vmatpush1.bf16.msra.mxu0 0
  %1270 = vmatprep.subr.bf16.mxu0 0
  %1271 = vmatpush1.bf16.msra.mxu0 0
  %1272 = vmatprep.subr.bf16.mxu0 0
  %1273 = vmatpush1.bf16.msra.mxu0 0
  %1274 = vmatprep.subr.bf16.mxu0 0
  %1275 = vmatpush1.bf16.msra.mxu0 0
  %1276 = vmatprep.subr.bf16.mxu0 0
  %1277 = vmatpush1.bf16.msra.mxu0 0
  %1278 = vmatprep.mubr.bf16.mxu0 0
  %1279 = vmatmul.mubr.bf16.gmra.mrb[0].mxu0 %v1244
  %v1280 = vpop.f32.mrb[0].mxu0
  %v1281 = vadd.f32 0.0, %v1280
  %v1282 = vpop.f32.mrb[0].mxu0
  %v1283 = vpop.f32.mrb[0].mxu0
  %v1284 = vadd.f32 0.0, %v1283
  %v1285 = vpop.f32.mrb[0].mxu0
  %1286 = vdwg.mxu0
  %v1287 = vadd.f32 %v1241, %v1281
  %v1288 = vadd.f32 %v1242, %v1284
  %v1290 = vsel %vm271, %v1105, 0
  %1292 = vmatprep.subr.bf16.mxu0 0
  %1293 = vmatpush1.bf16.msra.mxu0 %v326
  %1294 = vmatprep.subr.bf16.mxu0 0
  %1295 = vmatpush1.bf16.msra.mxu0 %v327
  %1296 = vmatprep.subr.bf16.mxu0 0
  %1297 = vmatpush1.bf16.msra.mxu0 0
  %1298 = vmatprep.subr.bf16.mxu0 0
  %1299 = vmatpush1.bf16.msra.mxu0 0
  %1300 = vmatprep.subr.bf16.mxu0 0
  %1301 = vmatpush1.bf16.msra.mxu0 0
  %1302 = vmatprep.subr.bf16.mxu0 0
  %1303 = vmatpush1.bf16.msra.mxu0 0
  %1304 = vmatprep.subr.bf16.mxu0 0
  %1305 = vmatpush1.bf16.msra.mxu0 0
  %1306 = vmatprep.subr.bf16.mxu0 0
  %1307 = vmatpush1.bf16.msra.mxu0 0
  %1308 = vmatprep.subr.bf16.mxu0 0
  %1309 = vmatpush1.bf16.msra.mxu0 0
  %1310 = vmatprep.subr.bf16.mxu0 0
  %1311 = vmatpush1.bf16.msra.mxu0 0
  %1312 = vmatprep.subr.bf16.mxu0 0
  %1313 = vmatpush1.bf16.msra.mxu0 0
  %1314 = vmatprep.subr.bf16.mxu0 0
  %1315 = vmatpush1.bf16.msra.mxu0 0
  %1316 = vmatprep.subr.bf16.mxu0 0
  %1317 = vmatpush1.bf16.msra.mxu0 0
  %1318 = vmatprep.subr.bf16.mxu0 0
  %1319 = vmatpush1.bf16.msra.mxu0 0
  %1320 = vmatprep.subr.bf16.mxu0 0
  %1321 = vmatpush1.bf16.msra.mxu0 0
  %1322 = vmatprep.subr.bf16.mxu0 0
  %1323 = vmatpush1.bf16.msra.mxu0 0
  %1324 = vmatprep.mubr.bf16.mxu0 0
  %1325 = vmatmul.mubr.bf16.gmra.mrb[0].mxu0 %v1290
  %v1326 = vpop.f32.mrb[0].mxu0
  %v1327 = vadd.f32 0.0, %v1326
  %v1328 = vpop.f32.mrb[0].mxu0
  %v1329 = vpop.f32.mrb[0].mxu0
  %v1330 = vadd.f32 0.0, %v1329
  %v1331 = vpop.f32.mrb[0].mxu0
  %1332 = vdwg.mxu0
  %v1333 = vadd.f32 %v1287, %v1327
  %v1334 = vadd.f32 %v1288, %v1330
  %v1336 = vsel %vm271, %v1151, 0
  %1338 = vmatprep.subr.bf16.mxu0 0
  %1339 = vmatpush1.bf16.msra.mxu0 %v384
  %1340 = vmatprep.subr.bf16.mxu0 0
  %1341 = vmatpush1.bf16.msra.mxu0 %v385
  %1342 = vmatprep.subr.bf16.mxu0 0
  %1343 = vmatpush1.bf16.msra.mxu0 0
  %1344 = vmatprep.subr.bf16.mxu0 0
  %1345 = vmatpush1.bf16.msra.mxu0 0
  %1346 = vmatprep.subr.bf16.mxu0 0
  %1347 = vmatpush1.bf16.msra.mxu0 0
  %1348 = vmatprep.subr.bf16.mxu0 0
  %1349 = vmatpush1.bf16.msra.mxu0 0
  %1350 = vmatprep.subr.bf16.mxu0 0
  %1351 = vmatpush1.bf16.msra.mxu0 0
  %1352 = vmatprep.subr.bf16.mxu0 0
  %1353 = vmatpush1.bf16.msra.mxu0 0
  %1354 = vmatprep.subr.bf16.mxu0 0
  %1355 = vmatpush1.bf16.msra.mxu0 0
  %1356 = vmatprep.subr.bf16.mxu0 0
  %1357 = vmatpush1.bf16.msra.mxu0 0
  %1358 = vmatprep.subr.bf16.mxu0 0
  %1359 = vmatpush1.bf16.msra.mxu0 0
  %1360 = vmatprep.subr.bf16.mxu0 0
  %1361 = vmatpush1.bf16.msra.mxu0 0
  %1362 = vmatprep.subr.bf16.mxu0 0
  %1363 = vmatpush1.bf16.msra.mxu0 0
  %1364 = vmatprep.subr.bf16.mxu0 0
  %1365 = vmatpush1.bf16.msra.mxu0 0
  %1366 = vmatprep.subr.bf16.mxu0 0
  %1367 = vmatpush1.bf16.msra.mxu0 0
  %1368 = vmatprep.subr.bf16.mxu0 0
  %1369 = vmatpush1.bf16.msra.mxu0 0
  %1370 = vmatprep.mubr.bf16.mxu0 0
  %1371 = vmatmul.mubr.bf16.gmra.mrb[0].mxu0 %v1336
  %v1372 = vpop.f32.mrb[0].mxu0
  %v1373 = vadd.f32 0.0, %v1372
  %v1374 = vpop.f32.mrb[0].mxu0
  %v1375 = vpop.f32.mrb[0].mxu0
  %v1376 = vadd.f32 0.0, %v1375
  %v1377 = vpop.f32.mrb[0].mxu0
  %1378 = vdwg.mxu0
  %v1379 = vadd.f32 %v1333, %v1373
  %v1380 = vadd.f32 %v1334, %v1376
  %v1382 = vsel %vm271, %v1193, 0
  %1384 = vmatprep.subr.bf16.mxu0 0
  %1385 = vmatpush1.bf16.msra.mxu0 %v442
  %1386 = vmatprep.subr.bf16.mxu0 0
  %1387 = vmatpush1.bf16.msra.mxu0 %v443
  %1388 = vmatprep.subr.bf16.mxu0 0
  %1389 = vmatpush1.bf16.msra.mxu0 0
  %1390 = vmatprep.subr.bf16.mxu0 0
  %1391 = vmatpush1.bf16.msra.mxu0 0
  %1392 = vmatprep.subr.bf16.mxu0 0
  %1393 = vmatpush1.bf16.msra.mxu0 0
  %1394 = vmatprep.subr.bf16.mxu0 0
  %1395 = vmatpush1.bf16.msra.mxu0 0
  %1396 = vmatprep.subr.bf16.mxu0 0
  %1397 = vmatpush1.bf16.msra.mxu0 0
  %1398 = vmatprep.subr.bf16.mxu0 0
  %1399 = vmatpush1.bf16.msra.mxu0 0
  %1400 = vmatprep.subr.bf16.mxu0 0
  %1401 = vmatpush1.bf16.msra.mxu0 0
  %1402 = vmatprep.subr.bf16.mxu0 0
  %1403 = vmatpush1.bf16.msra.mxu0 0
  %1404 = vmatprep.subr.bf16.mxu0 0
  %1405 = vmatpush1.bf16.msra.mxu0 0
  %1406 = vmatprep.subr.bf16.mxu0 0
  %1407 = vmatpush1.bf16.msra.mxu0 0
  %1408 = vmatprep.subr.bf16.mxu0 0
  %1409 = vmatpush1.bf16.msra.mxu0 0
  %1410 = vmatprep.subr.bf16.mxu0 0
  %1411 = vmatpush1.bf16.msra.mxu0 0
  %1412 = vmatprep.subr.bf16.mxu0 0
  %1413 = vmatpush1.bf16.msra.mxu0 0
  %1414 = vmatprep.subr.bf16.mxu0 0
  %1415 = vmatpush1.bf16.msra.mxu0 0
  %1416 = vmatprep.mubr.bf16.mxu0 0
  %1417 = vmatmul.mubr.bf16.gmra.mrb[0].mxu0 %v1382
  %v1418 = vpop.f32.mrb[0].mxu0
  %v1419 = vadd.f32 0.0, %v1418
  %v1420 = vpop.f32.mrb[0].mxu0
  %v1421 = vpop.f32.mrb[0].mxu0
  %v1422 = vadd.f32 0.0, %v1421
  %v1423 = vpop.f32.mrb[0].mxu0
  %1424 = vdwg.mxu0
  %v1425 = vadd.f32 %v1379, %v1419
  %v1426 = vadd.f32 %v1380, %v1422
  %v1428 = vsel %vm271, %v1239, 0
  %1430 = vmatprep.subr.bf16.mxu0 0
  %1431 = vmatpush1.bf16.msra.mxu0 %v500
  %1432 = vmatprep.subr.bf16.mxu0 0
  %1433 = vmatpush1.bf16.msra.mxu0 %v501
  %1434 = vmatprep.subr.bf16.mxu0 0
  %1435 = vmatpush1.bf16.msra.mxu0 0
  %1436 = vmatprep.subr.bf16.mxu0 0
  %1437 = vmatpush1.bf16.msra.mxu0 0
  %1438 = vmatprep.subr.bf16.mxu0 0
  %1439 = vmatpush1.bf16.msra.mxu0 0
  %1440 = vmatprep.subr.bf16.mxu0 0
  %1441 = vmatpush1.bf16.msra.mxu0 0
  %1442 = vmatprep.subr.bf16.mxu0 0
  %1443 = vmatpush1.bf16.msra.mxu0 0
  %1444 = vmatprep.subr.bf16.mxu0 0
  %1445 = vmatpush1.bf16.msra.mxu0 0
  %1446 = vmatprep.subr.bf16.mxu0 0
  %1447 = vmatpush1.bf16.msra.mxu0 0
  %1448 = vmatprep.subr.bf16.mxu0 0
  %1449 = vmatpush1.bf16.msra.mxu0 0
  %1450 = vmatprep.subr.bf16.mxu0 0
  %1451 = vmatpush1.bf16.msra.mxu0 0
  %1452 = vmatprep.subr.bf16.mxu0 0
  %1453 = vmatpush1.bf16.msra.mxu0 0
  %1454 = vmatprep.subr.bf16.mxu0 0
  %1455 = vmatpush1.bf16.msra.mxu0 0
  %1456 = vmatprep.subr.bf16.mxu0 0
  %1457 = vmatpush1.bf16.msra.mxu0 0
  %1458 = vmatprep.subr.bf16.mxu0 0
  %1459 = vmatpush1.bf16.msra.mxu0 0
  %1460 = vmatprep.subr.bf16.mxu0 0
  %1461 = vmatpush1.bf16.msra.mxu0 0
  %1462 = vmatprep.mubr.bf16.mxu0 0
  %1463 = vmatmul.mubr.bf16.gmra.mrb[0].mxu0 %v1428
  %v1464 = vpop.f32.mrb[0].mxu0
  %v1465 = vadd.f32 0.0, %v1464
  %v1466 = vpop.f32.mrb[0].mxu0
  %v1467 = vpop.f32.mrb[0].mxu0
  %v1468 = vadd.f32 0.0, %v1467
  %v1469 = vpop.f32.mrb[0].mxu0
  %1470 = vdwg.mxu0
  %v1471 = vadd.f32 %v1425, %v1465
  %v1472 = vadd.f32 %v1426, %v1468
  %v1473 = vxor.u32 %v1471, 2147483648
  %v1474 = vxor.u32 %v1472, 2147483648
  %v1475 = vmul.f32 %v1473, 1.442695
  %v1476 = vpow.pop %v1475
  %v1477 = vmul.f32 %v1474, 1.442695
  %v1478 = vpow.pop %v1477
  %v1479 = vadd.f32 %v1476, 1.0
  %v1480 = vadd.f32 %v1478, 1.0
  %v1481 = vrcp.pop %v1479
  %v1482 = vmul.f32 1.0, %v1481
  %v1483 = vrcp.pop %v1480
  %v1484 = vmul.f32 1.0, %v1483
  %v1485 = vmul.f32 %v1482, %v1052
  %v1486 = vmul.f32 %v1484, %v1054
  %v1487 = vpack.c.bf16 %v1486, %v1485
  %1488 = vmatprep.subr.bf16.mxu0 0
  %1489 = vmatpush1.bf16.msra.mxu0 %v1487
  %1490 = vmatprep.subr.bf16.mxu0 0
  %1491 = vmatpush1.bf16.msra.mxu0 0
  %1492 = vmatprep.subr.bf16.mxu0 0
  %1493 = vmatpush1.bf16.msra.mxu0 0
  %1494 = vmatprep.subr.bf16.mxu0 0
  %1495 = vmatpush1.bf16.msra.mxu0 0
  %1496 = vmatprep.subr.bf16.mxu0 0
  %1497 = vmatpush1.bf16.msra.mxu0 0
  %1498 = vmatprep.subr.bf16.mxu0 0
  %1499 = vmatpush1.bf16.msra.mxu0 0
  %1500 = vmatprep.subr.bf16.mxu0 0
  %1501 = vmatpush1.bf16.msra.mxu0 0
  %1502 = vmatprep.subr.bf16.mxu0 0
  %1503 = vmatpush1.bf16.msra.mxu0 0
  %1504 = vmatprep.subr.bf16.mxu0 0
  %1505 = vmatpush1.bf16.msra.mxu0 0
  %1506 = vmatprep.subr.bf16.mxu0 0
  %1507 = vmatpush1.bf16.msra.mxu0 0
  %1508 = vmatprep.subr.bf16.mxu0 0
  %1509 = vmatpush1.bf16.msra.mxu0 0
  %1510 = vmatprep.subr.bf16.mxu0 0
  %1511 = vmatpush1.bf16.msra.mxu0 0
  %1512 = vmatprep.subr.bf16.mxu0 0
  %1513 = vmatpush1.bf16.msra.mxu0 0
  %1514 = vmatprep.subr.bf16.mxu0 0
  %1515 = vmatpush1.bf16.msra.mxu0 0
  %1516 = vmatprep.subr.bf16.mxu0 0
  %1517 = vmatpush1.bf16.msra.mxu0 0
  %1518 = vmatprep.subr.bf16.mxu0 0
  %1519 = vmatpush1.bf16.msra.mxu0 0
  %1520 = vmatprep.mubr.bf16.mxu0 0
  %1521 = vmatmul.mubr.bf16.gmra.mrb[0].mxu0 %v75
  %v1522 = vpop.f32.mrb[0].mxu0
  %v1523 = vadd.f32 0.0, %v1522
  %v1524 = vpop.f32.mrb[0].mxu0
  %v1525 = vpop.f32.mrb[0].mxu0
  %v1526 = vadd.f32 0.0, %v1525
  %v1527 = vpop.f32.mrb[0].mxu0
  %1528 = vdwg.mxu0
  %v1529 = vpack.c.bf16 %v1526, %v1523
  %1530 = vmatprep.subr.bf16.mxu0 0
  %1531 = vmatpush1.bf16.msra.mxu0 %v1529
  %1532 = vmatprep.subr.bf16.mxu0 0
  %1533 = vmatpush1.bf16.msra.mxu0 0
  %1534 = vmatprep.subr.bf16.mxu0 0
  %1535 = vmatpush1.bf16.msra.mxu0 0
  %1536 = vmatprep.subr.bf16.mxu0 0
  %1537 = vmatpush1.bf16.msra.mxu0 0
  %1538 = vmatprep.subr.bf16.mxu0 0
  %1539 = vmatpush1.bf16.msra.mxu0 0
  %1540 = vmatprep.subr.bf16.mxu0 0
  %1541 = vmatpush1.bf16.msra.mxu0 0
  %1542 = vmatprep.subr.bf16.mxu0 0
  %1543 = vmatpush1.bf16.msra.mxu0 0
  %1544 = vmatprep.subr.bf16.mxu0 0
  %1545 = vmatpush1.bf16.msra.mxu0 0
  %1546 = vmatprep.subr.bf16.mxu0 0
  %1547 = vmatpush1.bf16.msra.mxu0 0
  %1548 = vmatprep.subr.bf16.mxu0 0
  %1549 = vmatpush1.bf16.msra.mxu0 0
  %1550 = vmatprep.subr.bf16.mxu0 0
  %1551 = vmatpush1.bf16.msra.mxu0 0
  %1552 = vmatprep.subr.bf16.mxu0 0
  %1553 = vmatpush1.bf16.msra.mxu0 0
  %1554 = vmatprep.subr.bf16.mxu0 0
  %1555 = vmatpush1.bf16.msra.mxu0 0
  %1556 = vmatprep.subr.bf16.mxu0 0
  %1557 = vmatpush1.bf16.msra.mxu0 0
  %1558 = vmatprep.subr.bf16.mxu0 0
  %1559 = vmatpush1.bf16.msra.mxu0 0
  %1560 = vmatprep.subr.bf16.mxu0 0
  %1561 = vmatpush1.bf16.msra.mxu0 0
  %1562 = vmatprep.mubr.bf16.mxu0 0
  %1563 = vmatmul.mubr.bf16.gmra.mrb[0].mxu0 %v75
  %v1564 = vpop.f32.mrb[0].mxu0
  %v1565 = vadd.f32 0.0, %v1564
  %v1566 = vpop.f32.mrb[0].mxu0
  %v1567 = vpop.f32.mrb[0].mxu0
  %v1568 = vadd.f32 0.0, %v1567
  %v1569 = vpop.f32.mrb[0].mxu0
  %1570 = vdwg.mxu0
  %v1571 = vmul.f32 %v1565, 2.0
  %v1572 = vmul.f32 %v1568, 2.0
  %v1573 = vsub.f32 %v1571, %v1485
  %v1574 = vsub.f32 %v1572, %v1486
  %v1575 = vpack.c.bf16 %v1574, %v1573
  %1576 = vmatprep.subr.bf16.mxu0 0
  %1577 = vmatpush1.bf16.msra.mxu0 %v1487
  %1578 = vmatprep.subr.bf16.mxu0 0
  %1579 = vmatpush1.bf16.msra.mxu0 0
  %1580 = vmatprep.subr.bf16.mxu0 0
  %1581 = vmatpush1.bf16.msra.mxu0 0
  %1582 = vmatprep.subr.bf16.mxu0 0
  %1583 = vmatpush1.bf16.msra.mxu0 0
  %1584 = vmatprep.subr.bf16.mxu0 0
  %1585 = vmatpush1.bf16.msra.mxu0 0
  %1586 = vmatprep.subr.bf16.mxu0 0
  %1587 = vmatpush1.bf16.msra.mxu0 0
  %1588 = vmatprep.subr.bf16.mxu0 0
  %1589 = vmatpush1.bf16.msra.mxu0 0
  %1590 = vmatprep.subr.bf16.mxu0 0
  %1591 = vmatpush1.bf16.msra.mxu0 0
  %1592 = vmatprep.subr.bf16.mxu0 0
  %1593 = vmatpush1.bf16.msra.mxu0 0
  %1594 = vmatprep.subr.bf16.mxu0 0
  %1595 = vmatpush1.bf16.msra.mxu0 0
  %1596 = vmatprep.subr.bf16.mxu0 0
  %1597 = vmatpush1.bf16.msra.mxu0 0
  %1598 = vmatprep.subr.bf16.mxu0 0
  %1599 = vmatpush1.bf16.msra.mxu0 0
  %1600 = vmatprep.subr.bf16.mxu0 0
  %1601 = vmatpush1.bf16.msra.mxu0 0
  %1602 = vmatprep.subr.bf16.mxu0 0
  %1603 = vmatpush1.bf16.msra.mxu0 0
  %1604 = vmatprep.subr.bf16.mxu0 0
  %1605 = vmatpush1.bf16.msra.mxu0 0
  %1606 = vmatprep.subr.bf16.mxu0 0
  %1607 = vmatpush1.bf16.msra.mxu0 0
  %1608 = vmatprep.mubr.bf16.mxu0 0
  %1609 = vmatmul.mubr.bf16.gmra.mrb[0].mxu0 %v169
  %v1610 = vpop.f32.mrb[0].mxu0
  %v1611 = vadd.f32 0.0, %v1610
  %v1612 = vpop.f32.mrb[0].mxu0
  %v1613 = vpop.f32.mrb[0].mxu0
  %v1614 = vadd.f32 0.0, %v1613
  %v1615 = vpop.f32.mrb[0].mxu0
  %1616 = vdwg.mxu0
  %v1617 = vpack.c.bf16 %v1614, %v1611
  %1618 = vmatprep.subr.bf16.mxu0 0
  %1619 = vmatpush1.bf16.msra.mxu0 %v1617
  %1620 = vmatprep.subr.bf16.mxu0 0
  %1621 = vmatpush1.bf16.msra.mxu0 0
  %1622 = vmatprep.subr.bf16.mxu0 0
  %1623 = vmatpush1.bf16.msra.mxu0 0
  %1624 = vmatprep.subr.bf16.mxu0 0
  %1625 = vmatpush1.bf16.msra.mxu0 0
  %1626 = vmatprep.subr.bf16.mxu0 0
  %1627 = vmatpush1.bf16.msra.mxu0 0
  %1628 = vmatprep.subr.bf16.mxu0 0
  %1629 = vmatpush1.bf16.msra.mxu0 0
  %1630 = vmatprep.subr.bf16.mxu0 0
  %1631 = vmatpush1.bf16.msra.mxu0 0
  %1632 = vmatprep.subr.bf16.mxu0 0
  %1633 = vmatpush1.bf16.msra.mxu0 0
  %1634 = vmatprep.subr.bf16.mxu0 0
  %1635 = vmatpush1.bf16.msra.mxu0 0
  %1636 = vmatprep.subr.bf16.mxu0 0
  %1637 = vmatpush1.bf16.msra.mxu0 0
  %1638 = vmatprep.subr.bf16.mxu0 0
  %1639 = vmatpush1.bf16.msra.mxu0 0
  %1640 = vmatprep.subr.bf16.mxu0 0
  %1641 = vmatpush1.bf16.msra.mxu0 0
  %1642 = vmatprep.subr.bf16.mxu0 0
  %1643 = vmatpush1.bf16.msra.mxu0 0
  %1644 = vmatprep.subr.bf16.mxu0 0
  %1645 = vmatpush1.bf16.msra.mxu0 0
  %1646 = vmatprep.subr.bf16.mxu0 0
  %1647 = vmatpush1.bf16.msra.mxu0 0
  %1648 = vmatprep.subr.bf16.mxu0 0
  %1649 = vmatpush1.bf16.msra.mxu0 0
  %1650 = vmatprep.mubr.bf16.mxu0 0
  %1651 = vmatmul.mubr.bf16.gmra.mrb[0].mxu0 %v169
  %v1652 = vpop.f32.mrb[0].mxu0
  %v1653 = vadd.f32 0.0, %v1652
  %v1654 = vpop.f32.mrb[0].mxu0
  %v1655 = vpop.f32.mrb[0].mxu0
  %v1656 = vadd.f32 0.0, %v1655
  %v1657 = vpop.f32.mrb[0].mxu0
  %1658 = vdwg.mxu0
  %v1659 = vmul.f32 %v1653, 2.0
  %v1660 = vmul.f32 %v1656, 2.0
  %v1661 = vsub.f32 %v1659, %v1485
  %v1662 = vsub.f32 %v1660, %v1486
  %v1663 = vpack.c.bf16 %v1662, %v1661
  %s1664 = scalar_lea.vmem %s1, 16
  %v1665 = vld [vmem:[%s1664] sm:$0xff]
  %v1666 = vld [vmem:[%s1664 + $0x8] sm:$0xff]
  %v1668 = vsel %vm271, %v1487, 0
  %1670 = vmatprep.subr.bf16.mxu0 0
  %1671 = vmatpush1.bf16.msra.mxu0 %v751
  %1672 = vmatprep.subr.bf16.mxu0 0
  %1673 = vmatpush1.bf16.msra.mxu0 %v752
  %1674 = vmatprep.subr.bf16.mxu0 0
  %1675 = vmatpush1.bf16.msra.mxu0 0
  %1676 = vmatprep.subr.bf16.mxu0 0
  %1677 = vmatpush1.bf16.msra.mxu0 0
  %1678 = vmatprep.subr.bf16.mxu0 0
  %1679 = vmatpush1.bf16.msra.mxu0 0
  %1680 = vmatprep.subr.bf16.mxu0 0
  %1681 = vmatpush1.bf16.msra.mxu0 0
  %1682 = vmatprep.subr.bf16.mxu0 0
  %1683 = vmatpush1.bf16.msra.mxu0 0
  %1684 = vmatprep.subr.bf16.mxu0 0
  %1685 = vmatpush1.bf16.msra.mxu0 0
  %1686 = vmatprep.subr.bf16.mxu0 0
  %1687 = vmatpush1.bf16.msra.mxu0 0
  %1688 = vmatprep.subr.bf16.mxu0 0
  %1689 = vmatpush1.bf16.msra.mxu0 0
  %1690 = vmatprep.subr.bf16.mxu0 0
  %1691 = vmatpush1.bf16.msra.mxu0 0
  %1692 = vmatprep.subr.bf16.mxu0 0
  %1693 = vmatpush1.bf16.msra.mxu0 0
  %1694 = vmatprep.subr.bf16.mxu0 0
  %1695 = vmatpush1.bf16.msra.mxu0 0
  %1696 = vmatprep.subr.bf16.mxu0 0
  %1697 = vmatpush1.bf16.msra.mxu0 0
  %1698 = vmatprep.subr.bf16.mxu0 0
  %1699 = vmatpush1.bf16.msra.mxu0 0
  %1700 = vmatprep.subr.bf16.mxu0 0
  %1701 = vmatpush1.bf16.msra.mxu0 0
  %1702 = vmatprep.mubr.bf16.mxu0 0
  %1703 = vmatmul.mubr.bf16.gmra.mrb[0].mxu0 %v1668
  %v1704 = vpop.f32.mrb[0].mxu0
  %v1705 = vadd.f32 0.0, %v1704
  %v1706 = vpop.f32.mrb[0].mxu0
  %v1707 = vpop.f32.mrb[0].mxu0
  %v1708 = vadd.f32 0.0, %v1707
  %v1709 = vpop.f32.mrb[0].mxu0
  %1710 = vdwg.mxu0
  %v1711 = vadd.f32 %v1665, %v1705
  %v1712 = vadd.f32 %v1666, %v1708
  %v1714 = vsel %vm271, %v1529, 0
  %1716 = vmatprep.subr.bf16.mxu0 0
  %1717 = vmatpush1.bf16.msra.mxu0 %v809
  %1718 = vmatprep.subr.bf16.mxu0 0
  %1719 = vmatpush1.bf16.msra.mxu0 %v810
  %1720 = vmatprep.subr.bf16.mxu0 0
  %1721 = vmatpush1.bf16.msra.mxu0 0
  %1722 = vmatprep.subr.bf16.mxu0 0
  %1723 = vmatpush1.bf16.msra.mxu0 0
  %1724 = vmatprep.subr.bf16.mxu0 0
  %1725 = vmatpush1.bf16.msra.mxu0 0
  %1726 = vmatprep.subr.bf16.mxu0 0
  %1727 = vmatpush1.bf16.msra.mxu0 0
  %1728 = vmatprep.subr.bf16.mxu0 0
  %1729 = vmatpush1.bf16.msra.mxu0 0
  %1730 = vmatprep.subr.bf16.mxu0 0
  %1731 = vmatpush1.bf16.msra.mxu0 0
  %1732 = vmatprep.subr.bf16.mxu0 0
  %1733 = vmatpush1.bf16.msra.mxu0 0
  %1734 = vmatprep.subr.bf16.mxu0 0
  %1735 = vmatpush1.bf16.msra.mxu0 0
  %1736 = vmatprep.subr.bf16.mxu0 0
  %1737 = vmatpush1.bf16.msra.mxu0 0
  %1738 = vmatprep.subr.bf16.mxu0 0
  %1739 = vmatpush1.bf16.msra.mxu0 0
  %1740 = vmatprep.subr.bf16.mxu0 0
  %1741 = vmatpush1.bf16.msra.mxu0 0
  %1742 = vmatprep.subr.bf16.mxu0 0
  %1743 = vmatpush1.bf16.msra.mxu0 0
  %1744 = vmatprep.subr.bf16.mxu0 0
  %1745 = vmatpush1.bf16.msra.mxu0 0
  %1746 = vmatprep.subr.bf16.mxu0 0
  %1747 = vmatpush1.bf16.msra.mxu0 0
  %1748 = vmatprep.mubr.bf16.mxu0 0
  %1749 = vmatmul.mubr.bf16.gmra.mrb[0].mxu0 %v1714
  %v1750 = vpop.f32.mrb[0].mxu0
  %v1751 = vadd.f32 0.0, %v1750
  %v1752 = vpop.f32.mrb[0].mxu0
  %v1753 = vpop.f32.mrb[0].mxu0
  %v1754 = vadd.f32 0.0, %v1753
  %v1755 = vpop.f32.mrb[0].mxu0
  %1756 = vdwg.mxu0
  %v1757 = vadd.f32 %v1711, %v1751
  %v1758 = vadd.f32 %v1712, %v1754
  %v1760 = vsel %vm271, %v1575, 0
  %1762 = vmatprep.subr.bf16.mxu0 0
  %1763 = vmatpush1.bf16.msra.mxu0 %v867
  %1764 = vmatprep.subr.bf16.mxu0 0
  %1765 = vmatpush1.bf16.msra.mxu0 %v868
  %1766 = vmatprep.subr.bf16.mxu0 0
  %1767 = vmatpush1.bf16.msra.mxu0 0
  %1768 = vmatprep.subr.bf16.mxu0 0
  %1769 = vmatpush1.bf16.msra.mxu0 0
  %1770 = vmatprep.subr.bf16.mxu0 0
  %1771 = vmatpush1.bf16.msra.mxu0 0
  %1772 = vmatprep.subr.bf16.mxu0 0
  %1773 = vmatpush1.bf16.msra.mxu0 0
  %1774 = vmatprep.subr.bf16.mxu0 0
  %1775 = vmatpush1.bf16.msra.mxu0 0
  %1776 = vmatprep.subr.bf16.mxu0 0
  %1777 = vmatpush1.bf16.msra.mxu0 0
  %1778 = vmatprep.subr.bf16.mxu0 0
  %1779 = vmatpush1.bf16.msra.mxu0 0
  %1780 = vmatprep.subr.bf16.mxu0 0
  %1781 = vmatpush1.bf16.msra.mxu0 0
  %1782 = vmatprep.subr.bf16.mxu0 0
  %1783 = vmatpush1.bf16.msra.mxu0 0
  %1784 = vmatprep.subr.bf16.mxu0 0
  %1785 = vmatpush1.bf16.msra.mxu0 0
  %1786 = vmatprep.subr.bf16.mxu0 0
  %1787 = vmatpush1.bf16.msra.mxu0 0
  %1788 = vmatprep.subr.bf16.mxu0 0
  %1789 = vmatpush1.bf16.msra.mxu0 0
  %1790 = vmatprep.subr.bf16.mxu0 0
  %1791 = vmatpush1.bf16.msra.mxu0 0
  %1792 = vmatprep.subr.bf16.mxu0 0
  %1793 = vmatpush1.bf16.msra.mxu0 0
  %1794 = vmatprep.mubr.bf16.mxu0 0
  %1795 = vmatmul.mubr.bf16.gmra.mrb[0].mxu0 %v1760
  %v1796 = vpop.f32.mrb[0].mxu0
  %v1797 = vadd.f32 0.0, %v1796
  %v1798 = vpop.f32.mrb[0].mxu0
  %v1799 = vpop.f32.mrb[0].mxu0
  %v1800 = vadd.f32 0.0, %v1799
  %v1801 = vpop.f32.mrb[0].mxu0
  %1802 = vdwg.mxu0
  %v1803 = vadd.f32 %v1757, %v1797
  %v1804 = vadd.f32 %v1758, %v1800
  %v1806 = vsel %vm271, %v1617, 0
  %1808 = vmatprep.subr.bf16.mxu0 0
  %1809 = vmatpush1.bf16.msra.mxu0 %v925
  %1810 = vmatprep.subr.bf16.mxu0 0
  %1811 = vmatpush1.bf16.msra.mxu0 %v926
  %1812 = vmatprep.subr.bf16.mxu0 0
  %1813 = vmatpush1.bf16.msra.mxu0 0
  %1814 = vmatprep.subr.bf16.mxu0 0
  %1815 = vmatpush1.bf16.msra.mxu0 0
  %1816 = vmatprep.subr.bf16.mxu0 0
  %1817 = vmatpush1.bf16.msra.mxu0 0
  %1818 = vmatprep.subr.bf16.mxu0 0
  %1819 = vmatpush1.bf16.msra.mxu0 0
  %1820 = vmatprep.subr.bf16.mxu0 0
  %1821 = vmatpush1.bf16.msra.mxu0 0
  %1822 = vmatprep.subr.bf16.mxu0 0
  %1823 = vmatpush1.bf16.msra.mxu0 0
  %1824 = vmatprep.subr.bf16.mxu0 0
  %1825 = vmatpush1.bf16.msra.mxu0 0
  %1826 = vmatprep.subr.bf16.mxu0 0
  %1827 = vmatpush1.bf16.msra.mxu0 0
  %1828 = vmatprep.subr.bf16.mxu0 0
  %1829 = vmatpush1.bf16.msra.mxu0 0
  %1830 = vmatprep.subr.bf16.mxu0 0
  %1831 = vmatpush1.bf16.msra.mxu0 0
  %1832 = vmatprep.subr.bf16.mxu0 0
  %1833 = vmatpush1.bf16.msra.mxu0 0
  %1834 = vmatprep.subr.bf16.mxu0 0
  %1835 = vmatpush1.bf16.msra.mxu0 0
  %1836 = vmatprep.subr.bf16.mxu0 0
  %1837 = vmatpush1.bf16.msra.mxu0 0
  %1838 = vmatprep.subr.bf16.mxu0 0
  %1839 = vmatpush1.bf16.msra.mxu0 0
  %1840 = vmatprep.mubr.bf16.mxu0 0
  %1841 = vmatmul.mubr.bf16.gmra.mrb[0].mxu0 %v1806
  %v1842 = vpop.f32.mrb[0].mxu0
  %v1843 = vadd.f32 0.0, %v1842
  %v1844 = vpop.f32.mrb[0].mxu0
  %v1845 = vpop.f32.mrb[0].mxu0
  %v1846 = vadd.f32 0.0, %v1845
  %v1847 = vpop.f32.mrb[0].mxu0
  %1848 = vdwg.mxu0
  %v1849 = vadd.f32 %v1803, %v1843
  %v1850 = vadd.f32 %v1804, %v1846
  %v1852 = vsel %vm271, %v1663, 0
  %1854 = vmatprep.subr.bf16.mxu0 0
  %1855 = vmatpush1.bf16.msra.mxu0 %v983
  %1856 = vmatprep.subr.bf16.mxu0 0
  %1857 = vmatpush1.bf16.msra.mxu0 %v984
  %1858 = vmatprep.subr.bf16.mxu0 0
  %1859 = vmatpush1.bf16.msra.mxu0 0
  %1860 = vmatprep.subr.bf16.mxu0 0
  %1861 = vmatpush1.bf16.msra.mxu0 0
  %1862 = vmatprep.subr.bf16.mxu0 0
  %1863 = vmatpush1.bf16.msra.mxu0 0
  %1864 = vmatprep.subr.bf16.mxu0 0
  %1865 = vmatpush1.bf16.msra.mxu0 0
  %1866 = vmatprep.subr.bf16.mxu0 0
  %1867 = vmatpush1.bf16.msra.mxu0 0
  %1868 = vmatprep.subr.bf16.mxu0 0
  %1869 = vmatpush1.bf16.msra.mxu0 0
  %1870 = vmatprep.subr.bf16.mxu0 0
  %1871 = vmatpush1.bf16.msra.mxu0 0
  %1872 = vmatprep.subr.bf16.mxu0 0
  %1873 = vmatpush1.bf16.msra.mxu0 0
  %1874 = vmatprep.subr.bf16.mxu0 0
  %1875 = vmatpush1.bf16.msra.mxu0 0
  %1876 = vmatprep.subr.bf16.mxu0 0
  %1877 = vmatpush1.bf16.msra.mxu0 0
  %1878 = vmatprep.subr.bf16.mxu0 0
  %1879 = vmatpush1.bf16.msra.mxu0 0
  %1880 = vmatprep.subr.bf16.mxu0 0
  %1881 = vmatpush1.bf16.msra.mxu0 0
  %1882 = vmatprep.subr.bf16.mxu0 0
  %1883 = vmatpush1.bf16.msra.mxu0 0
  %1884 = vmatprep.subr.bf16.mxu0 0
  %1885 = vmatpush1.bf16.msra.mxu0 0
  %1886 = vmatprep.mubr.bf16.mxu0 0
  %1887 = vmatmul.mubr.bf16.gmra.mrb[0].mxu0 %v1852
  %v1888 = vpop.f32.mrb[0].mxu0
  %v1889 = vadd.f32 0.0, %v1888
  %v1890 = vpop.f32.mrb[0].mxu0
  %v1891 = vpop.f32.mrb[0].mxu0
  %v1892 = vadd.f32 0.0, %v1891
  %v1893 = vpop.f32.mrb[0].mxu0
  %1894 = vdwg.mxu0
  %v1895 = vadd.f32 %v1849, %v1889
  %v1896 = vadd.f32 %v1850, %v1892
  %v1897 = vtanh.pop %v1895
  %v1898 = vtanh.pop %v1896
  %v1899 = vmul.f32 %v1482, %v1047
  %v1900 = vmul.f32 %v1484, %v1048
  %v1901 = vsub.f32 1.0, %v1482
  %v1902 = vsub.f32 1.0, %v1484
  %1905 = vrot.lane.b32.xlu0 %v1897, 32
  %v1906 = vpop.permute.xlu0 %1905
  %1907 = vrot.lane.b32.xlu0 %v1898, 32
  %v1908 = vpop.permute.xlu0 %1907
  %v1911 = vmul.f32 %v1901, %v1906
  %v1912 = vmul.f32 %v1902, %v1908
  %v1913 = vadd.f32 %v1899, %v1911
  %v1914 = vadd.f32 %v1900, %v1912
  %1917 = vrot.lane.b32.xlu0 %v1913, 96
  %v1918 = vpop.permute.xlu0 %1917
  %1919 = vrot.lane.b32.xlu0 %v1914, 96
  %v1920 = vpop.permute.xlu0 %1919
  %s1923 = scalar_lea.vmem %s6, 16
  %1924 = vst.msk [vmem:[%s1923] sm:$0xff] %vm271, %v1918
  %1925 = vst.msk [vmem:[%s1923 + $0x8] sm:$0xff] %vm271, %v1920
  %v1926 = vpack.c.bf16 %v1914, %v1913
  %1928 = vrot.lane.b32.xlu0 %v1926, 96
  %v1929 = vpop.permute.xlu0 %1928
  %1931 = vmatprep.subr.bf16.mxu0 0
  %1932 = vmatpush1.bf16.msra.mxu0 %v1929
  %1933 = vmatprep.subr.bf16.mxu0 0
  %1934 = vmatpush1.bf16.msra.mxu0 0
  %1935 = vmatprep.subr.bf16.mxu0 0
  %1936 = vmatpush1.bf16.msra.mxu0 0
  %1937 = vmatprep.subr.bf16.mxu0 0
  %1938 = vmatpush1.bf16.msra.mxu0 0
  %1939 = vmatprep.subr.bf16.mxu0 0
  %1940 = vmatpush1.bf16.msra.mxu0 0
  %1941 = vmatprep.subr.bf16.mxu0 0
  %1942 = vmatpush1.bf16.msra.mxu0 0
  %1943 = vmatprep.subr.bf16.mxu0 0
  %1944 = vmatpush1.bf16.msra.mxu0 0
  %1945 = vmatprep.subr.bf16.mxu0 0
  %1946 = vmatpush1.bf16.msra.mxu0 0
  %1947 = vmatprep.subr.bf16.mxu0 0
  %1948 = vmatpush1.bf16.msra.mxu0 0
  %1949 = vmatprep.subr.bf16.mxu0 0
  %1950 = vmatpush1.bf16.msra.mxu0 0
  %1951 = vmatprep.subr.bf16.mxu0 0
  %1952 = vmatpush1.bf16.msra.mxu0 0
  %1953 = vmatprep.subr.bf16.mxu0 0
  %1954 = vmatpush1.bf16.msra.mxu0 0
  %1955 = vmatprep.subr.bf16.mxu0 0
  %1956 = vmatpush1.bf16.msra.mxu0 0
  %1957 = vmatprep.subr.bf16.mxu0 0
  %1958 = vmatpush1.bf16.msra.mxu0 0
  %1959 = vmatprep.subr.bf16.mxu0 0
  %1960 = vmatpush1.bf16.msra.mxu0 0
  %1961 = vmatprep.subr.bf16.mxu0 0
  %1962 = vmatpush1.bf16.msra.mxu0 0
  %1963 = vmatprep.mubr.bf16.mxu0 0
  %1964 = vmatmul.mubr.bf16.gmra.mrb[0].mxu0 %v75
  %v1965 = vpop.f32.mrb[0].mxu0
  %v1966 = vadd.f32 0.0, %v1965
  %v1967 = vpop.f32.mrb[0].mxu0
  %v1968 = vpop.f32.mrb[0].mxu0
  %v1969 = vadd.f32 0.0, %v1968
  %v1970 = vpop.f32.mrb[0].mxu0
  %1971 = vdwg.mxu0
  %v1972 = vpack.c.bf16 %v1969, %v1966
  %1973 = vmatprep.subr.bf16.mxu0 0
  %1974 = vmatpush1.bf16.msra.mxu0 %v1972
  %1975 = vmatprep.subr.bf16.mxu0 0
  %1976 = vmatpush1.bf16.msra.mxu0 0
  %1977 = vmatprep.subr.bf16.mxu0 0
  %1978 = vmatpush1.bf16.msra.mxu0 0
  %1979 = vmatprep.subr.bf16.mxu0 0
  %1980 = vmatpush1.bf16.msra.mxu0 0
  %1981 = vmatprep.subr.bf16.mxu0 0
  %1982 = vmatpush1.bf16.msra.mxu0 0
  %1983 = vmatprep.subr.bf16.mxu0 0
  %1984 = vmatpush1.bf16.msra.mxu0 0
  %1985 = vmatprep.subr.bf16.mxu0 0
  %1986 = vmatpush1.bf16.msra.mxu0 0
  %1987 = vmatprep.subr.bf16.mxu0 0
  %1988 = vmatpush1.bf16.msra.mxu0 0
  %1989 = vmatprep.subr.bf16.mxu0 0
  %1990 = vmatpush1.bf16.msra.mxu0 0
  %1991 = vmatprep.subr.bf16.mxu0 0
  %1992 = vmatpush1.bf16.msra.mxu0 0
  %1993 = vmatprep.subr.bf16.mxu0 0
  %1994 = vmatpush1.bf16.msra.mxu0 0
  %1995 = vmatprep.subr.bf16.mxu0 0
  %1996 = vmatpush1.bf16.msra.mxu0 0
  %1997 = vmatprep.subr.bf16.mxu0 0
  %1998 = vmatpush1.bf16.msra.mxu0 0
  %1999 = vmatprep.subr.bf16.mxu0 0
  %2000 = vmatpush1.bf16.msra.mxu0 0
  %2001 = vmatprep.subr.bf16.mxu0 0
  %2002 = vmatpush1.bf16.msra.mxu0 0
  %2003 = vmatprep.subr.bf16.mxu0 0
  %2004 = vmatpush1.bf16.msra.mxu0 0
  %2005 = vmatprep.mubr.bf16.mxu0 0
  %2006 = vmatmul.mubr.bf16.gmra.mrb[0].mxu0 %v75
  %v2007 = vpop.f32.mrb[0].mxu0
  %v2008 = vadd.f32 0.0, %v2007
  %v2009 = vpop.f32.mrb[0].mxu0
  %v2010 = vpop.f32.mrb[0].mxu0
  %v2011 = vadd.f32 0.0, %v2010
  %v2012 = vpop.f32.mrb[0].mxu0
  %2013 = vdwg.mxu0
  %v2014 = vmul.f32 %v2008, 2.0
  %v2015 = vmul.f32 %v2011, 2.0
  %v2016 = vsub.f32 %v2014, %v1918
  %v2017 = vsub.f32 %v2015, %v1920
  %v2018 = vpack.c.bf16 %v2017, %v2016
  %2019 = vmatprep.subr.bf16.mxu0 0
  %2020 = vmatpush1.bf16.msra.mxu0 %v1929
  %2021 = vmatprep.subr.bf16.mxu0 0
  %2022 = vmatpush1.bf16.msra.mxu0 0
  %2023 = vmatprep.subr.bf16.mxu0 0
  %2024 = vmatpush1.bf16.msra.mxu0 0
  %2025 = vmatprep.subr.bf16.mxu0 0
  %2026 = vmatpush1.bf16.msra.mxu0 0
  %2027 = vmatprep.subr.bf16.mxu0 0
  %2028 = vmatpush1.bf16.msra.mxu0 0
  %2029 = vmatprep.subr.bf16.mxu0 0
  %2030 = vmatpush1.bf16.msra.mxu0 0
  %2031 = vmatprep.subr.bf16.mxu0 0
  %2032 = vmatpush1.bf16.msra.mxu0 0
  %2033 = vmatprep.subr.bf16.mxu0 0
  %2034 = vmatpush1.bf16.msra.mxu0 0
  %2035 = vmatprep.subr.bf16.mxu0 0
  %2036 = vmatpush1.bf16.msra.mxu0 0
  %2037 = vmatprep.subr.bf16.mxu0 0
  %2038 = vmatpush1.bf16.msra.mxu0 0
  %2039 = vmatprep.subr.bf16.mxu0 0
  %2040 = vmatpush1.bf16.msra.mxu0 0
  %2041 = vmatprep.subr.bf16.mxu0 0
  %2042 = vmatpush1.bf16.msra.mxu0 0
  %2043 = vmatprep.subr.bf16.mxu0 0
  %2044 = vmatpush1.bf16.msra.mxu0 0
  %2045 = vmatprep.subr.bf16.mxu0 0
  %2046 = vmatpush1.bf16.msra.mxu0 0
  %2047 = vmatprep.subr.bf16.mxu0 0
  %2048 = vmatpush1.bf16.msra.mxu0 0
  %2049 = vmatprep.subr.bf16.mxu0 0
  %2050 = vmatpush1.bf16.msra.mxu0 0
  %2051 = vmatprep.mubr.bf16.mxu0 0
  %2052 = vmatmul.mubr.bf16.gmra.mrb[0].mxu0 %v169
  %v2053 = vpop.f32.mrb[0].mxu0
  %v2054 = vadd.f32 0.0, %v2053
  %v2055 = vpop.f32.mrb[0].mxu0
  %v2056 = vpop.f32.mrb[0].mxu0
  %v2057 = vadd.f32 0.0, %v2056
  %v2058 = vpop.f32.mrb[0].mxu0
  %2059 = vdwg.mxu0
  %v2060 = vpack.c.bf16 %v2057, %v2054
  %2061 = vmatprep.subr.bf16.mxu0 0
  %2062 = vmatpush1.bf16.msra.mxu0 %v2060
  %2063 = vmatprep.subr.bf16.mxu0 0
  %2064 = vmatpush1.bf16.msra.mxu0 0
  %2065 = vmatprep.subr.bf16.mxu0 0
  %2066 = vmatpush1.bf16.msra.mxu0 0
  %2067 = vmatprep.subr.bf16.mxu0 0
  %2068 = vmatpush1.bf16.msra.mxu0 0
  %2069 = vmatprep.subr.bf16.mxu0 0
  %2070 = vmatpush1.bf16.msra.mxu0 0
  %2071 = vmatprep.subr.bf16.mxu0 0
  %2072 = vmatpush1.bf16.msra.mxu0 0
  %2073 = vmatprep.subr.bf16.mxu0 0
  %2074 = vmatpush1.bf16.msra.mxu0 0
  %2075 = vmatprep.subr.bf16.mxu0 0
  %2076 = vmatpush1.bf16.msra.mxu0 0
  %2077 = vmatprep.subr.bf16.mxu0 0
  %2078 = vmatpush1.bf16.msra.mxu0 0
  %2079 = vmatprep.subr.bf16.mxu0 0
  %2080 = vmatpush1.bf16.msra.mxu0 0
  %2081 = vmatprep.subr.bf16.mxu0 0
  %2082 = vmatpush1.bf16.msra.mxu0 0
  %2083 = vmatprep.subr.bf16.mxu0 0
  %2084 = vmatpush1.bf16.msra.mxu0 0
  %2085 = vmatprep.subr.bf16.mxu0 0
  %2086 = vmatpush1.bf16.msra.mxu0 0
  %2087 = vmatprep.subr.bf16.mxu0 0
  %2088 = vmatpush1.bf16.msra.mxu0 0
  %2089 = vmatprep.subr.bf16.mxu0 0
  %2090 = vmatpush1.bf16.msra.mxu0 0
  %2091 = vmatprep.subr.bf16.mxu0 0
  %2092 = vmatpush1.bf16.msra.mxu0 0
  %2093 = vmatprep.mubr.bf16.mxu0 0
  %2094 = vmatmul.mubr.bf16.gmra.mrb[0].mxu0 %v169
  %v2095 = vpop.f32.mrb[0].mxu0
  %v2096 = vadd.f32 0.0, %v2095
  %v2097 = vpop.f32.mrb[0].mxu0
  %v2098 = vpop.f32.mrb[0].mxu0
  %v2099 = vadd.f32 0.0, %v2098
  %v2100 = vpop.f32.mrb[0].mxu0
  %2101 = vdwg.mxu0
  %v2102 = vmul.f32 %v2096, 2.0
  %v2103 = vmul.f32 %v2099, 2.0
  %v2104 = vsub.f32 %v2102, %v1918
  %v2105 = vsub.f32 %v2103, %v1920
  %v2106 = vpack.c.bf16 %v2105, %v2104
  %s2107 = scalar_lea.vmem %s0, 32
  %v2108 = vld [vmem:[%s2107] sm:$0xff]
  %v2109 = vld [vmem:[%s2107 + $0x8] sm:$0xff]
  %v2111 = vsel %vm271, %v1929, 0
  %2113 = vmatprep.subr.bf16.mxu0 0
  %2114 = vmatpush1.bf16.msra.mxu0 %v267
  %2115 = vmatprep.subr.bf16.mxu0 0
  %2116 = vmatpush1.bf16.msra.mxu0 %v268
  %2117 = vmatprep.subr.bf16.mxu0 0
  %2118 = vmatpush1.bf16.msra.mxu0 0
  %2119 = vmatprep.subr.bf16.mxu0 0
  %2120 = vmatpush1.bf16.msra.mxu0 0
  %2121 = vmatprep.subr.bf16.mxu0 0
  %2122 = vmatpush1.bf16.msra.mxu0 0
  %2123 = vmatprep.subr.bf16.mxu0 0
  %2124 = vmatpush1.bf16.msra.mxu0 0
  %2125 = vmatprep.subr.bf16.mxu0 0
  %2126 = vmatpush1.bf16.msra.mxu0 0
  %2127 = vmatprep.subr.bf16.mxu0 0
  %2128 = vmatpush1.bf16.msra.mxu0 0
  %2129 = vmatprep.subr.bf16.mxu0 0
  %2130 = vmatpush1.bf16.msra.mxu0 0
  %2131 = vmatprep.subr.bf16.mxu0 0
  %2132 = vmatpush1.bf16.msra.mxu0 0
  %2133 = vmatprep.subr.bf16.mxu0 0
  %2134 = vmatpush1.bf16.msra.mxu0 0
  %2135 = vmatprep.subr.bf16.mxu0 0
  %2136 = vmatpush1.bf16.msra.mxu0 0
  %2137 = vmatprep.subr.bf16.mxu0 0
  %2138 = vmatpush1.bf16.msra.mxu0 0
  %2139 = vmatprep.subr.bf16.mxu0 0
  %2140 = vmatpush1.bf16.msra.mxu0 0
  %2141 = vmatprep.subr.bf16.mxu0 0
  %2142 = vmatpush1.bf16.msra.mxu0 0
  %2143 = vmatprep.subr.bf16.mxu0 0
  %2144 = vmatpush1.bf16.msra.mxu0 0
  %2145 = vmatprep.mubr.bf16.mxu0 0
  %2146 = vmatmul.mubr.bf16.gmra.mrb[0].mxu0 %v2111
  %v2147 = vpop.f32.mrb[0].mxu0
  %v2148 = vadd.f32 0.0, %v2147
  %v2149 = vpop.f32.mrb[0].mxu0
  %v2150 = vpop.f32.mrb[0].mxu0
  %v2151 = vadd.f32 0.0, %v2150
  %v2152 = vpop.f32.mrb[0].mxu0
  %2153 = vdwg.mxu0
  %v2154 = vadd.f32 %v2108, %v2148
  %v2155 = vadd.f32 %v2109, %v2151
  %v2157 = vsel %vm271, %v1972, 0
  %2159 = vmatprep.subr.bf16.mxu0 0
  %2160 = vmatpush1.bf16.msra.mxu0 %v326
  %2161 = vmatprep.subr.bf16.mxu0 0
  %2162 = vmatpush1.bf16.msra.mxu0 %v327
  %2163 = vmatprep.subr.bf16.mxu0 0
  %2164 = vmatpush1.bf16.msra.mxu0 0
  %2165 = vmatprep.subr.bf16.mxu0 0
  %2166 = vmatpush1.bf16.msra.mxu0 0
  %2167 = vmatprep.subr.bf16.mxu0 0
  %2168 = vmatpush1.bf16.msra.mxu0 0
  %2169 = vmatprep.subr.bf16.mxu0 0
  %2170 = vmatpush1.bf16.msra.mxu0 0
  %2171 = vmatprep.subr.bf16.mxu0 0
  %2172 = vmatpush1.bf16.msra.mxu0 0
  %2173 = vmatprep.subr.bf16.mxu0 0
  %2174 = vmatpush1.bf16.msra.mxu0 0
  %2175 = vmatprep.subr.bf16.mxu0 0
  %2176 = vmatpush1.bf16.msra.mxu0 0
  %2177 = vmatprep.subr.bf16.mxu0 0
  %2178 = vmatpush1.bf16.msra.mxu0 0
  %2179 = vmatprep.subr.bf16.mxu0 0
  %2180 = vmatpush1.bf16.msra.mxu0 0
  %2181 = vmatprep.subr.bf16.mxu0 0
  %2182 = vmatpush1.bf16.msra.mxu0 0
  %2183 = vmatprep.subr.bf16.mxu0 0
  %2184 = vmatpush1.bf16.msra.mxu0 0
  %2185 = vmatprep.subr.bf16.mxu0 0
  %2186 = vmatpush1.bf16.msra.mxu0 0
  %2187 = vmatprep.subr.bf16.mxu0 0
  %2188 = vmatpush1.bf16.msra.mxu0 0
  %2189 = vmatprep.subr.bf16.mxu0 0
  %2190 = vmatpush1.bf16.msra.mxu0 0
  %2191 = vmatprep.mubr.bf16.mxu0 0
  %2192 = vmatmul.mubr.bf16.gmra.mrb[0].mxu0 %v2157
  %v2193 = vpop.f32.mrb[0].mxu0
  %v2194 = vadd.f32 0.0, %v2193
  %v2195 = vpop.f32.mrb[0].mxu0
  %v2196 = vpop.f32.mrb[0].mxu0
  %v2197 = vadd.f32 0.0, %v2196
  %v2198 = vpop.f32.mrb[0].mxu0
  %2199 = vdwg.mxu0
  %v2200 = vadd.f32 %v2154, %v2194
  %v2201 = vadd.f32 %v2155, %v2197
  %v2203 = vsel %vm271, %v2018, 0
  %2205 = vmatprep.subr.bf16.mxu0 0
  %2206 = vmatpush1.bf16.msra.mxu0 %v384
  %2207 = vmatprep.subr.bf16.mxu0 0
  %2208 = vmatpush1.bf16.msra.mxu0 %v385
  %2209 = vmatprep.subr.bf16.mxu0 0
  %2210 = vmatpush1.bf16.msra.mxu0 0
  %2211 = vmatprep.subr.bf16.mxu0 0
  %2212 = vmatpush1.bf16.msra.mxu0 0
  %2213 = vmatprep.subr.bf16.mxu0 0
  %2214 = vmatpush1.bf16.msra.mxu0 0
  %2215 = vmatprep.subr.bf16.mxu0 0
  %2216 = vmatpush1.bf16.msra.mxu0 0
  %2217 = vmatprep.subr.bf16.mxu0 0
  %2218 = vmatpush1.bf16.msra.mxu0 0
  %2219 = vmatprep.subr.bf16.mxu0 0
  %2220 = vmatpush1.bf16.msra.mxu0 0
  %2221 = vmatprep.subr.bf16.mxu0 0
  %2222 = vmatpush1.bf16.msra.mxu0 0
  %2223 = vmatprep.subr.bf16.mxu0 0
  %2224 = vmatpush1.bf16.msra.mxu0 0
  %2225 = vmatprep.subr.bf16.mxu0 0
  %2226 = vmatpush1.bf16.msra.mxu0 0
  %2227 = vmatprep.subr.bf16.mxu0 0
  %2228 = vmatpush1.bf16.msra.mxu0 0
  %2229 = vmatprep.subr.bf16.mxu0 0
  %2230 = vmatpush1.bf16.msra.mxu0 0
  %2231 = vmatprep.subr.bf16.mxu0 0
  %2232 = vmatpush1.bf16.msra.mxu0 0
  %2233 = vmatprep.subr.bf16.mxu0 0
  %2234 = vmatpush1.bf16.msra.mxu0 0
  %2235 = vmatprep.subr.bf16.mxu0 0
  %2236 = vmatpush1.bf16.msra.mxu0 0
  %2237 = vmatprep.mubr.bf16.mxu0 0
  %2238 = vmatmul.mubr.bf16.gmra.mrb[0].mxu0 %v2203
  %v2239 = vpop.f32.mrb[0].mxu0
  %v2240 = vadd.f32 0.0, %v2239
  %v2241 = vpop.f32.mrb[0].mxu0
  %v2242 = vpop.f32.mrb[0].mxu0
  %v2243 = vadd.f32 0.0, %v2242
  %v2244 = vpop.f32.mrb[0].mxu0
  %2245 = vdwg.mxu0
  %v2246 = vadd.f32 %v2200, %v2240
  %v2247 = vadd.f32 %v2201, %v2243
  %v2249 = vsel %vm271, %v2060, 0
  %2251 = vmatprep.subr.bf16.mxu0 0
  %2252 = vmatpush1.bf16.msra.mxu0 %v442
  %2253 = vmatprep.subr.bf16.mxu0 0
  %2254 = vmatpush1.bf16.msra.mxu0 %v443
  %2255 = vmatprep.subr.bf16.mxu0 0
  %2256 = vmatpush1.bf16.msra.mxu0 0
  %2257 = vmatprep.subr.bf16.mxu0 0
  %2258 = vmatpush1.bf16.msra.mxu0 0
  %2259 = vmatprep.subr.bf16.mxu0 0
  %2260 = vmatpush1.bf16.msra.mxu0 0
  %2261 = vmatprep.subr.bf16.mxu0 0
  %2262 = vmatpush1.bf16.msra.mxu0 0
  %2263 = vmatprep.subr.bf16.mxu0 0
  %2264 = vmatpush1.bf16.msra.mxu0 0
  %2265 = vmatprep.subr.bf16.mxu0 0
  %2266 = vmatpush1.bf16.msra.mxu0 0
  %2267 = vmatprep.subr.bf16.mxu0 0
  %2268 = vmatpush1.bf16.msra.mxu0 0
  %2269 = vmatprep.subr.bf16.mxu0 0
  %2270 = vmatpush1.bf16.msra.mxu0 0
  %2271 = vmatprep.subr.bf16.mxu0 0
  %2272 = vmatpush1.bf16.msra.mxu0 0
  %2273 = vmatprep.subr.bf16.mxu0 0
  %2274 = vmatpush1.bf16.msra.mxu0 0
  %2275 = vmatprep.subr.bf16.mxu0 0
  %2276 = vmatpush1.bf16.msra.mxu0 0
  %2277 = vmatprep.subr.bf16.mxu0 0
  %2278 = vmatpush1.bf16.msra.mxu0 0
  %2279 = vmatprep.subr.bf16.mxu0 0
  %2280 = vmatpush1.bf16.msra.mxu0 0
  %2281 = vmatprep.subr.bf16.mxu0 0
  %2282 = vmatpush1.bf16.msra.mxu0 0
  %2283 = vmatprep.mubr.bf16.mxu0 0
  %2284 = vmatmul.mubr.bf16.gmra.mrb[0].mxu0 %v2249
  %v2285 = vpop.f32.mrb[0].mxu0
  %v2286 = vadd.f32 0.0, %v2285
  %v2287 = vpop.f32.mrb[0].mxu0
  %v2288 = vpop.f32.mrb[0].mxu0
  %v2289 = vadd.f32 0.0, %v2288
  %v2290 = vpop.f32.mrb[0].mxu0
  %2291 = vdwg.mxu0
  %v2292 = vadd.f32 %v2246, %v2286
  %v2293 = vadd.f32 %v2247, %v2289
  %v2295 = vsel %vm271, %v2106, 0
  %2297 = vmatprep.subr.bf16.mxu0 0
  %2298 = vmatpush1.bf16.msra.mxu0 %v500
  %2299 = vmatprep.subr.bf16.mxu0 0
  %2300 = vmatpush1.bf16.msra.mxu0 %v501
  %2301 = vmatprep.subr.bf16.mxu0 0
  %2302 = vmatpush1.bf16.msra.mxu0 0
  %2303 = vmatprep.subr.bf16.mxu0 0
  %2304 = vmatpush1.bf16.msra.mxu0 0
  %2305 = vmatprep.subr.bf16.mxu0 0
  %2306 = vmatpush1.bf16.msra.mxu0 0
  %2307 = vmatprep.subr.bf16.mxu0 0
  %2308 = vmatpush1.bf16.msra.mxu0 0
  %2309 = vmatprep.subr.bf16.mxu0 0
  %2310 = vmatpush1.bf16.msra.mxu0 0
  %2311 = vmatprep.subr.bf16.mxu0 0
  %2312 = vmatpush1.bf16.msra.mxu0 0
  %2313 = vmatprep.subr.bf16.mxu0 0
  %2314 = vmatpush1.bf16.msra.mxu0 0
  %2315 = vmatprep.subr.bf16.mxu0 0
  %2316 = vmatpush1.bf16.msra.mxu0 0
  %2317 = vmatprep.subr.bf16.mxu0 0
  %2318 = vmatpush1.bf16.msra.mxu0 0
  %2319 = vmatprep.subr.bf16.mxu0 0
  %2320 = vmatpush1.bf16.msra.mxu0 0
  %2321 = vmatprep.subr.bf16.mxu0 0
  %2322 = vmatpush1.bf16.msra.mxu0 0
  %2323 = vmatprep.subr.bf16.mxu0 0
  %2324 = vmatpush1.bf16.msra.mxu0 0
  %2325 = vmatprep.subr.bf16.mxu0 0
  %2326 = vmatpush1.bf16.msra.mxu0 0
  %2327 = vmatprep.subr.bf16.mxu0 0
  %2328 = vmatpush1.bf16.msra.mxu0 0
  %2329 = vmatprep.mubr.bf16.mxu0 0
  %2330 = vmatmul.mubr.bf16.gmra.mrb[0].mxu0 %v2295
  %v2331 = vpop.f32.mrb[0].mxu0
  %v2332 = vadd.f32 0.0, %v2331
  %v2333 = vpop.f32.mrb[0].mxu0
  %v2334 = vpop.f32.mrb[0].mxu0
  %v2335 = vadd.f32 0.0, %v2334
  %v2336 = vpop.f32.mrb[0].mxu0
  %2337 = vdwg.mxu0
  %v2338 = vadd.f32 %v2292, %v2332
  %v2339 = vadd.f32 %v2293, %v2335
  %v2340 = vxor.u32 %v2338, 2147483648
  %v2341 = vxor.u32 %v2339, 2147483648
  %v2342 = vmul.f32 %v2340, 1.442695
  %v2343 = vpow.pop %v2342
  %v2344 = vmul.f32 %v2341, 1.442695
  %v2345 = vpow.pop %v2344
  %v2346 = vadd.f32 %v2343, 1.0
  %v2347 = vadd.f32 %v2345, 1.0
  %v2348 = vrcp.pop %v2346
  %v2349 = vmul.f32 1.0, %v2348
  %v2350 = vrcp.pop %v2347
  %v2351 = vmul.f32 1.0, %v2350
  %v2352 = vmul.f32 %v2349, %v1918
  %v2353 = vmul.f32 %v2351, %v1920
  %v2354 = vpack.c.bf16 %v2353, %v2352
  %2355 = vmatprep.subr.bf16.mxu0 0
  %2356 = vmatpush1.bf16.msra.mxu0 %v2354
  %2357 = vmatprep.subr.bf16.mxu0 0
  %2358 = vmatpush1.bf16.msra.mxu0 0
  %2359 = vmatprep.subr.bf16.mxu0 0
  %2360 = vmatpush1.bf16.msra.mxu0 0
  %2361 = vmatprep.subr.bf16.mxu0 0
  %2362 = vmatpush1.bf16.msra.mxu0 0
  %2363 = vmatprep.subr.bf16.mxu0 0
  %2364 = vmatpush1.bf16.msra.mxu0 0
  %2365 = vmatprep.subr.bf16.mxu0 0
  %2366 = vmatpush1.bf16.msra.mxu0 0
  %2367 = vmatprep.subr.bf16.mxu0 0
  %2368 = vmatpush1.bf16.msra.mxu0 0
  %2369 = vmatprep.subr.bf16.mxu0 0
  %2370 = vmatpush1.bf16.msra.mxu0 0
  %2371 = vmatprep.subr.bf16.mxu0 0
  %2372 = vmatpush1.bf16.msra.mxu0 0
  %2373 = vmatprep.subr.bf16.mxu0 0
  %2374 = vmatpush1.bf16.msra.mxu0 0
  %2375 = vmatprep.subr.bf16.mxu0 0
  %2376 = vmatpush1.bf16.msra.mxu0 0
  %2377 = vmatprep.subr.bf16.mxu0 0
  %2378 = vmatpush1.bf16.msra.mxu0 0
  %2379 = vmatprep.subr.bf16.mxu0 0
  %2380 = vmatpush1.bf16.msra.mxu0 0
  %2381 = vmatprep.subr.bf16.mxu0 0
  %2382 = vmatpush1.bf16.msra.mxu0 0
  %2383 = vmatprep.subr.bf16.mxu0 0
  %2384 = vmatpush1.bf16.msra.mxu0 0
  %2385 = vmatprep.subr.bf16.mxu0 0
  %2386 = vmatpush1.bf16.msra.mxu0 0
  %2387 = vmatprep.mubr.bf16.mxu0 0
  %2388 = vmatmul.mubr.bf16.gmra.mrb[0].mxu0 %v75
  %v2389 = vpop.f32.mrb[0].mxu0
  %v2390 = vadd.f32 0.0, %v2389
  %v2391 = vpop.f32.mrb[0].mxu0
  %v2392 = vpop.f32.mrb[0].mxu0
  %v2393 = vadd.f32 0.0, %v2392
  %v2394 = vpop.f32.mrb[0].mxu0
  %2395 = vdwg.mxu0
  %v2396 = vpack.c.bf16 %v2393, %v2390
  %2397 = vmatprep.subr.bf16.mxu0 0
  %2398 = vmatpush1.bf16.msra.mxu0 %v2396
  %2399 = vmatprep.subr.bf16.mxu0 0
  %2400 = vmatpush1.bf16.msra.mxu0 0
  %2401 = vmatprep.subr.bf16.mxu0 0
  %2402 = vmatpush1.bf16.msra.mxu0 0
  %2403 = vmatprep.subr.bf16.mxu0 0
  %2404 = vmatpush1.bf16.msra.mxu0 0
  %2405 = vmatprep.subr.bf16.mxu0 0
  %2406 = vmatpush1.bf16.msra.mxu0 0
  %2407 = vmatprep.subr.bf16.mxu0 0
  %2408 = vmatpush1.bf16.msra.mxu0 0
  %2409 = vmatprep.subr.bf16.mxu0 0
  %2410 = vmatpush1.bf16.msra.mxu0 0
  %2411 = vmatprep.subr.bf16.mxu0 0
  %2412 = vmatpush1.bf16.msra.mxu0 0
  %2413 = vmatprep.subr.bf16.mxu0 0
  %2414 = vmatpush1.bf16.msra.mxu0 0
  %2415 = vmatprep.subr.bf16.mxu0 0
  %2416 = vmatpush1.bf16.msra.mxu0 0
  %2417 = vmatprep.subr.bf16.mxu0 0
  %2418 = vmatpush1.bf16.msra.mxu0 0
  %2419 = vmatprep.subr.bf16.mxu0 0
  %2420 = vmatpush1.bf16.msra.mxu0 0
  %2421 = vmatprep.subr.bf16.mxu0 0
  %2422 = vmatpush1.bf16.msra.mxu0 0
  %2423 = vmatprep.subr.bf16.mxu0 0
  %2424 = vmatpush1.bf16.msra.mxu0 0
  %2425 = vmatprep.subr.bf16.mxu0 0
  %2426 = vmatpush1.bf16.msra.mxu0 0
  %2427 = vmatprep.subr.bf16.mxu0 0
  %2428 = vmatpush1.bf16.msra.mxu0 0
  %2429 = vmatprep.mubr.bf16.mxu0 0
  %2430 = vmatmul.mubr.bf16.gmra.mrb[0].mxu0 %v75
  %v2431 = vpop.f32.mrb[0].mxu0
  %v2432 = vadd.f32 0.0, %v2431
  %v2433 = vpop.f32.mrb[0].mxu0
  %v2434 = vpop.f32.mrb[0].mxu0
  %v2435 = vadd.f32 0.0, %v2434
  %v2436 = vpop.f32.mrb[0].mxu0
  %2437 = vdwg.mxu0
  %v2438 = vmul.f32 %v2432, 2.0
  %v2439 = vmul.f32 %v2435, 2.0
  %v2440 = vsub.f32 %v2438, %v2352
  %v2441 = vsub.f32 %v2439, %v2353
  %v2442 = vpack.c.bf16 %v2441, %v2440
  %2443 = vmatprep.subr.bf16.mxu0 0
  %2444 = vmatpush1.bf16.msra.mxu0 %v2354
  %2445 = vmatprep.subr.bf16.mxu0 0
  %2446 = vmatpush1.bf16.msra.mxu0 0
  %2447 = vmatprep.subr.bf16.mxu0 0
  %2448 = vmatpush1.bf16.msra.mxu0 0
  %2449 = vmatprep.subr.bf16.mxu0 0
  %2450 = vmatpush1.bf16.msra.mxu0 0
  %2451 = vmatprep.subr.bf16.mxu0 0
  %2452 = vmatpush1.bf16.msra.mxu0 0
  %2453 = vmatprep.subr.bf16.mxu0 0
  %2454 = vmatpush1.bf16.msra.mxu0 0
  %2455 = vmatprep.subr.bf16.mxu0 0
  %2456 = vmatpush1.bf16.msra.mxu0 0
  %2457 = vmatprep.subr.bf16.mxu0 0
  %2458 = vmatpush1.bf16.msra.mxu0 0
  %2459 = vmatprep.subr.bf16.mxu0 0
  %2460 = vmatpush1.bf16.msra.mxu0 0
  %2461 = vmatprep.subr.bf16.mxu0 0
  %2462 = vmatpush1.bf16.msra.mxu0 0
  %2463 = vmatprep.subr.bf16.mxu0 0
  %2464 = vmatpush1.bf16.msra.mxu0 0
  %2465 = vmatprep.subr.bf16.mxu0 0
  %2466 = vmatpush1.bf16.msra.mxu0 0
  %2467 = vmatprep.subr.bf16.mxu0 0
  %2468 = vmatpush1.bf16.msra.mxu0 0
  %2469 = vmatprep.subr.bf16.mxu0 0
  %2470 = vmatpush1.bf16.msra.mxu0 0
  %2471 = vmatprep.subr.bf16.mxu0 0
  %2472 = vmatpush1.bf16.msra.mxu0 0
  %2473 = vmatprep.subr.bf16.mxu0 0
  %2474 = vmatpush1.bf16.msra.mxu0 0
  %2475 = vmatprep.mubr.bf16.mxu0 0
  %2476 = vmatmul.mubr.bf16.gmra.mrb[0].mxu0 %v169
  %v2477 = vpop.f32.mrb[0].mxu0
  %v2478 = vadd.f32 0.0, %v2477
  %v2479 = vpop.f32.mrb[0].mxu0
  %v2480 = vpop.f32.mrb[0].mxu0
  %v2481 = vadd.f32 0.0, %v2480
  %v2482 = vpop.f32.mrb[0].mxu0
  %2483 = vdwg.mxu0
  %v2484 = vpack.c.bf16 %v2481, %v2478
  %2485 = vmatprep.subr.bf16.mxu0 0
  %2486 = vmatpush1.bf16.msra.mxu0 %v2484
  %2487 = vmatprep.subr.bf16.mxu0 0
  %2488 = vmatpush1.bf16.msra.mxu0 0
  %2489 = vmatprep.subr.bf16.mxu0 0
  %2490 = vmatpush1.bf16.msra.mxu0 0
  %2491 = vmatprep.subr.bf16.mxu0 0
  %2492 = vmatpush1.bf16.msra.mxu0 0
  %2493 = vmatprep.subr.bf16.mxu0 0
  %2494 = vmatpush1.bf16.msra.mxu0 0
  %2495 = vmatprep.subr.bf16.mxu0 0
  %2496 = vmatpush1.bf16.msra.mxu0 0
  %2497 = vmatprep.subr.bf16.mxu0 0
  %2498 = vmatpush1.bf16.msra.mxu0 0
  %2499 = vmatprep.subr.bf16.mxu0 0
  %2500 = vmatpush1.bf16.msra.mxu0 0
  %2501 = vmatprep.subr.bf16.mxu0 0
  %2502 = vmatpush1.bf16.msra.mxu0 0
  %2503 = vmatprep.subr.bf16.mxu0 0
  %2504 = vmatpush1.bf16.msra.mxu0 0
  %2505 = vmatprep.subr.bf16.mxu0 0
  %2506 = vmatpush1.bf16.msra.mxu0 0
  %2507 = vmatprep.subr.bf16.mxu0 0
  %2508 = vmatpush1.bf16.msra.mxu0 0
  %2509 = vmatprep.subr.bf16.mxu0 0
  %2510 = vmatpush1.bf16.msra.mxu0 0
  %2511 = vmatprep.subr.bf16.mxu0 0
  %2512 = vmatpush1.bf16.msra.mxu0 0
  %2513 = vmatprep.subr.bf16.mxu0 0
  %2514 = vmatpush1.bf16.msra.mxu0 0
  %2515 = vmatprep.subr.bf16.mxu0 0
  %2516 = vmatpush1.bf16.msra.mxu0 0
  %2517 = vmatprep.mubr.bf16.mxu0 0
  %2518 = vmatmul.mubr.bf16.gmra.mrb[0].mxu0 %v169
  %v2519 = vpop.f32.mrb[0].mxu0
  %v2520 = vadd.f32 0.0, %v2519
  %v2521 = vpop.f32.mrb[0].mxu0
  %v2522 = vpop.f32.mrb[0].mxu0
  %v2523 = vadd.f32 0.0, %v2522
  %v2524 = vpop.f32.mrb[0].mxu0
  %2525 = vdwg.mxu0
  %v2526 = vmul.f32 %v2520, 2.0
  %v2527 = vmul.f32 %v2523, 2.0
  %v2528 = vsub.f32 %v2526, %v2352
  %v2529 = vsub.f32 %v2527, %v2353
  %v2530 = vpack.c.bf16 %v2529, %v2528
  %s2531 = scalar_lea.vmem %s1, 32
  %v2532 = vld [vmem:[%s2531] sm:$0xff]
  %v2533 = vld [vmem:[%s2531 + $0x8] sm:$0xff]
  %v2535 = vsel %vm271, %v2354, 0
  %2537 = vmatprep.subr.bf16.mxu0 0
  %2538 = vmatpush1.bf16.msra.mxu0 %v751
  %2539 = vmatprep.subr.bf16.mxu0 0
  %2540 = vmatpush1.bf16.msra.mxu0 %v752
  %2541 = vmatprep.subr.bf16.mxu0 0
  %2542 = vmatpush1.bf16.msra.mxu0 0
  %2543 = vmatprep.subr.bf16.mxu0 0
  %2544 = vmatpush1.bf16.msra.mxu0 0
  %2545 = vmatprep.subr.bf16.mxu0 0
  %2546 = vmatpush1.bf16.msra.mxu0 0
  %2547 = vmatprep.subr.bf16.mxu0 0
  %2548 = vmatpush1.bf16.msra.mxu0 0
  %2549 = vmatprep.subr.bf16.mxu0 0
  %2550 = vmatpush1.bf16.msra.mxu0 0
  %2551 = vmatprep.subr.bf16.mxu0 0
  %2552 = vmatpush1.bf16.msra.mxu0 0
  %2553 = vmatprep.subr.bf16.mxu0 0
  %2554 = vmatpush1.bf16.msra.mxu0 0
  %2555 = vmatprep.subr.bf16.mxu0 0
  %2556 = vmatpush1.bf16.msra.mxu0 0
  %2557 = vmatprep.subr.bf16.mxu0 0
  %2558 = vmatpush1.bf16.msra.mxu0 0
  %2559 = vmatprep.subr.bf16.mxu0 0
  %2560 = vmatpush1.bf16.msra.mxu0 0
  %2561 = vmatprep.subr.bf16.mxu0 0
  %2562 = vmatpush1.bf16.msra.mxu0 0
  %2563 = vmatprep.subr.bf16.mxu0 0
  %2564 = vmatpush1.bf16.msra.mxu0 0
  %2565 = vmatprep.subr.bf16.mxu0 0
  %2566 = vmatpush1.bf16.msra.mxu0 0
  %2567 = vmatprep.subr.bf16.mxu0 0
  %2568 = vmatpush1.bf16.msra.mxu0 0
  %2569 = vmatprep.mubr.bf16.mxu0 0
  %2570 = vmatmul.mubr.bf16.gmra.mrb[0].mxu0 %v2535
  %v2571 = vpop.f32.mrb[0].mxu0
  %v2572 = vadd.f32 0.0, %v2571
  %v2573 = vpop.f32.mrb[0].mxu0
  %v2574 = vpop.f32.mrb[0].mxu0
  %v2575 = vadd.f32 0.0, %v2574
  %v2576 = vpop.f32.mrb[0].mxu0
  %2577 = vdwg.mxu0
  %v2578 = vadd.f32 %v2532, %v2572
  %v2579 = vadd.f32 %v2533, %v2575
  %v2581 = vsel %vm271, %v2396, 0
  %2583 = vmatprep.subr.bf16.mxu0 0
  %2584 = vmatpush1.bf16.msra.mxu0 %v809
  %2585 = vmatprep.subr.bf16.mxu0 0
  %2586 = vmatpush1.bf16.msra.mxu0 %v810
  %2587 = vmatprep.subr.bf16.mxu0 0
  %2588 = vmatpush1.bf16.msra.mxu0 0
  %2589 = vmatprep.subr.bf16.mxu0 0
  %2590 = vmatpush1.bf16.msra.mxu0 0
  %2591 = vmatprep.subr.bf16.mxu0 0
  %2592 = vmatpush1.bf16.msra.mxu0 0
  %2593 = vmatprep.subr.bf16.mxu0 0
  %2594 = vmatpush1.bf16.msra.mxu0 0
  %2595 = vmatprep.subr.bf16.mxu0 0
  %2596 = vmatpush1.bf16.msra.mxu0 0
  %2597 = vmatprep.subr.bf16.mxu0 0
  %2598 = vmatpush1.bf16.msra.mxu0 0
  %2599 = vmatprep.subr.bf16.mxu0 0
  %2600 = vmatpush1.bf16.msra.mxu0 0
  %2601 = vmatprep.subr.bf16.mxu0 0
  %2602 = vmatpush1.bf16.msra.mxu0 0
  %2603 = vmatprep.subr.bf16.mxu0 0
  %2604 = vmatpush1.bf16.msra.mxu0 0
  %2605 = vmatprep.subr.bf16.mxu0 0
  %2606 = vmatpush1.bf16.msra.mxu0 0
  %2607 = vmatprep.subr.bf16.mxu0 0
  %2608 = vmatpush1.bf16.msra.mxu0 0
  %2609 = vmatprep.subr.bf16.mxu0 0
  %2610 = vmatpush1.bf16.msra.mxu0 0
  %2611 = vmatprep.subr.bf16.mxu0 0
  %2612 = vmatpush1.bf16.msra.mxu0 0
  %2613 = vmatprep.subr.bf16.mxu0 0
  %2614 = vmatpush1.bf16.msra.mxu0 0
  %2615 = vmatprep.mubr.bf16.mxu0 0
  %2616 = vmatmul.mubr.bf16.gmra.mrb[0].mxu0 %v2581
  %v2617 = vpop.f32.mrb[0].mxu0
  %v2618 = vadd.f32 0.0, %v2617
  %v2619 = vpop.f32.mrb[0].mxu0
  %v2620 = vpop.f32.mrb[0].mxu0
  %v2621 = vadd.f32 0.0, %v2620
  %v2622 = vpop.f32.mrb[0].mxu0
  %2623 = vdwg.mxu0
  %v2624 = vadd.f32 %v2578, %v2618
  %v2625 = vadd.f32 %v2579, %v2621
  %v2627 = vsel %vm271, %v2442, 0
  %2629 = vmatprep.subr.bf16.mxu0 0
  %2630 = vmatpush1.bf16.msra.mxu0 %v867
  %2631 = vmatprep.subr.bf16.mxu0 0
  %2632 = vmatpush1.bf16.msra.mxu0 %v868
  %2633 = vmatprep.subr.bf16.mxu0 0
  %2634 = vmatpush1.bf16.msra.mxu0 0
  %2635 = vmatprep.subr.bf16.mxu0 0
  %2636 = vmatpush1.bf16.msra.mxu0 0
  %2637 = vmatprep.subr.bf16.mxu0 0
  %2638 = vmatpush1.bf16.msra.mxu0 0
  %2639 = vmatprep.subr.bf16.mxu0 0
  %2640 = vmatpush1.bf16.msra.mxu0 0
  %2641 = vmatprep.subr.bf16.mxu0 0
  %2642 = vmatpush1.bf16.msra.mxu0 0
  %2643 = vmatprep.subr.bf16.mxu0 0
  %2644 = vmatpush1.bf16.msra.mxu0 0
  %2645 = vmatprep.subr.bf16.mxu0 0
  %2646 = vmatpush1.bf16.msra.mxu0 0
  %2647 = vmatprep.subr.bf16.mxu0 0
  %2648 = vmatpush1.bf16.msra.mxu0 0
  %2649 = vmatprep.subr.bf16.mxu0 0
  %2650 = vmatpush1.bf16.msra.mxu0 0
  %2651 = vmatprep.subr.bf16.mxu0 0
  %2652 = vmatpush1.bf16.msra.mxu0 0
  %2653 = vmatprep.subr.bf16.mxu0 0
  %2654 = vmatpush1.bf16.msra.mxu0 0
  %2655 = vmatprep.subr.bf16.mxu0 0
  %2656 = vmatpush1.bf16.msra.mxu0 0
  %2657 = vmatprep.subr.bf16.mxu0 0
  %2658 = vmatpush1.bf16.msra.mxu0 0
  %2659 = vmatprep.subr.bf16.mxu0 0
  %2660 = vmatpush1.bf16.msra.mxu0 0
  %2661 = vmatprep.mubr.bf16.mxu0 0
  %2662 = vmatmul.mubr.bf16.gmra.mrb[0].mxu0 %v2627
  %v2663 = vpop.f32.mrb[0].mxu0
  %v2664 = vadd.f32 0.0, %v2663
  %v2665 = vpop.f32.mrb[0].mxu0
  %v2666 = vpop.f32.mrb[0].mxu0
  %v2667 = vadd.f32 0.0, %v2666
  %v2668 = vpop.f32.mrb[0].mxu0
  %2669 = vdwg.mxu0
  %v2670 = vadd.f32 %v2624, %v2664
  %v2671 = vadd.f32 %v2625, %v2667
  %v2673 = vsel %vm271, %v2484, 0
  %2675 = vmatprep.subr.bf16.mxu0 0
  %2676 = vmatpush1.bf16.msra.mxu0 %v925
  %2677 = vmatprep.subr.bf16.mxu0 0
  %2678 = vmatpush1.bf16.msra.mxu0 %v926
  %2679 = vmatprep.subr.bf16.mxu0 0
  %2680 = vmatpush1.bf16.msra.mxu0 0
  %2681 = vmatprep.subr.bf16.mxu0 0
  %2682 = vmatpush1.bf16.msra.mxu0 0
  %2683 = vmatprep.subr.bf16.mxu0 0
  %2684 = vmatpush1.bf16.msra.mxu0 0
  %2685 = vmatprep.subr.bf16.mxu0 0
  %2686 = vmatpush1.bf16.msra.mxu0 0
  %2687 = vmatprep.subr.bf16.mxu0 0
  %2688 = vmatpush1.bf16.msra.mxu0 0
  %2689 = vmatprep.subr.bf16.mxu0 0
  %2690 = vmatpush1.bf16.msra.mxu0 0
  %2691 = vmatprep.subr.bf16.mxu0 0
  %2692 = vmatpush1.bf16.msra.mxu0 0
  %2693 = vmatprep.subr.bf16.mxu0 0
  %2694 = vmatpush1.bf16.msra.mxu0 0
  %2695 = vmatprep.subr.bf16.mxu0 0
  %2696 = vmatpush1.bf16.msra.mxu0 0
  %2697 = vmatprep.subr.bf16.mxu0 0
  %2698 = vmatpush1.bf16.msra.mxu0 0
  %2699 = vmatprep.subr.bf16.mxu0 0
  %2700 = vmatpush1.bf16.msra.mxu0 0
  %2701 = vmatprep.subr.bf16.mxu0 0
  %2702 = vmatpush1.bf16.msra.mxu0 0
  %2703 = vmatprep.subr.bf16.mxu0 0
  %2704 = vmatpush1.bf16.msra.mxu0 0
  %2705 = vmatprep.subr.bf16.mxu0 0
  %2706 = vmatpush1.bf16.msra.mxu0 0
  %2707 = vmatprep.mubr.bf16.mxu0 0
  %2708 = vmatmul.mubr.bf16.gmra.mrb[0].mxu0 %v2673
  %v2709 = vpop.f32.mrb[0].mxu0
  %v2710 = vadd.f32 0.0, %v2709
  %v2711 = vpop.f32.mrb[0].mxu0
  %v2712 = vpop.f32.mrb[0].mxu0
  %v2713 = vadd.f32 0.0, %v2712
  %v2714 = vpop.f32.mrb[0].mxu0
  %2715 = vdwg.mxu0
  %v2716 = vadd.f32 %v2670, %v2710
  %v2717 = vadd.f32 %v2671, %v2713
  %v2719 = vsel %vm271, %v2530, 0
  %2721 = vmatprep.subr.bf16.mxu0 0
  %2722 = vmatpush1.bf16.msra.mxu0 %v983
  %2723 = vmatprep.subr.bf16.mxu0 0
  %2724 = vmatpush1.bf16.msra.mxu0 %v984
  %2725 = vmatprep.subr.bf16.mxu0 0
  %2726 = vmatpush1.bf16.msra.mxu0 0
  %2727 = vmatprep.subr.bf16.mxu0 0
  %2728 = vmatpush1.bf16.msra.mxu0 0
  %2729 = vmatprep.subr.bf16.mxu0 0
  %2730 = vmatpush1.bf16.msra.mxu0 0
  %2731 = vmatprep.subr.bf16.mxu0 0
  %2732 = vmatpush1.bf16.msra.mxu0 0
  %2733 = vmatprep.subr.bf16.mxu0 0
  %2734 = vmatpush1.bf16.msra.mxu0 0
  %2735 = vmatprep.subr.bf16.mxu0 0
  %2736 = vmatpush1.bf16.msra.mxu0 0
  %2737 = vmatprep.subr.bf16.mxu0 0
  %2738 = vmatpush1.bf16.msra.mxu0 0
  %2739 = vmatprep.subr.bf16.mxu0 0
  %2740 = vmatpush1.bf16.msra.mxu0 0
  %2741 = vmatprep.subr.bf16.mxu0 0
  %2742 = vmatpush1.bf16.msra.mxu0 0
  %2743 = vmatprep.subr.bf16.mxu0 0
  %2744 = vmatpush1.bf16.msra.mxu0 0
  %2745 = vmatprep.subr.bf16.mxu0 0
  %2746 = vmatpush1.bf16.msra.mxu0 0
  %2747 = vmatprep.subr.bf16.mxu0 0
  %2748 = vmatpush1.bf16.msra.mxu0 0
  %2749 = vmatprep.subr.bf16.mxu0 0
  %2750 = vmatpush1.bf16.msra.mxu0 0
  %2751 = vmatprep.subr.bf16.mxu0 0
  %2752 = vmatpush1.bf16.msra.mxu0 0
  %2753 = vmatprep.mubr.bf16.mxu0 0
  %2754 = vmatmul.mubr.bf16.gmra.mrb[0].mxu0 %v2719
  %v2755 = vpop.f32.mrb[0].mxu0
  %v2756 = vadd.f32 0.0, %v2755
  %v2757 = vpop.f32.mrb[0].mxu0
  %v2758 = vpop.f32.mrb[0].mxu0
  %v2759 = vadd.f32 0.0, %v2758
  %v2760 = vpop.f32.mrb[0].mxu0
  %2761 = vdwg.mxu0
  %v2762 = vadd.f32 %v2716, %v2756
  %v2763 = vadd.f32 %v2717, %v2759
  %v2764 = vtanh.pop %v2762
  %v2765 = vtanh.pop %v2763
  %v2766 = vmul.f32 %v2349, %v1913
  %v2767 = vmul.f32 %v2351, %v1914
  %v2768 = vsub.f32 1.0, %v2349
  %v2769 = vsub.f32 1.0, %v2351
  %2772 = vrot.lane.b32.xlu0 %v2764, 32
  %v2773 = vpop.permute.xlu0 %2772
  %2774 = vrot.lane.b32.xlu0 %v2765, 32
  %v2775 = vpop.permute.xlu0 %2774
  %v2778 = vmul.f32 %v2768, %v2773
  %v2779 = vmul.f32 %v2769, %v2775
  %v2780 = vadd.f32 %v2766, %v2778
  %v2781 = vadd.f32 %v2767, %v2779
  %2784 = vrot.lane.b32.xlu0 %v2780, 96
  %v2785 = vpop.permute.xlu0 %2784
  %2786 = vrot.lane.b32.xlu0 %v2781, 96
  %v2787 = vpop.permute.xlu0 %2786
  %s2790 = scalar_lea.vmem %s6, 32
  %2791 = vst.msk [vmem:[%s2790] sm:$0xff] %vm271, %v2785
  %2792 = vst.msk [vmem:[%s2790 + $0x8] sm:$0xff] %vm271, %v2787
  %v2793 = vpack.c.bf16 %v2781, %v2780
  %2795 = vrot.lane.b32.xlu0 %v2793, 96
  %v2796 = vpop.permute.xlu0 %2795
  %2798 = vmatprep.subr.bf16.mxu0 0
  %2799 = vmatpush1.bf16.msra.mxu0 %v2796
  %2800 = vmatprep.subr.bf16.mxu0 0
  %2801 = vmatpush1.bf16.msra.mxu0 0
  %2802 = vmatprep.subr.bf16.mxu0 0
  %2803 = vmatpush1.bf16.msra.mxu0 0
  %2804 = vmatprep.subr.bf16.mxu0 0
  %2805 = vmatpush1.bf16.msra.mxu0 0
  %2806 = vmatprep.subr.bf16.mxu0 0
  %2807 = vmatpush1.bf16.msra.mxu0 0
  %2808 = vmatprep.subr.bf16.mxu0 0
  %2809 = vmatpush1.bf16.msra.mxu0 0
  %2810 = vmatprep.subr.bf16.mxu0 0
  %2811 = vmatpush1.bf16.msra.mxu0 0
  %2812 = vmatprep.subr.bf16.mxu0 0
  %2813 = vmatpush1.bf16.msra.mxu0 0
  %2814 = vmatprep.subr.bf16.mxu0 0
  %2815 = vmatpush1.bf16.msra.mxu0 0
  %2816 = vmatprep.subr.bf16.mxu0 0
  %2817 = vmatpush1.bf16.msra.mxu0 0
  %2818 = vmatprep.subr.bf16.mxu0 0
  %2819 = vmatpush1.bf16.msra.mxu0 0
  %2820 = vmatprep.subr.bf16.mxu0 0
  %2821 = vmatpush1.bf16.msra.mxu0 0
  %2822 = vmatprep.subr.bf16.mxu0 0
  %2823 = vmatpush1.bf16.msra.mxu0 0
  %2824 = vmatprep.subr.bf16.mxu0 0
  %2825 = vmatpush1.bf16.msra.mxu0 0
  %2826 = vmatprep.subr.bf16.mxu0 0
  %2827 = vmatpush1.bf16.msra.mxu0 0
  %2828 = vmatprep.subr.bf16.mxu0 0
  %2829 = vmatpush1.bf16.msra.mxu0 0
  %2830 = vmatprep.mubr.bf16.mxu0 0
  %2831 = vmatmul.mubr.bf16.gmra.mrb[0].mxu0 %v75
  %v2832 = vpop.f32.mrb[0].mxu0
  %v2833 = vadd.f32 0.0, %v2832
  %v2834 = vpop.f32.mrb[0].mxu0
  %v2835 = vpop.f32.mrb[0].mxu0
  %v2836 = vadd.f32 0.0, %v2835
  %v2837 = vpop.f32.mrb[0].mxu0
  %2838 = vdwg.mxu0
  %v2839 = vpack.c.bf16 %v2836, %v2833
  %2840 = vmatprep.subr.bf16.mxu0 0
  %2841 = vmatpush1.bf16.msra.mxu0 %v2839
  %2842 = vmatprep.subr.bf16.mxu0 0
  %2843 = vmatpush1.bf16.msra.mxu0 0
  %2844 = vmatprep.subr.bf16.mxu0 0
  %2845 = vmatpush1.bf16.msra.mxu0 0
  %2846 = vmatprep.subr.bf16.mxu0 0
  %2847 = vmatpush1.bf16.msra.mxu0 0
  %2848 = vmatprep.subr.bf16.mxu0 0
  %2849 = vmatpush1.bf16.msra.mxu0 0
  %2850 = vmatprep.subr.bf16.mxu0 0
  %2851 = vmatpush1.bf16.msra.mxu0 0
  %2852 = vmatprep.subr.bf16.mxu0 0
  %2853 = vmatpush1.bf16.msra.mxu0 0
  %2854 = vmatprep.subr.bf16.mxu0 0
  %2855 = vmatpush1.bf16.msra.mxu0 0
  %2856 = vmatprep.subr.bf16.mxu0 0
  %2857 = vmatpush1.bf16.msra.mxu0 0
  %2858 = vmatprep.subr.bf16.mxu0 0
  %2859 = vmatpush1.bf16.msra.mxu0 0
  %2860 = vmatprep.subr.bf16.mxu0 0
  %2861 = vmatpush1.bf16.msra.mxu0 0
  %2862 = vmatprep.subr.bf16.mxu0 0
  %2863 = vmatpush1.bf16.msra.mxu0 0
  %2864 = vmatprep.subr.bf16.mxu0 0
  %2865 = vmatpush1.bf16.msra.mxu0 0
  %2866 = vmatprep.subr.bf16.mxu0 0
  %2867 = vmatpush1.bf16.msra.mxu0 0
  %2868 = vmatprep.subr.bf16.mxu0 0
  %2869 = vmatpush1.bf16.msra.mxu0 0
  %2870 = vmatprep.subr.bf16.mxu0 0
  %2871 = vmatpush1.bf16.msra.mxu0 0
  %2872 = vmatprep.mubr.bf16.mxu0 0
  %2873 = vmatmul.mubr.bf16.gmra.mrb[0].mxu0 %v75
  %v2874 = vpop.f32.mrb[0].mxu0
  %v2875 = vadd.f32 0.0, %v2874
  %v2876 = vpop.f32.mrb[0].mxu0
  %v2877 = vpop.f32.mrb[0].mxu0
  %v2878 = vadd.f32 0.0, %v2877
  %v2879 = vpop.f32.mrb[0].mxu0
  %2880 = vdwg.mxu0
  %v2881 = vmul.f32 %v2875, 2.0
  %v2882 = vmul.f32 %v2878, 2.0
  %v2883 = vsub.f32 %v2881, %v2785
  %v2884 = vsub.f32 %v2882, %v2787
  %v2885 = vpack.c.bf16 %v2884, %v2883
  %2886 = vmatprep.subr.bf16.mxu0 0
  %2887 = vmatpush1.bf16.msra.mxu0 %v2796
  %2888 = vmatprep.subr.bf16.mxu0 0
  %2889 = vmatpush1.bf16.msra.mxu0 0
  %2890 = vmatprep.subr.bf16.mxu0 0
  %2891 = vmatpush1.bf16.msra.mxu0 0
  %2892 = vmatprep.subr.bf16.mxu0 0
  %2893 = vmatpush1.bf16.msra.mxu0 0
  %2894 = vmatprep.subr.bf16.mxu0 0
  %2895 = vmatpush1.bf16.msra.mxu0 0
  %2896 = vmatprep.subr.bf16.mxu0 0
  %2897 = vmatpush1.bf16.msra.mxu0 0
  %2898 = vmatprep.subr.bf16.mxu0 0
  %2899 = vmatpush1.bf16.msra.mxu0 0
  %2900 = vmatprep.subr.bf16.mxu0 0
  %2901 = vmatpush1.bf16.msra.mxu0 0
  %2902 = vmatprep.subr.bf16.mxu0 0
  %2903 = vmatpush1.bf16.msra.mxu0 0
  %2904 = vmatprep.subr.bf16.mxu0 0
  %2905 = vmatpush1.bf16.msra.mxu0 0
  %2906 = vmatprep.subr.bf16.mxu0 0
  %2907 = vmatpush1.bf16.msra.mxu0 0
  %2908 = vmatprep.subr.bf16.mxu0 0
  %2909 = vmatpush1.bf16.msra.mxu0 0
  %2910 = vmatprep.subr.bf16.mxu0 0
  %2911 = vmatpush1.bf16.msra.mxu0 0
  %2912 = vmatprep.subr.bf16.mxu0 0
  %2913 = vmatpush1.bf16.msra.mxu0 0
  %2914 = vmatprep.subr.bf16.mxu0 0
  %2915 = vmatpush1.bf16.msra.mxu0 0
  %2916 = vmatprep.subr.bf16.mxu0 0
  %2917 = vmatpush1.bf16.msra.mxu0 0
  %2918 = vmatprep.mubr.bf16.mxu0 0
  %2919 = vmatmul.mubr.bf16.gmra.mrb[0].mxu0 %v169
  %v2920 = vpop.f32.mrb[0].mxu0
  %v2921 = vadd.f32 0.0, %v2920
  %v2922 = vpop.f32.mrb[0].mxu0
  %v2923 = vpop.f32.mrb[0].mxu0
  %v2924 = vadd.f32 0.0, %v2923
  %v2925 = vpop.f32.mrb[0].mxu0
  %2926 = vdwg.mxu0
  %v2927 = vpack.c.bf16 %v2924, %v2921
  %2928 = vmatprep.subr.bf16.mxu0 0
  %2929 = vmatpush1.bf16.msra.mxu0 %v2927
  %2930 = vmatprep.subr.bf16.mxu0 0
  %2931 = vmatpush1.bf16.msra.mxu0 0
  %2932 = vmatprep.subr.bf16.mxu0 0
  %2933 = vmatpush1.bf16.msra.mxu0 0
  %2934 = vmatprep.subr.bf16.mxu0 0
  %2935 = vmatpush1.bf16.msra.mxu0 0
  %2936 = vmatprep.subr.bf16.mxu0 0
  %2937 = vmatpush1.bf16.msra.mxu0 0
  %2938 = vmatprep.subr.bf16.mxu0 0
  %2939 = vmatpush1.bf16.msra.mxu0 0
  %2940 = vmatprep.subr.bf16.mxu0 0
  %2941 = vmatpush1.bf16.msra.mxu0 0
  %2942 = vmatprep.subr.bf16.mxu0 0
  %2943 = vmatpush1.bf16.msra.mxu0 0
  %2944 = vmatprep.subr.bf16.mxu0 0
  %2945 = vmatpush1.bf16.msra.mxu0 0
  %2946 = vmatprep.subr.bf16.mxu0 0
  %2947 = vmatpush1.bf16.msra.mxu0 0
  %2948 = vmatprep.subr.bf16.mxu0 0
  %2949 = vmatpush1.bf16.msra.mxu0 0
  %2950 = vmatprep.subr.bf16.mxu0 0
  %2951 = vmatpush1.bf16.msra.mxu0 0
  %2952 = vmatprep.subr.bf16.mxu0 0
  %2953 = vmatpush1.bf16.msra.mxu0 0
  %2954 = vmatprep.subr.bf16.mxu0 0
  %2955 = vmatpush1.bf16.msra.mxu0 0
  %2956 = vmatprep.subr.bf16.mxu0 0
  %2957 = vmatpush1.bf16.msra.mxu0 0
  %2958 = vmatprep.subr.bf16.mxu0 0
  %2959 = vmatpush1.bf16.msra.mxu0 0
  %2960 = vmatprep.mubr.bf16.mxu0 0
  %2961 = vmatmul.mubr.bf16.gmra.mrb[0].mxu0 %v169
  %v2962 = vpop.f32.mrb[0].mxu0
  %v2963 = vadd.f32 0.0, %v2962
  %v2964 = vpop.f32.mrb[0].mxu0
  %v2965 = vpop.f32.mrb[0].mxu0
  %v2966 = vadd.f32 0.0, %v2965
  %v2967 = vpop.f32.mrb[0].mxu0
  %2968 = vdwg.mxu0
  %v2969 = vmul.f32 %v2963, 2.0
  %v2970 = vmul.f32 %v2966, 2.0
  %v2971 = vsub.f32 %v2969, %v2785
  %v2972 = vsub.f32 %v2970, %v2787
  %v2973 = vpack.c.bf16 %v2972, %v2971
  %s2974 = scalar_lea.vmem %s0, 48
  %v2975 = vld [vmem:[%s2974] sm:$0xff]
  %v2976 = vld [vmem:[%s2974 + $0x8] sm:$0xff]
  %v2978 = vsel %vm271, %v2796, 0
  %2980 = vmatprep.subr.bf16.mxu0 0
  %2981 = vmatpush1.bf16.msra.mxu0 %v267
  %2982 = vmatprep.subr.bf16.mxu0 0
  %2983 = vmatpush1.bf16.msra.mxu0 %v268
  %2984 = vmatprep.subr.bf16.mxu0 0
  %2985 = vmatpush1.bf16.msra.mxu0 0
  %2986 = vmatprep.subr.bf16.mxu0 0
  %2987 = vmatpush1.bf16.msra.mxu0 0
  %2988 = vmatprep.subr.bf16.mxu0 0
  %2989 = vmatpush1.bf16.msra.mxu0 0
  %2990 = vmatprep.subr.bf16.mxu0 0
  %2991 = vmatpush1.bf16.msra.mxu0 0
  %2992 = vmatprep.subr.bf16.mxu0 0
  %2993 = vmatpush1.bf16.msra.mxu0 0
  %2994 = vmatprep.subr.bf16.mxu0 0
  %2995 = vmatpush1.bf16.msra.mxu0 0
  %2996 = vmatprep.subr.bf16.mxu0 0
  %2997 = vmatpush1.bf16.msra.mxu0 0
  %2998 = vmatprep.subr.bf16.mxu0 0
  %2999 = vmatpush1.bf16.msra.mxu0 0
  %3000 = vmatprep.subr.bf16.mxu0 0
  %3001 = vmatpush1.bf16.msra.mxu0 0
  %3002 = vmatprep.subr.bf16.mxu0 0
  %3003 = vmatpush1.bf16.msra.mxu0 0
  %3004 = vmatprep.subr.bf16.mxu0 0
  %3005 = vmatpush1.bf16.msra.mxu0 0
  %3006 = vmatprep.subr.bf16.mxu0 0
  %3007 = vmatpush1.bf16.msra.mxu0 0
  %3008 = vmatprep.subr.bf16.mxu0 0
  %3009 = vmatpush1.bf16.msra.mxu0 0
  %3010 = vmatprep.subr.bf16.mxu0 0
  %3011 = vmatpush1.bf16.msra.mxu0 0
  %3012 = vmatprep.mubr.bf16.mxu0 0
  %3013 = vmatmul.mubr.bf16.gmra.mrb[0].mxu0 %v2978
  %v3014 = vpop.f32.mrb[0].mxu0
  %v3015 = vadd.f32 0.0, %v3014
  %v3016 = vpop.f32.mrb[0].mxu0
  %v3017 = vpop.f32.mrb[0].mxu0
  %v3018 = vadd.f32 0.0, %v3017
  %v3019 = vpop.f32.mrb[0].mxu0
  %3020 = vdwg.mxu0
  %v3021 = vadd.f32 %v2975, %v3015
  %v3022 = vadd.f32 %v2976, %v3018
  %v3024 = vsel %vm271, %v2839, 0
  %3026 = vmatprep.subr.bf16.mxu0 0
  %3027 = vmatpush1.bf16.msra.mxu0 %v326
  %3028 = vmatprep.subr.bf16.mxu0 0
  %3029 = vmatpush1.bf16.msra.mxu0 %v327
  %3030 = vmatprep.subr.bf16.mxu0 0
  %3031 = vmatpush1.bf16.msra.mxu0 0
  %3032 = vmatprep.subr.bf16.mxu0 0
  %3033 = vmatpush1.bf16.msra.mxu0 0
  %3034 = vmatprep.subr.bf16.mxu0 0
  %3035 = vmatpush1.bf16.msra.mxu0 0
  %3036 = vmatprep.subr.bf16.mxu0 0
  %3037 = vmatpush1.bf16.msra.mxu0 0
  %3038 = vmatprep.subr.bf16.mxu0 0
  %3039 = vmatpush1.bf16.msra.mxu0 0
  %3040 = vmatprep.subr.bf16.mxu0 0
  %3041 = vmatpush1.bf16.msra.mxu0 0
  %3042 = vmatprep.subr.bf16.mxu0 0
  %3043 = vmatpush1.bf16.msra.mxu0 0
  %3044 = vmatprep.subr.bf16.mxu0 0
  %3045 = vmatpush1.bf16.msra.mxu0 0
  %3046 = vmatprep.subr.bf16.mxu0 0
  %3047 = vmatpush1.bf16.msra.mxu0 0
  %3048 = vmatprep.subr.bf16.mxu0 0
  %3049 = vmatpush1.bf16.msra.mxu0 0
  %3050 = vmatprep.subr.bf16.mxu0 0
  %3051 = vmatpush1.bf16.msra.mxu0 0
  %3052 = vmatprep.subr.bf16.mxu0 0
  %3053 = vmatpush1.bf16.msra.mxu0 0
  %3054 = vmatprep.subr.bf16.mxu0 0
  %3055 = vmatpush1.bf16.msra.mxu0 0
  %3056 = vmatprep.subr.bf16.mxu0 0
  %3057 = vmatpush1.bf16.msra.mxu0 0
  %3058 = vmatprep.mubr.bf16.mxu0 0
  %3059 = vmatmul.mubr.bf16.gmra.mrb[0].mxu0 %v3024
  %v3060 = vpop.f32.mrb[0].mxu0
  %v3061 = vadd.f32 0.0, %v3060
  %v3062 = vpop.f32.mrb[0].mxu0
  %v3063 = vpop.f32.mrb[0].mxu0
  %v3064 = vadd.f32 0.0, %v3063
  %v3065 = vpop.f32.mrb[0].mxu0
  %3066 = vdwg.mxu0
  %v3067 = vadd.f32 %v3021, %v3061
  %v3068 = vadd.f32 %v3022, %v3064
  %v3070 = vsel %vm271, %v2885, 0
  %3072 = vmatprep.subr.bf16.mxu0 0
  %3073 = vmatpush1.bf16.msra.mxu0 %v384
  %3074 = vmatprep.subr.bf16.mxu0 0
  %3075 = vmatpush1.bf16.msra.mxu0 %v385
  %3076 = vmatprep.subr.bf16.mxu0 0
  %3077 = vmatpush1.bf16.msra.mxu0 0
  %3078 = vmatprep.subr.bf16.mxu0 0
  %3079 = vmatpush1.bf16.msra.mxu0 0
  %3080 = vmatprep.subr.bf16.mxu0 0
  %3081 = vmatpush1.bf16.msra.mxu0 0
  %3082 = vmatprep.subr.bf16.mxu0 0
  %3083 = vmatpush1.bf16.msra.mxu0 0
  %3084 = vmatprep.subr.bf16.mxu0 0
  %3085 = vmatpush1.bf16.msra.mxu0 0
  %3086 = vmatprep.subr.bf16.mxu0 0
  %3087 = vmatpush1.bf16.msra.mxu0 0
  %3088 = vmatprep.subr.bf16.mxu0 0
  %3089 = vmatpush1.bf16.msra.mxu0 0
  %3090 = vmatprep.subr.bf16.mxu0 0
  %3091 = vmatpush1.bf16.msra.mxu0 0
  %3092 = vmatprep.subr.bf16.mxu0 0
  %3093 = vmatpush1.bf16.msra.mxu0 0
  %3094 = vmatprep.subr.bf16.mxu0 0
  %3095 = vmatpush1.bf16.msra.mxu0 0
  %3096 = vmatprep.subr.bf16.mxu0 0
  %3097 = vmatpush1.bf16.msra.mxu0 0
  %3098 = vmatprep.subr.bf16.mxu0 0
  %3099 = vmatpush1.bf16.msra.mxu0 0
  %3100 = vmatprep.subr.bf16.mxu0 0
  %3101 = vmatpush1.bf16.msra.mxu0 0
  %3102 = vmatprep.subr.bf16.mxu0 0
  %3103 = vmatpush1.bf16.msra.mxu0 0
  %3104 = vmatprep.mubr.bf16.mxu0 0
  %3105 = vmatmul.mubr.bf16.gmra.mrb[0].mxu0 %v3070
  %v3106 = vpop.f32.mrb[0].mxu0
  %v3107 = vadd.f32 0.0, %v3106
  %v3108 = vpop.f32.mrb[0].mxu0
  %v3109 = vpop.f32.mrb[0].mxu0
  %v3110 = vadd.f32 0.0, %v3109
  %v3111 = vpop.f32.mrb[0].mxu0
  %3112 = vdwg.mxu0
  %v3113 = vadd.f32 %v3067, %v3107
  %v3114 = vadd.f32 %v3068, %v3110
  %v3116 = vsel %vm271, %v2927, 0
  %3118 = vmatprep.subr.bf16.mxu0 0
  %3119 = vmatpush1.bf16.msra.mxu0 %v442
  %3120 = vmatprep.subr.bf16.mxu0 0
  %3121 = vmatpush1.bf16.msra.mxu0 %v443
  %3122 = vmatprep.subr.bf16.mxu0 0
  %3123 = vmatpush1.bf16.msra.mxu0 0
  %3124 = vmatprep.subr.bf16.mxu0 0
  %3125 = vmatpush1.bf16.msra.mxu0 0
  %3126 = vmatprep.subr.bf16.mxu0 0
  %3127 = vmatpush1.bf16.msra.mxu0 0
  %3128 = vmatprep.subr.bf16.mxu0 0
  %3129 = vmatpush1.bf16.msra.mxu0 0
  %3130 = vmatprep.subr.bf16.mxu0 0
  %3131 = vmatpush1.bf16.msra.mxu0 0
  %3132 = vmatprep.subr.bf16.mxu0 0
  %3133 = vmatpush1.bf16.msra.mxu0 0
  %3134 = vmatprep.subr.bf16.mxu0 0
  %3135 = vmatpush1.bf16.msra.mxu0 0
  %3136 = vmatprep.subr.bf16.mxu0 0
  %3137 = vmatpush1.bf16.msra.mxu0 0
  %3138 = vmatprep.subr.bf16.mxu0 0
  %3139 = vmatpush1.bf16.msra.mxu0 0
  %3140 = vmatprep.subr.bf16.mxu0 0
  %3141 = vmatpush1.bf16.msra.mxu0 0
  %3142 = vmatprep.subr.bf16.mxu0 0
  %3143 = vmatpush1.bf16.msra.mxu0 0
  %3144 = vmatprep.subr.bf16.mxu0 0
  %3145 = vmatpush1.bf16.msra.mxu0 0
  %3146 = vmatprep.subr.bf16.mxu0 0
  %3147 = vmatpush1.bf16.msra.mxu0 0
  %3148 = vmatprep.subr.bf16.mxu0 0
  %3149 = vmatpush1.bf16.msra.mxu0 0
  %3150 = vmatprep.mubr.bf16.mxu0 0
  %3151 = vmatmul.mubr.bf16.gmra.mrb[0].mxu0 %v3116
  %v3152 = vpop.f32.mrb[0].mxu0
  %v3153 = vadd.f32 0.0, %v3152
  %v3154 = vpop.f32.mrb[0].mxu0
  %v3155 = vpop.f32.mrb[0].mxu0
  %v3156 = vadd.f32 0.0, %v3155
  %v3157 = vpop.f32.mrb[0].mxu0
  %3158 = vdwg.mxu0
  %v3159 = vadd.f32 %v3113, %v3153
  %v3160 = vadd.f32 %v3114, %v3156
  %v3162 = vsel %vm271, %v2973, 0
  %3164 = vmatprep.subr.bf16.mxu0 0
  %3165 = vmatpush1.bf16.msra.mxu0 %v500
  %3166 = vmatprep.subr.bf16.mxu0 0
  %3167 = vmatpush1.bf16.msra.mxu0 %v501
  %3168 = vmatprep.subr.bf16.mxu0 0
  %3169 = vmatpush1.bf16.msra.mxu0 0
  %3170 = vmatprep.subr.bf16.mxu0 0
  %3171 = vmatpush1.bf16.msra.mxu0 0
  %3172 = vmatprep.subr.bf16.mxu0 0
  %3173 = vmatpush1.bf16.msra.mxu0 0
  %3174 = vmatprep.subr.bf16.mxu0 0
  %3175 = vmatpush1.bf16.msra.mxu0 0
  %3176 = vmatprep.subr.bf16.mxu0 0
  %3177 = vmatpush1.bf16.msra.mxu0 0
  %3178 = vmatprep.subr.bf16.mxu0 0
  %3179 = vmatpush1.bf16.msra.mxu0 0
  %3180 = vmatprep.subr.bf16.mxu0 0
  %3181 = vmatpush1.bf16.msra.mxu0 0
  %3182 = vmatprep.subr.bf16.mxu0 0
  %3183 = vmatpush1.bf16.msra.mxu0 0
  %3184 = vmatprep.subr.bf16.mxu0 0
  %3185 = vmatpush1.bf16.msra.mxu0 0
  %3186 = vmatprep.subr.bf16.mxu0 0
  %3187 = vmatpush1.bf16.msra.mxu0 0
  %3188 = vmatprep.subr.bf16.mxu0 0
  %3189 = vmatpush1.bf16.msra.mxu0 0
  %3190 = vmatprep.subr.bf16.mxu0 0
  %3191 = vmatpush1.bf16.msra.mxu0 0
  %3192 = vmatprep.subr.bf16.mxu0 0
  %3193 = vmatpush1.bf16.msra.mxu0 0
  %3194 = vmatprep.subr.bf16.mxu0 0
  %3195 = vmatpush1.bf16.msra.mxu0 0
  %3196 = vmatprep.mubr.bf16.mxu0 0
  %3197 = vmatmul.mubr.bf16.gmra.mrb[0].mxu0 %v3162
  %v3198 = vpop.f32.mrb[0].mxu0
  %v3199 = vadd.f32 0.0, %v3198
  %v3200 = vpop.f32.mrb[0].mxu0
  %v3201 = vpop.f32.mrb[0].mxu0
  %v3202 = vadd.f32 0.0, %v3201
  %v3203 = vpop.f32.mrb[0].mxu0
  %3204 = vdwg.mxu0
  %v3205 = vadd.f32 %v3159, %v3199
  %v3206 = vadd.f32 %v3160, %v3202
  %v3207 = vxor.u32 %v3205, 2147483648
  %v3208 = vxor.u32 %v3206, 2147483648
  %v3209 = vmul.f32 %v3207, 1.442695
  %v3210 = vpow.pop %v3209
  %v3211 = vmul.f32 %v3208, 1.442695
  %v3212 = vpow.pop %v3211
  %v3213 = vadd.f32 %v3210, 1.0
  %v3214 = vadd.f32 %v3212, 1.0
  %v3215 = vrcp.pop %v3213
  %v3216 = vmul.f32 1.0, %v3215
  %v3217 = vrcp.pop %v3214
  %v3218 = vmul.f32 1.0, %v3217
  %v3219 = vmul.f32 %v3216, %v2785
  %v3220 = vmul.f32 %v3218, %v2787
  %v3221 = vpack.c.bf16 %v3220, %v3219
  %3222 = vmatprep.subr.bf16.mxu0 0
  %3223 = vmatpush1.bf16.msra.mxu0 %v3221
  %3224 = vmatprep.subr.bf16.mxu0 0
  %3225 = vmatpush1.bf16.msra.mxu0 0
  %3226 = vmatprep.subr.bf16.mxu0 0
  %3227 = vmatpush1.bf16.msra.mxu0 0
  %3228 = vmatprep.subr.bf16.mxu0 0
  %3229 = vmatpush1.bf16.msra.mxu0 0
  %3230 = vmatprep.subr.bf16.mxu0 0
  %3231 = vmatpush1.bf16.msra.mxu0 0
  %3232 = vmatprep.subr.bf16.mxu0 0
  %3233 = vmatpush1.bf16.msra.mxu0 0
  %3234 = vmatprep.subr.bf16.mxu0 0
  %3235 = vmatpush1.bf16.msra.mxu0 0
  %3236 = vmatprep.subr.bf16.mxu0 0
  %3237 = vmatpush1.bf16.msra.mxu0 0
  %3238 = vmatprep.subr.bf16.mxu0 0
  %3239 = vmatpush1.bf16.msra.mxu0 0
  %3240 = vmatprep.subr.bf16.mxu0 0
  %3241 = vmatpush1.bf16.msra.mxu0 0
  %3242 = vmatprep.subr.bf16.mxu0 0
  %3243 = vmatpush1.bf16.msra.mxu0 0
  %3244 = vmatprep.subr.bf16.mxu0 0
  %3245 = vmatpush1.bf16.msra.mxu0 0
  %3246 = vmatprep.subr.bf16.mxu0 0
  %3247 = vmatpush1.bf16.msra.mxu0 0
  %3248 = vmatprep.subr.bf16.mxu0 0
  %3249 = vmatpush1.bf16.msra.mxu0 0
  %3250 = vmatprep.subr.bf16.mxu0 0
  %3251 = vmatpush1.bf16.msra.mxu0 0
  %3252 = vmatprep.subr.bf16.mxu0 0
  %3253 = vmatpush1.bf16.msra.mxu0 0
  %3254 = vmatprep.mubr.bf16.mxu0 0
  %3255 = vmatmul.mubr.bf16.gmra.mrb[0].mxu0 %v75
  %v3256 = vpop.f32.mrb[0].mxu0
  %v3257 = vadd.f32 0.0, %v3256
  %v3258 = vpop.f32.mrb[0].mxu0
  %v3259 = vpop.f32.mrb[0].mxu0
  %v3260 = vadd.f32 0.0, %v3259
  %v3261 = vpop.f32.mrb[0].mxu0
  %3262 = vdwg.mxu0
  %v3263 = vpack.c.bf16 %v3260, %v3257
  %3264 = vmatprep.subr.bf16.mxu0 0
  %3265 = vmatpush1.bf16.msra.mxu0 %v3263
  %3266 = vmatprep.subr.bf16.mxu0 0
  %3267 = vmatpush1.bf16.msra.mxu0 0
  %3268 = vmatprep.subr.bf16.mxu0 0
  %3269 = vmatpush1.bf16.msra.mxu0 0
  %3270 = vmatprep.subr.bf16.mxu0 0
  %3271 = vmatpush1.bf16.msra.mxu0 0
  %3272 = vmatprep.subr.bf16.mxu0 0
  %3273 = vmatpush1.bf16.msra.mxu0 0
  %3274 = vmatprep.subr.bf16.mxu0 0
  %3275 = vmatpush1.bf16.msra.mxu0 0
  %3276 = vmatprep.subr.bf16.mxu0 0
  %3277 = vmatpush1.bf16.msra.mxu0 0
  %3278 = vmatprep.subr.bf16.mxu0 0
  %3279 = vmatpush1.bf16.msra.mxu0 0
  %3280 = vmatprep.subr.bf16.mxu0 0
  %3281 = vmatpush1.bf16.msra.mxu0 0
  %3282 = vmatprep.subr.bf16.mxu0 0
  %3283 = vmatpush1.bf16.msra.mxu0 0
  %3284 = vmatprep.subr.bf16.mxu0 0
  %3285 = vmatpush1.bf16.msra.mxu0 0
  %3286 = vmatprep.subr.bf16.mxu0 0
  %3287 = vmatpush1.bf16.msra.mxu0 0
  %3288 = vmatprep.subr.bf16.mxu0 0
  %3289 = vmatpush1.bf16.msra.mxu0 0
  %3290 = vmatprep.subr.bf16.mxu0 0
  %3291 = vmatpush1.bf16.msra.mxu0 0
  %3292 = vmatprep.subr.bf16.mxu0 0
  %3293 = vmatpush1.bf16.msra.mxu0 0
  %3294 = vmatprep.subr.bf16.mxu0 0
  %3295 = vmatpush1.bf16.msra.mxu0 0
  %3296 = vmatprep.mubr.bf16.mxu0 0
  %3297 = vmatmul.mubr.bf16.gmra.mrb[0].mxu0 %v75
  %v3298 = vpop.f32.mrb[0].mxu0
  %v3299 = vadd.f32 0.0, %v3298
  %v3300 = vpop.f32.mrb[0].mxu0
  %v3301 = vpop.f32.mrb[0].mxu0
  %v3302 = vadd.f32 0.0, %v3301
  %v3303 = vpop.f32.mrb[0].mxu0
  %3304 = vdwg.mxu0
  %v3305 = vmul.f32 %v3299, 2.0
  %v3306 = vmul.f32 %v3302, 2.0
  %v3307 = vsub.f32 %v3305, %v3219
  %v3308 = vsub.f32 %v3306, %v3220
  %v3309 = vpack.c.bf16 %v3308, %v3307
  %3310 = vmatprep.subr.bf16.mxu0 0
  %3311 = vmatpush1.bf16.msra.mxu0 %v3221
  %3312 = vmatprep.subr.bf16.mxu0 0
  %3313 = vmatpush1.bf16.msra.mxu0 0
  %3314 = vmatprep.subr.bf16.mxu0 0
  %3315 = vmatpush1.bf16.msra.mxu0 0
  %3316 = vmatprep.subr.bf16.mxu0 0
  %3317 = vmatpush1.bf16.msra.mxu0 0
  %3318 = vmatprep.subr.bf16.mxu0 0
  %3319 = vmatpush1.bf16.msra.mxu0 0
  %3320 = vmatprep.subr.bf16.mxu0 0
  %3321 = vmatpush1.bf16.msra.mxu0 0
  %3322 = vmatprep.subr.bf16.mxu0 0
  %3323 = vmatpush1.bf16.msra.mxu0 0
  %3324 = vmatprep.subr.bf16.mxu0 0
  %3325 = vmatpush1.bf16.msra.mxu0 0
  %3326 = vmatprep.subr.bf16.mxu0 0
  %3327 = vmatpush1.bf16.msra.mxu0 0
  %3328 = vmatprep.subr.bf16.mxu0 0
  %3329 = vmatpush1.bf16.msra.mxu0 0
  %3330 = vmatprep.subr.bf16.mxu0 0
  %3331 = vmatpush1.bf16.msra.mxu0 0
  %3332 = vmatprep.subr.bf16.mxu0 0
  %3333 = vmatpush1.bf16.msra.mxu0 0
  %3334 = vmatprep.subr.bf16.mxu0 0
  %3335 = vmatpush1.bf16.msra.mxu0 0
  %3336 = vmatprep.subr.bf16.mxu0 0
  %3337 = vmatpush1.bf16.msra.mxu0 0
  %3338 = vmatprep.subr.bf16.mxu0 0
  %3339 = vmatpush1.bf16.msra.mxu0 0
  %3340 = vmatprep.subr.bf16.mxu0 0
  %3341 = vmatpush1.bf16.msra.mxu0 0
  %3342 = vmatprep.mubr.bf16.mxu0 0
  %3343 = vmatmul.mubr.bf16.gmra.mrb[0].mxu0 %v169
  %v3344 = vpop.f32.mrb[0].mxu0
  %v3345 = vadd.f32 0.0, %v3344
  %v3346 = vpop.f32.mrb[0].mxu0
  %v3347 = vpop.f32.mrb[0].mxu0
  %v3348 = vadd.f32 0.0, %v3347
  %v3349 = vpop.f32.mrb[0].mxu0
  %3350 = vdwg.mxu0
  %v3351 = vpack.c.bf16 %v3348, %v3345
  %3352 = vmatprep.subr.bf16.mxu0 0
  %3353 = vmatpush1.bf16.msra.mxu0 %v3351
  %3354 = vmatprep.subr.bf16.mxu0 0
  %3355 = vmatpush1.bf16.msra.mxu0 0
  %3356 = vmatprep.subr.bf16.mxu0 0
  %3357 = vmatpush1.bf16.msra.mxu0 0
  %3358 = vmatprep.subr.bf16.mxu0 0
  %3359 = vmatpush1.bf16.msra.mxu0 0
  %3360 = vmatprep.subr.bf16.mxu0 0
  %3361 = vmatpush1.bf16.msra.mxu0 0
  %3362 = vmatprep.subr.bf16.mxu0 0
  %3363 = vmatpush1.bf16.msra.mxu0 0
  %3364 = vmatprep.subr.bf16.mxu0 0
  %3365 = vmatpush1.bf16.msra.mxu0 0
  %3366 = vmatprep.subr.bf16.mxu0 0
  %3367 = vmatpush1.bf16.msra.mxu0 0
  %3368 = vmatprep.subr.bf16.mxu0 0
  %3369 = vmatpush1.bf16.msra.mxu0 0
  %3370 = vmatprep.subr.bf16.mxu0 0
  %3371 = vmatpush1.bf16.msra.mxu0 0
  %3372 = vmatprep.subr.bf16.mxu0 0
  %3373 = vmatpush1.bf16.msra.mxu0 0
  %3374 = vmatprep.subr.bf16.mxu0 0
  %3375 = vmatpush1.bf16.msra.mxu0 0
  %3376 = vmatprep.subr.bf16.mxu0 0
  %3377 = vmatpush1.bf16.msra.mxu0 0
  %3378 = vmatprep.subr.bf16.mxu0 0
  %3379 = vmatpush1.bf16.msra.mxu0 0
  %3380 = vmatprep.subr.bf16.mxu0 0
  %3381 = vmatpush1.bf16.msra.mxu0 0
  %3382 = vmatprep.subr.bf16.mxu0 0
  %3383 = vmatpush1.bf16.msra.mxu0 0
  %3384 = vmatprep.mubr.bf16.mxu0 0
  %3385 = vmatmul.mubr.bf16.gmra.mrb[0].mxu0 %v169
  %v3386 = vpop.f32.mrb[0].mxu0
  %v3387 = vadd.f32 0.0, %v3386
  %v3388 = vpop.f32.mrb[0].mxu0
  %v3389 = vpop.f32.mrb[0].mxu0
  %v3390 = vadd.f32 0.0, %v3389
  %v3391 = vpop.f32.mrb[0].mxu0
  %3392 = vdwg.mxu0
  %v3393 = vmul.f32 %v3387, 2.0
  %v3394 = vmul.f32 %v3390, 2.0
  %v3395 = vsub.f32 %v3393, %v3219
  %v3396 = vsub.f32 %v3394, %v3220
  %v3397 = vpack.c.bf16 %v3396, %v3395
  %s3398 = scalar_lea.vmem %s1, 48
  %v3399 = vld [vmem:[%s3398] sm:$0xff]
  %v3400 = vld [vmem:[%s3398 + $0x8] sm:$0xff]
  %v3402 = vsel %vm271, %v3221, 0
  %3404 = vmatprep.subr.bf16.mxu0 0
  %3405 = vmatpush1.bf16.msra.mxu0 %v751
  %3406 = vmatprep.subr.bf16.mxu0 0
  %3407 = vmatpush1.bf16.msra.mxu0 %v752
  %3408 = vmatprep.subr.bf16.mxu0 0
  %3409 = vmatpush1.bf16.msra.mxu0 0
  %3410 = vmatprep.subr.bf16.mxu0 0
  %3411 = vmatpush1.bf16.msra.mxu0 0
  %3412 = vmatprep.subr.bf16.mxu0 0
  %3413 = vmatpush1.bf16.msra.mxu0 0
  %3414 = vmatprep.subr.bf16.mxu0 0
  %3415 = vmatpush1.bf16.msra.mxu0 0
  %3416 = vmatprep.subr.bf16.mxu0 0
  %3417 = vmatpush1.bf16.msra.mxu0 0
  %3418 = vmatprep.subr.bf16.mxu0 0
  %3419 = vmatpush1.bf16.msra.mxu0 0
  %3420 = vmatprep.subr.bf16.mxu0 0
  %3421 = vmatpush1.bf16.msra.mxu0 0
  %3422 = vmatprep.subr.bf16.mxu0 0
  %3423 = vmatpush1.bf16.msra.mxu0 0
  %3424 = vmatprep.subr.bf16.mxu0 0
  %3425 = vmatpush1.bf16.msra.mxu0 0
  %3426 = vmatprep.subr.bf16.mxu0 0
  %3427 = vmatpush1.bf16.msra.mxu0 0
  %3428 = vmatprep.subr.bf16.mxu0 0
  %3429 = vmatpush1.bf16.msra.mxu0 0
  %3430 = vmatprep.subr.bf16.mxu0 0
  %3431 = vmatpush1.bf16.msra.mxu0 0
  %3432 = vmatprep.subr.bf16.mxu0 0
  %3433 = vmatpush1.bf16.msra.mxu0 0
  %3434 = vmatprep.subr.bf16.mxu0 0
  %3435 = vmatpush1.bf16.msra.mxu0 0
  %3436 = vmatprep.mubr.bf16.mxu0 0
  %3437 = vmatmul.mubr.bf16.gmra.mrb[0].mxu0 %v3402
  %v3438 = vpop.f32.mrb[0].mxu0
  %v3439 = vadd.f32 0.0, %v3438
  %v3440 = vpop.f32.mrb[0].mxu0
  %v3441 = vpop.f32.mrb[0].mxu0
  %v3442 = vadd.f32 0.0, %v3441
  %v3443 = vpop.f32.mrb[0].mxu0
  %3444 = vdwg.mxu0
  %v3445 = vadd.f32 %v3399, %v3439
  %v3446 = vadd.f32 %v3400, %v3442
  %v3448 = vsel %vm271, %v3263, 0
  %3450 = vmatprep.subr.bf16.mxu0 0
  %3451 = vmatpush1.bf16.msra.mxu0 %v809
  %3452 = vmatprep.subr.bf16.mxu0 0
  %3453 = vmatpush1.bf16.msra.mxu0 %v810
  %3454 = vmatprep.subr.bf16.mxu0 0
  %3455 = vmatpush1.bf16.msra.mxu0 0
  %3456 = vmatprep.subr.bf16.mxu0 0
  %3457 = vmatpush1.bf16.msra.mxu0 0
  %3458 = vmatprep.subr.bf16.mxu0 0
  %3459 = vmatpush1.bf16.msra.mxu0 0
  %3460 = vmatprep.subr.bf16.mxu0 0
  %3461 = vmatpush1.bf16.msra.mxu0 0
  %3462 = vmatprep.subr.bf16.mxu0 0
  %3463 = vmatpush1.bf16.msra.mxu0 0
  %3464 = vmatprep.subr.bf16.mxu0 0
  %3465 = vmatpush1.bf16.msra.mxu0 0
  %3466 = vmatprep.subr.bf16.mxu0 0
  %3467 = vmatpush1.bf16.msra.mxu0 0
  %3468 = vmatprep.subr.bf16.mxu0 0
  %3469 = vmatpush1.bf16.msra.mxu0 0
  %3470 = vmatprep.subr.bf16.mxu0 0
  %3471 = vmatpush1.bf16.msra.mxu0 0
  %3472 = vmatprep.subr.bf16.mxu0 0
  %3473 = vmatpush1.bf16.msra.mxu0 0
  %3474 = vmatprep.subr.bf16.mxu0 0
  %3475 = vmatpush1.bf16.msra.mxu0 0
  %3476 = vmatprep.subr.bf16.mxu0 0
  %3477 = vmatpush1.bf16.msra.mxu0 0
  %3478 = vmatprep.subr.bf16.mxu0 0
  %3479 = vmatpush1.bf16.msra.mxu0 0
  %3480 = vmatprep.subr.bf16.mxu0 0
  %3481 = vmatpush1.bf16.msra.mxu0 0
  %3482 = vmatprep.mubr.bf16.mxu0 0
  %3483 = vmatmul.mubr.bf16.gmra.mrb[0].mxu0 %v3448
  %v3484 = vpop.f32.mrb[0].mxu0
  %v3485 = vadd.f32 0.0, %v3484
  %v3486 = vpop.f32.mrb[0].mxu0
  %v3487 = vpop.f32.mrb[0].mxu0
  %v3488 = vadd.f32 0.0, %v3487
  %v3489 = vpop.f32.mrb[0].mxu0
  %3490 = vdwg.mxu0
  %v3491 = vadd.f32 %v3445, %v3485
  %v3492 = vadd.f32 %v3446, %v3488
  %v3494 = vsel %vm271, %v3309, 0
  %3496 = vmatprep.subr.bf16.mxu0 0
  %3497 = vmatpush1.bf16.msra.mxu0 %v867
  %3498 = vmatprep.subr.bf16.mxu0 0
  %3499 = vmatpush1.bf16.msra.mxu0 %v868
  %3500 = vmatprep.subr.bf16.mxu0 0
  %3501 = vmatpush1.bf16.msra.mxu0 0
  %3502 = vmatprep.subr.bf16.mxu0 0
  %3503 = vmatpush1.bf16.msra.mxu0 0
  %3504 = vmatprep.subr.bf16.mxu0 0
  %3505 = vmatpush1.bf16.msra.mxu0 0
  %3506 = vmatprep.subr.bf16.mxu0 0
  %3507 = vmatpush1.bf16.msra.mxu0 0
  %3508 = vmatprep.subr.bf16.mxu0 0
  %3509 = vmatpush1.bf16.msra.mxu0 0
  %3510 = vmatprep.subr.bf16.mxu0 0
  %3511 = vmatpush1.bf16.msra.mxu0 0
  %3512 = vmatprep.subr.bf16.mxu0 0
  %3513 = vmatpush1.bf16.msra.mxu0 0
  %3514 = vmatprep.subr.bf16.mxu0 0
  %3515 = vmatpush1.bf16.msra.mxu0 0
  %3516 = vmatprep.subr.bf16.mxu0 0
  %3517 = vmatpush1.bf16.msra.mxu0 0
  %3518 = vmatprep.subr.bf16.mxu0 0
  %3519 = vmatpush1.bf16.msra.mxu0 0
  %3520 = vmatprep.subr.bf16.mxu0 0
  %3521 = vmatpush1.bf16.msra.mxu0 0
  %3522 = vmatprep.subr.bf16.mxu0 0
  %3523 = vmatpush1.bf16.msra.mxu0 0
  %3524 = vmatprep.subr.bf16.mxu0 0
  %3525 = vmatpush1.bf16.msra.mxu0 0
  %3526 = vmatprep.subr.bf16.mxu0 0
  %3527 = vmatpush1.bf16.msra.mxu0 0
  %3528 = vmatprep.mubr.bf16.mxu0 0
  %3529 = vmatmul.mubr.bf16.gmra.mrb[0].mxu0 %v3494
  %v3530 = vpop.f32.mrb[0].mxu0
  %v3531 = vadd.f32 0.0, %v3530
  %v3532 = vpop.f32.mrb[0].mxu0
  %v3533 = vpop.f32.mrb[0].mxu0
  %v3534 = vadd.f32 0.0, %v3533
  %v3535 = vpop.f32.mrb[0].mxu0
  %3536 = vdwg.mxu0
  %v3537 = vadd.f32 %v3491, %v3531
  %v3538 = vadd.f32 %v3492, %v3534
  %v3540 = vsel %vm271, %v3351, 0
  %3542 = vmatprep.subr.bf16.mxu0 0
  %3543 = vmatpush1.bf16.msra.mxu0 %v925
  %3544 = vmatprep.subr.bf16.mxu0 0
  %3545 = vmatpush1.bf16.msra.mxu0 %v926
  %3546 = vmatprep.subr.bf16.mxu0 0
  %3547 = vmatpush1.bf16.msra.mxu0 0
  %3548 = vmatprep.subr.bf16.mxu0 0
  %3549 = vmatpush1.bf16.msra.mxu0 0
  %3550 = vmatprep.subr.bf16.mxu0 0
  %3551 = vmatpush1.bf16.msra.mxu0 0
  %3552 = vmatprep.subr.bf16.mxu0 0
  %3553 = vmatpush1.bf16.msra.mxu0 0
  %3554 = vmatprep.subr.bf16.mxu0 0
  %3555 = vmatpush1.bf16.msra.mxu0 0
  %3556 = vmatprep.subr.bf16.mxu0 0
  %3557 = vmatpush1.bf16.msra.mxu0 0
  %3558 = vmatprep.subr.bf16.mxu0 0
  %3559 = vmatpush1.bf16.msra.mxu0 0
  %3560 = vmatprep.subr.bf16.mxu0 0
  %3561 = vmatpush1.bf16.msra.mxu0 0
  %3562 = vmatprep.subr.bf16.mxu0 0
  %3563 = vmatpush1.bf16.msra.mxu0 0
  %3564 = vmatprep.subr.bf16.mxu0 0
  %3565 = vmatpush1.bf16.msra.mxu0 0
  %3566 = vmatprep.subr.bf16.mxu0 0
  %3567 = vmatpush1.bf16.msra.mxu0 0
  %3568 = vmatprep.subr.bf16.mxu0 0
  %3569 = vmatpush1.bf16.msra.mxu0 0
  %3570 = vmatprep.subr.bf16.mxu0 0
  %3571 = vmatpush1.bf16.msra.mxu0 0
  %3572 = vmatprep.subr.bf16.mxu0 0
  %3573 = vmatpush1.bf16.msra.mxu0 0
  %3574 = vmatprep.mubr.bf16.mxu0 0
  %3575 = vmatmul.mubr.bf16.gmra.mrb[0].mxu0 %v3540
  %v3576 = vpop.f32.mrb[0].mxu0
  %v3577 = vadd.f32 0.0, %v3576
  %v3578 = vpop.f32.mrb[0].mxu0
  %v3579 = vpop.f32.mrb[0].mxu0
  %v3580 = vadd.f32 0.0, %v3579
  %v3581 = vpop.f32.mrb[0].mxu0
  %3582 = vdwg.mxu0
  %v3583 = vadd.f32 %v3537, %v3577
  %v3584 = vadd.f32 %v3538, %v3580
  %v3586 = vsel %vm271, %v3397, 0
  %3588 = vmatprep.subr.bf16.mxu0 0
  %3589 = vmatpush1.bf16.msra.mxu0 %v983
  %3590 = vmatprep.subr.bf16.mxu0 0
  %3591 = vmatpush1.bf16.msra.mxu0 %v984
  %3592 = vmatprep.subr.bf16.mxu0 0
  %3593 = vmatpush1.bf16.msra.mxu0 0
  %3594 = vmatprep.subr.bf16.mxu0 0
  %3595 = vmatpush1.bf16.msra.mxu0 0
  %3596 = vmatprep.subr.bf16.mxu0 0
  %3597 = vmatpush1.bf16.msra.mxu0 0
  %3598 = vmatprep.subr.bf16.mxu0 0
  %3599 = vmatpush1.bf16.msra.mxu0 0
  %3600 = vmatprep.subr.bf16.mxu0 0
  %3601 = vmatpush1.bf16.msra.mxu0 0
  %3602 = vmatprep.subr.bf16.mxu0 0
  %3603 = vmatpush1.bf16.msra.mxu0 0
  %3604 = vmatprep.subr.bf16.mxu0 0
  %3605 = vmatpush1.bf16.msra.mxu0 0
  %3606 = vmatprep.subr.bf16.mxu0 0
  %3607 = vmatpush1.bf16.msra.mxu0 0
  %3608 = vmatprep.subr.bf16.mxu0 0
  %3609 = vmatpush1.bf16.msra.mxu0 0
  %3610 = vmatprep.subr.bf16.mxu0 0
  %3611 = vmatpush1.bf16.msra.mxu0 0
  %3612 = vmatprep.subr.bf16.mxu0 0
  %3613 = vmatpush1.bf16.msra.mxu0 0
  %3614 = vmatprep.subr.bf16.mxu0 0
  %3615 = vmatpush1.bf16.msra.mxu0 0
  %3616 = vmatprep.subr.bf16.mxu0 0
  %3617 = vmatpush1.bf16.msra.mxu0 0
  %3618 = vmatprep.subr.bf16.mxu0 0
  %3619 = vmatpush1.bf16.msra.mxu0 0
  %3620 = vmatprep.mubr.bf16.mxu0 0
  %3621 = vmatmul.mubr.bf16.gmra.mrb[0].mxu0 %v3586
  %v3622 = vpop.f32.mrb[0].mxu0
  %v3623 = vadd.f32 0.0, %v3622
  %v3624 = vpop.f32.mrb[0].mxu0
  %v3625 = vpop.f32.mrb[0].mxu0
  %v3626 = vadd.f32 0.0, %v3625
  %v3627 = vpop.f32.mrb[0].mxu0
  %3628 = vdwg.mxu0
  %v3629 = vadd.f32 %v3583, %v3623
  %v3630 = vadd.f32 %v3584, %v3626
  %v3631 = vtanh.pop %v3629
  %v3632 = vtanh.pop %v3630
  %v3633 = vmul.f32 %v3216, %v2780
  %v3634 = vmul.f32 %v3218, %v2781
  %v3635 = vsub.f32 1.0, %v3216
  %v3636 = vsub.f32 1.0, %v3218
  %3639 = vrot.lane.b32.xlu0 %v3631, 32
  %v3640 = vpop.permute.xlu0 %3639
  %3641 = vrot.lane.b32.xlu0 %v3632, 32
  %v3642 = vpop.permute.xlu0 %3641
  %v3645 = vmul.f32 %v3635, %v3640
  %v3646 = vmul.f32 %v3636, %v3642
  %v3647 = vadd.f32 %v3633, %v3645
  %v3648 = vadd.f32 %v3634, %v3646
  %3651 = vrot.lane.b32.xlu0 %v3647, 96
  %v3652 = vpop.permute.xlu0 %3651
  %3653 = vrot.lane.b32.xlu0 %v3648, 96
  %v3654 = vpop.permute.xlu0 %3653
  %s3657 = scalar_lea.vmem %s6, 48
  %3658 = vst.msk [vmem:[%s3657] sm:$0xff] %vm271, %v3652
  %3659 = vst.msk [vmem:[%s3657 + $0x8] sm:$0xff] %vm271, %v3654
  %v3660 = vpack.c.bf16 %v3648, %v3647
  %3662 = vrot.lane.b32.xlu0 %v3660, 96
  %v3663 = vpop.permute.xlu0 %3662
  %3665 = vmatprep.subr.bf16.mxu0 0
  %3666 = vmatpush1.bf16.msra.mxu0 %v3663
  %3667 = vmatprep.subr.bf16.mxu0 0
  %3668 = vmatpush1.bf16.msra.mxu0 0
  %3669 = vmatprep.subr.bf16.mxu0 0
  %3670 = vmatpush1.bf16.msra.mxu0 0
  %3671 = vmatprep.subr.bf16.mxu0 0
  %3672 = vmatpush1.bf16.msra.mxu0 0
  %3673 = vmatprep.subr.bf16.mxu0 0
  %3674 = vmatpush1.bf16.msra.mxu0 0
  %3675 = vmatprep.subr.bf16.mxu0 0
  %3676 = vmatpush1.bf16.msra.mxu0 0
  %3677 = vmatprep.subr.bf16.mxu0 0
  %3678 = vmatpush1.bf16.msra.mxu0 0
  %3679 = vmatprep.subr.bf16.mxu0 0
  %3680 = vmatpush1.bf16.msra.mxu0 0
  %3681 = vmatprep.subr.bf16.mxu0 0
  %3682 = vmatpush1.bf16.msra.mxu0 0
  %3683 = vmatprep.subr.bf16.mxu0 0
  %3684 = vmatpush1.bf16.msra.mxu0 0
  %3685 = vmatprep.subr.bf16.mxu0 0
  %3686 = vmatpush1.bf16.msra.mxu0 0
  %3687 = vmatprep.subr.bf16.mxu0 0
  %3688 = vmatpush1.bf16.msra.mxu0 0
  %3689 = vmatprep.subr.bf16.mxu0 0
  %3690 = vmatpush1.bf16.msra.mxu0 0
  %3691 = vmatprep.subr.bf16.mxu0 0
  %3692 = vmatpush1.bf16.msra.mxu0 0
  %3693 = vmatprep.subr.bf16.mxu0 0
  %3694 = vmatpush1.bf16.msra.mxu0 0
  %3695 = vmatprep.subr.bf16.mxu0 0
  %3696 = vmatpush1.bf16.msra.mxu0 0
  %3697 = vmatprep.mubr.bf16.mxu0 0
  %3698 = vmatmul.mubr.bf16.gmra.mrb[0].mxu0 %v75
  %v3699 = vpop.f32.mrb[0].mxu0
  %v3700 = vadd.f32 0.0, %v3699
  %v3701 = vpop.f32.mrb[0].mxu0
  %v3702 = vpop.f32.mrb[0].mxu0
  %v3703 = vadd.f32 0.0, %v3702
  %v3704 = vpop.f32.mrb[0].mxu0
  %3705 = vdwg.mxu0
  %v3706 = vpack.c.bf16 %v3703, %v3700
  %3707 = vmatprep.subr.bf16.mxu0 0
  %3708 = vmatpush1.bf16.msra.mxu0 %v3706
  %3709 = vmatprep.subr.bf16.mxu0 0
  %3710 = vmatpush1.bf16.msra.mxu0 0
  %3711 = vmatprep.subr.bf16.mxu0 0
  %3712 = vmatpush1.bf16.msra.mxu0 0
  %3713 = vmatprep.subr.bf16.mxu0 0
  %3714 = vmatpush1.bf16.msra.mxu0 0
  %3715 = vmatprep.subr.bf16.mxu0 0
  %3716 = vmatpush1.bf16.msra.mxu0 0
  %3717 = vmatprep.subr.bf16.mxu0 0
  %3718 = vmatpush1.bf16.msra.mxu0 0
  %3719 = vmatprep.subr.bf16.mxu0 0
  %3720 = vmatpush1.bf16.msra.mxu0 0
  %3721 = vmatprep.subr.bf16.mxu0 0
  %3722 = vmatpush1.bf16.msra.mxu0 0
  %3723 = vmatprep.subr.bf16.mxu0 0
  %3724 = vmatpush1.bf16.msra.mxu0 0
  %3725 = vmatprep.subr.bf16.mxu0 0
  %3726 = vmatpush1.bf16.msra.mxu0 0
  %3727 = vmatprep.subr.bf16.mxu0 0
  %3728 = vmatpush1.bf16.msra.mxu0 0
  %3729 = vmatprep.subr.bf16.mxu0 0
  %3730 = vmatpush1.bf16.msra.mxu0 0
  %3731 = vmatprep.subr.bf16.mxu0 0
  %3732 = vmatpush1.bf16.msra.mxu0 0
  %3733 = vmatprep.subr.bf16.mxu0 0
  %3734 = vmatpush1.bf16.msra.mxu0 0
  %3735 = vmatprep.subr.bf16.mxu0 0
  %3736 = vmatpush1.bf16.msra.mxu0 0
  %3737 = vmatprep.subr.bf16.mxu0 0
  %3738 = vmatpush1.bf16.msra.mxu0 0
  %3739 = vmatprep.mubr.bf16.mxu0 0
  %3740 = vmatmul.mubr.bf16.gmra.mrb[0].mxu0 %v75
  %v3741 = vpop.f32.mrb[0].mxu0
  %v3742 = vadd.f32 0.0, %v3741
  %v3743 = vpop.f32.mrb[0].mxu0
  %v3744 = vpop.f32.mrb[0].mxu0
  %v3745 = vadd.f32 0.0, %v3744
  %v3746 = vpop.f32.mrb[0].mxu0
  %3747 = vdwg.mxu0
  %v3748 = vmul.f32 %v3742, 2.0
  %v3749 = vmul.f32 %v3745, 2.0
  %v3750 = vsub.f32 %v3748, %v3652
  %v3751 = vsub.f32 %v3749, %v3654
  %v3752 = vpack.c.bf16 %v3751, %v3750
  %3753 = vmatprep.subr.bf16.mxu0 0
  %3754 = vmatpush1.bf16.msra.mxu0 %v3663
  %3755 = vmatprep.subr.bf16.mxu0 0
  %3756 = vmatpush1.bf16.msra.mxu0 0
  %3757 = vmatprep.subr.bf16.mxu0 0
  %3758 = vmatpush1.bf16.msra.mxu0 0
  %3759 = vmatprep.subr.bf16.mxu0 0
  %3760 = vmatpush1.bf16.msra.mxu0 0
  %3761 = vmatprep.subr.bf16.mxu0 0
  %3762 = vmatpush1.bf16.msra.mxu0 0
  %3763 = vmatprep.subr.bf16.mxu0 0
  %3764 = vmatpush1.bf16.msra.mxu0 0
  %3765 = vmatprep.subr.bf16.mxu0 0
  %3766 = vmatpush1.bf16.msra.mxu0 0
  %3767 = vmatprep.subr.bf16.mxu0 0
  %3768 = vmatpush1.bf16.msra.mxu0 0
  %3769 = vmatprep.subr.bf16.mxu0 0
  %3770 = vmatpush1.bf16.msra.mxu0 0
  %3771 = vmatprep.subr.bf16.mxu0 0
  %3772 = vmatpush1.bf16.msra.mxu0 0
  %3773 = vmatprep.subr.bf16.mxu0 0
  %3774 = vmatpush1.bf16.msra.mxu0 0
  %3775 = vmatprep.subr.bf16.mxu0 0
  %3776 = vmatpush1.bf16.msra.mxu0 0
  %3777 = vmatprep.subr.bf16.mxu0 0
  %3778 = vmatpush1.bf16.msra.mxu0 0
  %3779 = vmatprep.subr.bf16.mxu0 0
  %3780 = vmatpush1.bf16.msra.mxu0 0
  %3781 = vmatprep.subr.bf16.mxu0 0
  %3782 = vmatpush1.bf16.msra.mxu0 0
  %3783 = vmatprep.subr.bf16.mxu0 0
  %3784 = vmatpush1.bf16.msra.mxu0 0
  %3785 = vmatprep.mubr.bf16.mxu0 0
  %3786 = vmatmul.mubr.bf16.gmra.mrb[0].mxu0 %v169
  %v3787 = vpop.f32.mrb[0].mxu0
  %v3788 = vadd.f32 0.0, %v3787
  %v3789 = vpop.f32.mrb[0].mxu0
  %v3790 = vpop.f32.mrb[0].mxu0
  %v3791 = vadd.f32 0.0, %v3790
  %v3792 = vpop.f32.mrb[0].mxu0
  %3793 = vdwg.mxu0
  %v3794 = vpack.c.bf16 %v3791, %v3788
  %3795 = vmatprep.subr.bf16.mxu0 0
  %3796 = vmatpush1.bf16.msra.mxu0 %v3794
  %3797 = vmatprep.subr.bf16.mxu0 0
  %3798 = vmatpush1.bf16.msra.mxu0 0
  %3799 = vmatprep.subr.bf16.mxu0 0
  %3800 = vmatpush1.bf16.msra.mxu0 0
  %3801 = vmatprep.subr.bf16.mxu0 0
  %3802 = vmatpush1.bf16.msra.mxu0 0
  %3803 = vmatprep.subr.bf16.mxu0 0
  %3804 = vmatpush1.bf16.msra.mxu0 0
  %3805 = vmatprep.subr.bf16.mxu0 0
  %3806 = vmatpush1.bf16.msra.mxu0 0
  %3807 = vmatprep.subr.bf16.mxu0 0
  %3808 = vmatpush1.bf16.msra.mxu0 0
  %3809 = vmatprep.subr.bf16.mxu0 0
  %3810 = vmatpush1.bf16.msra.mxu0 0
  %3811 = vmatprep.subr.bf16.mxu0 0
  %3812 = vmatpush1.bf16.msra.mxu0 0
  %3813 = vmatprep.subr.bf16.mxu0 0
  %3814 = vmatpush1.bf16.msra.mxu0 0
  %3815 = vmatprep.subr.bf16.mxu0 0
  %3816 = vmatpush1.bf16.msra.mxu0 0
  %3817 = vmatprep.subr.bf16.mxu0 0
  %3818 = vmatpush1.bf16.msra.mxu0 0
  %3819 = vmatprep.subr.bf16.mxu0 0
  %3820 = vmatpush1.bf16.msra.mxu0 0
  %3821 = vmatprep.subr.bf16.mxu0 0
  %3822 = vmatpush1.bf16.msra.mxu0 0
  %3823 = vmatprep.subr.bf16.mxu0 0
  %3824 = vmatpush1.bf16.msra.mxu0 0
  %3825 = vmatprep.subr.bf16.mxu0 0
  %3826 = vmatpush1.bf16.msra.mxu0 0
  %3827 = vmatprep.mubr.bf16.mxu0 0
  %3828 = vmatmul.mubr.bf16.gmra.mrb[0].mxu0 %v169
  %v3829 = vpop.f32.mrb[0].mxu0
  %v3830 = vadd.f32 0.0, %v3829
  %v3831 = vpop.f32.mrb[0].mxu0
  %v3832 = vpop.f32.mrb[0].mxu0
  %v3833 = vadd.f32 0.0, %v3832
  %v3834 = vpop.f32.mrb[0].mxu0
  %3835 = vdwg.mxu0
  %v3836 = vmul.f32 %v3830, 2.0
  %v3837 = vmul.f32 %v3833, 2.0
  %v3838 = vsub.f32 %v3836, %v3652
  %v3839 = vsub.f32 %v3837, %v3654
  %v3840 = vpack.c.bf16 %v3839, %v3838
  %s3841 = scalar_lea.vmem %s0, 64
  %v3842 = vld [vmem:[%s3841] sm:$0xff]
  %v3843 = vld [vmem:[%s3841 + $0x8] sm:$0xff]
  %v3845 = vsel %vm271, %v3663, 0
  %3847 = vmatprep.subr.bf16.mxu0 0
  %3848 = vmatpush1.bf16.msra.mxu0 %v267
  %3849 = vmatprep.subr.bf16.mxu0 0
  %3850 = vmatpush1.bf16.msra.mxu0 %v268
  %3851 = vmatprep.subr.bf16.mxu0 0
  %3852 = vmatpush1.bf16.msra.mxu0 0
  %3853 = vmatprep.subr.bf16.mxu0 0
  %3854 = vmatpush1.bf16.msra.mxu0 0
  %3855 = vmatprep.subr.bf16.mxu0 0
  %3856 = vmatpush1.bf16.msra.mxu0 0
  %3857 = vmatprep.subr.bf16.mxu0 0
  %3858 = vmatpush1.bf16.msra.mxu0 0
  %3859 = vmatprep.subr.bf16.mxu0 0
  %3860 = vmatpush1.bf16.msra.mxu0 0
  %3861 = vmatprep.subr.bf16.mxu0 0
  %3862 = vmatpush1.bf16.msra.mxu0 0
  %3863 = vmatprep.subr.bf16.mxu0 0
  %3864 = vmatpush1.bf16.msra.mxu0 0
  %3865 = vmatprep.subr.bf16.mxu0 0
  %3866 = vmatpush1.bf16.msra.mxu0 0
  %3867 = vmatprep.subr.bf16.mxu0 0
  %3868 = vmatpush1.bf16.msra.mxu0 0
  %3869 = vmatprep.subr.bf16.mxu0 0
  %3870 = vmatpush1.bf16.msra.mxu0 0
  %3871 = vmatprep.subr.bf16.mxu0 0
  %3872 = vmatpush1.bf16.msra.mxu0 0
  %3873 = vmatprep.subr.bf16.mxu0 0
  %3874 = vmatpush1.bf16.msra.mxu0 0
  %3875 = vmatprep.subr.bf16.mxu0 0
  %3876 = vmatpush1.bf16.msra.mxu0 0
  %3877 = vmatprep.subr.bf16.mxu0 0
  %3878 = vmatpush1.bf16.msra.mxu0 0
  %3879 = vmatprep.mubr.bf16.mxu0 0
  %3880 = vmatmul.mubr.bf16.gmra.mrb[0].mxu0 %v3845
  %v3881 = vpop.f32.mrb[0].mxu0
  %v3882 = vadd.f32 0.0, %v3881
  %v3883 = vpop.f32.mrb[0].mxu0
  %v3884 = vpop.f32.mrb[0].mxu0
  %v3885 = vadd.f32 0.0, %v3884
  %v3886 = vpop.f32.mrb[0].mxu0
  %3887 = vdwg.mxu0
  %v3888 = vadd.f32 %v3842, %v3882
  %v3889 = vadd.f32 %v3843, %v3885
  %v3891 = vsel %vm271, %v3706, 0
  %3893 = vmatprep.subr.bf16.mxu0 0
  %3894 = vmatpush1.bf16.msra.mxu0 %v326
  %3895 = vmatprep.subr.bf16.mxu0 0
  %3896 = vmatpush1.bf16.msra.mxu0 %v327
  %3897 = vmatprep.subr.bf16.mxu0 0
  %3898 = vmatpush1.bf16.msra.mxu0 0
  %3899 = vmatprep.subr.bf16.mxu0 0
  %3900 = vmatpush1.bf16.msra.mxu0 0
  %3901 = vmatprep.subr.bf16.mxu0 0
  %3902 = vmatpush1.bf16.msra.mxu0 0
  %3903 = vmatprep.subr.bf16.mxu0 0
  %3904 = vmatpush1.bf16.msra.mxu0 0
  %3905 = vmatprep.subr.bf16.mxu0 0
  %3906 = vmatpush1.bf16.msra.mxu0 0
  %3907 = vmatprep.subr.bf16.mxu0 0
  %3908 = vmatpush1.bf16.msra.mxu0 0
  %3909 = vmatprep.subr.bf16.mxu0 0
  %3910 = vmatpush1.bf16.msra.mxu0 0
  %3911 = vmatprep.subr.bf16.mxu0 0
  %3912 = vmatpush1.bf16.msra.mxu0 0
  %3913 = vmatprep.subr.bf16.mxu0 0
  %3914 = vmatpush1.bf16.msra.mxu0 0
  %3915 = vmatprep.subr.bf16.mxu0 0
  %3916 = vmatpush1.bf16.msra.mxu0 0
  %3917 = vmatprep.subr.bf16.mxu0 0
  %3918 = vmatpush1.bf16.msra.mxu0 0
  %3919 = vmatprep.subr.bf16.mxu0 0
  %3920 = vmatpush1.bf16.msra.mxu0 0
  %3921 = vmatprep.subr.bf16.mxu0 0
  %3922 = vmatpush1.bf16.msra.mxu0 0
  %3923 = vmatprep.subr.bf16.mxu0 0
  %3924 = vmatpush1.bf16.msra.mxu0 0
  %3925 = vmatprep.mubr.bf16.mxu0 0
  %3926 = vmatmul.mubr.bf16.gmra.mrb[0].mxu0 %v3891
  %v3927 = vpop.f32.mrb[0].mxu0
  %v3928 = vadd.f32 0.0, %v3927
  %v3929 = vpop.f32.mrb[0].mxu0
  %v3930 = vpop.f32.mrb[0].mxu0
  %v3931 = vadd.f32 0.0, %v3930
  %v3932 = vpop.f32.mrb[0].mxu0
  %3933 = vdwg.mxu0
  %v3934 = vadd.f32 %v3888, %v3928
  %v3935 = vadd.f32 %v3889, %v3931
  %v3937 = vsel %vm271, %v3752, 0
  %3939 = vmatprep.subr.bf16.mxu0 0
  %3940 = vmatpush1.bf16.msra.mxu0 %v384
  %3941 = vmatprep.subr.bf16.mxu0 0
  %3942 = vmatpush1.bf16.msra.mxu0 %v385
  %3943 = vmatprep.subr.bf16.mxu0 0
  %3944 = vmatpush1.bf16.msra.mxu0 0
  %3945 = vmatprep.subr.bf16.mxu0 0
  %3946 = vmatpush1.bf16.msra.mxu0 0
  %3947 = vmatprep.subr.bf16.mxu0 0
  %3948 = vmatpush1.bf16.msra.mxu0 0
  %3949 = vmatprep.subr.bf16.mxu0 0
  %3950 = vmatpush1.bf16.msra.mxu0 0
  %3951 = vmatprep.subr.bf16.mxu0 0
  %3952 = vmatpush1.bf16.msra.mxu0 0
  %3953 = vmatprep.subr.bf16.mxu0 0
  %3954 = vmatpush1.bf16.msra.mxu0 0
  %3955 = vmatprep.subr.bf16.mxu0 0
  %3956 = vmatpush1.bf16.msra.mxu0 0
  %3957 = vmatprep.subr.bf16.mxu0 0
  %3958 = vmatpush1.bf16.msra.mxu0 0
  %3959 = vmatprep.subr.bf16.mxu0 0
  %3960 = vmatpush1.bf16.msra.mxu0 0
  %3961 = vmatprep.subr.bf16.mxu0 0
  %3962 = vmatpush1.bf16.msra.mxu0 0
  %3963 = vmatprep.subr.bf16.mxu0 0
  %3964 = vmatpush1.bf16.msra.mxu0 0
  %3965 = vmatprep.subr.bf16.mxu0 0
  %3966 = vmatpush1.bf16.msra.mxu0 0
  %3967 = vmatprep.subr.bf16.mxu0 0
  %3968 = vmatpush1.bf16.msra.mxu0 0
  %3969 = vmatprep.subr.bf16.mxu0 0
  %3970 = vmatpush1.bf16.msra.mxu0 0
  %3971 = vmatprep.mubr.bf16.mxu0 0
  %3972 = vmatmul.mubr.bf16.gmra.mrb[0].mxu0 %v3937
  %v3973 = vpop.f32.mrb[0].mxu0
  %v3974 = vadd.f32 0.0, %v3973
  %v3975 = vpop.f32.mrb[0].mxu0
  %v3976 = vpop.f32.mrb[0].mxu0
  %v3977 = vadd.f32 0.0, %v3976
  %v3978 = vpop.f32.mrb[0].mxu0
  %3979 = vdwg.mxu0
  %v3980 = vadd.f32 %v3934, %v3974
  %v3981 = vadd.f32 %v3935, %v3977
  %v3983 = vsel %vm271, %v3794, 0
  %3985 = vmatprep.subr.bf16.mxu0 0
  %3986 = vmatpush1.bf16.msra.mxu0 %v442
  %3987 = vmatprep.subr.bf16.mxu0 0
  %3988 = vmatpush1.bf16.msra.mxu0 %v443
  %3989 = vmatprep.subr.bf16.mxu0 0
  %3990 = vmatpush1.bf16.msra.mxu0 0
  %3991 = vmatprep.subr.bf16.mxu0 0
  %3992 = vmatpush1.bf16.msra.mxu0 0
  %3993 = vmatprep.subr.bf16.mxu0 0
  %3994 = vmatpush1.bf16.msra.mxu0 0
  %3995 = vmatprep.subr.bf16.mxu0 0
  %3996 = vmatpush1.bf16.msra.mxu0 0
  %3997 = vmatprep.subr.bf16.mxu0 0
  %3998 = vmatpush1.bf16.msra.mxu0 0
  %3999 = vmatprep.subr.bf16.mxu0 0
  %4000 = vmatpush1.bf16.msra.mxu0 0
  %4001 = vmatprep.subr.bf16.mxu0 0
  %4002 = vmatpush1.bf16.msra.mxu0 0
  %4003 = vmatprep.subr.bf16.mxu0 0
  %4004 = vmatpush1.bf16.msra.mxu0 0
  %4005 = vmatprep.subr.bf16.mxu0 0
  %4006 = vmatpush1.bf16.msra.mxu0 0
  %4007 = vmatprep.subr.bf16.mxu0 0
  %4008 = vmatpush1.bf16.msra.mxu0 0
  %4009 = vmatprep.subr.bf16.mxu0 0
  %4010 = vmatpush1.bf16.msra.mxu0 0
  %4011 = vmatprep.subr.bf16.mxu0 0
  %4012 = vmatpush1.bf16.msra.mxu0 0
  %4013 = vmatprep.subr.bf16.mxu0 0
  %4014 = vmatpush1.bf16.msra.mxu0 0
  %4015 = vmatprep.subr.bf16.mxu0 0
  %4016 = vmatpush1.bf16.msra.mxu0 0
  %4017 = vmatprep.mubr.bf16.mxu0 0
  %4018 = vmatmul.mubr.bf16.gmra.mrb[0].mxu0 %v3983
  %v4019 = vpop.f32.mrb[0].mxu0
  %v4020 = vadd.f32 0.0, %v4019
  %v4021 = vpop.f32.mrb[0].mxu0
  %v4022 = vpop.f32.mrb[0].mxu0
  %v4023 = vadd.f32 0.0, %v4022
  %v4024 = vpop.f32.mrb[0].mxu0
  %4025 = vdwg.mxu0
  %v4026 = vadd.f32 %v3980, %v4020
  %v4027 = vadd.f32 %v3981, %v4023
  %v4029 = vsel %vm271, %v3840, 0
  %4031 = vmatprep.subr.bf16.mxu0 0
  %4032 = vmatpush1.bf16.msra.mxu0 %v500
  %4033 = vmatprep.subr.bf16.mxu0 0
  %4034 = vmatpush1.bf16.msra.mxu0 %v501
  %4035 = vmatprep.subr.bf16.mxu0 0
  %4036 = vmatpush1.bf16.msra.mxu0 0
  %4037 = vmatprep.subr.bf16.mxu0 0
  %4038 = vmatpush1.bf16.msra.mxu0 0
  %4039 = vmatprep.subr.bf16.mxu0 0
  %4040 = vmatpush1.bf16.msra.mxu0 0
  %4041 = vmatprep.subr.bf16.mxu0 0
  %4042 = vmatpush1.bf16.msra.mxu0 0
  %4043 = vmatprep.subr.bf16.mxu0 0
  %4044 = vmatpush1.bf16.msra.mxu0 0
  %4045 = vmatprep.subr.bf16.mxu0 0
  %4046 = vmatpush1.bf16.msra.mxu0 0
  %4047 = vmatprep.subr.bf16.mxu0 0
  %4048 = vmatpush1.bf16.msra.mxu0 0
  %4049 = vmatprep.subr.bf16.mxu0 0
  %4050 = vmatpush1.bf16.msra.mxu0 0
  %4051 = vmatprep.subr.bf16.mxu0 0
  %4052 = vmatpush1.bf16.msra.mxu0 0
  %4053 = vmatprep.subr.bf16.mxu0 0
  %4054 = vmatpush1.bf16.msra.mxu0 0
  %4055 = vmatprep.subr.bf16.mxu0 0
  %4056 = vmatpush1.bf16.msra.mxu0 0
  %4057 = vmatprep.subr.bf16.mxu0 0
  %4058 = vmatpush1.bf16.msra.mxu0 0
  %4059 = vmatprep.subr.bf16.mxu0 0
  %4060 = vmatpush1.bf16.msra.mxu0 0
  %4061 = vmatprep.subr.bf16.mxu0 0
  %4062 = vmatpush1.bf16.msra.mxu0 0
  %4063 = vmatprep.mubr.bf16.mxu0 0
  %4064 = vmatmul.mubr.bf16.gmra.mrb[0].mxu0 %v4029
  %v4065 = vpop.f32.mrb[0].mxu0
  %v4066 = vadd.f32 0.0, %v4065
  %v4067 = vpop.f32.mrb[0].mxu0
  %v4068 = vpop.f32.mrb[0].mxu0
  %v4069 = vadd.f32 0.0, %v4068
  %v4070 = vpop.f32.mrb[0].mxu0
  %4071 = vdwg.mxu0
  %v4072 = vadd.f32 %v4026, %v4066
  %v4073 = vadd.f32 %v4027, %v4069
  %v4074 = vxor.u32 %v4072, 2147483648
  %v4075 = vxor.u32 %v4073, 2147483648
  %v4076 = vmul.f32 %v4074, 1.442695
  %v4077 = vpow.pop %v4076
  %v4078 = vmul.f32 %v4075, 1.442695
  %v4079 = vpow.pop %v4078
  %v4080 = vadd.f32 %v4077, 1.0
  %v4081 = vadd.f32 %v4079, 1.0
  %v4082 = vrcp.pop %v4080
  %v4083 = vmul.f32 1.0, %v4082
  %v4084 = vrcp.pop %v4081
  %v4085 = vmul.f32 1.0, %v4084
  %v4086 = vmul.f32 %v4083, %v3652
  %v4087 = vmul.f32 %v4085, %v3654
  %v4088 = vpack.c.bf16 %v4087, %v4086
  %4089 = vmatprep.subr.bf16.mxu0 0
  %4090 = vmatpush1.bf16.msra.mxu0 %v4088
  %4091 = vmatprep.subr.bf16.mxu0 0
  %4092 = vmatpush1.bf16.msra.mxu0 0
  %4093 = vmatprep.subr.bf16.mxu0 0
  %4094 = vmatpush1.bf16.msra.mxu0 0
  %4095 = vmatprep.subr.bf16.mxu0 0
  %4096 = vmatpush1.bf16.msra.mxu0 0
  %4097 = vmatprep.subr.bf16.mxu0 0
  %4098 = vmatpush1.bf16.msra.mxu0 0
  %4099 = vmatprep.subr.bf16.mxu0 0
  %4100 = vmatpush1.bf16.msra.mxu0 0
  %4101 = vmatprep.subr.bf16.mxu0 0
  %4102 = vmatpush1.bf16.msra.mxu0 0
  %4103 = vmatprep.subr.bf16.mxu0 0
  %4104 = vmatpush1.bf16.msra.mxu0 0
  %4105 = vmatprep.subr.bf16.mxu0 0
  %4106 = vmatpush1.bf16.msra.mxu0 0
  %4107 = vmatprep.subr.bf16.mxu0 0
  %4108 = vmatpush1.bf16.msra.mxu0 0
  %4109 = vmatprep.subr.bf16.mxu0 0
  %4110 = vmatpush1.bf16.msra.mxu0 0
  %4111 = vmatprep.subr.bf16.mxu0 0
  %4112 = vmatpush1.bf16.msra.mxu0 0
  %4113 = vmatprep.subr.bf16.mxu0 0
  %4114 = vmatpush1.bf16.msra.mxu0 0
  %4115 = vmatprep.subr.bf16.mxu0 0
  %4116 = vmatpush1.bf16.msra.mxu0 0
  %4117 = vmatprep.subr.bf16.mxu0 0
  %4118 = vmatpush1.bf16.msra.mxu0 0
  %4119 = vmatprep.subr.bf16.mxu0 0
  %4120 = vmatpush1.bf16.msra.mxu0 0
  %4121 = vmatprep.mubr.bf16.mxu0 0
  %4122 = vmatmul.mubr.bf16.gmra.mrb[0].mxu0 %v75
  %v4123 = vpop.f32.mrb[0].mxu0
  %v4124 = vadd.f32 0.0, %v4123
  %v4125 = vpop.f32.mrb[0].mxu0
  %v4126 = vpop.f32.mrb[0].mxu0
  %v4127 = vadd.f32 0.0, %v4126
  %v4128 = vpop.f32.mrb[0].mxu0
  %4129 = vdwg.mxu0
  %v4130 = vpack.c.bf16 %v4127, %v4124
  %4131 = vmatprep.subr.bf16.mxu0 0
  %4132 = vmatpush1.bf16.msra.mxu0 %v4130
  %4133 = vmatprep.subr.bf16.mxu0 0
  %4134 = vmatpush1.bf16.msra.mxu0 0
  %4135 = vmatprep.subr.bf16.mxu0 0
  %4136 = vmatpush1.bf16.msra.mxu0 0
  %4137 = vmatprep.subr.bf16.mxu0 0
  %4138 = vmatpush1.bf16.msra.mxu0 0
  %4139 = vmatprep.subr.bf16.mxu0 0
  %4140 = vmatpush1.bf16.msra.mxu0 0
  %4141 = vmatprep.subr.bf16.mxu0 0
  %4142 = vmatpush1.bf16.msra.mxu0 0
  %4143 = vmatprep.subr.bf16.mxu0 0
  %4144 = vmatpush1.bf16.msra.mxu0 0
  %4145 = vmatprep.subr.bf16.mxu0 0
  %4146 = vmatpush1.bf16.msra.mxu0 0
  %4147 = vmatprep.subr.bf16.mxu0 0
  %4148 = vmatpush1.bf16.msra.mxu0 0
  %4149 = vmatprep.subr.bf16.mxu0 0
  %4150 = vmatpush1.bf16.msra.mxu0 0
  %4151 = vmatprep.subr.bf16.mxu0 0
  %4152 = vmatpush1.bf16.msra.mxu0 0
  %4153 = vmatprep.subr.bf16.mxu0 0
  %4154 = vmatpush1.bf16.msra.mxu0 0
  %4155 = vmatprep.subr.bf16.mxu0 0
  %4156 = vmatpush1.bf16.msra.mxu0 0
  %4157 = vmatprep.subr.bf16.mxu0 0
  %4158 = vmatpush1.bf16.msra.mxu0 0
  %4159 = vmatprep.subr.bf16.mxu0 0
  %4160 = vmatpush1.bf16.msra.mxu0 0
  %4161 = vmatprep.subr.bf16.mxu0 0
  %4162 = vmatpush1.bf16.msra.mxu0 0
  %4163 = vmatprep.mubr.bf16.mxu0 0
  %4164 = vmatmul.mubr.bf16.gmra.mrb[0].mxu0 %v75
  %v4165 = vpop.f32.mrb[0].mxu0
  %v4166 = vadd.f32 0.0, %v4165
  %v4167 = vpop.f32.mrb[0].mxu0
  %v4168 = vpop.f32.mrb[0].mxu0
  %v4169 = vadd.f32 0.0, %v4168
  %v4170 = vpop.f32.mrb[0].mxu0
  %4171 = vdwg.mxu0
  %v4172 = vmul.f32 %v4166, 2.0
  %v4173 = vmul.f32 %v4169, 2.0
  %v4174 = vsub.f32 %v4172, %v4086
  %v4175 = vsub.f32 %v4173, %v4087
  %v4176 = vpack.c.bf16 %v4175, %v4174
  %4177 = vmatprep.subr.bf16.mxu0 0
  %4178 = vmatpush1.bf16.msra.mxu0 %v4088
  %4179 = vmatprep.subr.bf16.mxu0 0
  %4180 = vmatpush1.bf16.msra.mxu0 0
  %4181 = vmatprep.subr.bf16.mxu0 0
  %4182 = vmatpush1.bf16.msra.mxu0 0
  %4183 = vmatprep.subr.bf16.mxu0 0
  %4184 = vmatpush1.bf16.msra.mxu0 0
  %4185 = vmatprep.subr.bf16.mxu0 0
  %4186 = vmatpush1.bf16.msra.mxu0 0
  %4187 = vmatprep.subr.bf16.mxu0 0
  %4188 = vmatpush1.bf16.msra.mxu0 0
  %4189 = vmatprep.subr.bf16.mxu0 0
  %4190 = vmatpush1.bf16.msra.mxu0 0
  %4191 = vmatprep.subr.bf16.mxu0 0
  %4192 = vmatpush1.bf16.msra.mxu0 0
  %4193 = vmatprep.subr.bf16.mxu0 0
  %4194 = vmatpush1.bf16.msra.mxu0 0
  %4195 = vmatprep.subr.bf16.mxu0 0
  %4196 = vmatpush1.bf16.msra.mxu0 0
  %4197 = vmatprep.subr.bf16.mxu0 0
  %4198 = vmatpush1.bf16.msra.mxu0 0
  %4199 = vmatprep.subr.bf16.mxu0 0
  %4200 = vmatpush1.bf16.msra.mxu0 0
  %4201 = vmatprep.subr.bf16.mxu0 0
  %4202 = vmatpush1.bf16.msra.mxu0 0
  %4203 = vmatprep.subr.bf16.mxu0 0
  %4204 = vmatpush1.bf16.msra.mxu0 0
  %4205 = vmatprep.subr.bf16.mxu0 0
  %4206 = vmatpush1.bf16.msra.mxu0 0
  %4207 = vmatprep.subr.bf16.mxu0 0
  %4208 = vmatpush1.bf16.msra.mxu0 0
  %4209 = vmatprep.mubr.bf16.mxu0 0
  %4210 = vmatmul.mubr.bf16.gmra.mrb[0].mxu0 %v169
  %v4211 = vpop.f32.mrb[0].mxu0
  %v4212 = vadd.f32 0.0, %v4211
  %v4213 = vpop.f32.mrb[0].mxu0
  %v4214 = vpop.f32.mrb[0].mxu0
  %v4215 = vadd.f32 0.0, %v4214
  %v4216 = vpop.f32.mrb[0].mxu0
  %4217 = vdwg.mxu0
  %v4218 = vpack.c.bf16 %v4215, %v4212
  %4219 = vmatprep.subr.bf16.mxu0 0
  %4220 = vmatpush1.bf16.msra.mxu0 %v4218
  %4221 = vmatprep.subr.bf16.mxu0 0
  %4222 = vmatpush1.bf16.msra.mxu0 0
  %4223 = vmatprep.subr.bf16.mxu0 0
  %4224 = vmatpush1.bf16.msra.mxu0 0
  %4225 = vmatprep.subr.bf16.mxu0 0
  %4226 = vmatpush1.bf16.msra.mxu0 0
  %4227 = vmatprep.subr.bf16.mxu0 0
  %4228 = vmatpush1.bf16.msra.mxu0 0
  %4229 = vmatprep.subr.bf16.mxu0 0
  %4230 = vmatpush1.bf16.msra.mxu0 0
  %4231 = vmatprep.subr.bf16.mxu0 0
  %4232 = vmatpush1.bf16.msra.mxu0 0
  %4233 = vmatprep.subr.bf16.mxu0 0
  %4234 = vmatpush1.bf16.msra.mxu0 0
  %4235 = vmatprep.subr.bf16.mxu0 0
  %4236 = vmatpush1.bf16.msra.mxu0 0
  %4237 = vmatprep.subr.bf16.mxu0 0
  %4238 = vmatpush1.bf16.msra.mxu0 0
  %4239 = vmatprep.subr.bf16.mxu0 0
  %4240 = vmatpush1.bf16.msra.mxu0 0
  %4241 = vmatprep.subr.bf16.mxu0 0
  %4242 = vmatpush1.bf16.msra.mxu0 0
  %4243 = vmatprep.subr.bf16.mxu0 0
  %4244 = vmatpush1.bf16.msra.mxu0 0
  %4245 = vmatprep.subr.bf16.mxu0 0
  %4246 = vmatpush1.bf16.msra.mxu0 0
  %4247 = vmatprep.subr.bf16.mxu0 0
  %4248 = vmatpush1.bf16.msra.mxu0 0
  %4249 = vmatprep.subr.bf16.mxu0 0
  %4250 = vmatpush1.bf16.msra.mxu0 0
  %4251 = vmatprep.mubr.bf16.mxu0 0
  %4252 = vmatmul.mubr.bf16.gmra.mrb[0].mxu0 %v169
  %v4253 = vpop.f32.mrb[0].mxu0
  %v4254 = vadd.f32 0.0, %v4253
  %v4255 = vpop.f32.mrb[0].mxu0
  %v4256 = vpop.f32.mrb[0].mxu0
  %v4257 = vadd.f32 0.0, %v4256
  %v4258 = vpop.f32.mrb[0].mxu0
  %4259 = vdwg.mxu0
  %v4260 = vmul.f32 %v4254, 2.0
  %v4261 = vmul.f32 %v4257, 2.0
  %v4262 = vsub.f32 %v4260, %v4086
  %v4263 = vsub.f32 %v4261, %v4087
  %v4264 = vpack.c.bf16 %v4263, %v4262
  %s4265 = scalar_lea.vmem %s1, 64
  %v4266 = vld [vmem:[%s4265] sm:$0xff]
  %v4267 = vld [vmem:[%s4265 + $0x8] sm:$0xff]
  %v4269 = vsel %vm271, %v4088, 0
  %4271 = vmatprep.subr.bf16.mxu0 0
  %4272 = vmatpush1.bf16.msra.mxu0 %v751
  %4273 = vmatprep.subr.bf16.mxu0 0
  %4274 = vmatpush1.bf16.msra.mxu0 %v752
  %4275 = vmatprep.subr.bf16.mxu0 0
  %4276 = vmatpush1.bf16.msra.mxu0 0
  %4277 = vmatprep.subr.bf16.mxu0 0
  %4278 = vmatpush1.bf16.msra.mxu0 0
  %4279 = vmatprep.subr.bf16.mxu0 0
  %4280 = vmatpush1.bf16.msra.mxu0 0
  %4281 = vmatprep.subr.bf16.mxu0 0
  %4282 = vmatpush1.bf16.msra.mxu0 0
  %4283 = vmatprep.subr.bf16.mxu0 0
  %4284 = vmatpush1.bf16.msra.mxu0 0
  %4285 = vmatprep.subr.bf16.mxu0 0
  %4286 = vmatpush1.bf16.msra.mxu0 0
  %4287 = vmatprep.subr.bf16.mxu0 0
  %4288 = vmatpush1.bf16.msra.mxu0 0
  %4289 = vmatprep.subr.bf16.mxu0 0
  %4290 = vmatpush1.bf16.msra.mxu0 0
  %4291 = vmatprep.subr.bf16.mxu0 0
  %4292 = vmatpush1.bf16.msra.mxu0 0
  %4293 = vmatprep.subr.bf16.mxu0 0
  %4294 = vmatpush1.bf16.msra.mxu0 0
  %4295 = vmatprep.subr.bf16.mxu0 0
  %4296 = vmatpush1.bf16.msra.mxu0 0
  %4297 = vmatprep.subr.bf16.mxu0 0
  %4298 = vmatpush1.bf16.msra.mxu0 0
  %4299 = vmatprep.subr.bf16.mxu0 0
  %4300 = vmatpush1.bf16.msra.mxu0 0
  %4301 = vmatprep.subr.bf16.mxu0 0
  %4302 = vmatpush1.bf16.msra.mxu0 0
  %4303 = vmatprep.mubr.bf16.mxu0 0
  %4304 = vmatmul.mubr.bf16.gmra.mrb[0].mxu0 %v4269
  %v4305 = vpop.f32.mrb[0].mxu0
  %v4306 = vadd.f32 0.0, %v4305
  %v4307 = vpop.f32.mrb[0].mxu0
  %v4308 = vpop.f32.mrb[0].mxu0
  %v4309 = vadd.f32 0.0, %v4308
  %v4310 = vpop.f32.mrb[0].mxu0
  %4311 = vdwg.mxu0
  %v4312 = vadd.f32 %v4266, %v4306
  %v4313 = vadd.f32 %v4267, %v4309
  %v4315 = vsel %vm271, %v4130, 0
  %4317 = vmatprep.subr.bf16.mxu0 0
  %4318 = vmatpush1.bf16.msra.mxu0 %v809
  %4319 = vmatprep.subr.bf16.mxu0 0
  %4320 = vmatpush1.bf16.msra.mxu0 %v810
  %4321 = vmatprep.subr.bf16.mxu0 0
  %4322 = vmatpush1.bf16.msra.mxu0 0
  %4323 = vmatprep.subr.bf16.mxu0 0
  %4324 = vmatpush1.bf16.msra.mxu0 0
  %4325 = vmatprep.subr.bf16.mxu0 0
  %4326 = vmatpush1.bf16.msra.mxu0 0
  %4327 = vmatprep.subr.bf16.mxu0 0
  %4328 = vmatpush1.bf16.msra.mxu0 0
  %4329 = vmatprep.subr.bf16.mxu0 0
  %4330 = vmatpush1.bf16.msra.mxu0 0
  %4331 = vmatprep.subr.bf16.mxu0 0
  %4332 = vmatpush1.bf16.msra.mxu0 0
  %4333 = vmatprep.subr.bf16.mxu0 0
  %4334 = vmatpush1.bf16.msra.mxu0 0
  %4335 = vmatprep.subr.bf16.mxu0 0
  %4336 = vmatpush1.bf16.msra.mxu0 0
  %4337 = vmatprep.subr.bf16.mxu0 0
  %4338 = vmatpush1.bf16.msra.mxu0 0
  %4339 = vmatprep.subr.bf16.mxu0 0
  %4340 = vmatpush1.bf16.msra.mxu0 0
  %4341 = vmatprep.subr.bf16.mxu0 0
  %4342 = vmatpush1.bf16.msra.mxu0 0
  %4343 = vmatprep.subr.bf16.mxu0 0
  %4344 = vmatpush1.bf16.msra.mxu0 0
  %4345 = vmatprep.subr.bf16.mxu0 0
  %4346 = vmatpush1.bf16.msra.mxu0 0
  %4347 = vmatprep.subr.bf16.mxu0 0
  %4348 = vmatpush1.bf16.msra.mxu0 0
  %4349 = vmatprep.mubr.bf16.mxu0 0
  %4350 = vmatmul.mubr.bf16.gmra.mrb[0].mxu0 %v4315
  %v4351 = vpop.f32.mrb[0].mxu0
  %v4352 = vadd.f32 0.0, %v4351
  %v4353 = vpop.f32.mrb[0].mxu0
  %v4354 = vpop.f32.mrb[0].mxu0
  %v4355 = vadd.f32 0.0, %v4354
  %v4356 = vpop.f32.mrb[0].mxu0
  %4357 = vdwg.mxu0
  %v4358 = vadd.f32 %v4312, %v4352
  %v4359 = vadd.f32 %v4313, %v4355
  %v4361 = vsel %vm271, %v4176, 0
  %4363 = vmatprep.subr.bf16.mxu0 0
  %4364 = vmatpush1.bf16.msra.mxu0 %v867
  %4365 = vmatprep.subr.bf16.mxu0 0
  %4366 = vmatpush1.bf16.msra.mxu0 %v868
  %4367 = vmatprep.subr.bf16.mxu0 0
  %4368 = vmatpush1.bf16.msra.mxu0 0
  %4369 = vmatprep.subr.bf16.mxu0 0
  %4370 = vmatpush1.bf16.msra.mxu0 0
  %4371 = vmatprep.subr.bf16.mxu0 0
  %4372 = vmatpush1.bf16.msra.mxu0 0
  %4373 = vmatprep.subr.bf16.mxu0 0
  %4374 = vmatpush1.bf16.msra.mxu0 0
  %4375 = vmatprep.subr.bf16.mxu0 0
  %4376 = vmatpush1.bf16.msra.mxu0 0
  %4377 = vmatprep.subr.bf16.mxu0 0
  %4378 = vmatpush1.bf16.msra.mxu0 0
  %4379 = vmatprep.subr.bf16.mxu0 0
  %4380 = vmatpush1.bf16.msra.mxu0 0
  %4381 = vmatprep.subr.bf16.mxu0 0
  %4382 = vmatpush1.bf16.msra.mxu0 0
  %4383 = vmatprep.subr.bf16.mxu0 0
  %4384 = vmatpush1.bf16.msra.mxu0 0
  %4385 = vmatprep.subr.bf16.mxu0 0
  %4386 = vmatpush1.bf16.msra.mxu0 0
  %4387 = vmatprep.subr.bf16.mxu0 0
  %4388 = vmatpush1.bf16.msra.mxu0 0
  %4389 = vmatprep.subr.bf16.mxu0 0
  %4390 = vmatpush1.bf16.msra.mxu0 0
  %4391 = vmatprep.subr.bf16.mxu0 0
  %4392 = vmatpush1.bf16.msra.mxu0 0
  %4393 = vmatprep.subr.bf16.mxu0 0
  %4394 = vmatpush1.bf16.msra.mxu0 0
  %4395 = vmatprep.mubr.bf16.mxu0 0
  %4396 = vmatmul.mubr.bf16.gmra.mrb[0].mxu0 %v4361
  %v4397 = vpop.f32.mrb[0].mxu0
  %v4398 = vadd.f32 0.0, %v4397
  %v4399 = vpop.f32.mrb[0].mxu0
  %v4400 = vpop.f32.mrb[0].mxu0
  %v4401 = vadd.f32 0.0, %v4400
  %v4402 = vpop.f32.mrb[0].mxu0
  %4403 = vdwg.mxu0
  %v4404 = vadd.f32 %v4358, %v4398
  %v4405 = vadd.f32 %v4359, %v4401
  %v4407 = vsel %vm271, %v4218, 0
  %4409 = vmatprep.subr.bf16.mxu0 0
  %4410 = vmatpush1.bf16.msra.mxu0 %v925
  %4411 = vmatprep.subr.bf16.mxu0 0
  %4412 = vmatpush1.bf16.msra.mxu0 %v926
  %4413 = vmatprep.subr.bf16.mxu0 0
  %4414 = vmatpush1.bf16.msra.mxu0 0
  %4415 = vmatprep.subr.bf16.mxu0 0
  %4416 = vmatpush1.bf16.msra.mxu0 0
  %4417 = vmatprep.subr.bf16.mxu0 0
  %4418 = vmatpush1.bf16.msra.mxu0 0
  %4419 = vmatprep.subr.bf16.mxu0 0
  %4420 = vmatpush1.bf16.msra.mxu0 0
  %4421 = vmatprep.subr.bf16.mxu0 0
  %4422 = vmatpush1.bf16.msra.mxu0 0
  %4423 = vmatprep.subr.bf16.mxu0 0
  %4424 = vmatpush1.bf16.msra.mxu0 0
  %4425 = vmatprep.subr.bf16.mxu0 0
  %4426 = vmatpush1.bf16.msra.mxu0 0
  %4427 = vmatprep.subr.bf16.mxu0 0
  %4428 = vmatpush1.bf16.msra.mxu0 0
  %4429 = vmatprep.subr.bf16.mxu0 0
  %4430 = vmatpush1.bf16.msra.mxu0 0
  %4431 = vmatprep.subr.bf16.mxu0 0
  %4432 = vmatpush1.bf16.msra.mxu0 0
  %4433 = vmatprep.subr.bf16.mxu0 0
  %4434 = vmatpush1.bf16.msra.mxu0 0
  %4435 = vmatprep.subr.bf16.mxu0 0
  %4436 = vmatpush1.bf16.msra.mxu0 0
  %4437 = vmatprep.subr.bf16.mxu0 0
  %4438 = vmatpush1.bf16.msra.mxu0 0
  %4439 = vmatprep.subr.bf16.mxu0 0
  %4440 = vmatpush1.bf16.msra.mxu0 0
  %4441 = vmatprep.mubr.bf16.mxu0 0
  %4442 = vmatmul.mubr.bf16.gmra.mrb[0].mxu0 %v4407
  %v4443 = vpop.f32.mrb[0].mxu0
  %v4444 = vadd.f32 0.0, %v4443
  %v4445 = vpop.f32.mrb[0].mxu0
  %v4446 = vpop.f32.mrb[0].mxu0
  %v4447 = vadd.f32 0.0, %v4446
  %v4448 = vpop.f32.mrb[0].mxu0
  %4449 = vdwg.mxu0
  %v4450 = vadd.f32 %v4404, %v4444
  %v4451 = vadd.f32 %v4405, %v4447
  %v4453 = vsel %vm271, %v4264, 0
  %4455 = vmatprep.subr.bf16.mxu0 0
  %4456 = vmatpush1.bf16.msra.mxu0 %v983
  %4457 = vmatprep.subr.bf16.mxu0 0
  %4458 = vmatpush1.bf16.msra.mxu0 %v984
  %4459 = vmatprep.subr.bf16.mxu0 0
  %4460 = vmatpush1.bf16.msra.mxu0 0
  %4461 = vmatprep.subr.bf16.mxu0 0
  %4462 = vmatpush1.bf16.msra.mxu0 0
  %4463 = vmatprep.subr.bf16.mxu0 0
  %4464 = vmatpush1.bf16.msra.mxu0 0
  %4465 = vmatprep.subr.bf16.mxu0 0
  %4466 = vmatpush1.bf16.msra.mxu0 0
  %4467 = vmatprep.subr.bf16.mxu0 0
  %4468 = vmatpush1.bf16.msra.mxu0 0
  %4469 = vmatprep.subr.bf16.mxu0 0
  %4470 = vmatpush1.bf16.msra.mxu0 0
  %4471 = vmatprep.subr.bf16.mxu0 0
  %4472 = vmatpush1.bf16.msra.mxu0 0
  %4473 = vmatprep.subr.bf16.mxu0 0
  %4474 = vmatpush1.bf16.msra.mxu0 0
  %4475 = vmatprep.subr.bf16.mxu0 0
  %4476 = vmatpush1.bf16.msra.mxu0 0
  %4477 = vmatprep.subr.bf16.mxu0 0
  %4478 = vmatpush1.bf16.msra.mxu0 0
  %4479 = vmatprep.subr.bf16.mxu0 0
  %4480 = vmatpush1.bf16.msra.mxu0 0
  %4481 = vmatprep.subr.bf16.mxu0 0
  %4482 = vmatpush1.bf16.msra.mxu0 0
  %4483 = vmatprep.subr.bf16.mxu0 0
  %4484 = vmatpush1.bf16.msra.mxu0 0
  %4485 = vmatprep.subr.bf16.mxu0 0
  %4486 = vmatpush1.bf16.msra.mxu0 0
  %4487 = vmatprep.mubr.bf16.mxu0 0
  %4488 = vmatmul.mubr.bf16.gmra.mrb[0].mxu0 %v4453
  %v4489 = vpop.f32.mrb[0].mxu0
  %v4490 = vadd.f32 0.0, %v4489
  %v4491 = vpop.f32.mrb[0].mxu0
  %v4492 = vpop.f32.mrb[0].mxu0
  %v4493 = vadd.f32 0.0, %v4492
  %v4494 = vpop.f32.mrb[0].mxu0
  %4495 = vdwg.mxu0
  %v4496 = vadd.f32 %v4450, %v4490
  %v4497 = vadd.f32 %v4451, %v4493
  %v4498 = vtanh.pop %v4496
  %v4499 = vtanh.pop %v4497
  %v4500 = vmul.f32 %v4083, %v3647
  %v4501 = vmul.f32 %v4085, %v3648
  %v4502 = vsub.f32 1.0, %v4083
  %v4503 = vsub.f32 1.0, %v4085
  %4506 = vrot.lane.b32.xlu0 %v4498, 32
  %v4507 = vpop.permute.xlu0 %4506
  %4508 = vrot.lane.b32.xlu0 %v4499, 32
  %v4509 = vpop.permute.xlu0 %4508
  %v4512 = vmul.f32 %v4502, %v4507
  %v4513 = vmul.f32 %v4503, %v4509
  %v4514 = vadd.f32 %v4500, %v4512
  %v4515 = vadd.f32 %v4501, %v4513
  %4518 = vrot.lane.b32.xlu0 %v4514, 96
  %v4519 = vpop.permute.xlu0 %4518
  %4520 = vrot.lane.b32.xlu0 %v4515, 96
  %v4521 = vpop.permute.xlu0 %4520
  %s4524 = scalar_lea.vmem %s6, 64
  %4525 = vst.msk [vmem:[%s4524] sm:$0xff] %vm271, %v4519
  %4526 = vst.msk [vmem:[%s4524 + $0x8] sm:$0xff] %vm271, %v4521
  %v4527 = vpack.c.bf16 %v4515, %v4514
  %4529 = vrot.lane.b32.xlu0 %v4527, 96
  %v4530 = vpop.permute.xlu0 %4529
  %4532 = vmatprep.subr.bf16.mxu0 0
  %4533 = vmatpush1.bf16.msra.mxu0 %v4530
  %4534 = vmatprep.subr.bf16.mxu0 0
  %4535 = vmatpush1.bf16.msra.mxu0 0
  %4536 = vmatprep.subr.bf16.mxu0 0
  %4537 = vmatpush1.bf16.msra.mxu0 0
  %4538 = vmatprep.subr.bf16.mxu0 0
  %4539 = vmatpush1.bf16.msra.mxu0 0
  %4540 = vmatprep.subr.bf16.mxu0 0
  %4541 = vmatpush1.bf16.msra.mxu0 0
  %4542 = vmatprep.subr.bf16.mxu0 0
  %4543 = vmatpush1.bf16.msra.mxu0 0
  %4544 = vmatprep.subr.bf16.mxu0 0
  %4545 = vmatpush1.bf16.msra.mxu0 0
  %4546 = vmatprep.subr.bf16.mxu0 0
  %4547 = vmatpush1.bf16.msra.mxu0 0
  %4548 = vmatprep.subr.bf16.mxu0 0
  %4549 = vmatpush1.bf16.msra.mxu0 0
  %4550 = vmatprep.subr.bf16.mxu0 0
  %4551 = vmatpush1.bf16.msra.mxu0 0
  %4552 = vmatprep.subr.bf16.mxu0 0
  %4553 = vmatpush1.bf16.msra.mxu0 0
  %4554 = vmatprep.subr.bf16.mxu0 0
  %4555 = vmatpush1.bf16.msra.mxu0 0
  %4556 = vmatprep.subr.bf16.mxu0 0
  %4557 = vmatpush1.bf16.msra.mxu0 0
  %4558 = vmatprep.subr.bf16.mxu0 0
  %4559 = vmatpush1.bf16.msra.mxu0 0
  %4560 = vmatprep.subr.bf16.mxu0 0
  %4561 = vmatpush1.bf16.msra.mxu0 0
  %4562 = vmatprep.subr.bf16.mxu0 0
  %4563 = vmatpush1.bf16.msra.mxu0 0
  %4564 = vmatprep.mubr.bf16.mxu0 0
  %4565 = vmatmul.mubr.bf16.gmra.mrb[0].mxu0 %v75
  %v4566 = vpop.f32.mrb[0].mxu0
  %v4567 = vadd.f32 0.0, %v4566
  %v4568 = vpop.f32.mrb[0].mxu0
  %v4569 = vpop.f32.mrb[0].mxu0
  %v4570 = vadd.f32 0.0, %v4569
  %v4571 = vpop.f32.mrb[0].mxu0
  %4572 = vdwg.mxu0
  %v4573 = vpack.c.bf16 %v4570, %v4567
  %4574 = vmatprep.subr.bf16.mxu0 0
  %4575 = vmatpush1.bf16.msra.mxu0 %v4573
  %4576 = vmatprep.subr.bf16.mxu0 0
  %4577 = vmatpush1.bf16.msra.mxu0 0
  %4578 = vmatprep.subr.bf16.mxu0 0
  %4579 = vmatpush1.bf16.msra.mxu0 0
  %4580 = vmatprep.subr.bf16.mxu0 0
  %4581 = vmatpush1.bf16.msra.mxu0 0
  %4582 = vmatprep.subr.bf16.mxu0 0
  %4583 = vmatpush1.bf16.msra.mxu0 0
  %4584 = vmatprep.subr.bf16.mxu0 0
  %4585 = vmatpush1.bf16.msra.mxu0 0
  %4586 = vmatprep.subr.bf16.mxu0 0
  %4587 = vmatpush1.bf16.msra.mxu0 0
  %4588 = vmatprep.subr.bf16.mxu0 0
  %4589 = vmatpush1.bf16.msra.mxu0 0
  %4590 = vmatprep.subr.bf16.mxu0 0
  %4591 = vmatpush1.bf16.msra.mxu0 0
  %4592 = vmatprep.subr.bf16.mxu0 0
  %4593 = vmatpush1.bf16.msra.mxu0 0
  %4594 = vmatprep.subr.bf16.mxu0 0
  %4595 = vmatpush1.bf16.msra.mxu0 0
  %4596 = vmatprep.subr.bf16.mxu0 0
  %4597 = vmatpush1.bf16.msra.mxu0 0
  %4598 = vmatprep.subr.bf16.mxu0 0
  %4599 = vmatpush1.bf16.msra.mxu0 0
  %4600 = vmatprep.subr.bf16.mxu0 0
  %4601 = vmatpush1.bf16.msra.mxu0 0
  %4602 = vmatprep.subr.bf16.mxu0 0
  %4603 = vmatpush1.bf16.msra.mxu0 0
  %4604 = vmatprep.subr.bf16.mxu0 0
  %4605 = vmatpush1.bf16.msra.mxu0 0
  %4606 = vmatprep.mubr.bf16.mxu0 0
  %4607 = vmatmul.mubr.bf16.gmra.mrb[0].mxu0 %v75
  %v4608 = vpop.f32.mrb[0].mxu0
  %v4609 = vadd.f32 0.0, %v4608
  %v4610 = vpop.f32.mrb[0].mxu0
  %v4611 = vpop.f32.mrb[0].mxu0
  %v4612 = vadd.f32 0.0, %v4611
  %v4613 = vpop.f32.mrb[0].mxu0
  %4614 = vdwg.mxu0
  %v4615 = vmul.f32 %v4609, 2.0
  %v4616 = vmul.f32 %v4612, 2.0
  %v4617 = vsub.f32 %v4615, %v4519
  %v4618 = vsub.f32 %v4616, %v4521
  %v4619 = vpack.c.bf16 %v4618, %v4617
  %4620 = vmatprep.subr.bf16.mxu0 0
  %4621 = vmatpush1.bf16.msra.mxu0 %v4530
  %4622 = vmatprep.subr.bf16.mxu0 0
  %4623 = vmatpush1.bf16.msra.mxu0 0
  %4624 = vmatprep.subr.bf16.mxu0 0
  %4625 = vmatpush1.bf16.msra.mxu0 0
  %4626 = vmatprep.subr.bf16.mxu0 0
  %4627 = vmatpush1.bf16.msra.mxu0 0
  %4628 = vmatprep.subr.bf16.mxu0 0
  %4629 = vmatpush1.bf16.msra.mxu0 0
  %4630 = vmatprep.subr.bf16.mxu0 0
  %4631 = vmatpush1.bf16.msra.mxu0 0
  %4632 = vmatprep.subr.bf16.mxu0 0
  %4633 = vmatpush1.bf16.msra.mxu0 0
  %4634 = vmatprep.subr.bf16.mxu0 0
  %4635 = vmatpush1.bf16.msra.mxu0 0
  %4636 = vmatprep.subr.bf16.mxu0 0
  %4637 = vmatpush1.bf16.msra.mxu0 0
  %4638 = vmatprep.subr.bf16.mxu0 0
  %4639 = vmatpush1.bf16.msra.mxu0 0
  %4640 = vmatprep.subr.bf16.mxu0 0
  %4641 = vmatpush1.bf16.msra.mxu0 0
  %4642 = vmatprep.subr.bf16.mxu0 0
  %4643 = vmatpush1.bf16.msra.mxu0 0
  %4644 = vmatprep.subr.bf16.mxu0 0
  %4645 = vmatpush1.bf16.msra.mxu0 0
  %4646 = vmatprep.subr.bf16.mxu0 0
  %4647 = vmatpush1.bf16.msra.mxu0 0
  %4648 = vmatprep.subr.bf16.mxu0 0
  %4649 = vmatpush1.bf16.msra.mxu0 0
  %4650 = vmatprep.subr.bf16.mxu0 0
  %4651 = vmatpush1.bf16.msra.mxu0 0
  %4652 = vmatprep.mubr.bf16.mxu0 0
  %4653 = vmatmul.mubr.bf16.gmra.mrb[0].mxu0 %v169
  %v4654 = vpop.f32.mrb[0].mxu0
  %v4655 = vadd.f32 0.0, %v4654
  %v4656 = vpop.f32.mrb[0].mxu0
  %v4657 = vpop.f32.mrb[0].mxu0
  %v4658 = vadd.f32 0.0, %v4657
  %v4659 = vpop.f32.mrb[0].mxu0
  %4660 = vdwg.mxu0
  %v4661 = vpack.c.bf16 %v4658, %v4655
  %4662 = vmatprep.subr.bf16.mxu0 0
  %4663 = vmatpush1.bf16.msra.mxu0 %v4661
  %4664 = vmatprep.subr.bf16.mxu0 0
  %4665 = vmatpush1.bf16.msra.mxu0 0
  %4666 = vmatprep.subr.bf16.mxu0 0
  %4667 = vmatpush1.bf16.msra.mxu0 0
  %4668 = vmatprep.subr.bf16.mxu0 0
  %4669 = vmatpush1.bf16.msra.mxu0 0
  %4670 = vmatprep.subr.bf16.mxu0 0
  %4671 = vmatpush1.bf16.msra.mxu0 0
  %4672 = vmatprep.subr.bf16.mxu0 0
  %4673 = vmatpush1.bf16.msra.mxu0 0
  %4674 = vmatprep.subr.bf16.mxu0 0
  %4675 = vmatpush1.bf16.msra.mxu0 0
  %4676 = vmatprep.subr.bf16.mxu0 0
  %4677 = vmatpush1.bf16.msra.mxu0 0
  %4678 = vmatprep.subr.bf16.mxu0 0
  %4679 = vmatpush1.bf16.msra.mxu0 0
  %4680 = vmatprep.subr.bf16.mxu0 0
  %4681 = vmatpush1.bf16.msra.mxu0 0
  %4682 = vmatprep.subr.bf16.mxu0 0
  %4683 = vmatpush1.bf16.msra.mxu0 0
  %4684 = vmatprep.subr.bf16.mxu0 0
  %4685 = vmatpush1.bf16.msra.mxu0 0
  %4686 = vmatprep.subr.bf16.mxu0 0
  %4687 = vmatpush1.bf16.msra.mxu0 0
  %4688 = vmatprep.subr.bf16.mxu0 0
  %4689 = vmatpush1.bf16.msra.mxu0 0
  %4690 = vmatprep.subr.bf16.mxu0 0
  %4691 = vmatpush1.bf16.msra.mxu0 0
  %4692 = vmatprep.subr.bf16.mxu0 0
  %4693 = vmatpush1.bf16.msra.mxu0 0
  %4694 = vmatprep.mubr.bf16.mxu0 0
  %4695 = vmatmul.mubr.bf16.gmra.mrb[0].mxu0 %v169
  %v4696 = vpop.f32.mrb[0].mxu0
  %v4697 = vadd.f32 0.0, %v4696
  %v4698 = vpop.f32.mrb[0].mxu0
  %v4699 = vpop.f32.mrb[0].mxu0
  %v4700 = vadd.f32 0.0, %v4699
  %v4701 = vpop.f32.mrb[0].mxu0
  %4702 = vdwg.mxu0
  %v4703 = vmul.f32 %v4697, 2.0
  %v4704 = vmul.f32 %v4700, 2.0
  %v4705 = vsub.f32 %v4703, %v4519
  %v4706 = vsub.f32 %v4704, %v4521
  %v4707 = vpack.c.bf16 %v4706, %v4705
  %s4708 = scalar_lea.vmem %s0, 80
  %v4709 = vld [vmem:[%s4708] sm:$0xff]
  %v4710 = vld [vmem:[%s4708 + $0x8] sm:$0xff]
  %v4712 = vsel %vm271, %v4530, 0
  %4714 = vmatprep.subr.bf16.mxu0 0
  %4715 = vmatpush1.bf16.msra.mxu0 %v267
  %4716 = vmatprep.subr.bf16.mxu0 0
  %4717 = vmatpush1.bf16.msra.mxu0 %v268
  %4718 = vmatprep.subr.bf16.mxu0 0
  %4719 = vmatpush1.bf16.msra.mxu0 0
  %4720 = vmatprep.subr.bf16.mxu0 0
  %4721 = vmatpush1.bf16.msra.mxu0 0
  %4722 = vmatprep.subr.bf16.mxu0 0
  %4723 = vmatpush1.bf16.msra.mxu0 0
  %4724 = vmatprep.subr.bf16.mxu0 0
  %4725 = vmatpush1.bf16.msra.mxu0 0
  %4726 = vmatprep.subr.bf16.mxu0 0
  %4727 = vmatpush1.bf16.msra.mxu0 0
  %4728 = vmatprep.subr.bf16.mxu0 0
  %4729 = vmatpush1.bf16.msra.mxu0 0
  %4730 = vmatprep.subr.bf16.mxu0 0
  %4731 = vmatpush1.bf16.msra.mxu0 0
  %4732 = vmatprep.subr.bf16.mxu0 0
  %4733 = vmatpush1.bf16.msra.mxu0 0
  %4734 = vmatprep.subr.bf16.mxu0 0
  %4735 = vmatpush1.bf16.msra.mxu0 0
  %4736 = vmatprep.subr.bf16.mxu0 0
  %4737 = vmatpush1.bf16.msra.mxu0 0
  %4738 = vmatprep.subr.bf16.mxu0 0
  %4739 = vmatpush1.bf16.msra.mxu0 0
  %4740 = vmatprep.subr.bf16.mxu0 0
  %4741 = vmatpush1.bf16.msra.mxu0 0
  %4742 = vmatprep.subr.bf16.mxu0 0
  %4743 = vmatpush1.bf16.msra.mxu0 0
  %4744 = vmatprep.subr.bf16.mxu0 0
  %4745 = vmatpush1.bf16.msra.mxu0 0
  %4746 = vmatprep.mubr.bf16.mxu0 0
  %4747 = vmatmul.mubr.bf16.gmra.mrb[0].mxu0 %v4712
  %v4748 = vpop.f32.mrb[0].mxu0
  %v4749 = vadd.f32 0.0, %v4748
  %v4750 = vpop.f32.mrb[0].mxu0
  %v4751 = vpop.f32.mrb[0].mxu0
  %v4752 = vadd.f32 0.0, %v4751
  %v4753 = vpop.f32.mrb[0].mxu0
  %4754 = vdwg.mxu0
  %v4755 = vadd.f32 %v4709, %v4749
  %v4756 = vadd.f32 %v4710, %v4752
  %v4758 = vsel %vm271, %v4573, 0
  %4760 = vmatprep.subr.bf16.mxu0 0
  %4761 = vmatpush1.bf16.msra.mxu0 %v326
  %4762 = vmatprep.subr.bf16.mxu0 0
  %4763 = vmatpush1.bf16.msra.mxu0 %v327
  %4764 = vmatprep.subr.bf16.mxu0 0
  %4765 = vmatpush1.bf16.msra.mxu0 0
  %4766 = vmatprep.subr.bf16.mxu0 0
  %4767 = vmatpush1.bf16.msra.mxu0 0
  %4768 = vmatprep.subr.bf16.mxu0 0
  %4769 = vmatpush1.bf16.msra.mxu0 0
  %4770 = vmatprep.subr.bf16.mxu0 0
  %4771 = vmatpush1.bf16.msra.mxu0 0
  %4772 = vmatprep.subr.bf16.mxu0 0
  %4773 = vmatpush1.bf16.msra.mxu0 0
  %4774 = vmatprep.subr.bf16.mxu0 0
  %4775 = vmatpush1.bf16.msra.mxu0 0
  %4776 = vmatprep.subr.bf16.mxu0 0
  %4777 = vmatpush1.bf16.msra.mxu0 0
  %4778 = vmatprep.subr.bf16.mxu0 0
  %4779 = vmatpush1.bf16.msra.mxu0 0
  %4780 = vmatprep.subr.bf16.mxu0 0
  %4781 = vmatpush1.bf16.msra.mxu0 0
  %4782 = vmatprep.subr.bf16.mxu0 0
  %4783 = vmatpush1.bf16.msra.mxu0 0
  %4784 = vmatprep.subr.bf16.mxu0 0
  %4785 = vmatpush1.bf16.msra.mxu0 0
  %4786 = vmatprep.subr.bf16.mxu0 0
  %4787 = vmatpush1.bf16.msra.mxu0 0
  %4788 = vmatprep.subr.bf16.mxu0 0
  %4789 = vmatpush1.bf16.msra.mxu0 0
  %4790 = vmatprep.subr.bf16.mxu0 0
  %4791 = vmatpush1.bf16.msra.mxu0 0
  %4792 = vmatprep.mubr.bf16.mxu0 0
  %4793 = vmatmul.mubr.bf16.gmra.mrb[0].mxu0 %v4758
  %v4794 = vpop.f32.mrb[0].mxu0
  %v4795 = vadd.f32 0.0, %v4794
  %v4796 = vpop.f32.mrb[0].mxu0
  %v4797 = vpop.f32.mrb[0].mxu0
  %v4798 = vadd.f32 0.0, %v4797
  %v4799 = vpop.f32.mrb[0].mxu0
  %4800 = vdwg.mxu0
  %v4801 = vadd.f32 %v4755, %v4795
  %v4802 = vadd.f32 %v4756, %v4798
  %v4804 = vsel %vm271, %v4619, 0
  %4806 = vmatprep.subr.bf16.mxu0 0
  %4807 = vmatpush1.bf16.msra.mxu0 %v384
  %4808 = vmatprep.subr.bf16.mxu0 0
  %4809 = vmatpush1.bf16.msra.mxu0 %v385
  %4810 = vmatprep.subr.bf16.mxu0 0
  %4811 = vmatpush1.bf16.msra.mxu0 0
  %4812 = vmatprep.subr.bf16.mxu0 0
  %4813 = vmatpush1.bf16.msra.mxu0 0
  %4814 = vmatprep.subr.bf16.mxu0 0
  %4815 = vmatpush1.bf16.msra.mxu0 0
  %4816 = vmatprep.subr.bf16.mxu0 0
  %4817 = vmatpush1.bf16.msra.mxu0 0
  %4818 = vmatprep.subr.bf16.mxu0 0
  %4819 = vmatpush1.bf16.msra.mxu0 0
  %4820 = vmatprep.subr.bf16.mxu0 0
  %4821 = vmatpush1.bf16.msra.mxu0 0
  %4822 = vmatprep.subr.bf16.mxu0 0
  %4823 = vmatpush1.bf16.msra.mxu0 0
  %4824 = vmatprep.subr.bf16.mxu0 0
  %4825 = vmatpush1.bf16.msra.mxu0 0
  %4826 = vmatprep.subr.bf16.mxu0 0
  %4827 = vmatpush1.bf16.msra.mxu0 0
  %4828 = vmatprep.subr.bf16.mxu0 0
  %4829 = vmatpush1.bf16.msra.mxu0 0
  %4830 = vmatprep.subr.bf16.mxu0 0
  %4831 = vmatpush1.bf16.msra.mxu0 0
  %4832 = vmatprep.subr.bf16.mxu0 0
  %4833 = vmatpush1.bf16.msra.mxu0 0
  %4834 = vmatprep.subr.bf16.mxu0 0
  %4835 = vmatpush1.bf16.msra.mxu0 0
  %4836 = vmatprep.subr.bf16.mxu0 0
  %4837 = vmatpush1.bf16.msra.mxu0 0
  %4838 = vmatprep.mubr.bf16.mxu0 0
  %4839 = vmatmul.mubr.bf16.gmra.mrb[0].mxu0 %v4804
  %v4840 = vpop.f32.mrb[0].mxu0
  %v4841 = vadd.f32 0.0, %v4840
  %v4842 = vpop.f32.mrb[0].mxu0
  %v4843 = vpop.f32.mrb[0].mxu0
  %v4844 = vadd.f32 0.0, %v4843
  %v4845 = vpop.f32.mrb[0].mxu0
  %4846 = vdwg.mxu0
  %v4847 = vadd.f32 %v4801, %v4841
  %v4848 = vadd.f32 %v4802, %v4844
  %v4850 = vsel %vm271, %v4661, 0
  %4852 = vmatprep.subr.bf16.mxu0 0
  %4853 = vmatpush1.bf16.msra.mxu0 %v442
  %4854 = vmatprep.subr.bf16.mxu0 0
  %4855 = vmatpush1.bf16.msra.mxu0 %v443
  %4856 = vmatprep.subr.bf16.mxu0 0
  %4857 = vmatpush1.bf16.msra.mxu0 0
  %4858 = vmatprep.subr.bf16.mxu0 0
  %4859 = vmatpush1.bf16.msra.mxu0 0
  %4860 = vmatprep.subr.bf16.mxu0 0
  %4861 = vmatpush1.bf16.msra.mxu0 0
  %4862 = vmatprep.subr.bf16.mxu0 0
  %4863 = vmatpush1.bf16.msra.mxu0 0
  %4864 = vmatprep.subr.bf16.mxu0 0
  %4865 = vmatpush1.bf16.msra.mxu0 0
  %4866 = vmatprep.subr.bf16.mxu0 0
  %4867 = vmatpush1.bf16.msra.mxu0 0
  %4868 = vmatprep.subr.bf16.mxu0 0
  %4869 = vmatpush1.bf16.msra.mxu0 0
  %4870 = vmatprep.subr.bf16.mxu0 0
  %4871 = vmatpush1.bf16.msra.mxu0 0
  %4872 = vmatprep.subr.bf16.mxu0 0
  %4873 = vmatpush1.bf16.msra.mxu0 0
  %4874 = vmatprep.subr.bf16.mxu0 0
  %4875 = vmatpush1.bf16.msra.mxu0 0
  %4876 = vmatprep.subr.bf16.mxu0 0
  %4877 = vmatpush1.bf16.msra.mxu0 0
  %4878 = vmatprep.subr.bf16.mxu0 0
  %4879 = vmatpush1.bf16.msra.mxu0 0
  %4880 = vmatprep.subr.bf16.mxu0 0
  %4881 = vmatpush1.bf16.msra.mxu0 0
  %4882 = vmatprep.subr.bf16.mxu0 0
  %4883 = vmatpush1.bf16.msra.mxu0 0
  %4884 = vmatprep.mubr.bf16.mxu0 0
  %4885 = vmatmul.mubr.bf16.gmra.mrb[0].mxu0 %v4850
  %v4886 = vpop.f32.mrb[0].mxu0
  %v4887 = vadd.f32 0.0, %v4886
  %v4888 = vpop.f32.mrb[0].mxu0
  %v4889 = vpop.f32.mrb[0].mxu0
  %v4890 = vadd.f32 0.0, %v4889
  %v4891 = vpop.f32.mrb[0].mxu0
  %4892 = vdwg.mxu0
  %v4893 = vadd.f32 %v4847, %v4887
  %v4894 = vadd.f32 %v4848, %v4890
  %v4896 = vsel %vm271, %v4707, 0
  %4898 = vmatprep.subr.bf16.mxu0 0
  %4899 = vmatpush1.bf16.msra.mxu0 %v500
  %4900 = vmatprep.subr.bf16.mxu0 0
  %4901 = vmatpush1.bf16.msra.mxu0 %v501
  %4902 = vmatprep.subr.bf16.mxu0 0
  %4903 = vmatpush1.bf16.msra.mxu0 0
  %4904 = vmatprep.subr.bf16.mxu0 0
  %4905 = vmatpush1.bf16.msra.mxu0 0
  %4906 = vmatprep.subr.bf16.mxu0 0
  %4907 = vmatpush1.bf16.msra.mxu0 0
  %4908 = vmatprep.subr.bf16.mxu0 0
  %4909 = vmatpush1.bf16.msra.mxu0 0
  %4910 = vmatprep.subr.bf16.mxu0 0
  %4911 = vmatpush1.bf16.msra.mxu0 0
  %4912 = vmatprep.subr.bf16.mxu0 0
  %4913 = vmatpush1.bf16.msra.mxu0 0
  %4914 = vmatprep.subr.bf16.mxu0 0
  %4915 = vmatpush1.bf16.msra.mxu0 0
  %4916 = vmatprep.subr.bf16.mxu0 0
  %4917 = vmatpush1.bf16.msra.mxu0 0
  %4918 = vmatprep.subr.bf16.mxu0 0
  %4919 = vmatpush1.bf16.msra.mxu0 0
  %4920 = vmatprep.subr.bf16.mxu0 0
  %4921 = vmatpush1.bf16.msra.mxu0 0
  %4922 = vmatprep.subr.bf16.mxu0 0
  %4923 = vmatpush1.bf16.msra.mxu0 0
  %4924 = vmatprep.subr.bf16.mxu0 0
  %4925 = vmatpush1.bf16.msra.mxu0 0
  %4926 = vmatprep.subr.bf16.mxu0 0
  %4927 = vmatpush1.bf16.msra.mxu0 0
  %4928 = vmatprep.subr.bf16.mxu0 0
  %4929 = vmatpush1.bf16.msra.mxu0 0
  %4930 = vmatprep.mubr.bf16.mxu0 0
  %4931 = vmatmul.mubr.bf16.gmra.mrb[0].mxu0 %v4896
  %v4932 = vpop.f32.mrb[0].mxu0
  %v4933 = vadd.f32 0.0, %v4932
  %v4934 = vpop.f32.mrb[0].mxu0
  %v4935 = vpop.f32.mrb[0].mxu0
  %v4936 = vadd.f32 0.0, %v4935
  %v4937 = vpop.f32.mrb[0].mxu0
  %4938 = vdwg.mxu0
  %v4939 = vadd.f32 %v4893, %v4933
  %v4940 = vadd.f32 %v4894, %v4936
  %v4941 = vxor.u32 %v4939, 2147483648
  %v4942 = vxor.u32 %v4940, 2147483648
  %v4943 = vmul.f32 %v4941, 1.442695
  %v4944 = vpow.pop %v4943
  %v4945 = vmul.f32 %v4942, 1.442695
  %v4946 = vpow.pop %v4945
  %v4947 = vadd.f32 %v4944, 1.0
  %v4948 = vadd.f32 %v4946, 1.0
  %v4949 = vrcp.pop %v4947
  %v4950 = vmul.f32 1.0, %v4949
  %v4951 = vrcp.pop %v4948
  %v4952 = vmul.f32 1.0, %v4951
  %v4953 = vmul.f32 %v4950, %v4519
  %v4954 = vmul.f32 %v4952, %v4521
  %v4955 = vpack.c.bf16 %v4954, %v4953
  %4956 = vmatprep.subr.bf16.mxu0 0
  %4957 = vmatpush1.bf16.msra.mxu0 %v4955
  %4958 = vmatprep.subr.bf16.mxu0 0
  %4959 = vmatpush1.bf16.msra.mxu0 0
  %4960 = vmatprep.subr.bf16.mxu0 0
  %4961 = vmatpush1.bf16.msra.mxu0 0
  %4962 = vmatprep.subr.bf16.mxu0 0
  %4963 = vmatpush1.bf16.msra.mxu0 0
  %4964 = vmatprep.subr.bf16.mxu0 0
  %4965 = vmatpush1.bf16.msra.mxu0 0
  %4966 = vmatprep.subr.bf16.mxu0 0
  %4967 = vmatpush1.bf16.msra.mxu0 0
  %4968 = vmatprep.subr.bf16.mxu0 0
  %4969 = vmatpush1.bf16.msra.mxu0 0
  %4970 = vmatprep.subr.bf16.mxu0 0
  %4971 = vmatpush1.bf16.msra.mxu0 0
  %4972 = vmatprep.subr.bf16.mxu0 0
  %4973 = vmatpush1.bf16.msra.mxu0 0
  %4974 = vmatprep.subr.bf16.mxu0 0
  %4975 = vmatpush1.bf16.msra.mxu0 0
  %4976 = vmatprep.subr.bf16.mxu0 0
  %4977 = vmatpush1.bf16.msra.mxu0 0
  %4978 = vmatprep.subr.bf16.mxu0 0
  %4979 = vmatpush1.bf16.msra.mxu0 0
  %4980 = vmatprep.subr.bf16.mxu0 0
  %4981 = vmatpush1.bf16.msra.mxu0 0
  %4982 = vmatprep.subr.bf16.mxu0 0
  %4983 = vmatpush1.bf16.msra.mxu0 0
  %4984 = vmatprep.subr.bf16.mxu0 0
  %4985 = vmatpush1.bf16.msra.mxu0 0
  %4986 = vmatprep.subr.bf16.mxu0 0
  %4987 = vmatpush1.bf16.msra.mxu0 0
  %4988 = vmatprep.mubr.bf16.mxu0 0
  %4989 = vmatmul.mubr.bf16.gmra.mrb[0].mxu0 %v75
  %v4990 = vpop.f32.mrb[0].mxu0
  %v4991 = vadd.f32 0.0, %v4990
  %v4992 = vpop.f32.mrb[0].mxu0
  %v4993 = vpop.f32.mrb[0].mxu0
  %v4994 = vadd.f32 0.0, %v4993
  %v4995 = vpop.f32.mrb[0].mxu0
  %4996 = vdwg.mxu0
  %v4997 = vpack.c.bf16 %v4994, %v4991
  %4998 = vmatprep.subr.bf16.mxu0 0
  %4999 = vmatpush1.bf16.msra.mxu0 %v4997
  %5000 = vmatprep.subr.bf16.mxu0 0
  %5001 = vmatpush1.bf16.msra.mxu0 0
  %5002 = vmatprep.subr.bf16.mxu0 0
  %5003 = vmatpush1.bf16.msra.mxu0 0
  %5004 = vmatprep.subr.bf16.mxu0 0
  %5005 = vmatpush1.bf16.msra.mxu0 0
  %5006 = vmatprep.subr.bf16.mxu0 0
  %5007 = vmatpush1.bf16.msra.mxu0 0
  %5008 = vmatprep.subr.bf16.mxu0 0
  %5009 = vmatpush1.bf16.msra.mxu0 0
  %5010 = vmatprep.subr.bf16.mxu0 0
  %5011 = vmatpush1.bf16.msra.mxu0 0
  %5012 = vmatprep.subr.bf16.mxu0 0
  %5013 = vmatpush1.bf16.msra.mxu0 0
  %5014 = vmatprep.subr.bf16.mxu0 0
  %5015 = vmatpush1.bf16.msra.mxu0 0
  %5016 = vmatprep.subr.bf16.mxu0 0
  %5017 = vmatpush1.bf16.msra.mxu0 0
  %5018 = vmatprep.subr.bf16.mxu0 0
  %5019 = vmatpush1.bf16.msra.mxu0 0
  %5020 = vmatprep.subr.bf16.mxu0 0
  %5021 = vmatpush1.bf16.msra.mxu0 0
  %5022 = vmatprep.subr.bf16.mxu0 0
  %5023 = vmatpush1.bf16.msra.mxu0 0
  %5024 = vmatprep.subr.bf16.mxu0 0
  %5025 = vmatpush1.bf16.msra.mxu0 0
  %5026 = vmatprep.subr.bf16.mxu0 0
  %5027 = vmatpush1.bf16.msra.mxu0 0
  %5028 = vmatprep.subr.bf16.mxu0 0
  %5029 = vmatpush1.bf16.msra.mxu0 0
  %5030 = vmatprep.mubr.bf16.mxu0 0
  %5031 = vmatmul.mubr.bf16.gmra.mrb[0].mxu0 %v75
  %v5032 = vpop.f32.mrb[0].mxu0
  %v5033 = vadd.f32 0.0, %v5032
  %v5034 = vpop.f32.mrb[0].mxu0
  %v5035 = vpop.f32.mrb[0].mxu0
  %v5036 = vadd.f32 0.0, %v5035
  %v5037 = vpop.f32.mrb[0].mxu0
  %5038 = vdwg.mxu0
  %v5039 = vmul.f32 %v5033, 2.0
  %v5040 = vmul.f32 %v5036, 2.0
  %v5041 = vsub.f32 %v5039, %v4953
  %v5042 = vsub.f32 %v5040, %v4954
  %v5043 = vpack.c.bf16 %v5042, %v5041
  %5044 = vmatprep.subr.bf16.mxu0 0
  %5045 = vmatpush1.bf16.msra.mxu0 %v4955
  %5046 = vmatprep.subr.bf16.mxu0 0
  %5047 = vmatpush1.bf16.msra.mxu0 0
  %5048 = vmatprep.subr.bf16.mxu0 0
  %5049 = vmatpush1.bf16.msra.mxu0 0
  %5050 = vmatprep.subr.bf16.mxu0 0
  %5051 = vmatpush1.bf16.msra.mxu0 0
  %5052 = vmatprep.subr.bf16.mxu0 0
  %5053 = vmatpush1.bf16.msra.mxu0 0
  %5054 = vmatprep.subr.bf16.mxu0 0
  %5055 = vmatpush1.bf16.msra.mxu0 0
  %5056 = vmatprep.subr.bf16.mxu0 0
  %5057 = vmatpush1.bf16.msra.mxu0 0
  %5058 = vmatprep.subr.bf16.mxu0 0
  %5059 = vmatpush1.bf16.msra.mxu0 0
  %5060 = vmatprep.subr.bf16.mxu0 0
  %5061 = vmatpush1.bf16.msra.mxu0 0
  %5062 = vmatprep.subr.bf16.mxu0 0
  %5063 = vmatpush1.bf16.msra.mxu0 0
  %5064 = vmatprep.subr.bf16.mxu0 0
  %5065 = vmatpush1.bf16.msra.mxu0 0
  %5066 = vmatprep.subr.bf16.mxu0 0
  %5067 = vmatpush1.bf16.msra.mxu0 0
  %5068 = vmatprep.subr.bf16.mxu0 0
  %5069 = vmatpush1.bf16.msra.mxu0 0
  %5070 = vmatprep.subr.bf16.mxu0 0
  %5071 = vmatpush1.bf16.msra.mxu0 0
  %5072 = vmatprep.subr.bf16.mxu0 0
  %5073 = vmatpush1.bf16.msra.mxu0 0
  %5074 = vmatprep.subr.bf16.mxu0 0
  %5075 = vmatpush1.bf16.msra.mxu0 0
  %5076 = vmatprep.mubr.bf16.mxu0 0
  %5077 = vmatmul.mubr.bf16.gmra.mrb[0].mxu0 %v169
  %v5078 = vpop.f32.mrb[0].mxu0
  %v5079 = vadd.f32 0.0, %v5078
  %v5080 = vpop.f32.mrb[0].mxu0
  %v5081 = vpop.f32.mrb[0].mxu0
  %v5082 = vadd.f32 0.0, %v5081
  %v5083 = vpop.f32.mrb[0].mxu0
  %5084 = vdwg.mxu0
  %v5085 = vpack.c.bf16 %v5082, %v5079
  %5086 = vmatprep.subr.bf16.mxu0 0
  %5087 = vmatpush1.bf16.msra.mxu0 %v5085
  %5088 = vmatprep.subr.bf16.mxu0 0
  %5089 = vmatpush1.bf16.msra.mxu0 0
  %5090 = vmatprep.subr.bf16.mxu0 0
  %5091 = vmatpush1.bf16.msra.mxu0 0
  %5092 = vmatprep.subr.bf16.mxu0 0
  %5093 = vmatpush1.bf16.msra.mxu0 0
  %5094 = vmatprep.subr.bf16.mxu0 0
  %5095 = vmatpush1.bf16.msra.mxu0 0
  %5096 = vmatprep.subr.bf16.mxu0 0
  %5097 = vmatpush1.bf16.msra.mxu0 0
  %5098 = vmatprep.subr.bf16.mxu0 0
  %5099 = vmatpush1.bf16.msra.mxu0 0
  %5100 = vmatprep.subr.bf16.mxu0 0
  %5101 = vmatpush1.bf16.msra.mxu0 0
  %5102 = vmatprep.subr.bf16.mxu0 0
  %5103 = vmatpush1.bf16.msra.mxu0 0
  %5104 = vmatprep.subr.bf16.mxu0 0
  %5105 = vmatpush1.bf16.msra.mxu0 0
  %5106 = vmatprep.subr.bf16.mxu0 0
  %5107 = vmatpush1.bf16.msra.mxu0 0
  %5108 = vmatprep.subr.bf16.mxu0 0
  %5109 = vmatpush1.bf16.msra.mxu0 0
  %5110 = vmatprep.subr.bf16.mxu0 0
  %5111 = vmatpush1.bf16.msra.mxu0 0
  %5112 = vmatprep.subr.bf16.mxu0 0
  %5113 = vmatpush1.bf16.msra.mxu0 0
  %5114 = vmatprep.subr.bf16.mxu0 0
  %5115 = vmatpush1.bf16.msra.mxu0 0
  %5116 = vmatprep.subr.bf16.mxu0 0
  %5117 = vmatpush1.bf16.msra.mxu0 0
  %5118 = vmatprep.mubr.bf16.mxu0 0
  %5119 = vmatmul.mubr.bf16.gmra.mrb[0].mxu0 %v169
  %v5120 = vpop.f32.mrb[0].mxu0
  %v5121 = vadd.f32 0.0, %v5120
  %v5122 = vpop.f32.mrb[0].mxu0
  %v5123 = vpop.f32.mrb[0].mxu0
  %v5124 = vadd.f32 0.0, %v5123
  %v5125 = vpop.f32.mrb[0].mxu0
  %5126 = vdwg.mxu0
  %v5127 = vmul.f32 %v5121, 2.0
  %v5128 = vmul.f32 %v5124, 2.0
  %v5129 = vsub.f32 %v5127, %v4953
  %v5130 = vsub.f32 %v5128, %v4954
  %v5131 = vpack.c.bf16 %v5130, %v5129
  %s5132 = scalar_lea.vmem %s1, 80
  %v5133 = vld [vmem:[%s5132] sm:$0xff]
  %v5134 = vld [vmem:[%s5132 + $0x8] sm:$0xff]
  %v5136 = vsel %vm271, %v4955, 0
  %5138 = vmatprep.subr.bf16.mxu0 0
  %5139 = vmatpush1.bf16.msra.mxu0 %v751
  %5140 = vmatprep.subr.bf16.mxu0 0
  %5141 = vmatpush1.bf16.msra.mxu0 %v752
  %5142 = vmatprep.subr.bf16.mxu0 0
  %5143 = vmatpush1.bf16.msra.mxu0 0
  %5144 = vmatprep.subr.bf16.mxu0 0
  %5145 = vmatpush1.bf16.msra.mxu0 0
  %5146 = vmatprep.subr.bf16.mxu0 0
  %5147 = vmatpush1.bf16.msra.mxu0 0
  %5148 = vmatprep.subr.bf16.mxu0 0
  %5149 = vmatpush1.bf16.msra.mxu0 0
  %5150 = vmatprep.subr.bf16.mxu0 0
  %5151 = vmatpush1.bf16.msra.mxu0 0
  %5152 = vmatprep.subr.bf16.mxu0 0
  %5153 = vmatpush1.bf16.msra.mxu0 0
  %5154 = vmatprep.subr.bf16.mxu0 0
  %5155 = vmatpush1.bf16.msra.mxu0 0
  %5156 = vmatprep.subr.bf16.mxu0 0
  %5157 = vmatpush1.bf16.msra.mxu0 0
  %5158 = vmatprep.subr.bf16.mxu0 0
  %5159 = vmatpush1.bf16.msra.mxu0 0
  %5160 = vmatprep.subr.bf16.mxu0 0
  %5161 = vmatpush1.bf16.msra.mxu0 0
  %5162 = vmatprep.subr.bf16.mxu0 0
  %5163 = vmatpush1.bf16.msra.mxu0 0
  %5164 = vmatprep.subr.bf16.mxu0 0
  %5165 = vmatpush1.bf16.msra.mxu0 0
  %5166 = vmatprep.subr.bf16.mxu0 0
  %5167 = vmatpush1.bf16.msra.mxu0 0
  %5168 = vmatprep.subr.bf16.mxu0 0
  %5169 = vmatpush1.bf16.msra.mxu0 0
  %5170 = vmatprep.mubr.bf16.mxu0 0
  %5171 = vmatmul.mubr.bf16.gmra.mrb[0].mxu0 %v5136
  %v5172 = vpop.f32.mrb[0].mxu0
  %v5173 = vadd.f32 0.0, %v5172
  %v5174 = vpop.f32.mrb[0].mxu0
  %v5175 = vpop.f32.mrb[0].mxu0
  %v5176 = vadd.f32 0.0, %v5175
  %v5177 = vpop.f32.mrb[0].mxu0
  %5178 = vdwg.mxu0
  %v5179 = vadd.f32 %v5133, %v5173
  %v5180 = vadd.f32 %v5134, %v5176
  %v5182 = vsel %vm271, %v4997, 0
  %5184 = vmatprep.subr.bf16.mxu0 0
  %5185 = vmatpush1.bf16.msra.mxu0 %v809
  %5186 = vmatprep.subr.bf16.mxu0 0
  %5187 = vmatpush1.bf16.msra.mxu0 %v810
  %5188 = vmatprep.subr.bf16.mxu0 0
  %5189 = vmatpush1.bf16.msra.mxu0 0
  %5190 = vmatprep.subr.bf16.mxu0 0
  %5191 = vmatpush1.bf16.msra.mxu0 0
  %5192 = vmatprep.subr.bf16.mxu0 0
  %5193 = vmatpush1.bf16.msra.mxu0 0
  %5194 = vmatprep.subr.bf16.mxu0 0
  %5195 = vmatpush1.bf16.msra.mxu0 0
  %5196 = vmatprep.subr.bf16.mxu0 0
  %5197 = vmatpush1.bf16.msra.mxu0 0
  %5198 = vmatprep.subr.bf16.mxu0 0
  %5199 = vmatpush1.bf16.msra.mxu0 0
  %5200 = vmatprep.subr.bf16.mxu0 0
  %5201 = vmatpush1.bf16.msra.mxu0 0
  %5202 = vmatprep.subr.bf16.mxu0 0
  %5203 = vmatpush1.bf16.msra.mxu0 0
  %5204 = vmatprep.subr.bf16.mxu0 0
  %5205 = vmatpush1.bf16.msra.mxu0 0
  %5206 = vmatprep.subr.bf16.mxu0 0
  %5207 = vmatpush1.bf16.msra.mxu0 0
  %5208 = vmatprep.subr.bf16.mxu0 0
  %5209 = vmatpush1.bf16.msra.mxu0 0
  %5210 = vmatprep.subr.bf16.mxu0 0
  %5211 = vmatpush1.bf16.msra.mxu0 0
  %5212 = vmatprep.subr.bf16.mxu0 0
  %5213 = vmatpush1.bf16.msra.mxu0 0
  %5214 = vmatprep.subr.bf16.mxu0 0
  %5215 = vmatpush1.bf16.msra.mxu0 0
  %5216 = vmatprep.mubr.bf16.mxu0 0
  %5217 = vmatmul.mubr.bf16.gmra.mrb[0].mxu0 %v5182
  %v5218 = vpop.f32.mrb[0].mxu0
  %v5219 = vadd.f32 0.0, %v5218
  %v5220 = vpop.f32.mrb[0].mxu0
  %v5221 = vpop.f32.mrb[0].mxu0
  %v5222 = vadd.f32 0.0, %v5221
  %v5223 = vpop.f32.mrb[0].mxu0
  %5224 = vdwg.mxu0
  %v5225 = vadd.f32 %v5179, %v5219
  %v5226 = vadd.f32 %v5180, %v5222
  %v5228 = vsel %vm271, %v5043, 0
  %5230 = vmatprep.subr.bf16.mxu0 0
  %5231 = vmatpush1.bf16.msra.mxu0 %v867
  %5232 = vmatprep.subr.bf16.mxu0 0
  %5233 = vmatpush1.bf16.msra.mxu0 %v868
  %5234 = vmatprep.subr.bf16.mxu0 0
  %5235 = vmatpush1.bf16.msra.mxu0 0
  %5236 = vmatprep.subr.bf16.mxu0 0
  %5237 = vmatpush1.bf16.msra.mxu0 0
  %5238 = vmatprep.subr.bf16.mxu0 0
  %5239 = vmatpush1.bf16.msra.mxu0 0
  %5240 = vmatprep.subr.bf16.mxu0 0
  %5241 = vmatpush1.bf16.msra.mxu0 0
  %5242 = vmatprep.subr.bf16.mxu0 0
  %5243 = vmatpush1.bf16.msra.mxu0 0
  %5244 = vmatprep.subr.bf16.mxu0 0
  %5245 = vmatpush1.bf16.msra.mxu0 0
  %5246 = vmatprep.subr.bf16.mxu0 0
  %5247 = vmatpush1.bf16.msra.mxu0 0
  %5248 = vmatprep.subr.bf16.mxu0 0
  %5249 = vmatpush1.bf16.msra.mxu0 0
  %5250 = vmatprep.subr.bf16.mxu0 0
  %5251 = vmatpush1.bf16.msra.mxu0 0
  %5252 = vmatprep.subr.bf16.mxu0 0
  %5253 = vmatpush1.bf16.msra.mxu0 0
  %5254 = vmatprep.subr.bf16.mxu0 0
  %5255 = vmatpush1.bf16.msra.mxu0 0
  %5256 = vmatprep.subr.bf16.mxu0 0
  %5257 = vmatpush1.bf16.msra.mxu0 0
  %5258 = vmatprep.subr.bf16.mxu0 0
  %5259 = vmatpush1.bf16.msra.mxu0 0
  %5260 = vmatprep.subr.bf16.mxu0 0
  %5261 = vmatpush1.bf16.msra.mxu0 0
  %5262 = vmatprep.mubr.bf16.mxu0 0
  %5263 = vmatmul.mubr.bf16.gmra.mrb[0].mxu0 %v5228
  %v5264 = vpop.f32.mrb[0].mxu0
  %v5265 = vadd.f32 0.0, %v5264
  %v5266 = vpop.f32.mrb[0].mxu0
  %v5267 = vpop.f32.mrb[0].mxu0
  %v5268 = vadd.f32 0.0, %v5267
  %v5269 = vpop.f32.mrb[0].mxu0
  %5270 = vdwg.mxu0
  %v5271 = vadd.f32 %v5225, %v5265
  %v5272 = vadd.f32 %v5226, %v5268
  %v5274 = vsel %vm271, %v5085, 0
  %5276 = vmatprep.subr.bf16.mxu0 0
  %5277 = vmatpush1.bf16.msra.mxu0 %v925
  %5278 = vmatprep.subr.bf16.mxu0 0
  %5279 = vmatpush1.bf16.msra.mxu0 %v926
  %5280 = vmatprep.subr.bf16.mxu0 0
  %5281 = vmatpush1.bf16.msra.mxu0 0
  %5282 = vmatprep.subr.bf16.mxu0 0
  %5283 = vmatpush1.bf16.msra.mxu0 0
  %5284 = vmatprep.subr.bf16.mxu0 0
  %5285 = vmatpush1.bf16.msra.mxu0 0
  %5286 = vmatprep.subr.bf16.mxu0 0
  %5287 = vmatpush1.bf16.msra.mxu0 0
  %5288 = vmatprep.subr.bf16.mxu0 0
  %5289 = vmatpush1.bf16.msra.mxu0 0
  %5290 = vmatprep.subr.bf16.mxu0 0
  %5291 = vmatpush1.bf16.msra.mxu0 0
  %5292 = vmatprep.subr.bf16.mxu0 0
  %5293 = vmatpush1.bf16.msra.mxu0 0
  %5294 = vmatprep.subr.bf16.mxu0 0
  %5295 = vmatpush1.bf16.msra.mxu0 0
  %5296 = vmatprep.subr.bf16.mxu0 0
  %5297 = vmatpush1.bf16.msra.mxu0 0
  %5298 = vmatprep.subr.bf16.mxu0 0
  %5299 = vmatpush1.bf16.msra.mxu0 0
  %5300 = vmatprep.subr.bf16.mxu0 0
  %5301 = vmatpush1.bf16.msra.mxu0 0
  %5302 = vmatprep.subr.bf16.mxu0 0
  %5303 = vmatpush1.bf16.msra.mxu0 0
  %5304 = vmatprep.subr.bf16.mxu0 0
  %5305 = vmatpush1.bf16.msra.mxu0 0
  %5306 = vmatprep.subr.bf16.mxu0 0
  %5307 = vmatpush1.bf16.msra.mxu0 0
  %5308 = vmatprep.mubr.bf16.mxu0 0
  %5309 = vmatmul.mubr.bf16.gmra.mrb[0].mxu0 %v5274
  %v5310 = vpop.f32.mrb[0].mxu0
  %v5311 = vadd.f32 0.0, %v5310
  %v5312 = vpop.f32.mrb[0].mxu0
  %v5313 = vpop.f32.mrb[0].mxu0
  %v5314 = vadd.f32 0.0, %v5313
  %v5315 = vpop.f32.mrb[0].mxu0
  %5316 = vdwg.mxu0
  %v5317 = vadd.f32 %v5271, %v5311
  %v5318 = vadd.f32 %v5272, %v5314
  %v5320 = vsel %vm271, %v5131, 0
  %5322 = vmatprep.subr.bf16.mxu0 0
  %5323 = vmatpush1.bf16.msra.mxu0 %v983
  %5324 = vmatprep.subr.bf16.mxu0 0
  %5325 = vmatpush1.bf16.msra.mxu0 %v984
  %5326 = vmatprep.subr.bf16.mxu0 0
  %5327 = vmatpush1.bf16.msra.mxu0 0
  %5328 = vmatprep.subr.bf16.mxu0 0
  %5329 = vmatpush1.bf16.msra.mxu0 0
  %5330 = vmatprep.subr.bf16.mxu0 0
  %5331 = vmatpush1.bf16.msra.mxu0 0
  %5332 = vmatprep.subr.bf16.mxu0 0
  %5333 = vmatpush1.bf16.msra.mxu0 0
  %5334 = vmatprep.subr.bf16.mxu0 0
  %5335 = vmatpush1.bf16.msra.mxu0 0
  %5336 = vmatprep.subr.bf16.mxu0 0
  %5337 = vmatpush1.bf16.msra.mxu0 0
  %5338 = vmatprep.subr.bf16.mxu0 0
  %5339 = vmatpush1.bf16.msra.mxu0 0
  %5340 = vmatprep.subr.bf16.mxu0 0
  %5341 = vmatpush1.bf16.msra.mxu0 0
  %5342 = vmatprep.subr.bf16.mxu0 0
  %5343 = vmatpush1.bf16.msra.mxu0 0
  %5344 = vmatprep.subr.bf16.mxu0 0
  %5345 = vmatpush1.bf16.msra.mxu0 0
  %5346 = vmatprep.subr.bf16.mxu0 0
  %5347 = vmatpush1.bf16.msra.mxu0 0
  %5348 = vmatprep.subr.bf16.mxu0 0
  %5349 = vmatpush1.bf16.msra.mxu0 0
  %5350 = vmatprep.subr.bf16.mxu0 0
  %5351 = vmatpush1.bf16.msra.mxu0 0
  %5352 = vmatprep.subr.bf16.mxu0 0
  %5353 = vmatpush1.bf16.msra.mxu0 0
  %5354 = vmatprep.mubr.bf16.mxu0 0
  %5355 = vmatmul.mubr.bf16.gmra.mrb[0].mxu0 %v5320
  %v5356 = vpop.f32.mrb[0].mxu0
  %v5357 = vadd.f32 0.0, %v5356
  %v5358 = vpop.f32.mrb[0].mxu0
  %v5359 = vpop.f32.mrb[0].mxu0
  %v5360 = vadd.f32 0.0, %v5359
  %v5361 = vpop.f32.mrb[0].mxu0
  %5362 = vdwg.mxu0
  %v5363 = vadd.f32 %v5317, %v5357
  %v5364 = vadd.f32 %v5318, %v5360
  %v5365 = vtanh.pop %v5363
  %v5366 = vtanh.pop %v5364
  %v5367 = vmul.f32 %v4950, %v4514
  %v5368 = vmul.f32 %v4952, %v4515
  %v5369 = vsub.f32 1.0, %v4950
  %v5370 = vsub.f32 1.0, %v4952
  %5373 = vrot.lane.b32.xlu0 %v5365, 32
  %v5374 = vpop.permute.xlu0 %5373
  %5375 = vrot.lane.b32.xlu0 %v5366, 32
  %v5376 = vpop.permute.xlu0 %5375
  %v5379 = vmul.f32 %v5369, %v5374
  %v5380 = vmul.f32 %v5370, %v5376
  %v5381 = vadd.f32 %v5367, %v5379
  %v5382 = vadd.f32 %v5368, %v5380
  %5385 = vrot.lane.b32.xlu0 %v5381, 96
  %v5386 = vpop.permute.xlu0 %5385
  %5387 = vrot.lane.b32.xlu0 %v5382, 96
  %v5388 = vpop.permute.xlu0 %5387
  %s5391 = scalar_lea.vmem %s6, 80
  %5392 = vst.msk [vmem:[%s5391] sm:$0xff] %vm271, %v5386
  %5393 = vst.msk [vmem:[%s5391 + $0x8] sm:$0xff] %vm271, %v5388
  %v5394 = vpack.c.bf16 %v5382, %v5381
  %5396 = vrot.lane.b32.xlu0 %v5394, 96
  %v5397 = vpop.permute.xlu0 %5396
  %5399 = vmatprep.subr.bf16.mxu0 0
  %5400 = vmatpush1.bf16.msra.mxu0 %v5397
  %5401 = vmatprep.subr.bf16.mxu0 0
  %5402 = vmatpush1.bf16.msra.mxu0 0
  %5403 = vmatprep.subr.bf16.mxu0 0
  %5404 = vmatpush1.bf16.msra.mxu0 0
  %5405 = vmatprep.subr.bf16.mxu0 0
  %5406 = vmatpush1.bf16.msra.mxu0 0
  %5407 = vmatprep.subr.bf16.mxu0 0
  %5408 = vmatpush1.bf16.msra.mxu0 0
  %5409 = vmatprep.subr.bf16.mxu0 0
  %5410 = vmatpush1.bf16.msra.mxu0 0
  %5411 = vmatprep.subr.bf16.mxu0 0
  %5412 = vmatpush1.bf16.msra.mxu0 0
  %5413 = vmatprep.subr.bf16.mxu0 0
  %5414 = vmatpush1.bf16.msra.mxu0 0
  %5415 = vmatprep.subr.bf16.mxu0 0
  %5416 = vmatpush1.bf16.msra.mxu0 0
  %5417 = vmatprep.subr.bf16.mxu0 0
  %5418 = vmatpush1.bf16.msra.mxu0 0
  %5419 = vmatprep.subr.bf16.mxu0 0
  %5420 = vmatpush1.bf16.msra.mxu0 0
  %5421 = vmatprep.subr.bf16.mxu0 0
  %5422 = vmatpush1.bf16.msra.mxu0 0
  %5423 = vmatprep.subr.bf16.mxu0 0
  %5424 = vmatpush1.bf16.msra.mxu0 0
  %5425 = vmatprep.subr.bf16.mxu0 0
  %5426 = vmatpush1.bf16.msra.mxu0 0
  %5427 = vmatprep.subr.bf16.mxu0 0
  %5428 = vmatpush1.bf16.msra.mxu0 0
  %5429 = vmatprep.subr.bf16.mxu0 0
  %5430 = vmatpush1.bf16.msra.mxu0 0
  %5431 = vmatprep.mubr.bf16.mxu0 0
  %5432 = vmatmul.mubr.bf16.gmra.mrb[0].mxu0 %v75
  %v5433 = vpop.f32.mrb[0].mxu0
  %v5434 = vadd.f32 0.0, %v5433
  %v5435 = vpop.f32.mrb[0].mxu0
  %v5436 = vpop.f32.mrb[0].mxu0
  %v5437 = vadd.f32 0.0, %v5436
  %v5438 = vpop.f32.mrb[0].mxu0
  %5439 = vdwg.mxu0
  %v5440 = vpack.c.bf16 %v5437, %v5434
  %5441 = vmatprep.subr.bf16.mxu0 0
  %5442 = vmatpush1.bf16.msra.mxu0 %v5440
  %5443 = vmatprep.subr.bf16.mxu0 0
  %5444 = vmatpush1.bf16.msra.mxu0 0
  %5445 = vmatprep.subr.bf16.mxu0 0
  %5446 = vmatpush1.bf16.msra.mxu0 0
  %5447 = vmatprep.subr.bf16.mxu0 0
  %5448 = vmatpush1.bf16.msra.mxu0 0
  %5449 = vmatprep.subr.bf16.mxu0 0
  %5450 = vmatpush1.bf16.msra.mxu0 0
  %5451 = vmatprep.subr.bf16.mxu0 0
  %5452 = vmatpush1.bf16.msra.mxu0 0
  %5453 = vmatprep.subr.bf16.mxu0 0
  %5454 = vmatpush1.bf16.msra.mxu0 0
  %5455 = vmatprep.subr.bf16.mxu0 0
  %5456 = vmatpush1.bf16.msra.mxu0 0
  %5457 = vmatprep.subr.bf16.mxu0 0
  %5458 = vmatpush1.bf16.msra.mxu0 0
  %5459 = vmatprep.subr.bf16.mxu0 0
  %5460 = vmatpush1.bf16.msra.mxu0 0
  %5461 = vmatprep.subr.bf16.mxu0 0
  %5462 = vmatpush1.bf16.msra.mxu0 0
  %5463 = vmatprep.subr.bf16.mxu0 0
  %5464 = vmatpush1.bf16.msra.mxu0 0
  %5465 = vmatprep.subr.bf16.mxu0 0
  %5466 = vmatpush1.bf16.msra.mxu0 0
  %5467 = vmatprep.subr.bf16.mxu0 0
  %5468 = vmatpush1.bf16.msra.mxu0 0
  %5469 = vmatprep.subr.bf16.mxu0 0
  %5470 = vmatpush1.bf16.msra.mxu0 0
  %5471 = vmatprep.subr.bf16.mxu0 0
  %5472 = vmatpush1.bf16.msra.mxu0 0
  %5473 = vmatprep.mubr.bf16.mxu0 0
  %5474 = vmatmul.mubr.bf16.gmra.mrb[0].mxu0 %v75
  %v5475 = vpop.f32.mrb[0].mxu0
  %v5476 = vadd.f32 0.0, %v5475
  %v5477 = vpop.f32.mrb[0].mxu0
  %v5478 = vpop.f32.mrb[0].mxu0
  %v5479 = vadd.f32 0.0, %v5478
  %v5480 = vpop.f32.mrb[0].mxu0
  %5481 = vdwg.mxu0
  %v5482 = vmul.f32 %v5476, 2.0
  %v5483 = vmul.f32 %v5479, 2.0
  %v5484 = vsub.f32 %v5482, %v5386
  %v5485 = vsub.f32 %v5483, %v5388
  %v5486 = vpack.c.bf16 %v5485, %v5484
  %5487 = vmatprep.subr.bf16.mxu0 0
  %5488 = vmatpush1.bf16.msra.mxu0 %v5397
  %5489 = vmatprep.subr.bf16.mxu0 0
  %5490 = vmatpush1.bf16.msra.mxu0 0
  %5491 = vmatprep.subr.bf16.mxu0 0
  %5492 = vmatpush1.bf16.msra.mxu0 0
  %5493 = vmatprep.subr.bf16.mxu0 0
  %5494 = vmatpush1.bf16.msra.mxu0 0
  %5495 = vmatprep.subr.bf16.mxu0 0
  %5496 = vmatpush1.bf16.msra.mxu0 0
  %5497 = vmatprep.subr.bf16.mxu0 0
  %5498 = vmatpush1.bf16.msra.mxu0 0
  %5499 = vmatprep.subr.bf16.mxu0 0
  %5500 = vmatpush1.bf16.msra.mxu0 0
  %5501 = vmatprep.subr.bf16.mxu0 0
  %5502 = vmatpush1.bf16.msra.mxu0 0
  %5503 = vmatprep.subr.bf16.mxu0 0
  %5504 = vmatpush1.bf16.msra.mxu0 0
  %5505 = vmatprep.subr.bf16.mxu0 0
  %5506 = vmatpush1.bf16.msra.mxu0 0
  %5507 = vmatprep.subr.bf16.mxu0 0
  %5508 = vmatpush1.bf16.msra.mxu0 0
  %5509 = vmatprep.subr.bf16.mxu0 0
  %5510 = vmatpush1.bf16.msra.mxu0 0
  %5511 = vmatprep.subr.bf16.mxu0 0
  %5512 = vmatpush1.bf16.msra.mxu0 0
  %5513 = vmatprep.subr.bf16.mxu0 0
  %5514 = vmatpush1.bf16.msra.mxu0 0
  %5515 = vmatprep.subr.bf16.mxu0 0
  %5516 = vmatpush1.bf16.msra.mxu0 0
  %5517 = vmatprep.subr.bf16.mxu0 0
  %5518 = vmatpush1.bf16.msra.mxu0 0
  %5519 = vmatprep.mubr.bf16.mxu0 0
  %5520 = vmatmul.mubr.bf16.gmra.mrb[0].mxu0 %v169
  %v5521 = vpop.f32.mrb[0].mxu0
  %v5522 = vadd.f32 0.0, %v5521
  %v5523 = vpop.f32.mrb[0].mxu0
  %v5524 = vpop.f32.mrb[0].mxu0
  %v5525 = vadd.f32 0.0, %v5524
  %v5526 = vpop.f32.mrb[0].mxu0
  %5527 = vdwg.mxu0
  %v5528 = vpack.c.bf16 %v5525, %v5522
  %5529 = vmatprep.subr.bf16.mxu0 0
  %5530 = vmatpush1.bf16.msra.mxu0 %v5528
  %5531 = vmatprep.subr.bf16.mxu0 0
  %5532 = vmatpush1.bf16.msra.mxu0 0
  %5533 = vmatprep.subr.bf16.mxu0 0
  %5534 = vmatpush1.bf16.msra.mxu0 0
  %5535 = vmatprep.subr.bf16.mxu0 0
  %5536 = vmatpush1.bf16.msra.mxu0 0
  %5537 = vmatprep.subr.bf16.mxu0 0
  %5538 = vmatpush1.bf16.msra.mxu0 0
  %5539 = vmatprep.subr.bf16.mxu0 0
  %5540 = vmatpush1.bf16.msra.mxu0 0
  %5541 = vmatprep.subr.bf16.mxu0 0
  %5542 = vmatpush1.bf16.msra.mxu0 0
  %5543 = vmatprep.subr.bf16.mxu0 0
  %5544 = vmatpush1.bf16.msra.mxu0 0
  %5545 = vmatprep.subr.bf16.mxu0 0
  %5546 = vmatpush1.bf16.msra.mxu0 0
  %5547 = vmatprep.subr.bf16.mxu0 0
  %5548 = vmatpush1.bf16.msra.mxu0 0
  %5549 = vmatprep.subr.bf16.mxu0 0
  %5550 = vmatpush1.bf16.msra.mxu0 0
  %5551 = vmatprep.subr.bf16.mxu0 0
  %5552 = vmatpush1.bf16.msra.mxu0 0
  %5553 = vmatprep.subr.bf16.mxu0 0
  %5554 = vmatpush1.bf16.msra.mxu0 0
  %5555 = vmatprep.subr.bf16.mxu0 0
  %5556 = vmatpush1.bf16.msra.mxu0 0
  %5557 = vmatprep.subr.bf16.mxu0 0
  %5558 = vmatpush1.bf16.msra.mxu0 0
  %5559 = vmatprep.subr.bf16.mxu0 0
  %5560 = vmatpush1.bf16.msra.mxu0 0
  %5561 = vmatprep.mubr.bf16.mxu0 0
  %5562 = vmatmul.mubr.bf16.gmra.mrb[0].mxu0 %v169
  %v5563 = vpop.f32.mrb[0].mxu0
  %v5564 = vadd.f32 0.0, %v5563
  %v5565 = vpop.f32.mrb[0].mxu0
  %v5566 = vpop.f32.mrb[0].mxu0
  %v5567 = vadd.f32 0.0, %v5566
  %v5568 = vpop.f32.mrb[0].mxu0
  %5569 = vdwg.mxu0
  %v5570 = vmul.f32 %v5564, 2.0
  %v5571 = vmul.f32 %v5567, 2.0
  %v5572 = vsub.f32 %v5570, %v5386
  %v5573 = vsub.f32 %v5571, %v5388
  %v5574 = vpack.c.bf16 %v5573, %v5572
  %s5575 = scalar_lea.vmem %s0, 96
  %v5576 = vld [vmem:[%s5575] sm:$0xff]
  %v5577 = vld [vmem:[%s5575 + $0x8] sm:$0xff]
  %v5579 = vsel %vm271, %v5397, 0
  %5581 = vmatprep.subr.bf16.mxu0 0
  %5582 = vmatpush1.bf16.msra.mxu0 %v267
  %5583 = vmatprep.subr.bf16.mxu0 0
  %5584 = vmatpush1.bf16.msra.mxu0 %v268
  %5585 = vmatprep.subr.bf16.mxu0 0
  %5586 = vmatpush1.bf16.msra.mxu0 0
  %5587 = vmatprep.subr.bf16.mxu0 0
  %5588 = vmatpush1.bf16.msra.mxu0 0
  %5589 = vmatprep.subr.bf16.mxu0 0
  %5590 = vmatpush1.bf16.msra.mxu0 0
  %5591 = vmatprep.subr.bf16.mxu0 0
  %5592 = vmatpush1.bf16.msra.mxu0 0
  %5593 = vmatprep.subr.bf16.mxu0 0
  %5594 = vmatpush1.bf16.msra.mxu0 0
  %5595 = vmatprep.subr.bf16.mxu0 0
  %5596 = vmatpush1.bf16.msra.mxu0 0
  %5597 = vmatprep.subr.bf16.mxu0 0
  %5598 = vmatpush1.bf16.msra.mxu0 0
  %5599 = vmatprep.subr.bf16.mxu0 0
  %5600 = vmatpush1.bf16.msra.mxu0 0
  %5601 = vmatprep.subr.bf16.mxu0 0
  %5602 = vmatpush1.bf16.msra.mxu0 0
  %5603 = vmatprep.subr.bf16.mxu0 0
  %5604 = vmatpush1.bf16.msra.mxu0 0
  %5605 = vmatprep.subr.bf16.mxu0 0
  %5606 = vmatpush1.bf16.msra.mxu0 0
  %5607 = vmatprep.subr.bf16.mxu0 0
  %5608 = vmatpush1.bf16.msra.mxu0 0
  %5609 = vmatprep.subr.bf16.mxu0 0
  %5610 = vmatpush1.bf16.msra.mxu0 0
  %5611 = vmatprep.subr.bf16.mxu0 0
  %5612 = vmatpush1.bf16.msra.mxu0 0
  %5613 = vmatprep.mubr.bf16.mxu0 0
  %5614 = vmatmul.mubr.bf16.gmra.mrb[0].mxu0 %v5579
  %v5615 = vpop.f32.mrb[0].mxu0
  %v5616 = vadd.f32 0.0, %v5615
  %v5617 = vpop.f32.mrb[0].mxu0
  %v5618 = vpop.f32.mrb[0].mxu0
  %v5619 = vadd.f32 0.0, %v5618
  %v5620 = vpop.f32.mrb[0].mxu0
  %5621 = vdwg.mxu0
  %v5622 = vadd.f32 %v5576, %v5616
  %v5623 = vadd.f32 %v5577, %v5619
  %v5625 = vsel %vm271, %v5440, 0
  %5627 = vmatprep.subr.bf16.mxu0 0
  %5628 = vmatpush1.bf16.msra.mxu0 %v326
  %5629 = vmatprep.subr.bf16.mxu0 0
  %5630 = vmatpush1.bf16.msra.mxu0 %v327
  %5631 = vmatprep.subr.bf16.mxu0 0
  %5632 = vmatpush1.bf16.msra.mxu0 0
  %5633 = vmatprep.subr.bf16.mxu0 0
  %5634 = vmatpush1.bf16.msra.mxu0 0
  %5635 = vmatprep.subr.bf16.mxu0 0
  %5636 = vmatpush1.bf16.msra.mxu0 0
  %5637 = vmatprep.subr.bf16.mxu0 0
  %5638 = vmatpush1.bf16.msra.mxu0 0
  %5639 = vmatprep.subr.bf16.mxu0 0
  %5640 = vmatpush1.bf16.msra.mxu0 0
  %5641 = vmatprep.subr.bf16.mxu0 0
  %5642 = vmatpush1.bf16.msra.mxu0 0
  %5643 = vmatprep.subr.bf16.mxu0 0
  %5644 = vmatpush1.bf16.msra.mxu0 0
  %5645 = vmatprep.subr.bf16.mxu0 0
  %5646 = vmatpush1.bf16.msra.mxu0 0
  %5647 = vmatprep.subr.bf16.mxu0 0
  %5648 = vmatpush1.bf16.msra.mxu0 0
  %5649 = vmatprep.subr.bf16.mxu0 0
  %5650 = vmatpush1.bf16.msra.mxu0 0
  %5651 = vmatprep.subr.bf16.mxu0 0
  %5652 = vmatpush1.bf16.msra.mxu0 0
  %5653 = vmatprep.subr.bf16.mxu0 0
  %5654 = vmatpush1.bf16.msra.mxu0 0
  %5655 = vmatprep.subr.bf16.mxu0 0
  %5656 = vmatpush1.bf16.msra.mxu0 0
  %5657 = vmatprep.subr.bf16.mxu0 0
  %5658 = vmatpush1.bf16.msra.mxu0 0
  %5659 = vmatprep.mubr.bf16.mxu0 0
  %5660 = vmatmul.mubr.bf16.gmra.mrb[0].mxu0 %v5625
  %v5661 = vpop.f32.mrb[0].mxu0
  %v5662 = vadd.f32 0.0, %v5661
  %v5663 = vpop.f32.mrb[0].mxu0
  %v5664 = vpop.f32.mrb[0].mxu0
  %v5665 = vadd.f32 0.0, %v5664
  %v5666 = vpop.f32.mrb[0].mxu0
  %5667 = vdwg.mxu0
  %v5668 = vadd.f32 %v5622, %v5662
  %v5669 = vadd.f32 %v5623, %v5665
  %v5671 = vsel %vm271, %v5486, 0
  %5673 = vmatprep.subr.bf16.mxu0 0
  %5674 = vmatpush1.bf16.msra.mxu0 %v384
  %5675 = vmatprep.subr.bf16.mxu0 0
  %5676 = vmatpush1.bf16.msra.mxu0 %v385
  %5677 = vmatprep.subr.bf16.mxu0 0
  %5678 = vmatpush1.bf16.msra.mxu0 0
  %5679 = vmatprep.subr.bf16.mxu0 0
  %5680 = vmatpush1.bf16.msra.mxu0 0
  %5681 = vmatprep.subr.bf16.mxu0 0
  %5682 = vmatpush1.bf16.msra.mxu0 0
  %5683 = vmatprep.subr.bf16.mxu0 0
  %5684 = vmatpush1.bf16.msra.mxu0 0
  %5685 = vmatprep.subr.bf16.mxu0 0
  %5686 = vmatpush1.bf16.msra.mxu0 0
  %5687 = vmatprep.subr.bf16.mxu0 0
  %5688 = vmatpush1.bf16.msra.mxu0 0
  %5689 = vmatprep.subr.bf16.mxu0 0
  %5690 = vmatpush1.bf16.msra.mxu0 0
  %5691 = vmatprep.subr.bf16.mxu0 0
  %5692 = vmatpush1.bf16.msra.mxu0 0
  %5693 = vmatprep.subr.bf16.mxu0 0
  %5694 = vmatpush1.bf16.msra.mxu0 0
  %5695 = vmatprep.subr.bf16.mxu0 0
  %5696 = vmatpush1.bf16.msra.mxu0 0
  %5697 = vmatprep.subr.bf16.mxu0 0
  %5698 = vmatpush1.bf16.msra.mxu0 0
  %5699 = vmatprep.subr.bf16.mxu0 0
  %5700 = vmatpush1.bf16.msra.mxu0 0
  %5701 = vmatprep.subr.bf16.mxu0 0
  %5702 = vmatpush1.bf16.msra.mxu0 0
  %5703 = vmatprep.subr.bf16.mxu0 0
  %5704 = vmatpush1.bf16.msra.mxu0 0
  %5705 = vmatprep.mubr.bf16.mxu0 0
  %5706 = vmatmul.mubr.bf16.gmra.mrb[0].mxu0 %v5671
  %v5707 = vpop.f32.mrb[0].mxu0
  %v5708 = vadd.f32 0.0, %v5707
  %v5709 = vpop.f32.mrb[0].mxu0
  %v5710 = vpop.f32.mrb[0].mxu0
  %v5711 = vadd.f32 0.0, %v5710
  %v5712 = vpop.f32.mrb[0].mxu0
  %5713 = vdwg.mxu0
  %v5714 = vadd.f32 %v5668, %v5708
  %v5715 = vadd.f32 %v5669, %v5711
  %v5717 = vsel %vm271, %v5528, 0
  %5719 = vmatprep.subr.bf16.mxu0 0
  %5720 = vmatpush1.bf16.msra.mxu0 %v442
  %5721 = vmatprep.subr.bf16.mxu0 0
  %5722 = vmatpush1.bf16.msra.mxu0 %v443
  %5723 = vmatprep.subr.bf16.mxu0 0
  %5724 = vmatpush1.bf16.msra.mxu0 0
  %5725 = vmatprep.subr.bf16.mxu0 0
  %5726 = vmatpush1.bf16.msra.mxu0 0
  %5727 = vmatprep.subr.bf16.mxu0 0
  %5728 = vmatpush1.bf16.msra.mxu0 0
  %5729 = vmatprep.subr.bf16.mxu0 0
  %5730 = vmatpush1.bf16.msra.mxu0 0
  %5731 = vmatprep.subr.bf16.mxu0 0
  %5732 = vmatpush1.bf16.msra.mxu0 0
  %5733 = vmatprep.subr.bf16.mxu0 0
  %5734 = vmatpush1.bf16.msra.mxu0 0
  %5735 = vmatprep.subr.bf16.mxu0 0
  %5736 = vmatpush1.bf16.msra.mxu0 0
  %5737 = vmatprep.subr.bf16.mxu0 0
  %5738 = vmatpush1.bf16.msra.mxu0 0
  %5739 = vmatprep.subr.bf16.mxu0 0
  %5740 = vmatpush1.bf16.msra.mxu0 0
  %5741 = vmatprep.subr.bf16.mxu0 0
  %5742 = vmatpush1.bf16.msra.mxu0 0
  %5743 = vmatprep.subr.bf16.mxu0 0
  %5744 = vmatpush1.bf16.msra.mxu0 0
  %5745 = vmatprep.subr.bf16.mxu0 0
  %5746 = vmatpush1.bf16.msra.mxu0 0
  %5747 = vmatprep.subr.bf16.mxu0 0
  %5748 = vmatpush1.bf16.msra.mxu0 0
  %5749 = vmatprep.subr.bf16.mxu0 0
  %5750 = vmatpush1.bf16.msra.mxu0 0
  %5751 = vmatprep.mubr.bf16.mxu0 0
  %5752 = vmatmul.mubr.bf16.gmra.mrb[0].mxu0 %v5717
  %v5753 = vpop.f32.mrb[0].mxu0
  %v5754 = vadd.f32 0.0, %v5753
  %v5755 = vpop.f32.mrb[0].mxu0
  %v5756 = vpop.f32.mrb[0].mxu0
  %v5757 = vadd.f32 0.0, %v5756
  %v5758 = vpop.f32.mrb[0].mxu0
  %5759 = vdwg.mxu0
  %v5760 = vadd.f32 %v5714, %v5754
  %v5761 = vadd.f32 %v5715, %v5757
  %v5763 = vsel %vm271, %v5574, 0
  %5765 = vmatprep.subr.bf16.mxu0 0
  %5766 = vmatpush1.bf16.msra.mxu0 %v500
  %5767 = vmatprep.subr.bf16.mxu0 0
  %5768 = vmatpush1.bf16.msra.mxu0 %v501
  %5769 = vmatprep.subr.bf16.mxu0 0
  %5770 = vmatpush1.bf16.msra.mxu0 0
  %5771 = vmatprep.subr.bf16.mxu0 0
  %5772 = vmatpush1.bf16.msra.mxu0 0
  %5773 = vmatprep.subr.bf16.mxu0 0
  %5774 = vmatpush1.bf16.msra.mxu0 0
  %5775 = vmatprep.subr.bf16.mxu0 0
  %5776 = vmatpush1.bf16.msra.mxu0 0
  %5777 = vmatprep.subr.bf16.mxu0 0
  %5778 = vmatpush1.bf16.msra.mxu0 0
  %5779 = vmatprep.subr.bf16.mxu0 0
  %5780 = vmatpush1.bf16.msra.mxu0 0
  %5781 = vmatprep.subr.bf16.mxu0 0
  %5782 = vmatpush1.bf16.msra.mxu0 0
  %5783 = vmatprep.subr.bf16.mxu0 0
  %5784 = vmatpush1.bf16.msra.mxu0 0
  %5785 = vmatprep.subr.bf16.mxu0 0
  %5786 = vmatpush1.bf16.msra.mxu0 0
  %5787 = vmatprep.subr.bf16.mxu0 0
  %5788 = vmatpush1.bf16.msra.mxu0 0
  %5789 = vmatprep.subr.bf16.mxu0 0
  %5790 = vmatpush1.bf16.msra.mxu0 0
  %5791 = vmatprep.subr.bf16.mxu0 0
  %5792 = vmatpush1.bf16.msra.mxu0 0
  %5793 = vmatprep.subr.bf16.mxu0 0
  %5794 = vmatpush1.bf16.msra.mxu0 0
  %5795 = vmatprep.subr.bf16.mxu0 0
  %5796 = vmatpush1.bf16.msra.mxu0 0
  %5797 = vmatprep.mubr.bf16.mxu0 0
  %5798 = vmatmul.mubr.bf16.gmra.mrb[0].mxu0 %v5763
  %v5799 = vpop.f32.mrb[0].mxu0
  %v5800 = vadd.f32 0.0, %v5799
  %v5801 = vpop.f32.mrb[0].mxu0
  %v5802 = vpop.f32.mrb[0].mxu0
  %v5803 = vadd.f32 0.0, %v5802
  %v5804 = vpop.f32.mrb[0].mxu0
  %5805 = vdwg.mxu0
  %v5806 = vadd.f32 %v5760, %v5800
  %v5807 = vadd.f32 %v5761, %v5803
  %v5808 = vxor.u32 %v5806, 2147483648
  %v5809 = vxor.u32 %v5807, 2147483648
  %v5810 = vmul.f32 %v5808, 1.442695
  %v5811 = vpow.pop %v5810
  %v5812 = vmul.f32 %v5809, 1.442695
  %v5813 = vpow.pop %v5812
  %v5814 = vadd.f32 %v5811, 1.0
  %v5815 = vadd.f32 %v5813, 1.0
  %v5816 = vrcp.pop %v5814
  %v5817 = vmul.f32 1.0, %v5816
  %v5818 = vrcp.pop %v5815
  %v5819 = vmul.f32 1.0, %v5818
  %v5820 = vmul.f32 %v5817, %v5386
  %v5821 = vmul.f32 %v5819, %v5388
  %v5822 = vpack.c.bf16 %v5821, %v5820
  %5823 = vmatprep.subr.bf16.mxu0 0
  %5824 = vmatpush1.bf16.msra.mxu0 %v5822
  %5825 = vmatprep.subr.bf16.mxu0 0
  %5826 = vmatpush1.bf16.msra.mxu0 0
  %5827 = vmatprep.subr.bf16.mxu0 0
  %5828 = vmatpush1.bf16.msra.mxu0 0
  %5829 = vmatprep.subr.bf16.mxu0 0
  %5830 = vmatpush1.bf16.msra.mxu0 0
  %5831 = vmatprep.subr.bf16.mxu0 0
  %5832 = vmatpush1.bf16.msra.mxu0 0
  %5833 = vmatprep.subr.bf16.mxu0 0
  %5834 = vmatpush1.bf16.msra.mxu0 0
  %5835 = vmatprep.subr.bf16.mxu0 0
  %5836 = vmatpush1.bf16.msra.mxu0 0
  %5837 = vmatprep.subr.bf16.mxu0 0
  %5838 = vmatpush1.bf16.msra.mxu0 0
  %5839 = vmatprep.subr.bf16.mxu0 0
  %5840 = vmatpush1.bf16.msra.mxu0 0
  %5841 = vmatprep.subr.bf16.mxu0 0
  %5842 = vmatpush1.bf16.msra.mxu0 0
  %5843 = vmatprep.subr.bf16.mxu0 0
  %5844 = vmatpush1.bf16.msra.mxu0 0
  %5845 = vmatprep.subr.bf16.mxu0 0
  %5846 = vmatpush1.bf16.msra.mxu0 0
  %5847 = vmatprep.subr.bf16.mxu0 0
  %5848 = vmatpush1.bf16.msra.mxu0 0
  %5849 = vmatprep.subr.bf16.mxu0 0
  %5850 = vmatpush1.bf16.msra.mxu0 0
  %5851 = vmatprep.subr.bf16.mxu0 0
  %5852 = vmatpush1.bf16.msra.mxu0 0
  %5853 = vmatprep.subr.bf16.mxu0 0
  %5854 = vmatpush1.bf16.msra.mxu0 0
  %5855 = vmatprep.mubr.bf16.mxu0 0
  %5856 = vmatmul.mubr.bf16.gmra.mrb[0].mxu0 %v75
  %v5857 = vpop.f32.mrb[0].mxu0
  %v5858 = vadd.f32 0.0, %v5857
  %v5859 = vpop.f32.mrb[0].mxu0
  %v5860 = vpop.f32.mrb[0].mxu0
  %v5861 = vadd.f32 0.0, %v5860
  %v5862 = vpop.f32.mrb[0].mxu0
  %5863 = vdwg.mxu0
  %v5864 = vpack.c.bf16 %v5861, %v5858
  %5865 = vmatprep.subr.bf16.mxu0 0
  %5866 = vmatpush1.bf16.msra.mxu0 %v5864
  %5867 = vmatprep.subr.bf16.mxu0 0
  %5868 = vmatpush1.bf16.msra.mxu0 0
  %5869 = vmatprep.subr.bf16.mxu0 0
  %5870 = vmatpush1.bf16.msra.mxu0 0
  %5871 = vmatprep.subr.bf16.mxu0 0
  %5872 = vmatpush1.bf16.msra.mxu0 0
  %5873 = vmatprep.subr.bf16.mxu0 0
  %5874 = vmatpush1.bf16.msra.mxu0 0
  %5875 = vmatprep.subr.bf16.mxu0 0
  %5876 = vmatpush1.bf16.msra.mxu0 0
  %5877 = vmatprep.subr.bf16.mxu0 0
  %5878 = vmatpush1.bf16.msra.mxu0 0
  %5879 = vmatprep.subr.bf16.mxu0 0
  %5880 = vmatpush1.bf16.msra.mxu0 0
  %5881 = vmatprep.subr.bf16.mxu0 0
  %5882 = vmatpush1.bf16.msra.mxu0 0
  %5883 = vmatprep.subr.bf16.mxu0 0
  %5884 = vmatpush1.bf16.msra.mxu0 0
  %5885 = vmatprep.subr.bf16.mxu0 0
  %5886 = vmatpush1.bf16.msra.mxu0 0
  %5887 = vmatprep.subr.bf16.mxu0 0
  %5888 = vmatpush1.bf16.msra.mxu0 0
  %5889 = vmatprep.subr.bf16.mxu0 0
  %5890 = vmatpush1.bf16.msra.mxu0 0
  %5891 = vmatprep.subr.bf16.mxu0 0
  %5892 = vmatpush1.bf16.msra.mxu0 0
  %5893 = vmatprep.subr.bf16.mxu0 0
  %5894 = vmatpush1.bf16.msra.mxu0 0
  %5895 = vmatprep.subr.bf16.mxu0 0
  %5896 = vmatpush1.bf16.msra.mxu0 0
  %5897 = vmatprep.mubr.bf16.mxu0 0
  %5898 = vmatmul.mubr.bf16.gmra.mrb[0].mxu0 %v75
  %v5899 = vpop.f32.mrb[0].mxu0
  %v5900 = vadd.f32 0.0, %v5899
  %v5901 = vpop.f32.mrb[0].mxu0
  %v5902 = vpop.f32.mrb[0].mxu0
  %v5903 = vadd.f32 0.0, %v5902
  %v5904 = vpop.f32.mrb[0].mxu0
  %5905 = vdwg.mxu0
  %v5906 = vmul.f32 %v5900, 2.0
  %v5907 = vmul.f32 %v5903, 2.0
  %v5908 = vsub.f32 %v5906, %v5820
  %v5909 = vsub.f32 %v5907, %v5821
  %v5910 = vpack.c.bf16 %v5909, %v5908
  %5911 = vmatprep.subr.bf16.mxu0 0
  %5912 = vmatpush1.bf16.msra.mxu0 %v5822
  %5913 = vmatprep.subr.bf16.mxu0 0
  %5914 = vmatpush1.bf16.msra.mxu0 0
  %5915 = vmatprep.subr.bf16.mxu0 0
  %5916 = vmatpush1.bf16.msra.mxu0 0
  %5917 = vmatprep.subr.bf16.mxu0 0
  %5918 = vmatpush1.bf16.msra.mxu0 0
  %5919 = vmatprep.subr.bf16.mxu0 0
  %5920 = vmatpush1.bf16.msra.mxu0 0
  %5921 = vmatprep.subr.bf16.mxu0 0
  %5922 = vmatpush1.bf16.msra.mxu0 0
  %5923 = vmatprep.subr.bf16.mxu0 0
  %5924 = vmatpush1.bf16.msra.mxu0 0
  %5925 = vmatprep.subr.bf16.mxu0 0
  %5926 = vmatpush1.bf16.msra.mxu0 0
  %5927 = vmatprep.subr.bf16.mxu0 0
  %5928 = vmatpush1.bf16.msra.mxu0 0
  %5929 = vmatprep.subr.bf16.mxu0 0
  %5930 = vmatpush1.bf16.msra.mxu0 0
  %5931 = vmatprep.subr.bf16.mxu0 0
  %5932 = vmatpush1.bf16.msra.mxu0 0
  %5933 = vmatprep.subr.bf16.mxu0 0
  %5934 = vmatpush1.bf16.msra.mxu0 0
  %5935 = vmatprep.subr.bf16.mxu0 0
  %5936 = vmatpush1.bf16.msra.mxu0 0
  %5937 = vmatprep.subr.bf16.mxu0 0
  %5938 = vmatpush1.bf16.msra.mxu0 0
  %5939 = vmatprep.subr.bf16.mxu0 0
  %5940 = vmatpush1.bf16.msra.mxu0 0
  %5941 = vmatprep.subr.bf16.mxu0 0
  %5942 = vmatpush1.bf16.msra.mxu0 0
  %5943 = vmatprep.mubr.bf16.mxu0 0
  %5944 = vmatmul.mubr.bf16.gmra.mrb[0].mxu0 %v169
  %v5945 = vpop.f32.mrb[0].mxu0
  %v5946 = vadd.f32 0.0, %v5945
  %v5947 = vpop.f32.mrb[0].mxu0
  %v5948 = vpop.f32.mrb[0].mxu0
  %v5949 = vadd.f32 0.0, %v5948
  %v5950 = vpop.f32.mrb[0].mxu0
  %5951 = vdwg.mxu0
  %v5952 = vpack.c.bf16 %v5949, %v5946
  %5953 = vmatprep.subr.bf16.mxu0 0
  %5954 = vmatpush1.bf16.msra.mxu0 %v5952
  %5955 = vmatprep.subr.bf16.mxu0 0
  %5956 = vmatpush1.bf16.msra.mxu0 0
  %5957 = vmatprep.subr.bf16.mxu0 0
  %5958 = vmatpush1.bf16.msra.mxu0 0
  %5959 = vmatprep.subr.bf16.mxu0 0
  %5960 = vmatpush1.bf16.msra.mxu0 0
  %5961 = vmatprep.subr.bf16.mxu0 0
  %5962 = vmatpush1.bf16.msra.mxu0 0
  %5963 = vmatprep.subr.bf16.mxu0 0
  %5964 = vmatpush1.bf16.msra.mxu0 0
  %5965 = vmatprep.subr.bf16.mxu0 0
  %5966 = vmatpush1.bf16.msra.mxu0 0
  %5967 = vmatprep.subr.bf16.mxu0 0
  %5968 = vmatpush1.bf16.msra.mxu0 0
  %5969 = vmatprep.subr.bf16.mxu0 0
  %5970 = vmatpush1.bf16.msra.mxu0 0
  %5971 = vmatprep.subr.bf16.mxu0 0
  %5972 = vmatpush1.bf16.msra.mxu0 0
  %5973 = vmatprep.subr.bf16.mxu0 0
  %5974 = vmatpush1.bf16.msra.mxu0 0
  %5975 = vmatprep.subr.bf16.mxu0 0
  %5976 = vmatpush1.bf16.msra.mxu0 0
  %5977 = vmatprep.subr.bf16.mxu0 0
  %5978 = vmatpush1.bf16.msra.mxu0 0
  %5979 = vmatprep.subr.bf16.mxu0 0
  %5980 = vmatpush1.bf16.msra.mxu0 0
  %5981 = vmatprep.subr.bf16.mxu0 0
  %5982 = vmatpush1.bf16.msra.mxu0 0
  %5983 = vmatprep.subr.bf16.mxu0 0
  %5984 = vmatpush1.bf16.msra.mxu0 0
  %5985 = vmatprep.mubr.bf16.mxu0 0
  %5986 = vmatmul.mubr.bf16.gmra.mrb[0].mxu0 %v169
  %v5987 = vpop.f32.mrb[0].mxu0
  %v5988 = vadd.f32 0.0, %v5987
  %v5989 = vpop.f32.mrb[0].mxu0
  %v5990 = vpop.f32.mrb[0].mxu0
  %v5991 = vadd.f32 0.0, %v5990
  %v5992 = vpop.f32.mrb[0].mxu0
  %5993 = vdwg.mxu0
  %v5994 = vmul.f32 %v5988, 2.0
  %v5995 = vmul.f32 %v5991, 2.0
  %v5996 = vsub.f32 %v5994, %v5820
  %v5997 = vsub.f32 %v5995, %v5821
  %v5998 = vpack.c.bf16 %v5997, %v5996
  %s5999 = scalar_lea.vmem %s1, 96
  %v6000 = vld [vmem:[%s5999] sm:$0xff]
  %v6001 = vld [vmem:[%s5999 + $0x8] sm:$0xff]
  %v6003 = vsel %vm271, %v5822, 0
  %6005 = vmatprep.subr.bf16.mxu0 0
  %6006 = vmatpush1.bf16.msra.mxu0 %v751
  %6007 = vmatprep.subr.bf16.mxu0 0
  %6008 = vmatpush1.bf16.msra.mxu0 %v752
  %6009 = vmatprep.subr.bf16.mxu0 0
  %6010 = vmatpush1.bf16.msra.mxu0 0
  %6011 = vmatprep.subr.bf16.mxu0 0
  %6012 = vmatpush1.bf16.msra.mxu0 0
  %6013 = vmatprep.subr.bf16.mxu0 0
  %6014 = vmatpush1.bf16.msra.mxu0 0
  %6015 = vmatprep.subr.bf16.mxu0 0
  %6016 = vmatpush1.bf16.msra.mxu0 0
  %6017 = vmatprep.subr.bf16.mxu0 0
  %6018 = vmatpush1.bf16.msra.mxu0 0
  %6019 = vmatprep.subr.bf16.mxu0 0
  %6020 = vmatpush1.bf16.msra.mxu0 0
  %6021 = vmatprep.subr.bf16.mxu0 0
  %6022 = vmatpush1.bf16.msra.mxu0 0
  %6023 = vmatprep.subr.bf16.mxu0 0
  %6024 = vmatpush1.bf16.msra.mxu0 0
  %6025 = vmatprep.subr.bf16.mxu0 0
  %6026 = vmatpush1.bf16.msra.mxu0 0
  %6027 = vmatprep.subr.bf16.mxu0 0
  %6028 = vmatpush1.bf16.msra.mxu0 0
  %6029 = vmatprep.subr.bf16.mxu0 0
  %6030 = vmatpush1.bf16.msra.mxu0 0
  %6031 = vmatprep.subr.bf16.mxu0 0
  %6032 = vmatpush1.bf16.msra.mxu0 0
  %6033 = vmatprep.subr.bf16.mxu0 0
  %6034 = vmatpush1.bf16.msra.mxu0 0
  %6035 = vmatprep.subr.bf16.mxu0 0
  %6036 = vmatpush1.bf16.msra.mxu0 0
  %6037 = vmatprep.mubr.bf16.mxu0 0
  %6038 = vmatmul.mubr.bf16.gmra.mrb[0].mxu0 %v6003
  %v6039 = vpop.f32.mrb[0].mxu0
  %v6040 = vadd.f32 0.0, %v6039
  %v6041 = vpop.f32.mrb[0].mxu0
  %v6042 = vpop.f32.mrb[0].mxu0
  %v6043 = vadd.f32 0.0, %v6042
  %v6044 = vpop.f32.mrb[0].mxu0
  %6045 = vdwg.mxu0
  %v6046 = vadd.f32 %v6000, %v6040
  %v6047 = vadd.f32 %v6001, %v6043
  %v6049 = vsel %vm271, %v5864, 0
  %6051 = vmatprep.subr.bf16.mxu0 0
  %6052 = vmatpush1.bf16.msra.mxu0 %v809
  %6053 = vmatprep.subr.bf16.mxu0 0
  %6054 = vmatpush1.bf16.msra.mxu0 %v810
  %6055 = vmatprep.subr.bf16.mxu0 0
  %6056 = vmatpush1.bf16.msra.mxu0 0
  %6057 = vmatprep.subr.bf16.mxu0 0
  %6058 = vmatpush1.bf16.msra.mxu0 0
  %6059 = vmatprep.subr.bf16.mxu0 0
  %6060 = vmatpush1.bf16.msra.mxu0 0
  %6061 = vmatprep.subr.bf16.mxu0 0
  %6062 = vmatpush1.bf16.msra.mxu0 0
  %6063 = vmatprep.subr.bf16.mxu0 0
  %6064 = vmatpush1.bf16.msra.mxu0 0
  %6065 = vmatprep.subr.bf16.mxu0 0
  %6066 = vmatpush1.bf16.msra.mxu0 0
  %6067 = vmatprep.subr.bf16.mxu0 0
  %6068 = vmatpush1.bf16.msra.mxu0 0
  %6069 = vmatprep.subr.bf16.mxu0 0
  %6070 = vmatpush1.bf16.msra.mxu0 0
  %6071 = vmatprep.subr.bf16.mxu0 0
  %6072 = vmatpush1.bf16.msra.mxu0 0
  %6073 = vmatprep.subr.bf16.mxu0 0
  %6074 = vmatpush1.bf16.msra.mxu0 0
  %6075 = vmatprep.subr.bf16.mxu0 0
  %6076 = vmatpush1.bf16.msra.mxu0 0
  %6077 = vmatprep.subr.bf16.mxu0 0
  %6078 = vmatpush1.bf16.msra.mxu0 0
  %6079 = vmatprep.subr.bf16.mxu0 0
  %6080 = vmatpush1.bf16.msra.mxu0 0
  %6081 = vmatprep.subr.bf16.mxu0 0
  %6082 = vmatpush1.bf16.msra.mxu0 0
  %6083 = vmatprep.mubr.bf16.mxu0 0
  %6084 = vmatmul.mubr.bf16.gmra.mrb[0].mxu0 %v6049
  %v6085 = vpop.f32.mrb[0].mxu0
  %v6086 = vadd.f32 0.0, %v6085
  %v6087 = vpop.f32.mrb[0].mxu0
  %v6088 = vpop.f32.mrb[0].mxu0
  %v6089 = vadd.f32 0.0, %v6088
  %v6090 = vpop.f32.mrb[0].mxu0
  %6091 = vdwg.mxu0
  %v6092 = vadd.f32 %v6046, %v6086
  %v6093 = vadd.f32 %v6047, %v6089
  %v6095 = vsel %vm271, %v5910, 0
  %6097 = vmatprep.subr.bf16.mxu0 0
  %6098 = vmatpush1.bf16.msra.mxu0 %v867
  %6099 = vmatprep.subr.bf16.mxu0 0
  %6100 = vmatpush1.bf16.msra.mxu0 %v868
  %6101 = vmatprep.subr.bf16.mxu0 0
  %6102 = vmatpush1.bf16.msra.mxu0 0
  %6103 = vmatprep.subr.bf16.mxu0 0
  %6104 = vmatpush1.bf16.msra.mxu0 0
  %6105 = vmatprep.subr.bf16.mxu0 0
  %6106 = vmatpush1.bf16.msra.mxu0 0
  %6107 = vmatprep.subr.bf16.mxu0 0
  %6108 = vmatpush1.bf16.msra.mxu0 0
  %6109 = vmatprep.subr.bf16.mxu0 0
  %6110 = vmatpush1.bf16.msra.mxu0 0
  %6111 = vmatprep.subr.bf16.mxu0 0
  %6112 = vmatpush1.bf16.msra.mxu0 0
  %6113 = vmatprep.subr.bf16.mxu0 0
  %6114 = vmatpush1.bf16.msra.mxu0 0
  %6115 = vmatprep.subr.bf16.mxu0 0
  %6116 = vmatpush1.bf16.msra.mxu0 0
  %6117 = vmatprep.subr.bf16.mxu0 0
  %6118 = vmatpush1.bf16.msra.mxu0 0
  %6119 = vmatprep.subr.bf16.mxu0 0
  %6120 = vmatpush1.bf16.msra.mxu0 0
  %6121 = vmatprep.subr.bf16.mxu0 0
  %6122 = vmatpush1.bf16.msra.mxu0 0
  %6123 = vmatprep.subr.bf16.mxu0 0
  %6124 = vmatpush1.bf16.msra.mxu0 0
  %6125 = vmatprep.subr.bf16.mxu0 0
  %6126 = vmatpush1.bf16.msra.mxu0 0
  %6127 = vmatprep.subr.bf16.mxu0 0
  %6128 = vmatpush1.bf16.msra.mxu0 0
  %6129 = vmatprep.mubr.bf16.mxu0 0
  %6130 = vmatmul.mubr.bf16.gmra.mrb[0].mxu0 %v6095
  %v6131 = vpop.f32.mrb[0].mxu0
  %v6132 = vadd.f32 0.0, %v6131
  %v6133 = vpop.f32.mrb[0].mxu0
  %v6134 = vpop.f32.mrb[0].mxu0
  %v6135 = vadd.f32 0.0, %v6134
  %v6136 = vpop.f32.mrb[0].mxu0
  %6137 = vdwg.mxu0
  %v6138 = vadd.f32 %v6092, %v6132
  %v6139 = vadd.f32 %v6093, %v6135
  %v6141 = vsel %vm271, %v5952, 0
  %6143 = vmatprep.subr.bf16.mxu0 0
  %6144 = vmatpush1.bf16.msra.mxu0 %v925
  %6145 = vmatprep.subr.bf16.mxu0 0
  %6146 = vmatpush1.bf16.msra.mxu0 %v926
  %6147 = vmatprep.subr.bf16.mxu0 0
  %6148 = vmatpush1.bf16.msra.mxu0 0
  %6149 = vmatprep.subr.bf16.mxu0 0
  %6150 = vmatpush1.bf16.msra.mxu0 0
  %6151 = vmatprep.subr.bf16.mxu0 0
  %6152 = vmatpush1.bf16.msra.mxu0 0
  %6153 = vmatprep.subr.bf16.mxu0 0
  %6154 = vmatpush1.bf16.msra.mxu0 0
  %6155 = vmatprep.subr.bf16.mxu0 0
  %6156 = vmatpush1.bf16.msra.mxu0 0
  %6157 = vmatprep.subr.bf16.mxu0 0
  %6158 = vmatpush1.bf16.msra.mxu0 0
  %6159 = vmatprep.subr.bf16.mxu0 0
  %6160 = vmatpush1.bf16.msra.mxu0 0
  %6161 = vmatprep.subr.bf16.mxu0 0
  %6162 = vmatpush1.bf16.msra.mxu0 0
  %6163 = vmatprep.subr.bf16.mxu0 0
  %6164 = vmatpush1.bf16.msra.mxu0 0
  %6165 = vmatprep.subr.bf16.mxu0 0
  %6166 = vmatpush1.bf16.msra.mxu0 0
  %6167 = vmatprep.subr.bf16.mxu0 0
  %6168 = vmatpush1.bf16.msra.mxu0 0
  %6169 = vmatprep.subr.bf16.mxu0 0
  %6170 = vmatpush1.bf16.msra.mxu0 0
  %6171 = vmatprep.subr.bf16.mxu0 0
  %6172 = vmatpush1.bf16.msra.mxu0 0
  %6173 = vmatprep.subr.bf16.mxu0 0
  %6174 = vmatpush1.bf16.msra.mxu0 0
  %6175 = vmatprep.mubr.bf16.mxu0 0
  %6176 = vmatmul.mubr.bf16.gmra.mrb[0].mxu0 %v6141
  %v6177 = vpop.f32.mrb[0].mxu0
  %v6178 = vadd.f32 0.0, %v6177
  %v6179 = vpop.f32.mrb[0].mxu0
  %v6180 = vpop.f32.mrb[0].mxu0
  %v6181 = vadd.f32 0.0, %v6180
  %v6182 = vpop.f32.mrb[0].mxu0
  %6183 = vdwg.mxu0
  %v6184 = vadd.f32 %v6138, %v6178
  %v6185 = vadd.f32 %v6139, %v6181
  %v6187 = vsel %vm271, %v5998, 0
  %6189 = vmatprep.subr.bf16.mxu0 0
  %6190 = vmatpush1.bf16.msra.mxu0 %v983
  %6191 = vmatprep.subr.bf16.mxu0 0
  %6192 = vmatpush1.bf16.msra.mxu0 %v984
  %6193 = vmatprep.subr.bf16.mxu0 0
  %6194 = vmatpush1.bf16.msra.mxu0 0
  %6195 = vmatprep.subr.bf16.mxu0 0
  %6196 = vmatpush1.bf16.msra.mxu0 0
  %6197 = vmatprep.subr.bf16.mxu0 0
  %6198 = vmatpush1.bf16.msra.mxu0 0
  %6199 = vmatprep.subr.bf16.mxu0 0
  %6200 = vmatpush1.bf16.msra.mxu0 0
  %6201 = vmatprep.subr.bf16.mxu0 0
  %6202 = vmatpush1.bf16.msra.mxu0 0
  %6203 = vmatprep.subr.bf16.mxu0 0
  %6204 = vmatpush1.bf16.msra.mxu0 0
  %6205 = vmatprep.subr.bf16.mxu0 0
  %6206 = vmatpush1.bf16.msra.mxu0 0
  %6207 = vmatprep.subr.bf16.mxu0 0
  %6208 = vmatpush1.bf16.msra.mxu0 0
  %6209 = vmatprep.subr.bf16.mxu0 0
  %6210 = vmatpush1.bf16.msra.mxu0 0
  %6211 = vmatprep.subr.bf16.mxu0 0
  %6212 = vmatpush1.bf16.msra.mxu0 0
  %6213 = vmatprep.subr.bf16.mxu0 0
  %6214 = vmatpush1.bf16.msra.mxu0 0
  %6215 = vmatprep.subr.bf16.mxu0 0
  %6216 = vmatpush1.bf16.msra.mxu0 0
  %6217 = vmatprep.subr.bf16.mxu0 0
  %6218 = vmatpush1.bf16.msra.mxu0 0
  %6219 = vmatprep.subr.bf16.mxu0 0
  %6220 = vmatpush1.bf16.msra.mxu0 0
  %6221 = vmatprep.mubr.bf16.mxu0 0
  %6222 = vmatmul.mubr.bf16.gmra.mrb[0].mxu0 %v6187
  %v6223 = vpop.f32.mrb[0].mxu0
  %v6224 = vadd.f32 0.0, %v6223
  %v6225 = vpop.f32.mrb[0].mxu0
  %v6226 = vpop.f32.mrb[0].mxu0
  %v6227 = vadd.f32 0.0, %v6226
  %v6228 = vpop.f32.mrb[0].mxu0
  %6229 = vdwg.mxu0
  %v6230 = vadd.f32 %v6184, %v6224
  %v6231 = vadd.f32 %v6185, %v6227
  %v6232 = vtanh.pop %v6230
  %v6233 = vtanh.pop %v6231
  %v6234 = vmul.f32 %v5817, %v5381
  %v6235 = vmul.f32 %v5819, %v5382
  %v6236 = vsub.f32 1.0, %v5817
  %v6237 = vsub.f32 1.0, %v5819
  %6240 = vrot.lane.b32.xlu0 %v6232, 32
  %v6241 = vpop.permute.xlu0 %6240
  %6242 = vrot.lane.b32.xlu0 %v6233, 32
  %v6243 = vpop.permute.xlu0 %6242
  %v6246 = vmul.f32 %v6236, %v6241
  %v6247 = vmul.f32 %v6237, %v6243
  %v6248 = vadd.f32 %v6234, %v6246
  %v6249 = vadd.f32 %v6235, %v6247
  %6252 = vrot.lane.b32.xlu0 %v6248, 96
  %v6253 = vpop.permute.xlu0 %6252
  %6254 = vrot.lane.b32.xlu0 %v6249, 96
  %v6255 = vpop.permute.xlu0 %6254
  %s6258 = scalar_lea.vmem %s6, 96
  %6259 = vst.msk [vmem:[%s6258] sm:$0xff] %vm271, %v6253
  %6260 = vst.msk [vmem:[%s6258 + $0x8] sm:$0xff] %vm271, %v6255
  %v6261 = vpack.c.bf16 %v6249, %v6248
  %6263 = vrot.lane.b32.xlu0 %v6261, 96
  %v6264 = vpop.permute.xlu0 %6263
  %6266 = vmatprep.subr.bf16.mxu0 0
  %6267 = vmatpush1.bf16.msra.mxu0 %v6264
  %6268 = vmatprep.subr.bf16.mxu0 0
  %6269 = vmatpush1.bf16.msra.mxu0 0
  %6270 = vmatprep.subr.bf16.mxu0 0
  %6271 = vmatpush1.bf16.msra.mxu0 0
  %6272 = vmatprep.subr.bf16.mxu0 0
  %6273 = vmatpush1.bf16.msra.mxu0 0
  %6274 = vmatprep.subr.bf16.mxu0 0
  %6275 = vmatpush1.bf16.msra.mxu0 0
  %6276 = vmatprep.subr.bf16.mxu0 0
  %6277 = vmatpush1.bf16.msra.mxu0 0
  %6278 = vmatprep.subr.bf16.mxu0 0
  %6279 = vmatpush1.bf16.msra.mxu0 0
  %6280 = vmatprep.subr.bf16.mxu0 0
  %6281 = vmatpush1.bf16.msra.mxu0 0
  %6282 = vmatprep.subr.bf16.mxu0 0
  %6283 = vmatpush1.bf16.msra.mxu0 0
  %6284 = vmatprep.subr.bf16.mxu0 0
  %6285 = vmatpush1.bf16.msra.mxu0 0
  %6286 = vmatprep.subr.bf16.mxu0 0
  %6287 = vmatpush1.bf16.msra.mxu0 0
  %6288 = vmatprep.subr.bf16.mxu0 0
  %6289 = vmatpush1.bf16.msra.mxu0 0
  %6290 = vmatprep.subr.bf16.mxu0 0
  %6291 = vmatpush1.bf16.msra.mxu0 0
  %6292 = vmatprep.subr.bf16.mxu0 0
  %6293 = vmatpush1.bf16.msra.mxu0 0
  %6294 = vmatprep.subr.bf16.mxu0 0
  %6295 = vmatpush1.bf16.msra.mxu0 0
  %6296 = vmatprep.subr.bf16.mxu0 0
  %6297 = vmatpush1.bf16.msra.mxu0 0
  %6298 = vmatprep.mubr.bf16.mxu0 0
  %6299 = vmatmul.mubr.bf16.gmra.mrb[0].mxu0 %v75
  %v6300 = vpop.f32.mrb[0].mxu0
  %v6301 = vadd.f32 0.0, %v6300
  %v6302 = vpop.f32.mrb[0].mxu0
  %v6303 = vpop.f32.mrb[0].mxu0
  %v6304 = vadd.f32 0.0, %v6303
  %v6305 = vpop.f32.mrb[0].mxu0
  %6306 = vdwg.mxu0
  %v6307 = vpack.c.bf16 %v6304, %v6301
  %6308 = vmatprep.subr.bf16.mxu0 0
  %6309 = vmatpush1.bf16.msra.mxu0 %v6307
  %6310 = vmatprep.subr.bf16.mxu0 0
  %6311 = vmatpush1.bf16.msra.mxu0 0
  %6312 = vmatprep.subr.bf16.mxu0 0
  %6313 = vmatpush1.bf16.msra.mxu0 0
  %6314 = vmatprep.subr.bf16.mxu0 0
  %6315 = vmatpush1.bf16.msra.mxu0 0
  %6316 = vmatprep.subr.bf16.mxu0 0
  %6317 = vmatpush1.bf16.msra.mxu0 0
  %6318 = vmatprep.subr.bf16.mxu0 0
  %6319 = vmatpush1.bf16.msra.mxu0 0
  %6320 = vmatprep.subr.bf16.mxu0 0
  %6321 = vmatpush1.bf16.msra.mxu0 0
  %6322 = vmatprep.subr.bf16.mxu0 0
  %6323 = vmatpush1.bf16.msra.mxu0 0
  %6324 = vmatprep.subr.bf16.mxu0 0
  %6325 = vmatpush1.bf16.msra.mxu0 0
  %6326 = vmatprep.subr.bf16.mxu0 0
  %6327 = vmatpush1.bf16.msra.mxu0 0
  %6328 = vmatprep.subr.bf16.mxu0 0
  %6329 = vmatpush1.bf16.msra.mxu0 0
  %6330 = vmatprep.subr.bf16.mxu0 0
  %6331 = vmatpush1.bf16.msra.mxu0 0
  %6332 = vmatprep.subr.bf16.mxu0 0
  %6333 = vmatpush1.bf16.msra.mxu0 0
  %6334 = vmatprep.subr.bf16.mxu0 0
  %6335 = vmatpush1.bf16.msra.mxu0 0
  %6336 = vmatprep.subr.bf16.mxu0 0
  %6337 = vmatpush1.bf16.msra.mxu0 0
  %6338 = vmatprep.subr.bf16.mxu0 0
  %6339 = vmatpush1.bf16.msra.mxu0 0
  %6340 = vmatprep.mubr.bf16.mxu0 0
  %6341 = vmatmul.mubr.bf16.gmra.mrb[0].mxu0 %v75
  %v6342 = vpop.f32.mrb[0].mxu0
  %v6343 = vadd.f32 0.0, %v6342
  %v6344 = vpop.f32.mrb[0].mxu0
  %v6345 = vpop.f32.mrb[0].mxu0
  %v6346 = vadd.f32 0.0, %v6345
  %v6347 = vpop.f32.mrb[0].mxu0
  %6348 = vdwg.mxu0
  %v6349 = vmul.f32 %v6343, 2.0
  %v6350 = vmul.f32 %v6346, 2.0
  %v6351 = vsub.f32 %v6349, %v6253
  %v6352 = vsub.f32 %v6350, %v6255
  %v6353 = vpack.c.bf16 %v6352, %v6351
  %6354 = vmatprep.subr.bf16.mxu0 0
  %6355 = vmatpush1.bf16.msra.mxu0 %v6264
  %6356 = vmatprep.subr.bf16.mxu0 0
  %6357 = vmatpush1.bf16.msra.mxu0 0
  %6358 = vmatprep.subr.bf16.mxu0 0
  %6359 = vmatpush1.bf16.msra.mxu0 0
  %6360 = vmatprep.subr.bf16.mxu0 0
  %6361 = vmatpush1.bf16.msra.mxu0 0
  %6362 = vmatprep.subr.bf16.mxu0 0
  %6363 = vmatpush1.bf16.msra.mxu0 0
  %6364 = vmatprep.subr.bf16.mxu0 0
  %6365 = vmatpush1.bf16.msra.mxu0 0
  %6366 = vmatprep.subr.bf16.mxu0 0
  %6367 = vmatpush1.bf16.msra.mxu0 0
  %6368 = vmatprep.subr.bf16.mxu0 0
  %6369 = vmatpush1.bf16.msra.mxu0 0
  %6370 = vmatprep.subr.bf16.mxu0 0
  %6371 = vmatpush1.bf16.msra.mxu0 0
  %6372 = vmatprep.subr.bf16.mxu0 0
  %6373 = vmatpush1.bf16.msra.mxu0 0
  %6374 = vmatprep.subr.bf16.mxu0 0
  %6375 = vmatpush1.bf16.msra.mxu0 0
  %6376 = vmatprep.subr.bf16.mxu0 0
  %6377 = vmatpush1.bf16.msra.mxu0 0
  %6378 = vmatprep.subr.bf16.mxu0 0
  %6379 = vmatpush1.bf16.msra.mxu0 0
  %6380 = vmatprep.subr.bf16.mxu0 0
  %6381 = vmatpush1.bf16.msra.mxu0 0
  %6382 = vmatprep.subr.bf16.mxu0 0
  %6383 = vmatpush1.bf16.msra.mxu0 0
  %6384 = vmatprep.subr.bf16.mxu0 0
  %6385 = vmatpush1.bf16.msra.mxu0 0
  %6386 = vmatprep.mubr.bf16.mxu0 0
  %6387 = vmatmul.mubr.bf16.gmra.mrb[0].mxu0 %v169
  %v6388 = vpop.f32.mrb[0].mxu0
  %v6389 = vadd.f32 0.0, %v6388
  %v6390 = vpop.f32.mrb[0].mxu0
  %v6391 = vpop.f32.mrb[0].mxu0
  %v6392 = vadd.f32 0.0, %v6391
  %v6393 = vpop.f32.mrb[0].mxu0
  %6394 = vdwg.mxu0
  %v6395 = vpack.c.bf16 %v6392, %v6389
  %6396 = vmatprep.subr.bf16.mxu0 0
  %6397 = vmatpush1.bf16.msra.mxu0 %v6395
  %6398 = vmatprep.subr.bf16.mxu0 0
  %6399 = vmatpush1.bf16.msra.mxu0 0
  %6400 = vmatprep.subr.bf16.mxu0 0
  %6401 = vmatpush1.bf16.msra.mxu0 0
  %6402 = vmatprep.subr.bf16.mxu0 0
  %6403 = vmatpush1.bf16.msra.mxu0 0
  %6404 = vmatprep.subr.bf16.mxu0 0
  %6405 = vmatpush1.bf16.msra.mxu0 0
  %6406 = vmatprep.subr.bf16.mxu0 0
  %6407 = vmatpush1.bf16.msra.mxu0 0
  %6408 = vmatprep.subr.bf16.mxu0 0
  %6409 = vmatpush1.bf16.msra.mxu0 0
  %6410 = vmatprep.subr.bf16.mxu0 0
  %6411 = vmatpush1.bf16.msra.mxu0 0
  %6412 = vmatprep.subr.bf16.mxu0 0
  %6413 = vmatpush1.bf16.msra.mxu0 0
  %6414 = vmatprep.subr.bf16.mxu0 0
  %6415 = vmatpush1.bf16.msra.mxu0 0
  %6416 = vmatprep.subr.bf16.mxu0 0
  %6417 = vmatpush1.bf16.msra.mxu0 0
  %6418 = vmatprep.subr.bf16.mxu0 0
  %6419 = vmatpush1.bf16.msra.mxu0 0
  %6420 = vmatprep.subr.bf16.mxu0 0
  %6421 = vmatpush1.bf16.msra.mxu0 0
  %6422 = vmatprep.subr.bf16.mxu0 0
  %6423 = vmatpush1.bf16.msra.mxu0 0
  %6424 = vmatprep.subr.bf16.mxu0 0
  %6425 = vmatpush1.bf16.msra.mxu0 0
  %6426 = vmatprep.subr.bf16.mxu0 0
  %6427 = vmatpush1.bf16.msra.mxu0 0
  %6428 = vmatprep.mubr.bf16.mxu0 0
  %6429 = vmatmul.mubr.bf16.gmra.mrb[0].mxu0 %v169
  %v6430 = vpop.f32.mrb[0].mxu0
  %v6431 = vadd.f32 0.0, %v6430
  %v6432 = vpop.f32.mrb[0].mxu0
  %v6433 = vpop.f32.mrb[0].mxu0
  %v6434 = vadd.f32 0.0, %v6433
  %v6435 = vpop.f32.mrb[0].mxu0
  %6436 = vdwg.mxu0
  %v6437 = vmul.f32 %v6431, 2.0
  %v6438 = vmul.f32 %v6434, 2.0
  %v6439 = vsub.f32 %v6437, %v6253
  %v6440 = vsub.f32 %v6438, %v6255
  %v6441 = vpack.c.bf16 %v6440, %v6439
  %s6442 = scalar_lea.vmem %s0, 112
  %v6443 = vld [vmem:[%s6442] sm:$0xff]
  %v6444 = vld [vmem:[%s6442 + $0x8] sm:$0xff]
  %v6446 = vsel %vm271, %v6264, 0
  %6448 = vmatprep.subr.bf16.mxu0 0
  %6449 = vmatpush1.bf16.msra.mxu0 %v267
  %6450 = vmatprep.subr.bf16.mxu0 0
  %6451 = vmatpush1.bf16.msra.mxu0 %v268
  %6452 = vmatprep.subr.bf16.mxu0 0
  %6453 = vmatpush1.bf16.msra.mxu0 0
  %6454 = vmatprep.subr.bf16.mxu0 0
  %6455 = vmatpush1.bf16.msra.mxu0 0
  %6456 = vmatprep.subr.bf16.mxu0 0
  %6457 = vmatpush1.bf16.msra.mxu0 0
  %6458 = vmatprep.subr.bf16.mxu0 0
  %6459 = vmatpush1.bf16.msra.mxu0 0
  %6460 = vmatprep.subr.bf16.mxu0 0
  %6461 = vmatpush1.bf16.msra.mxu0 0
  %6462 = vmatprep.subr.bf16.mxu0 0
  %6463 = vmatpush1.bf16.msra.mxu0 0
  %6464 = vmatprep.subr.bf16.mxu0 0
  %6465 = vmatpush1.bf16.msra.mxu0 0
  %6466 = vmatprep.subr.bf16.mxu0 0
  %6467 = vmatpush1.bf16.msra.mxu0 0
  %6468 = vmatprep.subr.bf16.mxu0 0
  %6469 = vmatpush1.bf16.msra.mxu0 0
  %6470 = vmatprep.subr.bf16.mxu0 0
  %6471 = vmatpush1.bf16.msra.mxu0 0
  %6472 = vmatprep.subr.bf16.mxu0 0
  %6473 = vmatpush1.bf16.msra.mxu0 0
  %6474 = vmatprep.subr.bf16.mxu0 0
  %6475 = vmatpush1.bf16.msra.mxu0 0
  %6476 = vmatprep.subr.bf16.mxu0 0
  %6477 = vmatpush1.bf16.msra.mxu0 0
  %6478 = vmatprep.subr.bf16.mxu0 0
  %6479 = vmatpush1.bf16.msra.mxu0 0
  %6480 = vmatprep.mubr.bf16.mxu0 0
  %6481 = vmatmul.mubr.bf16.gmra.mrb[0].mxu0 %v6446
  %v6482 = vpop.f32.mrb[0].mxu0
  %v6483 = vadd.f32 0.0, %v6482
  %v6484 = vpop.f32.mrb[0].mxu0
  %v6485 = vpop.f32.mrb[0].mxu0
  %v6486 = vadd.f32 0.0, %v6485
  %v6487 = vpop.f32.mrb[0].mxu0
  %6488 = vdwg.mxu0
  %v6489 = vadd.f32 %v6443, %v6483
  %v6490 = vadd.f32 %v6444, %v6486
  %v6492 = vsel %vm271, %v6307, 0
  %6494 = vmatprep.subr.bf16.mxu0 0
  %6495 = vmatpush1.bf16.msra.mxu0 %v326
  %6496 = vmatprep.subr.bf16.mxu0 0
  %6497 = vmatpush1.bf16.msra.mxu0 %v327
  %6498 = vmatprep.subr.bf16.mxu0 0
  %6499 = vmatpush1.bf16.msra.mxu0 0
  %6500 = vmatprep.subr.bf16.mxu0 0
  %6501 = vmatpush1.bf16.msra.mxu0 0
  %6502 = vmatprep.subr.bf16.mxu0 0
  %6503 = vmatpush1.bf16.msra.mxu0 0
  %6504 = vmatprep.subr.bf16.mxu0 0
  %6505 = vmatpush1.bf16.msra.mxu0 0
  %6506 = vmatprep.subr.bf16.mxu0 0
  %6507 = vmatpush1.bf16.msra.mxu0 0
  %6508 = vmatprep.subr.bf16.mxu0 0
  %6509 = vmatpush1.bf16.msra.mxu0 0
  %6510 = vmatprep.subr.bf16.mxu0 0
  %6511 = vmatpush1.bf16.msra.mxu0 0
  %6512 = vmatprep.subr.bf16.mxu0 0
  %6513 = vmatpush1.bf16.msra.mxu0 0
  %6514 = vmatprep.subr.bf16.mxu0 0
  %6515 = vmatpush1.bf16.msra.mxu0 0
  %6516 = vmatprep.subr.bf16.mxu0 0
  %6517 = vmatpush1.bf16.msra.mxu0 0
  %6518 = vmatprep.subr.bf16.mxu0 0
  %6519 = vmatpush1.bf16.msra.mxu0 0
  %6520 = vmatprep.subr.bf16.mxu0 0
  %6521 = vmatpush1.bf16.msra.mxu0 0
  %6522 = vmatprep.subr.bf16.mxu0 0
  %6523 = vmatpush1.bf16.msra.mxu0 0
  %6524 = vmatprep.subr.bf16.mxu0 0
  %6525 = vmatpush1.bf16.msra.mxu0 0
  %6526 = vmatprep.mubr.bf16.mxu0 0
  %6527 = vmatmul.mubr.bf16.gmra.mrb[0].mxu0 %v6492
  %v6528 = vpop.f32.mrb[0].mxu0
  %v6529 = vadd.f32 0.0, %v6528
  %v6530 = vpop.f32.mrb[0].mxu0
  %v6531 = vpop.f32.mrb[0].mxu0
  %v6532 = vadd.f32 0.0, %v6531
  %v6533 = vpop.f32.mrb[0].mxu0
  %6534 = vdwg.mxu0
  %v6535 = vadd.f32 %v6489, %v6529
  %v6536 = vadd.f32 %v6490, %v6532
  %v6538 = vsel %vm271, %v6353, 0
  %6540 = vmatprep.subr.bf16.mxu0 0
  %6541 = vmatpush1.bf16.msra.mxu0 %v384
  %6542 = vmatprep.subr.bf16.mxu0 0
  %6543 = vmatpush1.bf16.msra.mxu0 %v385
  %6544 = vmatprep.subr.bf16.mxu0 0
  %6545 = vmatpush1.bf16.msra.mxu0 0
  %6546 = vmatprep.subr.bf16.mxu0 0
  %6547 = vmatpush1.bf16.msra.mxu0 0
  %6548 = vmatprep.subr.bf16.mxu0 0
  %6549 = vmatpush1.bf16.msra.mxu0 0
  %6550 = vmatprep.subr.bf16.mxu0 0
  %6551 = vmatpush1.bf16.msra.mxu0 0
  %6552 = vmatprep.subr.bf16.mxu0 0
  %6553 = vmatpush1.bf16.msra.mxu0 0
  %6554 = vmatprep.subr.bf16.mxu0 0
  %6555 = vmatpush1.bf16.msra.mxu0 0
  %6556 = vmatprep.subr.bf16.mxu0 0
  %6557 = vmatpush1.bf16.msra.mxu0 0
  %6558 = vmatprep.subr.bf16.mxu0 0
  %6559 = vmatpush1.bf16.msra.mxu0 0
  %6560 = vmatprep.subr.bf16.mxu0 0
  %6561 = vmatpush1.bf16.msra.mxu0 0
  %6562 = vmatprep.subr.bf16.mxu0 0
  %6563 = vmatpush1.bf16.msra.mxu0 0
  %6564 = vmatprep.subr.bf16.mxu0 0
  %6565 = vmatpush1.bf16.msra.mxu0 0
  %6566 = vmatprep.subr.bf16.mxu0 0
  %6567 = vmatpush1.bf16.msra.mxu0 0
  %6568 = vmatprep.subr.bf16.mxu0 0
  %6569 = vmatpush1.bf16.msra.mxu0 0
  %6570 = vmatprep.subr.bf16.mxu0 0
  %6571 = vmatpush1.bf16.msra.mxu0 0
  %6572 = vmatprep.mubr.bf16.mxu0 0
  %6573 = vmatmul.mubr.bf16.gmra.mrb[0].mxu0 %v6538
  %v6574 = vpop.f32.mrb[0].mxu0
  %v6575 = vadd.f32 0.0, %v6574
  %v6576 = vpop.f32.mrb[0].mxu0
  %v6577 = vpop.f32.mrb[0].mxu0
  %v6578 = vadd.f32 0.0, %v6577
  %v6579 = vpop.f32.mrb[0].mxu0
  %6580 = vdwg.mxu0
  %v6581 = vadd.f32 %v6535, %v6575
  %v6582 = vadd.f32 %v6536, %v6578
  %v6584 = vsel %vm271, %v6395, 0
  %6586 = vmatprep.subr.bf16.mxu0 0
  %6587 = vmatpush1.bf16.msra.mxu0 %v442
  %6588 = vmatprep.subr.bf16.mxu0 0
  %6589 = vmatpush1.bf16.msra.mxu0 %v443
  %6590 = vmatprep.subr.bf16.mxu0 0
  %6591 = vmatpush1.bf16.msra.mxu0 0
  %6592 = vmatprep.subr.bf16.mxu0 0
  %6593 = vmatpush1.bf16.msra.mxu0 0
  %6594 = vmatprep.subr.bf16.mxu0 0
  %6595 = vmatpush1.bf16.msra.mxu0 0
  %6596 = vmatprep.subr.bf16.mxu0 0
  %6597 = vmatpush1.bf16.msra.mxu0 0
  %6598 = vmatprep.subr.bf16.mxu0 0
  %6599 = vmatpush1.bf16.msra.mxu0 0
  %6600 = vmatprep.subr.bf16.mxu0 0
  %6601 = vmatpush1.bf16.msra.mxu0 0
  %6602 = vmatprep.subr.bf16.mxu0 0
  %6603 = vmatpush1.bf16.msra.mxu0 0
  %6604 = vmatprep.subr.bf16.mxu0 0
  %6605 = vmatpush1.bf16.msra.mxu0 0
  %6606 = vmatprep.subr.bf16.mxu0 0
  %6607 = vmatpush1.bf16.msra.mxu0 0
  %6608 = vmatprep.subr.bf16.mxu0 0
  %6609 = vmatpush1.bf16.msra.mxu0 0
  %6610 = vmatprep.subr.bf16.mxu0 0
  %6611 = vmatpush1.bf16.msra.mxu0 0
  %6612 = vmatprep.subr.bf16.mxu0 0
  %6613 = vmatpush1.bf16.msra.mxu0 0
  %6614 = vmatprep.subr.bf16.mxu0 0
  %6615 = vmatpush1.bf16.msra.mxu0 0
  %6616 = vmatprep.subr.bf16.mxu0 0
  %6617 = vmatpush1.bf16.msra.mxu0 0
  %6618 = vmatprep.mubr.bf16.mxu0 0
  %6619 = vmatmul.mubr.bf16.gmra.mrb[0].mxu0 %v6584
  %v6620 = vpop.f32.mrb[0].mxu0
  %v6621 = vadd.f32 0.0, %v6620
  %v6622 = vpop.f32.mrb[0].mxu0
  %v6623 = vpop.f32.mrb[0].mxu0
  %v6624 = vadd.f32 0.0, %v6623
  %v6625 = vpop.f32.mrb[0].mxu0
  %6626 = vdwg.mxu0
  %v6627 = vadd.f32 %v6581, %v6621
  %v6628 = vadd.f32 %v6582, %v6624
  %v6630 = vsel %vm271, %v6441, 0
  %6632 = vmatprep.subr.bf16.mxu0 0
  %6633 = vmatpush1.bf16.msra.mxu0 %v500
  %6634 = vmatprep.subr.bf16.mxu0 0
  %6635 = vmatpush1.bf16.msra.mxu0 %v501
  %6636 = vmatprep.subr.bf16.mxu0 0
  %6637 = vmatpush1.bf16.msra.mxu0 0
  %6638 = vmatprep.subr.bf16.mxu0 0
  %6639 = vmatpush1.bf16.msra.mxu0 0
  %6640 = vmatprep.subr.bf16.mxu0 0
  %6641 = vmatpush1.bf16.msra.mxu0 0
  %6642 = vmatprep.subr.bf16.mxu0 0
  %6643 = vmatpush1.bf16.msra.mxu0 0
  %6644 = vmatprep.subr.bf16.mxu0 0
  %6645 = vmatpush1.bf16.msra.mxu0 0
  %6646 = vmatprep.subr.bf16.mxu0 0
  %6647 = vmatpush1.bf16.msra.mxu0 0
  %6648 = vmatprep.subr.bf16.mxu0 0
  %6649 = vmatpush1.bf16.msra.mxu0 0
  %6650 = vmatprep.subr.bf16.mxu0 0
  %6651 = vmatpush1.bf16.msra.mxu0 0
  %6652 = vmatprep.subr.bf16.mxu0 0
  %6653 = vmatpush1.bf16.msra.mxu0 0
  %6654 = vmatprep.subr.bf16.mxu0 0
  %6655 = vmatpush1.bf16.msra.mxu0 0
  %6656 = vmatprep.subr.bf16.mxu0 0
  %6657 = vmatpush1.bf16.msra.mxu0 0
  %6658 = vmatprep.subr.bf16.mxu0 0
  %6659 = vmatpush1.bf16.msra.mxu0 0
  %6660 = vmatprep.subr.bf16.mxu0 0
  %6661 = vmatpush1.bf16.msra.mxu0 0
  %6662 = vmatprep.subr.bf16.mxu0 0
  %6663 = vmatpush1.bf16.msra.mxu0 0
  %6664 = vmatprep.mubr.bf16.mxu0 0
  %6665 = vmatmul.mubr.bf16.gmra.mrb[0].mxu0 %v6630
  %v6666 = vpop.f32.mrb[0].mxu0
  %v6667 = vadd.f32 0.0, %v6666
  %v6668 = vpop.f32.mrb[0].mxu0
  %v6669 = vpop.f32.mrb[0].mxu0
  %v6670 = vadd.f32 0.0, %v6669
  %v6671 = vpop.f32.mrb[0].mxu0
  %6672 = vdwg.mxu0
  %v6673 = vadd.f32 %v6627, %v6667
  %v6674 = vadd.f32 %v6628, %v6670
  %v6675 = vxor.u32 %v6673, 2147483648
  %v6676 = vxor.u32 %v6674, 2147483648
  %v6677 = vmul.f32 %v6675, 1.442695
  %v6678 = vpow.pop %v6677
  %v6679 = vmul.f32 %v6676, 1.442695
  %v6680 = vpow.pop %v6679
  %v6681 = vadd.f32 %v6678, 1.0
  %v6682 = vadd.f32 %v6680, 1.0
  %v6683 = vrcp.pop %v6681
  %v6684 = vmul.f32 1.0, %v6683
  %v6685 = vrcp.pop %v6682
  %v6686 = vmul.f32 1.0, %v6685
  %v6687 = vmul.f32 %v6684, %v6253
  %v6688 = vmul.f32 %v6686, %v6255
  %v6689 = vpack.c.bf16 %v6688, %v6687
  %6690 = vmatprep.subr.bf16.mxu0 0
  %6691 = vmatpush1.bf16.msra.mxu0 %v6689
  %6692 = vmatprep.subr.bf16.mxu0 0
  %6693 = vmatpush1.bf16.msra.mxu0 0
  %6694 = vmatprep.subr.bf16.mxu0 0
  %6695 = vmatpush1.bf16.msra.mxu0 0
  %6696 = vmatprep.subr.bf16.mxu0 0
  %6697 = vmatpush1.bf16.msra.mxu0 0
  %6698 = vmatprep.subr.bf16.mxu0 0
  %6699 = vmatpush1.bf16.msra.mxu0 0
  %6700 = vmatprep.subr.bf16.mxu0 0
  %6701 = vmatpush1.bf16.msra.mxu0 0
  %6702 = vmatprep.subr.bf16.mxu0 0
  %6703 = vmatpush1.bf16.msra.mxu0 0
  %6704 = vmatprep.subr.bf16.mxu0 0
  %6705 = vmatpush1.bf16.msra.mxu0 0
  %6706 = vmatprep.subr.bf16.mxu0 0
  %6707 = vmatpush1.bf16.msra.mxu0 0
  %6708 = vmatprep.subr.bf16.mxu0 0
  %6709 = vmatpush1.bf16.msra.mxu0 0
  %6710 = vmatprep.subr.bf16.mxu0 0
  %6711 = vmatpush1.bf16.msra.mxu0 0
  %6712 = vmatprep.subr.bf16.mxu0 0
  %6713 = vmatpush1.bf16.msra.mxu0 0
  %6714 = vmatprep.subr.bf16.mxu0 0
  %6715 = vmatpush1.bf16.msra.mxu0 0
  %6716 = vmatprep.subr.bf16.mxu0 0
  %6717 = vmatpush1.bf16.msra.mxu0 0
  %6718 = vmatprep.subr.bf16.mxu0 0
  %6719 = vmatpush1.bf16.msra.mxu0 0
  %6720 = vmatprep.subr.bf16.mxu0 0
  %6721 = vmatpush1.bf16.msra.mxu0 0
  %6722 = vmatprep.mubr.bf16.mxu0 0
  %6723 = vmatmul.mubr.bf16.gmra.mrb[0].mxu0 %v75
  %v6724 = vpop.f32.mrb[0].mxu0
  %v6725 = vadd.f32 0.0, %v6724
  %v6726 = vpop.f32.mrb[0].mxu0
  %v6727 = vpop.f32.mrb[0].mxu0
  %v6728 = vadd.f32 0.0, %v6727
  %v6729 = vpop.f32.mrb[0].mxu0
  %6730 = vdwg.mxu0
  %v6731 = vpack.c.bf16 %v6728, %v6725
  %6732 = vmatprep.subr.bf16.mxu0 0
  %6733 = vmatpush1.bf16.msra.mxu0 %v6731
  %6734 = vmatprep.subr.bf16.mxu0 0
  %6735 = vmatpush1.bf16.msra.mxu0 0
  %6736 = vmatprep.subr.bf16.mxu0 0
  %6737 = vmatpush1.bf16.msra.mxu0 0
  %6738 = vmatprep.subr.bf16.mxu0 0
  %6739 = vmatpush1.bf16.msra.mxu0 0
  %6740 = vmatprep.subr.bf16.mxu0 0
  %6741 = vmatpush1.bf16.msra.mxu0 0
  %6742 = vmatprep.subr.bf16.mxu0 0
  %6743 = vmatpush1.bf16.msra.mxu0 0
  %6744 = vmatprep.subr.bf16.mxu0 0
  %6745 = vmatpush1.bf16.msra.mxu0 0
  %6746 = vmatprep.subr.bf16.mxu0 0
  %6747 = vmatpush1.bf16.msra.mxu0 0
  %6748 = vmatprep.subr.bf16.mxu0 0
  %6749 = vmatpush1.bf16.msra.mxu0 0
  %6750 = vmatprep.subr.bf16.mxu0 0
  %6751 = vmatpush1.bf16.msra.mxu0 0
  %6752 = vmatprep.subr.bf16.mxu0 0
  %6753 = vmatpush1.bf16.msra.mxu0 0
  %6754 = vmatprep.subr.bf16.mxu0 0
  %6755 = vmatpush1.bf16.msra.mxu0 0
  %6756 = vmatprep.subr.bf16.mxu0 0
  %6757 = vmatpush1.bf16.msra.mxu0 0
  %6758 = vmatprep.subr.bf16.mxu0 0
  %6759 = vmatpush1.bf16.msra.mxu0 0
  %6760 = vmatprep.subr.bf16.mxu0 0
  %6761 = vmatpush1.bf16.msra.mxu0 0
  %6762 = vmatprep.subr.bf16.mxu0 0
  %6763 = vmatpush1.bf16.msra.mxu0 0
  %6764 = vmatprep.mubr.bf16.mxu0 0
  %6765 = vmatmul.mubr.bf16.gmra.mrb[0].mxu0 %v75
  %v6766 = vpop.f32.mrb[0].mxu0
  %v6767 = vadd.f32 0.0, %v6766
  %v6768 = vpop.f32.mrb[0].mxu0
  %v6769 = vpop.f32.mrb[0].mxu0
  %v6770 = vadd.f32 0.0, %v6769
  %v6771 = vpop.f32.mrb[0].mxu0
  %6772 = vdwg.mxu0
  %v6773 = vmul.f32 %v6767, 2.0
  %v6774 = vmul.f32 %v6770, 2.0
  %v6775 = vsub.f32 %v6773, %v6687
  %v6776 = vsub.f32 %v6774, %v6688
  %v6777 = vpack.c.bf16 %v6776, %v6775
  %6778 = vmatprep.subr.bf16.mxu0 0
  %6779 = vmatpush1.bf16.msra.mxu0 %v6689
  %6780 = vmatprep.subr.bf16.mxu0 0
  %6781 = vmatpush1.bf16.msra.mxu0 0
  %6782 = vmatprep.subr.bf16.mxu0 0
  %6783 = vmatpush1.bf16.msra.mxu0 0
  %6784 = vmatprep.subr.bf16.mxu0 0
  %6785 = vmatpush1.bf16.msra.mxu0 0
  %6786 = vmatprep.subr.bf16.mxu0 0
  %6787 = vmatpush1.bf16.msra.mxu0 0
  %6788 = vmatprep.subr.bf16.mxu0 0
  %6789 = vmatpush1.bf16.msra.mxu0 0
  %6790 = vmatprep.subr.bf16.mxu0 0
  %6791 = vmatpush1.bf16.msra.mxu0 0
  %6792 = vmatprep.subr.bf16.mxu0 0
  %6793 = vmatpush1.bf16.msra.mxu0 0
  %6794 = vmatprep.subr.bf16.mxu0 0
  %6795 = vmatpush1.bf16.msra.mxu0 0
  %6796 = vmatprep.subr.bf16.mxu0 0
  %6797 = vmatpush1.bf16.msra.mxu0 0
  %6798 = vmatprep.subr.bf16.mxu0 0
  %6799 = vmatpush1.bf16.msra.mxu0 0
  %6800 = vmatprep.subr.bf16.mxu0 0
  %6801 = vmatpush1.bf16.msra.mxu0 0
  %6802 = vmatprep.subr.bf16.mxu0 0
  %6803 = vmatpush1.bf16.msra.mxu0 0
  %6804 = vmatprep.subr.bf16.mxu0 0
  %6805 = vmatpush1.bf16.msra.mxu0 0
  %6806 = vmatprep.subr.bf16.mxu0 0
  %6807 = vmatpush1.bf16.msra.mxu0 0
  %6808 = vmatprep.subr.bf16.mxu0 0
  %6809 = vmatpush1.bf16.msra.mxu0 0
  %6810 = vmatprep.mubr.bf16.mxu0 0
  %6811 = vmatmul.mubr.bf16.gmra.mrb[0].mxu0 %v169
  %v6812 = vpop.f32.mrb[0].mxu0
  %v6813 = vadd.f32 0.0, %v6812
  %v6814 = vpop.f32.mrb[0].mxu0
  %v6815 = vpop.f32.mrb[0].mxu0
  %v6816 = vadd.f32 0.0, %v6815
  %v6817 = vpop.f32.mrb[0].mxu0
  %6818 = vdwg.mxu0
  %v6819 = vpack.c.bf16 %v6816, %v6813
  %6820 = vmatprep.subr.bf16.mxu0 0
  %6821 = vmatpush1.bf16.msra.mxu0 %v6819
  %6822 = vmatprep.subr.bf16.mxu0 0
  %6823 = vmatpush1.bf16.msra.mxu0 0
  %6824 = vmatprep.subr.bf16.mxu0 0
  %6825 = vmatpush1.bf16.msra.mxu0 0
  %6826 = vmatprep.subr.bf16.mxu0 0
  %6827 = vmatpush1.bf16.msra.mxu0 0
  %6828 = vmatprep.subr.bf16.mxu0 0
  %6829 = vmatpush1.bf16.msra.mxu0 0
  %6830 = vmatprep.subr.bf16.mxu0 0
  %6831 = vmatpush1.bf16.msra.mxu0 0
  %6832 = vmatprep.subr.bf16.mxu0 0
  %6833 = vmatpush1.bf16.msra.mxu0 0
  %6834 = vmatprep.subr.bf16.mxu0 0
  %6835 = vmatpush1.bf16.msra.mxu0 0
  %6836 = vmatprep.subr.bf16.mxu0 0
  %6837 = vmatpush1.bf16.msra.mxu0 0
  %6838 = vmatprep.subr.bf16.mxu0 0
  %6839 = vmatpush1.bf16.msra.mxu0 0
  %6840 = vmatprep.subr.bf16.mxu0 0
  %6841 = vmatpush1.bf16.msra.mxu0 0
  %6842 = vmatprep.subr.bf16.mxu0 0
  %6843 = vmatpush1.bf16.msra.mxu0 0
  %6844 = vmatprep.subr.bf16.mxu0 0
  %6845 = vmatpush1.bf16.msra.mxu0 0
  %6846 = vmatprep.subr.bf16.mxu0 0
  %6847 = vmatpush1.bf16.msra.mxu0 0
  %6848 = vmatprep.subr.bf16.mxu0 0
  %6849 = vmatpush1.bf16.msra.mxu0 0
  %6850 = vmatprep.subr.bf16.mxu0 0
  %6851 = vmatpush1.bf16.msra.mxu0 0
  %6852 = vmatprep.mubr.bf16.mxu0 0
  %6853 = vmatmul.mubr.bf16.gmra.mrb[0].mxu0 %v169
  %v6854 = vpop.f32.mrb[0].mxu0
  %v6855 = vadd.f32 0.0, %v6854
  %v6856 = vpop.f32.mrb[0].mxu0
  %v6857 = vpop.f32.mrb[0].mxu0
  %v6858 = vadd.f32 0.0, %v6857
  %v6859 = vpop.f32.mrb[0].mxu0
  %6860 = vdwg.mxu0
  %v6861 = vmul.f32 %v6855, 2.0
  %v6862 = vmul.f32 %v6858, 2.0
  %v6863 = vsub.f32 %v6861, %v6687
  %v6864 = vsub.f32 %v6862, %v6688
  %v6865 = vpack.c.bf16 %v6864, %v6863
  %s6866 = scalar_lea.vmem %s1, 112
  %v6867 = vld [vmem:[%s6866] sm:$0xff]
  %v6868 = vld [vmem:[%s6866 + $0x8] sm:$0xff]
  %v6870 = vsel %vm271, %v6689, 0
  %6872 = vmatprep.subr.bf16.mxu0 0
  %6873 = vmatpush1.bf16.msra.mxu0 %v751
  %6874 = vmatprep.subr.bf16.mxu0 0
  %6875 = vmatpush1.bf16.msra.mxu0 %v752
  %6876 = vmatprep.subr.bf16.mxu0 0
  %6877 = vmatpush1.bf16.msra.mxu0 0
  %6878 = vmatprep.subr.bf16.mxu0 0
  %6879 = vmatpush1.bf16.msra.mxu0 0
  %6880 = vmatprep.subr.bf16.mxu0 0
  %6881 = vmatpush1.bf16.msra.mxu0 0
  %6882 = vmatprep.subr.bf16.mxu0 0
  %6883 = vmatpush1.bf16.msra.mxu0 0
  %6884 = vmatprep.subr.bf16.mxu0 0
  %6885 = vmatpush1.bf16.msra.mxu0 0
  %6886 = vmatprep.subr.bf16.mxu0 0
  %6887 = vmatpush1.bf16.msra.mxu0 0
  %6888 = vmatprep.subr.bf16.mxu0 0
  %6889 = vmatpush1.bf16.msra.mxu0 0
  %6890 = vmatprep.subr.bf16.mxu0 0
  %6891 = vmatpush1.bf16.msra.mxu0 0
  %6892 = vmatprep.subr.bf16.mxu0 0
  %6893 = vmatpush1.bf16.msra.mxu0 0
  %6894 = vmatprep.subr.bf16.mxu0 0
  %6895 = vmatpush1.bf16.msra.mxu0 0
  %6896 = vmatprep.subr.bf16.mxu0 0
  %6897 = vmatpush1.bf16.msra.mxu0 0
  %6898 = vmatprep.subr.bf16.mxu0 0
  %6899 = vmatpush1.bf16.msra.mxu0 0
  %6900 = vmatprep.subr.bf16.mxu0 0
  %6901 = vmatpush1.bf16.msra.mxu0 0
  %6902 = vmatprep.subr.bf16.mxu0 0
  %6903 = vmatpush1.bf16.msra.mxu0 0
  %6904 = vmatprep.mubr.bf16.mxu0 0
  %6905 = vmatmul.mubr.bf16.gmra.mrb[0].mxu0 %v6870
  %v6906 = vpop.f32.mrb[0].mxu0
  %v6907 = vadd.f32 0.0, %v6906
  %v6908 = vpop.f32.mrb[0].mxu0
  %v6909 = vpop.f32.mrb[0].mxu0
  %v6910 = vadd.f32 0.0, %v6909
  %v6911 = vpop.f32.mrb[0].mxu0
  %6912 = vdwg.mxu0
  %v6913 = vadd.f32 %v6867, %v6907
  %v6914 = vadd.f32 %v6868, %v6910
  %v6916 = vsel %vm271, %v6731, 0
  %6918 = vmatprep.subr.bf16.mxu0 0
  %6919 = vmatpush1.bf16.msra.mxu0 %v809
  %6920 = vmatprep.subr.bf16.mxu0 0
  %6921 = vmatpush1.bf16.msra.mxu0 %v810
  %6922 = vmatprep.subr.bf16.mxu0 0
  %6923 = vmatpush1.bf16.msra.mxu0 0
  %6924 = vmatprep.subr.bf16.mxu0 0
  %6925 = vmatpush1.bf16.msra.mxu0 0
  %6926 = vmatprep.subr.bf16.mxu0 0
  %6927 = vmatpush1.bf16.msra.mxu0 0
  %6928 = vmatprep.subr.bf16.mxu0 0
  %6929 = vmatpush1.bf16.msra.mxu0 0
  %6930 = vmatprep.subr.bf16.mxu0 0
  %6931 = vmatpush1.bf16.msra.mxu0 0
  %6932 = vmatprep.subr.bf16.mxu0 0
  %6933 = vmatpush1.bf16.msra.mxu0 0
  %6934 = vmatprep.subr.bf16.mxu0 0
  %6935 = vmatpush1.bf16.msra.mxu0 0
  %6936 = vmatprep.subr.bf16.mxu0 0
  %6937 = vmatpush1.bf16.msra.mxu0 0
  %6938 = vmatprep.subr.bf16.mxu0 0
  %6939 = vmatpush1.bf16.msra.mxu0 0
  %6940 = vmatprep.subr.bf16.mxu0 0
  %6941 = vmatpush1.bf16.msra.mxu0 0
  %6942 = vmatprep.subr.bf16.mxu0 0
  %6943 = vmatpush1.bf16.msra.mxu0 0
  %6944 = vmatprep.subr.bf16.mxu0 0
  %6945 = vmatpush1.bf16.msra.mxu0 0
  %6946 = vmatprep.subr.bf16.mxu0 0
  %6947 = vmatpush1.bf16.msra.mxu0 0
  %6948 = vmatprep.subr.bf16.mxu0 0
  %6949 = vmatpush1.bf16.msra.mxu0 0
  %6950 = vmatprep.mubr.bf16.mxu0 0
  %6951 = vmatmul.mubr.bf16.gmra.mrb[0].mxu0 %v6916
  %v6952 = vpop.f32.mrb[0].mxu0
  %v6953 = vadd.f32 0.0, %v6952
  %v6954 = vpop.f32.mrb[0].mxu0
  %v6955 = vpop.f32.mrb[0].mxu0
  %v6956 = vadd.f32 0.0, %v6955
  %v6957 = vpop.f32.mrb[0].mxu0
  %6958 = vdwg.mxu0
  %v6959 = vadd.f32 %v6913, %v6953
  %v6960 = vadd.f32 %v6914, %v6956
  %v6962 = vsel %vm271, %v6777, 0
  %6964 = vmatprep.subr.bf16.mxu0 0
  %6965 = vmatpush1.bf16.msra.mxu0 %v867
  %6966 = vmatprep.subr.bf16.mxu0 0
  %6967 = vmatpush1.bf16.msra.mxu0 %v868
  %6968 = vmatprep.subr.bf16.mxu0 0
  %6969 = vmatpush1.bf16.msra.mxu0 0
  %6970 = vmatprep.subr.bf16.mxu0 0
  %6971 = vmatpush1.bf16.msra.mxu0 0
  %6972 = vmatprep.subr.bf16.mxu0 0
  %6973 = vmatpush1.bf16.msra.mxu0 0
  %6974 = vmatprep.subr.bf16.mxu0 0
  %6975 = vmatpush1.bf16.msra.mxu0 0
  %6976 = vmatprep.subr.bf16.mxu0 0
  %6977 = vmatpush1.bf16.msra.mxu0 0
  %6978 = vmatprep.subr.bf16.mxu0 0
  %6979 = vmatpush1.bf16.msra.mxu0 0
  %6980 = vmatprep.subr.bf16.mxu0 0
  %6981 = vmatpush1.bf16.msra.mxu0 0
  %6982 = vmatprep.subr.bf16.mxu0 0
  %6983 = vmatpush1.bf16.msra.mxu0 0
  %6984 = vmatprep.subr.bf16.mxu0 0
  %6985 = vmatpush1.bf16.msra.mxu0 0
  %6986 = vmatprep.subr.bf16.mxu0 0
  %6987 = vmatpush1.bf16.msra.mxu0 0
  %6988 = vmatprep.subr.bf16.mxu0 0
  %6989 = vmatpush1.bf16.msra.mxu0 0
  %6990 = vmatprep.subr.bf16.mxu0 0
  %6991 = vmatpush1.bf16.msra.mxu0 0
  %6992 = vmatprep.subr.bf16.mxu0 0
  %6993 = vmatpush1.bf16.msra.mxu0 0
  %6994 = vmatprep.subr.bf16.mxu0 0
  %6995 = vmatpush1.bf16.msra.mxu0 0
  %6996 = vmatprep.mubr.bf16.mxu0 0
  %6997 = vmatmul.mubr.bf16.gmra.mrb[0].mxu0 %v6962
  %v6998 = vpop.f32.mrb[0].mxu0
  %v6999 = vadd.f32 0.0, %v6998
  %v7000 = vpop.f32.mrb[0].mxu0
  %v7001 = vpop.f32.mrb[0].mxu0
  %v7002 = vadd.f32 0.0, %v7001
  %v7003 = vpop.f32.mrb[0].mxu0
  %7004 = vdwg.mxu0
  %v7005 = vadd.f32 %v6959, %v6999
  %v7006 = vadd.f32 %v6960, %v7002
  %v7008 = vsel %vm271, %v6819, 0
  %7010 = vmatprep.subr.bf16.mxu0 0
  %7011 = vmatpush1.bf16.msra.mxu0 %v925
  %7012 = vmatprep.subr.bf16.mxu0 0
  %7013 = vmatpush1.bf16.msra.mxu0 %v926
  %7014 = vmatprep.subr.bf16.mxu0 0
  %7015 = vmatpush1.bf16.msra.mxu0 0
  %7016 = vmatprep.subr.bf16.mxu0 0
  %7017 = vmatpush1.bf16.msra.mxu0 0
  %7018 = vmatprep.subr.bf16.mxu0 0
  %7019 = vmatpush1.bf16.msra.mxu0 0
  %7020 = vmatprep.subr.bf16.mxu0 0
  %7021 = vmatpush1.bf16.msra.mxu0 0
  %7022 = vmatprep.subr.bf16.mxu0 0
  %7023 = vmatpush1.bf16.msra.mxu0 0
  %7024 = vmatprep.subr.bf16.mxu0 0
  %7025 = vmatpush1.bf16.msra.mxu0 0
  %7026 = vmatprep.subr.bf16.mxu0 0
  %7027 = vmatpush1.bf16.msra.mxu0 0
  %7028 = vmatprep.subr.bf16.mxu0 0
  %7029 = vmatpush1.bf16.msra.mxu0 0
  %7030 = vmatprep.subr.bf16.mxu0 0
  %7031 = vmatpush1.bf16.msra.mxu0 0
  %7032 = vmatprep.subr.bf16.mxu0 0
  %7033 = vmatpush1.bf16.msra.mxu0 0
  %7034 = vmatprep.subr.bf16.mxu0 0
  %7035 = vmatpush1.bf16.msra.mxu0 0
  %7036 = vmatprep.subr.bf16.mxu0 0
  %7037 = vmatpush1.bf16.msra.mxu0 0
  %7038 = vmatprep.subr.bf16.mxu0 0
  %7039 = vmatpush1.bf16.msra.mxu0 0
  %7040 = vmatprep.subr.bf16.mxu0 0
  %7041 = vmatpush1.bf16.msra.mxu0 0
  %7042 = vmatprep.mubr.bf16.mxu0 0
  %7043 = vmatmul.mubr.bf16.gmra.mrb[0].mxu0 %v7008
  %v7044 = vpop.f32.mrb[0].mxu0
  %v7045 = vadd.f32 0.0, %v7044
  %v7046 = vpop.f32.mrb[0].mxu0
  %v7047 = vpop.f32.mrb[0].mxu0
  %v7048 = vadd.f32 0.0, %v7047
  %v7049 = vpop.f32.mrb[0].mxu0
  %7050 = vdwg.mxu0
  %v7051 = vadd.f32 %v7005, %v7045
  %v7052 = vadd.f32 %v7006, %v7048
  %v7054 = vsel %vm271, %v6865, 0
  %7056 = vmatprep.subr.bf16.mxu0 0
  %7057 = vmatpush1.bf16.msra.mxu0 %v983
  %7058 = vmatprep.subr.bf16.mxu0 0
  %7059 = vmatpush1.bf16.msra.mxu0 %v984
  %7060 = vmatprep.subr.bf16.mxu0 0
  %7061 = vmatpush1.bf16.msra.mxu0 0
  %7062 = vmatprep.subr.bf16.mxu0 0
  %7063 = vmatpush1.bf16.msra.mxu0 0
  %7064 = vmatprep.subr.bf16.mxu0 0
  %7065 = vmatpush1.bf16.msra.mxu0 0
  %7066 = vmatprep.subr.bf16.mxu0 0
  %7067 = vmatpush1.bf16.msra.mxu0 0
  %7068 = vmatprep.subr.bf16.mxu0 0
  %7069 = vmatpush1.bf16.msra.mxu0 0
  %7070 = vmatprep.subr.bf16.mxu0 0
  %7071 = vmatpush1.bf16.msra.mxu0 0
  %7072 = vmatprep.subr.bf16.mxu0 0
  %7073 = vmatpush1.bf16.msra.mxu0 0
  %7074 = vmatprep.subr.bf16.mxu0 0
  %7075 = vmatpush1.bf16.msra.mxu0 0
  %7076 = vmatprep.subr.bf16.mxu0 0
  %7077 = vmatpush1.bf16.msra.mxu0 0
  %7078 = vmatprep.subr.bf16.mxu0 0
  %7079 = vmatpush1.bf16.msra.mxu0 0
  %7080 = vmatprep.subr.bf16.mxu0 0
  %7081 = vmatpush1.bf16.msra.mxu0 0
  %7082 = vmatprep.subr.bf16.mxu0 0
  %7083 = vmatpush1.bf16.msra.mxu0 0
  %7084 = vmatprep.subr.bf16.mxu0 0
  %7085 = vmatpush1.bf16.msra.mxu0 0
  %7086 = vmatprep.subr.bf16.mxu0 0
  %7087 = vmatpush1.bf16.msra.mxu0 0
  %7088 = vmatprep.mubr.bf16.mxu0 0
  %7089 = vmatmul.mubr.bf16.gmra.mrb[0].mxu0 %v7054
  %v7090 = vpop.f32.mrb[0].mxu0
  %v7091 = vadd.f32 0.0, %v7090
  %v7092 = vpop.f32.mrb[0].mxu0
  %v7093 = vpop.f32.mrb[0].mxu0
  %v7094 = vadd.f32 0.0, %v7093
  %v7095 = vpop.f32.mrb[0].mxu0
  %7096 = vdwg.mxu0
  %v7097 = vadd.f32 %v7051, %v7091
  %v7098 = vadd.f32 %v7052, %v7094
  %v7099 = vtanh.pop %v7097
  %v7100 = vtanh.pop %v7098
  %v7101 = vmul.f32 %v6684, %v6248
  %v7102 = vmul.f32 %v6686, %v6249
  %v7103 = vsub.f32 1.0, %v6684
  %v7104 = vsub.f32 1.0, %v6686
  %7107 = vrot.lane.b32.xlu0 %v7099, 32
  %v7108 = vpop.permute.xlu0 %7107
  %7109 = vrot.lane.b32.xlu0 %v7100, 32
  %v7110 = vpop.permute.xlu0 %7109
  %v7113 = vmul.f32 %v7103, %v7108
  %v7114 = vmul.f32 %v7104, %v7110
  %v7115 = vadd.f32 %v7101, %v7113
  %v7116 = vadd.f32 %v7102, %v7114
  %7119 = vrot.lane.b32.xlu0 %v7115, 96
  %v7120 = vpop.permute.xlu0 %7119
  %7121 = vrot.lane.b32.xlu0 %v7116, 96
  %v7122 = vpop.permute.xlu0 %7121
  %s7125 = scalar_lea.vmem %s6, 112
  %7126 = vst.msk [vmem:[%s7125] sm:$0xff] %vm271, %v7120
  %7127 = vst.msk [vmem:[%s7125 + $0x8] sm:$0xff] %vm271, %v7122
  // Predicated region
  $region26: #{dcrnn_forward.1} parent=0 // pred_check
    _
  $region27: #{dcrnn_forward.1} parent=0 // pred_check_branch
    %7129 = sbr.rel (0) target = $region29
  $region28: #{dcrnn_forward.1} parent=0 // pred_region
    _
  $region29: #{dcrnn_forward.1} parent=0 // pred_fallthru
    _
  // Predicated region
  $region30: #{dcrnn_forward.1} parent=0 // pred_check
    _
  $region31: #{dcrnn_forward.1} parent=0 // pred_check_branch
    %7131 = sbr.rel (0) target = $region33
  $region32: #{dcrnn_forward.1} parent=0 // pred_region
    _
  $region33: #{dcrnn_forward.1} parent=0 // pred_fallthru
    _

</llo_original>
